<compile_context>
chip_gen: v7x
topology: tpu7x:2x2x1
jax: 0.10.0
libtpu: 0.0.40
codegen_flags: <defaults>
</compile_context>

<pallas_src>
import jax
import jax.numpy as jnp
from jax.experimental import pallas as pl
from jax.experimental.pallas import tpu as pltpu

# ----------------------------- config (stand-in for cmd_args) ----------------
FEAT_DIM = 8                 # cmd_args.feat_dim
ATTR_DIM = 0                 # cmd_args.attr_dim
LATENT_DIM = (32, 32, 32, 1) # cmd_args.latent_dim (DGCNN default)
SORTPOOL_K = 12              # cmd_args.sortpooling_k
CONV1D_CH = (16, 32)
CONV1D_KW2 = 5
HIDDEN = 32                  # cmd_args.hidden
NUM_CLASS = 2                # cmd_args.num_class
OUT_DIM = 0                  # cmd_args.out_dim == 0 -> use gnn.dense_dim

D_TOTAL = sum(LATENT_DIM)             # 97
L1 = (SORTPOOL_K - 2) // 2 + 1        # length after MaxPool1d(2,2)  -> 6
L2 = L1 - CONV1D_KW2 + 1              # length after conv1d #2       -> 2
C1, C2 = CONV1D_CH
DENSE_DIM = L2 * C2                   # 64
OUT_PAD = 128                         # lane-dense log-prob output width
MAX_BB = 8                            # graphs packed per grid step (8*16 = 128 rows)

assert LATENT_DIM[-1] == 1 and len(LATENT_DIM) == 4 and NUM_CLASS <= OUT_PAD


# ----------------------------- the fused kernel -------------------------------
def _dgcnn_fused_kernel(a_ref, x_ref,
                        w0_ref, b0_ref, w1_ref, b1_ref,
                        w2_ref, b2_ref, w3_ref, b3_ref,
                        c1w_ref, c1b_ref, c2w_ref, c2b_ref,
                        mw1_ref, mb1_ref, mw2_ref, mb2_ref,
                        o_ref):
    a = a_ref[...]                                   # (BB, N, N), resident for all layers
    BB, N, _ = a.shape
    BBN = BB * N

    # ---- stacked graph convolutions: tanh(((A+I)@(X W) + b) / (deg(A)+1)) ----
    dinv = 1.0 / (jnp.sum(a, axis=2, keepdims=True) + 1.0)        # (BB, N, 1)
    cur2 = x_ref[...].reshape(BBN, -1)                            # (BB*N, F0) packed rows
    feats2 = []                                                   # per-layer (BB*N, Fout)
    h3_last = None
    for w_ref, b_ref in ((w0_ref, b0_ref), (w1_ref, b1_ref),
                         (w2_ref, b2_ref), (w3_ref, b3_ref)):
        w = w_ref[...]
        xw = jnp.dot(cur2, w, preferred_element_type=jnp.float32)         # (BB*N, Fout), 128 MXU rows
        xw3 = xw.reshape(BB, N, w.shape[1])
        ax3 = jnp.einsum('bij,bjf->bif', a, xw3,
                         preferred_element_type=jnp.float32)              # batched (A @ XW)
        h3 = jnp.tanh((ax3 + xw3 + b_ref[...]) * dinv)                    # (+I folded as +XW)
        cur2 = h3.reshape(BBN, w.shape[1])
        feats2.append(cur2)
        h3_last = h3                                                      # (BB, N, 1) on last layer

    # ---- conv1d #1 (kernel=stride=D_total == per-node linear) on ALL packed rows,
    #      as a chunk-sum over the gconv layers (no 97-lane concat materialized) ----
    y1 = c1b_ref[...]                                                     # (1, C1)
    off = 0
    for l, width in enumerate(LATENT_DIM):
        if width == 1:
            y1 = y1 + feats2[l] * c1w_ref[off:off + 1, :]                 # outer product chunk
        else:
            y1 = y1 + jnp.dot(feats2[l], c1w_ref[off:off + width, :],
                              preferred_element_type=jnp.float32)
        off += width
    y1 = jnp.maximum(y1, 0.0)                                             # (BB*N, C1)
    y1_3 = y1.reshape(BB, N, C1)

    # ---- SortPooling: in-kernel top-k of the last gconv channel (descending,
    #      lowest index on ties, same as lax.top_k) fused with the row gather.
    #      ReLU(conv1(gathered)) == gather(ReLU(conv1(all))) since conv1 is per-row. ----
    work = h3_last                                                        # (BB, N, 1)
    iota_f = jax.lax.broadcasted_iota(jnp.int32, (BB, N, 1), 1).astype(jnp.float32)
    rows = []                                                             # K x (BB, C1)
    for _ in range(SORTPOOL_K):
        mx = jnp.max(work, axis=1, keepdims=True)                         # (BB, 1, 1)
        first = jnp.min(jnp.where(work == mx, iota_f, jnp.float32(N)),
                        axis=1, keepdims=True)                            # (BB, 1, 1)
        ohb = iota_f == first                                             # (BB, N, 1) one-hot
        rows.append(jnp.sum(ohb.astype(jnp.float32) * y1_3, axis=1))      # gathered row (BB, C1)
        work = jnp.where(ohb, jnp.float32(-1e30), work)

    # ---- MaxPool1d(2, 2) over the sorted-node axis ----
    pooled = [jnp.maximum(rows[2 * m], rows[2 * m + 1]) for m in range(L1)]

    # ---- conv1d #2 (tap-sum) + ReLU, (C,L)-flatten folded into the first MLP layer ----
    b2c = c2b_ref[...]                                                    # (1, C2)
    hacc = mb1_ref[...]                                                   # (1, HIDDEN)
    for p in range(L2):
        r = b2c
        for t in range(CONV1D_KW2):
            r = r + jnp.dot(pooled[p + t], c2w_ref[t * C1:(t + 1) * C1, :],
                            preferred_element_type=jnp.float32)           # (BB, C2)
        r = jnp.maximum(r, 0.0)
        hacc = hacc + jnp.dot(r, mw1_ref[p * C2:(p + 1) * C2, :],
                              preferred_element_type=jnp.float32)         # (BB, HIDDEN)

    hidden = jnp.maximum(hacc, 0.0)
    logits = jnp.dot(hidden, mw2_ref[...],
                     preferred_element_type=jnp.float32) + mb2_ref[...]   # (BB, NUM_CLASS)

    # ---- log_softmax, emitted as ONE lane-dense (BB, 128) store ----
    mxl = jnp.max(logits, axis=-1, keepdims=True)
    z = logits - mxl
    lp = z - jnp.log(jnp.sum(jnp.exp(z), axis=-1, keepdims=True))
    o_ref[...] = jnp.concatenate(
        [lp, jnp.zeros((BB, OUT_PAD - NUM_CLASS), jnp.float32)], axis=-1)


# ----------------------------- wrapper ----------------------------------------
def fused_dgcnn_forward(params, adj, x):
    """adj: (B, N, N) f32, x: (B, N, FEAT_DIM) f32 -> (B, NUM_CLASS) log-probs."""
    B, N, F0 = x.shape
    # TODO(synk): graphs with fewer than SORTPOOL_K nodes are not handled
    # (original DGCNN zero-pads the sortpooled tensor).
    assert N >= SORTPOOL_K

    BB = B if B <= MAX_BB else MAX_BB
    Bp = ((B + BB - 1) // BB) * BB
    if Bp != B:                                       # pad batch with empty graphs
        adj = jnp.pad(adj, ((0, Bp - B), (0, 0), (0, 0)))
        x = jnp.pad(x, ((0, Bp - B), (0, 0), (0, 0)))

    (w0, b0), (w1, b1), (w2, b2), (w3, b3) = params["gconv"]

    # one-time weight re-layouts done in XLA outside the hot kernel:
    #  - conv2 weight rows reordered (channel, tap) -> (tap, channel)
    #  - mlp_w1 rows reordered (channel*L2 + pos)   -> (pos*C2 + channel)
    c2w = params["conv2_w"].reshape(C1, CONV1D_KW2, C2).transpose(1, 0, 2) \
                           .reshape(CONV1D_KW2 * C1, C2)
    mw1 = params["mlp_w1"].reshape(C2, L2, HIDDEN).transpose(1, 0, 2) \
                          .reshape(L2 * C2, HIDDEN)

    weights = (
        w0, b0.reshape(1, -1), w1, b1.reshape(1, -1),
        w2, b2.reshape(1, -1), w3, b3.reshape(1, -1),
        params["conv1_w"], params["conv1_b"].reshape(1, -1),
        c2w, params["conv2_b"].reshape(1, -1),
        mw1, params["mlp_b1"].reshape(1, -1),
        params["mlp_w2"], params["mlp_b2"].reshape(1, -1),
    )
    w_specs = [pl.BlockSpec(w.shape, lambda i: (0, 0)) for w in weights]

    flops_graph, fin = 0, F0
    for fout in LATENT_DIM:
        flops_graph += 2 * N * fin * fout + 2 * N * N * fout
        fin = fout
    flops_graph += (2 * N * D_TOTAL * C1 + 2 * SORTPOOL_K * N * C1
                    + 2 * L2 * CONV1D_KW2 * C1 * C2
                    + 2 * DENSE_DIM * HIDDEN + 2 * HIDDEN * NUM_CLASS)
    bytes_acc = 4 * (Bp * N * N + Bp * N * F0 + Bp * OUT_PAD
                     + sum(int(w.size) for w in weights))

    out = pl.pallas_call(
        _dgcnn_fused_kernel,
        out_shape=jax.ShapeDtypeStruct((Bp, OUT_PAD), jnp.float32),
        grid=(Bp // BB,),
        in_specs=[
            pl.BlockSpec((BB, N, N), lambda i: (i, 0, 0)),
            pl.BlockSpec((BB, N, F0), lambda i: (i, 0, 0)),
            *w_specs,
        ],
        out_specs=pl.BlockSpec((BB, OUT_PAD), lambda i: (i, 0)),
        compiler_params=pltpu.CompilerParams(
            dimension_semantics=("parallel",)),      # independent batch tiles (v7x megacore)
        cost_estimate=pl.CostEstimate(
            flops=Bp * flops_graph,
            transcendentals=Bp * (N * D_TOTAL + NUM_CLASS),
            bytes_accessed=bytes_acc),
    )(adj, x, *weights)

    return out[:B, :NUM_CLASS]


# ----------------------------- parameters ------------------------------------
def init_params(key):
    ks = jax.random.split(key, 16)
    ki = 0

    def unif(shape, fan_in):
        nonlocal ki
        bound = 1.0 / (float(fan_in) ** 0.5)
        out = jax.random.uniform(ks[ki], shape, jnp.float32, -bound, bound)
        ki += 1
        return out

    params = {}
    gconv = []
    fin = FEAT_DIM + ATTR_DIM
    for fout in LATENT_DIM:
        w = unif((fin, fout), fin)
        b = unif((fout,), fin)
        gconv.append((w, b))
        fin = fout
    params["gconv"] = gconv

    # Conv1d(1, 16, kernel=d_total, stride=d_total) -> matmul weight (d_total, 16)
    params["conv1_w"] = unif((D_TOTAL, C1), D_TOTAL)
    params["conv1_b"] = unif((C1,), D_TOTAL)
    # Conv1d(16, 32, kernel=5) -> im2col weight (16*5, 32), rows ordered (channel, tap)
    params["conv2_w"] = unif((C1 * CONV1D_KW2, C2), C1 * CONV1D_KW2)
    params["conv2_b"] = unif((C2,), C1 * CONV1D_KW2)

    in_dim = DENSE_DIM if OUT_DIM == 0 else OUT_DIM
    params["mlp_w1"] = unif((in_dim, HIDDEN), in_dim)
    params["mlp_b1"] = unif((HIDDEN,), in_dim)
    params["mlp_w2"] = unif((HIDDEN, NUM_CLASS), HIDDEN)
    params["mlp_b2"] = unif((NUM_CLASS,), HIDDEN)
    return params


# ----------------------------- forward ----------------------------------------
def classifier_forward(params, adj, node_feat, labels):
    """adj: (B, N, N) f32, node_feat: (B, N, FEAT_DIM) f32, labels: (B,) int32."""
    logprobs = fused_dgcnn_forward(params, adj, node_feat)     # (B, NUM_CLASS)

    # NLL loss / accuracy over graph labels (plain-JAX glue)
    nll = -jnp.take_along_axis(logprobs, labels[:, None], axis=1)[:, 0]
    loss = jnp.mean(nll)
    pred = jnp.argmax(logprobs, axis=1)
    acc = jnp.mean((pred == labels).astype(jnp.float32))
    # TODO(synk): the repo's modified MLPClassifier also consumes `link_labels`
    # (definition not provided); only the graph-classification head is modeled.
    return logprobs, loss, acc


# ----------------------------- main --------------------------------------------
if __name__ == "__main__":
    key = jax.random.PRNGKey(0)
    k_adj, k_tag, k_lab, k_par = jax.random.split(key, 4)

    B, N = 16, 16                    # 16 graphs, 16 nodes each (>= SORTPOOL_K)
    rand = jax.random.uniform(k_adj, (B, N, N))
    upper = jnp.triu((rand < 0.3).astype(jnp.float32), k=1)
    adj = upper + jnp.transpose(upper, (0, 2, 1))              # symmetric 0/1 adjacency

    tags = jax.random.randint(k_tag, (B, N), 0, FEAT_DIM)
    node_feat = jax.nn.one_hot(tags, FEAT_DIM, dtype=jnp.float32)  # one-hot node tags
    labels = jax.random.randint(k_lab, (B,), 0, NUM_CLASS)

    params = init_params(k_par)

    fwd = jax.jit(classifier_forward)
    logprobs, loss, acc = fwd(params, adj, node_feat, labels)
    jax.block_until_ready((logprobs, loss, acc))

    assert logprobs.shape == (B, NUM_CLASS)
    assert bool(jnp.all(jnp.isfinite(logprobs)))
    # log_softmax self-consistency: per-graph probabilities sum to 1
    assert bool(jnp.allclose(jnp.sum(jnp.exp(logprobs), axis=1), 1.0, atol=1e-4))
    print("KERNEL_OK")
</pallas_src>

<mosaic_0001>
module attributes {stable_mosaic.version = 11 : i64} {
  func.func @_dgcnn_fused_kernel(%arg0: i32, %arg1: memref<8x16x16xf32, #tpu.memory_space<vmem>>, %arg2: memref<8x16x8xf32, #tpu.memory_space<vmem>>, %arg3: memref<8x32xf32, #tpu.memory_space<vmem>>, %arg4: memref<1x32xf32, #tpu.memory_space<vmem>>, %arg5: memref<32x32xf32, #tpu.memory_space<vmem>>, %arg6: memref<1x32xf32, #tpu.memory_space<vmem>>, %arg7: memref<32x32xf32, #tpu.memory_space<vmem>>, %arg8: memref<1x32xf32, #tpu.memory_space<vmem>>, %arg9: memref<32x1xf32, #tpu.memory_space<vmem>>, %arg10: memref<1x1xf32, #tpu.memory_space<vmem>>, %arg11: memref<97x16xf32, #tpu.memory_space<vmem>>, %arg12: memref<1x16xf32, #tpu.memory_space<vmem>>, %arg13: memref<80x32xf32, #tpu.memory_space<vmem>>, %arg14: memref<1x32xf32, #tpu.memory_space<vmem>>, %arg15: memref<64x32xf32, #tpu.memory_space<vmem>>, %arg16: memref<1x32xf32, #tpu.memory_space<vmem>>, %arg17: memref<32x2xf32, #tpu.memory_space<vmem>>, %arg18: memref<1x2xf32, #tpu.memory_space<vmem>>, %arg19: memref<8x128xf32, #tpu.memory_space<vmem>>) attributes {dimension_semantics = [#tpu.dimension_semantics<parallel>], iteration_bounds = array<i64: 2>, scalar_prefetch = 0 : i64, scratch_operands = 0 : i64, tpu.core_type = #tpu.core_type<tc>, window_params = [{transform_indices = @transform_0, window_bounds = array<i64: 8, 16, 16>}, {transform_indices = @transform_1, window_bounds = array<i64: 8, 16, 8>}, {pipeline_mode = #tpu.pipeline_mode<synchronous>, transform_indices = @transform_2, window_bounds = array<i64: 8, 32>}, {pipeline_mode = #tpu.pipeline_mode<synchronous>, transform_indices = @transform_3, window_bounds = array<i64: 1, 32>}, {pipeline_mode = #tpu.pipeline_mode<synchronous>, transform_indices = @transform_4, window_bounds = array<i64: 32, 32>}, {pipeline_mode = #tpu.pipeline_mode<synchronous>, transform_indices = @transform_5, window_bounds = array<i64: 1, 32>}, {pipeline_mode = #tpu.pipeline_mode<synchronous>, transform_indices = @transform_6, window_bounds = array<i64: 32, 32>}, {pipeline_mode = #tpu.pipeline_mode<synchronous>, transform_indices = @transform_7, window_bounds = array<i64: 1, 32>}, {pipeline_mode = #tpu.pipeline_mode<synchronous>, transform_indices = @transform_8, window_bounds = array<i64: 32, 1>}, {pipeline_mode = #tpu.pipeline_mode<synchronous>, transform_indices = @transform_9, window_bounds = array<i64: 1, 1>}, {pipeline_mode = #tpu.pipeline_mode<synchronous>, transform_indices = @transform_10, window_bounds = array<i64: 97, 16>}, {pipeline_mode = #tpu.pipeline_mode<synchronous>, transform_indices = @transform_11, window_bounds = array<i64: 1, 16>}, {pipeline_mode = #tpu.pipeline_mode<synchronous>, transform_indices = @transform_12, window_bounds = array<i64: 80, 32>}, {pipeline_mode = #tpu.pipeline_mode<synchronous>, transform_indices = @transform_13, window_bounds = array<i64: 1, 32>}, {pipeline_mode = #tpu.pipeline_mode<synchronous>, transform_indices = @transform_14, window_bounds = array<i64: 64, 32>}, {pipeline_mode = #tpu.pipeline_mode<synchronous>, transform_indices = @transform_15, window_bounds = array<i64: 1, 32>}, {pipeline_mode = #tpu.pipeline_mode<synchronous>, transform_indices = @transform_16, window_bounds = array<i64: 32, 2>}, {pipeline_mode = #tpu.pipeline_mode<synchronous>, transform_indices = @transform_17, window_bounds = array<i64: 1, 2>}, {transform_indices = @transform_18, window_bounds = array<i64: 8, 128>}]} {
    %c0 = arith.constant 0 : index
    %c0_0 = arith.constant 0 : index
    %c0_1 = arith.constant 0 : index
    %0 = vector.load %arg1[%c0, %c0_0, %c0_1] : memref<8x16x16xf32, #tpu.memory_space<vmem>>, vector<8x16x16xf32>
    %cst = arith.constant dense<0.000000e+00> : vector<8x16xf32>
    %1 = vector.multi_reduction <add>, %0, %cst [2] : vector<8x16x16xf32> to vector<8x16xf32>
    %2 = vector.shape_cast %1 : vector<8x16xf32> to vector<8x16x1xf32>
    %cst_2 = arith.constant 1.000000e+00 : f32
    %3 = vector.broadcast %cst_2 : f32 to vector<8x16x1xf32>
    %4 = arith.addf %2, %3 : vector<8x16x1xf32>
    %cst_3 = arith.constant 1.000000e+00 : f32
    %5 = vector.broadcast %cst_3 : f32 to vector<8x16x1xf32>
    %6 = arith.divf %5, %4 : vector<8x16x1xf32>
    %c0_4 = arith.constant 0 : index
    %c0_5 = arith.constant 0 : index
    %c0_6 = arith.constant 0 : index
    %7 = vector.load %arg2[%c0_4, %c0_5, %c0_6] : memref<8x16x8xf32, #tpu.memory_space<vmem>>, vector<8x16x8xf32>
    %8 = vector.shape_cast %7 : vector<8x16x8xf32> to vector<128x8xf32>
    %c0_7 = arith.constant 0 : index
    %c0_8 = arith.constant 0 : index
    %9 = vector.load %arg3[%c0_7, %c0_8] : memref<8x32xf32, #tpu.memory_space<vmem>>, vector<8x32xf32>
    %cst_9 = arith.constant dense<0.000000e+00> : vector<128x32xf32>
    %10 = tpu.matmul %8, %9, %cst_9 {dimension_numbers = #tpu.dot_dimension_numbers<[1], [0], [0], [1], [0, 0, 1, 1], [], []>} : vector<128x8xf32>, vector<8x32xf32>, vector<128x32xf32> -> vector<128x32xf32>
    %11 = vector.shape_cast %10 : vector<128x32xf32> to vector<8x16x32xf32>
    "tpu.trace_start"() <{level = 10 : i32, message = "bij,bjf->bif"}> : () -> ()
    %cst_10 = arith.constant dense<0.000000e+00> : vector<8x16x32xf32>
    %12 = tpu.matmul %0, %11, %cst_10 {dimension_numbers = #tpu.dot_dimension_numbers<[2], [1], [1], [2], [0, 0, 0, 1, 1, 2], [0], [0]>} : vector<8x16x16xf32>, vector<8x16x32xf32>, vector<8x16x32xf32> -> vector<8x16x32xf32>
    "tpu.trace_stop"() : () -> ()
    %13 = arith.addf %12, %11 : vector<8x16x32xf32>
    %c0_11 = arith.constant 0 : index
    %c0_12 = arith.constant 0 : index
    %14 = vector.load %arg4[%c0_11, %c0_12] : memref<1x32xf32, #tpu.memory_space<vmem>>, vector<1x32xf32>
    %15 = vector.shape_cast %14 : vector<1x32xf32> to vector<1x1x32xf32>
    %16 = vector.broadcast %15 : vector<1x1x32xf32> to vector<8x16x32xf32>
    %17 = arith.addf %13, %16 : vector<8x16x32xf32>
    %18 = vector.broadcast %6 : vector<8x16x1xf32> to vector<8x16x32xf32>
    %19 = arith.mulf %17, %18 : vector<8x16x32xf32>
    %20 = math.tanh %19 : vector<8x16x32xf32>
    %21 = vector.shape_cast %20 : vector<8x16x32xf32> to vector<128x32xf32>
    %c0_13 = arith.constant 0 : index
    %c0_14 = arith.constant 0 : index
    %22 = vector.load %arg5[%c0_13, %c0_14] : memref<32x32xf32, #tpu.memory_space<vmem>>, vector<32x32xf32>
    %cst_15 = arith.constant dense<0.000000e+00> : vector<128x32xf32>
    %23 = tpu.matmul %21, %22, %cst_15 {dimension_numbers = #tpu.dot_dimension_numbers<[1], [0], [0], [1], [0, 0, 1, 1], [], []>} : vector<128x32xf32>, vector<32x32xf32>, vector<128x32xf32> -> vector<128x32xf32>
    %24 = vector.shape_cast %23 : vector<128x32xf32> to vector<8x16x32xf32>
    "tpu.trace_start"() <{level = 10 : i32, message = "bij,bjf->bif"}> : () -> ()
    %cst_16 = arith.constant dense<0.000000e+00> : vector<8x16x32xf32>
    %25 = tpu.matmul %0, %24, %cst_16 {dimension_numbers = #tpu.dot_dimension_numbers<[2], [1], [1], [2], [0, 0, 0, 1, 1, 2], [0], [0]>} : vector<8x16x16xf32>, vector<8x16x32xf32>, vector<8x16x32xf32> -> vector<8x16x32xf32>
    "tpu.trace_stop"() : () -> ()
    %26 = arith.addf %25, %24 : vector<8x16x32xf32>
    %c0_17 = arith.constant 0 : index
    %c0_18 = arith.constant 0 : index
    %27 = vector.load %arg6[%c0_17, %c0_18] : memref<1x32xf32, #tpu.memory_space<vmem>>, vector<1x32xf32>
    %28 = vector.shape_cast %27 : vector<1x32xf32> to vector<1x1x32xf32>
    %29 = vector.broadcast %28 : vector<1x1x32xf32> to vector<8x16x32xf32>
    %30 = arith.addf %26, %29 : vector<8x16x32xf32>
    %31 = vector.broadcast %6 : vector<8x16x1xf32> to vector<8x16x32xf32>
    %32 = arith.mulf %30, %31 : vector<8x16x32xf32>
    %33 = math.tanh %32 : vector<8x16x32xf32>
    %34 = vector.shape_cast %33 : vector<8x16x32xf32> to vector<128x32xf32>
    %c0_19 = arith.constant 0 : index
    %c0_20 = arith.constant 0 : index
    %35 = vector.load %arg7[%c0_19, %c0_20] : memref<32x32xf32, #tpu.memory_space<vmem>>, vector<32x32xf32>
    %cst_21 = arith.constant dense<0.000000e+00> : vector<128x32xf32>
    %36 = tpu.matmul %34, %35, %cst_21 {dimension_numbers = #tpu.dot_dimension_numbers<[1], [0], [0], [1], [0, 0, 1, 1], [], []>} : vector<128x32xf32>, vector<32x32xf32>, vector<128x32xf32> -> vector<128x32xf32>
    %37 = vector.shape_cast %36 : vector<128x32xf32> to vector<8x16x32xf32>
    "tpu.trace_start"() <{level = 10 : i32, message = "bij,bjf->bif"}> : () -> ()
    %cst_22 = arith.constant dense<0.000000e+00> : vector<8x16x32xf32>
    %38 = tpu.matmul %0, %37, %cst_22 {dimension_numbers = #tpu.dot_dimension_numbers<[2], [1], [1], [2], [0, 0, 0, 1, 1, 2], [0], [0]>} : vector<8x16x16xf32>, vector<8x16x32xf32>, vector<8x16x32xf32> -> vector<8x16x32xf32>
    "tpu.trace_stop"() : () -> ()
    %39 = arith.addf %38, %37 : vector<8x16x32xf32>
    %c0_23 = arith.constant 0 : index
    %c0_24 = arith.constant 0 : index
    %40 = vector.load %arg8[%c0_23, %c0_24] : memref<1x32xf32, #tpu.memory_space<vmem>>, vector<1x32xf32>
    %41 = vector.shape_cast %40 : vector<1x32xf32> to vector<1x1x32xf32>
    %42 = vector.broadcast %41 : vector<1x1x32xf32> to vector<8x16x32xf32>
    %43 = arith.addf %39, %42 : vector<8x16x32xf32>
    %44 = vector.broadcast %6 : vector<8x16x1xf32> to vector<8x16x32xf32>
    %45 = arith.mulf %43, %44 : vector<8x16x32xf32>
    %46 = math.tanh %45 : vector<8x16x32xf32>
    %47 = vector.shape_cast %46 : vector<8x16x32xf32> to vector<128x32xf32>
    %c0_25 = arith.constant 0 : index
    %c0_26 = arith.constant 0 : index
    %48 = vector.load %arg9[%c0_25, %c0_26] : memref<32x1xf32, #tpu.memory_space<vmem>>, vector<32x1xf32>
    %cst_27 = arith.constant dense<0.000000e+00> : vector<128x1xf32>
    %49 = tpu.matmul %47, %48, %cst_27 {dimension_numbers = #tpu.dot_dimension_numbers<[1], [0], [0], [1], [0, 0, 1, 1], [], []>} : vector<128x32xf32>, vector<32x1xf32>, vector<128x1xf32> -> vector<128x1xf32>
    %50 = vector.shape_cast %49 : vector<128x1xf32> to vector<8x16x1xf32>
    "tpu.trace_start"() <{level = 10 : i32, message = "bij,bjf->bif"}> : () -> ()
    %cst_28 = arith.constant dense<0.000000e+00> : vector<8x16x1xf32>
    %51 = tpu.matmul %0, %50, %cst_28 {dimension_numbers = #tpu.dot_dimension_numbers<[2], [1], [1], [2], [0, 0, 0, 1, 1, 2], [0], [0]>} : vector<8x16x16xf32>, vector<8x16x1xf32>, vector<8x16x1xf32> -> vector<8x16x1xf32>
    "tpu.trace_stop"() : () -> ()
    %52 = arith.addf %51, %50 : vector<8x16x1xf32>
    %c0_29 = arith.constant 0 : index
    %c0_30 = arith.constant 0 : index
    %53 = vector.load %arg10[%c0_29, %c0_30] : memref<1x1xf32, #tpu.memory_space<vmem>>, vector<1x1xf32>
    %54 = vector.shape_cast %53 : vector<1x1xf32> to vector<1x1x1xf32>
    %55 = vector.broadcast %54 : vector<1x1x1xf32> to vector<8x16x1xf32>
    %56 = arith.addf %52, %55 : vector<8x16x1xf32>
    %57 = arith.mulf %56, %6 : vector<8x16x1xf32>
    %58 = math.tanh %57 : vector<8x16x1xf32>
    %59 = vector.shape_cast %58 : vector<8x16x1xf32> to vector<128x1xf32>
    %c0_31 = arith.constant 0 : index
    %c0_32 = arith.constant 0 : index
    %60 = vector.load %arg12[%c0_31, %c0_32] : memref<1x16xf32, #tpu.memory_space<vmem>>, vector<1x16xf32>
    %c0_33 = arith.constant 0 : index
    %c0_34 = arith.constant 0 : index
    %61 = vector.load %arg11[%c0_33, %c0_34] : memref<97x16xf32, #tpu.memory_space<vmem>>, vector<32x16xf32>
    %cst_35 = arith.constant dense<0.000000e+00> : vector<128x16xf32>
    %62 = tpu.matmul %21, %61, %cst_35 {dimension_numbers = #tpu.dot_dimension_numbers<[1], [0], [0], [1], [0, 0, 1, 1], [], []>} : vector<128x32xf32>, vector<32x16xf32>, vector<128x16xf32> -> vector<128x16xf32>
    %63 = vector.broadcast %60 : vector<1x16xf32> to vector<128x16xf32>
    %64 = arith.addf %63, %62 : vector<128x16xf32>
    %c32 = arith.constant 32 : index
    %c0_36 = arith.constant 0 : index
    %65 = vector.load %arg11[%c32, %c0_36] : memref<97x16xf32, #tpu.memory_space<vmem>>, vector<32x16xf32>
    %cst_37 = arith.constant dense<0.000000e+00> : vector<128x16xf32>
    %66 = tpu.matmul %34, %65, %cst_37 {dimension_numbers = #tpu.dot_dimension_numbers<[1], [0], [0], [1], [0, 0, 1, 1], [], []>} : vector<128x32xf32>, vector<32x16xf32>, vector<128x16xf32> -> vector<128x16xf32>
    %67 = arith.addf %64, %66 : vector<128x16xf32>
    %c64 = arith.constant 64 : index
    %c0_38 = arith.constant 0 : index
    %68 = vector.load %arg11[%c64, %c0_38] : memref<97x16xf32, #tpu.memory_space<vmem>>, vector<32x16xf32>
    %cst_39 = arith.constant dense<0.000000e+00> : vector<128x16xf32>
    %69 = tpu.matmul %47, %68, %cst_39 {dimension_numbers = #tpu.dot_dimension_numbers<[1], [0], [0], [1], [0, 0, 1, 1], [], []>} : vector<128x32xf32>, vector<32x16xf32>, vector<128x16xf32> -> vector<128x16xf32>
    %70 = arith.addf %67, %69 : vector<128x16xf32>
    %c96 = arith.constant 96 : index
    %c0_40 = arith.constant 0 : index
    %71 = vector.load %arg11[%c96, %c0_40] : memref<97x16xf32, #tpu.memory_space<vmem>>, vector<1x16xf32>
    %72 = vector.broadcast %59 : vector<128x1xf32> to vector<128x16xf32>
    %73 = vector.broadcast %71 : vector<1x16xf32> to vector<128x16xf32>
    %74 = arith.mulf %72, %73 : vector<128x16xf32>
    %75 = arith.addf %70, %74 : vector<128x16xf32>
    %cst_41 = arith.constant 0.000000e+00 : f32
    %76 = vector.broadcast %cst_41 : f32 to vector<128x16xf32>
    %77 = arith.maximumf %75, %76 : vector<128x16xf32>
    %78 = vector.shape_cast %77 : vector<128x16xf32> to vector<8x16x16xf32>
    %79 = tpu.iota {dimensions = array<i32: 1>} : vector<8x16x1xi32>
    %80 = arith.sitofp %79 : vector<8x16x1xi32> to vector<8x16x1xf32>
    %cst_42 = arith.constant dense<0xFF800000> : vector<8x1xf32>
    %81 = vector.multi_reduction <maximumf>, %58, %cst_42 [1] : vector<8x16x1xf32> to vector<8x1xf32>
    %82 = vector.shape_cast %81 : vector<8x1xf32> to vector<8x1x1xf32>
    %83 = vector.broadcast %82 : vector<8x1x1xf32> to vector<8x16x1xf32>
    %84 = arith.cmpf oeq, %58, %83 : vector<8x16x1xf32>
    %cst_43 = arith.constant 1.600000e+01 : f32
    %85 = vector.broadcast %cst_43 : f32 to vector<8x16x1xf32>
    %86 = arith.select %84, %80, %85 : vector<8x16x1xi1>, vector<8x16x1xf32>
    %cst_44 = arith.constant dense<0x7F800000> : vector<8x1xf32>
    %87 = vector.multi_reduction <minimumf>, %86, %cst_44 [1] : vector<8x16x1xf32> to vector<8x1xf32>
    %88 = vector.shape_cast %87 : vector<8x1xf32> to vector<8x1x1xf32>
    %89 = vector.broadcast %88 : vector<8x1x1xf32> to vector<8x16x1xf32>
    %90 = arith.cmpf oeq, %80, %89 : vector<8x16x1xf32>
    %91 = arith.extui %90 : vector<8x16x1xi1> to vector<8x16x1xi32>
    %92 = arith.sitofp %91 : vector<8x16x1xi32> to vector<8x16x1xf32>
    %93 = vector.broadcast %92 : vector<8x16x1xf32> to vector<8x16x16xf32>
    %94 = arith.mulf %93, %78 : vector<8x16x16xf32>
    %cst_45 = arith.constant dense<0.000000e+00> : vector<8x16xf32>
    %95 = vector.multi_reduction <add>, %94, %cst_45 [1] : vector<8x16x16xf32> to vector<8x16xf32>
    %cst_46 = arith.constant -1.000000e+30 : f32
    %96 = vector.broadcast %cst_46 : f32 to vector<8x16x1xf32>
    %97 = arith.select %90, %96, %58 : vector<8x16x1xi1>, vector<8x16x1xf32>
    %cst_47 = arith.constant dense<0xFF800000> : vector<8x1xf32>
    %98 = vector.multi_reduction <maximumf>, %97, %cst_47 [1] : vector<8x16x1xf32> to vector<8x1xf32>
    %99 = vector.shape_cast %98 : vector<8x1xf32> to vector<8x1x1xf32>
    %100 = vector.broadcast %99 : vector<8x1x1xf32> to vector<8x16x1xf32>
    %101 = arith.cmpf oeq, %97, %100 : vector<8x16x1xf32>
    %cst_48 = arith.constant 1.600000e+01 : f32
    %102 = vector.broadcast %cst_48 : f32 to vector<8x16x1xf32>
    %103 = arith.select %101, %80, %102 : vector<8x16x1xi1>, vector<8x16x1xf32>
    %cst_49 = arith.constant dense<0x7F800000> : vector<8x1xf32>
    %104 = vector.multi_reduction <minimumf>, %103, %cst_49 [1] : vector<8x16x1xf32> to vector<8x1xf32>
    %105 = vector.shape_cast %104 : vector<8x1xf32> to vector<8x1x1xf32>
    %106 = vector.broadcast %105 : vector<8x1x1xf32> to vector<8x16x1xf32>
    %107 = arith.cmpf oeq, %80, %106 : vector<8x16x1xf32>
    %108 = arith.extui %107 : vector<8x16x1xi1> to vector<8x16x1xi32>
    %109 = arith.sitofp %108 : vector<8x16x1xi32> to vector<8x16x1xf32>
    %110 = vector.broadcast %109 : vector<8x16x1xf32> to vector<8x16x16xf32>
    %111 = arith.mulf %110, %78 : vector<8x16x16xf32>
    %cst_50 = arith.constant dense<0.000000e+00> : vector<8x16xf32>
    %112 = vector.multi_reduction <add>, %111, %cst_50 [1] : vector<8x16x16xf32> to vector<8x16xf32>
    %cst_51 = arith.constant -1.000000e+30 : f32
    %113 = vector.broadcast %cst_51 : f32 to vector<8x16x1xf32>
    %114 = arith.select %107, %113, %97 : vector<8x16x1xi1>, vector<8x16x1xf32>
    %cst_52 = arith.constant dense<0xFF800000> : vector<8x1xf32>
    %115 = vector.multi_reduction <maximumf>, %114, %cst_52 [1] : vector<8x16x1xf32> to vector<8x1xf32>
    %116 = vector.shape_cast %115 : vector<8x1xf32> to vector<8x1x1xf32>
    %117 = vector.broadcast %116 : vector<8x1x1xf32> to vector<8x16x1xf32>
    %118 = arith.cmpf oeq, %114, %117 : vector<8x16x1xf32>
    %cst_53 = arith.constant 1.600000e+01 : f32
    %119 = vector.broadcast %cst_53 : f32 to vector<8x16x1xf32>
    %120 = arith.select %118, %80, %119 : vector<8x16x1xi1>, vector<8x16x1xf32>
    %cst_54 = arith.constant dense<0x7F800000> : vector<8x1xf32>
    %121 = vector.multi_reduction <minimumf>, %120, %cst_54 [1] : vector<8x16x1xf32> to vector<8x1xf32>
    %122 = vector.shape_cast %121 : vector<8x1xf32> to vector<8x1x1xf32>
    %123 = vector.broadcast %122 : vector<8x1x1xf32> to vector<8x16x1xf32>
    %124 = arith.cmpf oeq, %80, %123 : vector<8x16x1xf32>
    %125 = arith.extui %124 : vector<8x16x1xi1> to vector<8x16x1xi32>
    %126 = arith.sitofp %125 : vector<8x16x1xi32> to vector<8x16x1xf32>
    %127 = vector.broadcast %126 : vector<8x16x1xf32> to vector<8x16x16xf32>
    %128 = arith.mulf %127, %78 : vector<8x16x16xf32>
    %cst_55 = arith.constant dense<0.000000e+00> : vector<8x16xf32>
    %129 = vector.multi_reduction <add>, %128, %cst_55 [1] : vector<8x16x16xf32> to vector<8x16xf32>
    %cst_56 = arith.constant -1.000000e+30 : f32
    %130 = vector.broadcast %cst_56 : f32 to vector<8x16x1xf32>
    %131 = arith.select %124, %130, %114 : vector<8x16x1xi1>, vector<8x16x1xf32>
    %cst_57 = arith.constant dense<0xFF800000> : vector<8x1xf32>
    %132 = vector.multi_reduction <maximumf>, %131, %cst_57 [1] : vector<8x16x1xf32> to vector<8x1xf32>
    %133 = vector.shape_cast %132 : vector<8x1xf32> to vector<8x1x1xf32>
    %134 = vector.broadcast %133 : vector<8x1x1xf32> to vector<8x16x1xf32>
    %135 = arith.cmpf oeq, %131, %134 : vector<8x16x1xf32>
    %cst_58 = arith.constant 1.600000e+01 : f32
    %136 = vector.broadcast %cst_58 : f32 to vector<8x16x1xf32>
    %137 = arith.select %135, %80, %136 : vector<8x16x1xi1>, vector<8x16x1xf32>
    %cst_59 = arith.constant dense<0x7F800000> : vector<8x1xf32>
    %138 = vector.multi_reduction <minimumf>, %137, %cst_59 [1] : vector<8x16x1xf32> to vector<8x1xf32>
    %139 = vector.shape_cast %138 : vector<8x1xf32> to vector<8x1x1xf32>
    %140 = vector.broadcast %139 : vector<8x1x1xf32> to vector<8x16x1xf32>
    %141 = arith.cmpf oeq, %80, %140 : vector<8x16x1xf32>
    %142 = arith.extui %141 : vector<8x16x1xi1> to vector<8x16x1xi32>
    %143 = arith.sitofp %142 : vector<8x16x1xi32> to vector<8x16x1xf32>
    %144 = vector.broadcast %143 : vector<8x16x1xf32> to vector<8x16x16xf32>
    %145 = arith.mulf %144, %78 : vector<8x16x16xf32>
    %cst_60 = arith.constant dense<0.000000e+00> : vector<8x16xf32>
    %146 = vector.multi_reduction <add>, %145, %cst_60 [1] : vector<8x16x16xf32> to vector<8x16xf32>
    %cst_61 = arith.constant -1.000000e+30 : f32
    %147 = vector.broadcast %cst_61 : f32 to vector<8x16x1xf32>
    %148 = arith.select %141, %147, %131 : vector<8x16x1xi1>, vector<8x16x1xf32>
    %cst_62 = arith.constant dense<0xFF800000> : vector<8x1xf32>
    %149 = vector.multi_reduction <maximumf>, %148, %cst_62 [1] : vector<8x16x1xf32> to vector<8x1xf32>
    %150 = vector.shape_cast %149 : vector<8x1xf32> to vector<8x1x1xf32>
    %151 = vector.broadcast %150 : vector<8x1x1xf32> to vector<8x16x1xf32>
    %152 = arith.cmpf oeq, %148, %151 : vector<8x16x1xf32>
    %cst_63 = arith.constant 1.600000e+01 : f32
    %153 = vector.broadcast %cst_63 : f32 to vector<8x16x1xf32>
    %154 = arith.select %152, %80, %153 : vector<8x16x1xi1>, vector<8x16x1xf32>
    %cst_64 = arith.constant dense<0x7F800000> : vector<8x1xf32>
    %155 = vector.multi_reduction <minimumf>, %154, %cst_64 [1] : vector<8x16x1xf32> to vector<8x1xf32>
    %156 = vector.shape_cast %155 : vector<8x1xf32> to vector<8x1x1xf32>
    %157 = vector.broadcast %156 : vector<8x1x1xf32> to vector<8x16x1xf32>
    %158 = arith.cmpf oeq, %80, %157 : vector<8x16x1xf32>
    %159 = arith.extui %158 : vector<8x16x1xi1> to vector<8x16x1xi32>
    %160 = arith.sitofp %159 : vector<8x16x1xi32> to vector<8x16x1xf32>
    %161 = vector.broadcast %160 : vector<8x16x1xf32> to vector<8x16x16xf32>
    %162 = arith.mulf %161, %78 : vector<8x16x16xf32>
    %cst_65 = arith.constant dense<0.000000e+00> : vector<8x16xf32>
    %163 = vector.multi_reduction <add>, %162, %cst_65 [1] : vector<8x16x16xf32> to vector<8x16xf32>
    %cst_66 = arith.constant -1.000000e+30 : f32
    %164 = vector.broadcast %cst_66 : f32 to vector<8x16x1xf32>
    %165 = arith.select %158, %164, %148 : vector<8x16x1xi1>, vector<8x16x1xf32>
    %cst_67 = arith.constant dense<0xFF800000> : vector<8x1xf32>
    %166 = vector.multi_reduction <maximumf>, %165, %cst_67 [1] : vector<8x16x1xf32> to vector<8x1xf32>
    %167 = vector.shape_cast %166 : vector<8x1xf32> to vector<8x1x1xf32>
    %168 = vector.broadcast %167 : vector<8x1x1xf32> to vector<8x16x1xf32>
    %169 = arith.cmpf oeq, %165, %168 : vector<8x16x1xf32>
    %cst_68 = arith.constant 1.600000e+01 : f32
    %170 = vector.broadcast %cst_68 : f32 to vector<8x16x1xf32>
    %171 = arith.select %169, %80, %170 : vector<8x16x1xi1>, vector<8x16x1xf32>
    %cst_69 = arith.constant dense<0x7F800000> : vector<8x1xf32>
    %172 = vector.multi_reduction <minimumf>, %171, %cst_69 [1] : vector<8x16x1xf32> to vector<8x1xf32>
    %173 = vector.shape_cast %172 : vector<8x1xf32> to vector<8x1x1xf32>
    %174 = vector.broadcast %173 : vector<8x1x1xf32> to vector<8x16x1xf32>
    %175 = arith.cmpf oeq, %80, %174 : vector<8x16x1xf32>
    %176 = arith.extui %175 : vector<8x16x1xi1> to vector<8x16x1xi32>
    %177 = arith.sitofp %176 : vector<8x16x1xi32> to vector<8x16x1xf32>
    %178 = vector.broadcast %177 : vector<8x16x1xf32> to vector<8x16x16xf32>
    %179 = arith.mulf %178, %78 : vector<8x16x16xf32>
    %cst_70 = arith.constant dense<0.000000e+00> : vector<8x16xf32>
    %180 = vector.multi_reduction <add>, %179, %cst_70 [1] : vector<8x16x16xf32> to vector<8x16xf32>
    %cst_71 = arith.constant -1.000000e+30 : f32
    %181 = vector.broadcast %cst_71 : f32 to vector<8x16x1xf32>
    %182 = arith.select %175, %181, %165 : vector<8x16x1xi1>, vector<8x16x1xf32>
    %cst_72 = arith.constant dense<0xFF800000> : vector<8x1xf32>
    %183 = vector.multi_reduction <maximumf>, %182, %cst_72 [1] : vector<8x16x1xf32> to vector<8x1xf32>
    %184 = vector.shape_cast %183 : vector<8x1xf32> to vector<8x1x1xf32>
    %185 = vector.broadcast %184 : vector<8x1x1xf32> to vector<8x16x1xf32>
    %186 = arith.cmpf oeq, %182, %185 : vector<8x16x1xf32>
    %cst_73 = arith.constant 1.600000e+01 : f32
    %187 = vector.broadcast %cst_73 : f32 to vector<8x16x1xf32>
    %188 = arith.select %186, %80, %187 : vector<8x16x1xi1>, vector<8x16x1xf32>
    %cst_74 = arith.constant dense<0x7F800000> : vector<8x1xf32>
    %189 = vector.multi_reduction <minimumf>, %188, %cst_74 [1] : vector<8x16x1xf32> to vector<8x1xf32>
    %190 = vector.shape_cast %189 : vector<8x1xf32> to vector<8x1x1xf32>
    %191 = vector.broadcast %190 : vector<8x1x1xf32> to vector<8x16x1xf32>
    %192 = arith.cmpf oeq, %80, %191 : vector<8x16x1xf32>
    %193 = arith.extui %192 : vector<8x16x1xi1> to vector<8x16x1xi32>
    %194 = arith.sitofp %193 : vector<8x16x1xi32> to vector<8x16x1xf32>
    %195 = vector.broadcast %194 : vector<8x16x1xf32> to vector<8x16x16xf32>
    %196 = arith.mulf %195, %78 : vector<8x16x16xf32>
    %cst_75 = arith.constant dense<0.000000e+00> : vector<8x16xf32>
    %197 = vector.multi_reduction <add>, %196, %cst_75 [1] : vector<8x16x16xf32> to vector<8x16xf32>
    %cst_76 = arith.constant -1.000000e+30 : f32
    %198 = vector.broadcast %cst_76 : f32 to vector<8x16x1xf32>
    %199 = arith.select %192, %198, %182 : vector<8x16x1xi1>, vector<8x16x1xf32>
    %cst_77 = arith.constant dense<0xFF800000> : vector<8x1xf32>
    %200 = vector.multi_reduction <maximumf>, %199, %cst_77 [1] : vector<8x16x1xf32> to vector<8x1xf32>
    %201 = vector.shape_cast %200 : vector<8x1xf32> to vector<8x1x1xf32>
    %202 = vector.broadcast %201 : vector<8x1x1xf32> to vector<8x16x1xf32>
    %203 = arith.cmpf oeq, %199, %202 : vector<8x16x1xf32>
    %cst_78 = arith.constant 1.600000e+01 : f32
    %204 = vector.broadcast %cst_78 : f32 to vector<8x16x1xf32>
    %205 = arith.select %203, %80, %204 : vector<8x16x1xi1>, vector<8x16x1xf32>
    %cst_79 = arith.constant dense<0x7F800000> : vector<8x1xf32>
    %206 = vector.multi_reduction <minimumf>, %205, %cst_79 [1] : vector<8x16x1xf32> to vector<8x1xf32>
    %207 = vector.shape_cast %206 : vector<8x1xf32> to vector<8x1x1xf32>
    %208 = vector.broadcast %207 : vector<8x1x1xf32> to vector<8x16x1xf32>
    %209 = arith.cmpf oeq, %80, %208 : vector<8x16x1xf32>
    %210 = arith.extui %209 : vector<8x16x1xi1> to vector<8x16x1xi32>
    %211 = arith.sitofp %210 : vector<8x16x1xi32> to vector<8x16x1xf32>
    %212 = vector.broadcast %211 : vector<8x16x1xf32> to vector<8x16x16xf32>
    %213 = arith.mulf %212, %78 : vector<8x16x16xf32>
    %cst_80 = arith.constant dense<0.000000e+00> : vector<8x16xf32>
    %214 = vector.multi_reduction <add>, %213, %cst_80 [1] : vector<8x16x16xf32> to vector<8x16xf32>
    %cst_81 = arith.constant -1.000000e+30 : f32
    %215 = vector.broadcast %cst_81 : f32 to vector<8x16x1xf32>
    %216 = arith.select %209, %215, %199 : vector<8x16x1xi1>, vector<8x16x1xf32>
    %cst_82 = arith.constant dense<0xFF800000> : vector<8x1xf32>
    %217 = vector.multi_reduction <maximumf>, %216, %cst_82 [1] : vector<8x16x1xf32> to vector<8x1xf32>
    %218 = vector.shape_cast %217 : vector<8x1xf32> to vector<8x1x1xf32>
    %219 = vector.broadcast %218 : vector<8x1x1xf32> to vector<8x16x1xf32>
    %220 = arith.cmpf oeq, %216, %219 : vector<8x16x1xf32>
    %cst_83 = arith.constant 1.600000e+01 : f32
    %221 = vector.broadcast %cst_83 : f32 to vector<8x16x1xf32>
    %222 = arith.select %220, %80, %221 : vector<8x16x1xi1>, vector<8x16x1xf32>
    %cst_84 = arith.constant dense<0x7F800000> : vector<8x1xf32>
    %223 = vector.multi_reduction <minimumf>, %222, %cst_84 [1] : vector<8x16x1xf32> to vector<8x1xf32>
    %224 = vector.shape_cast %223 : vector<8x1xf32> to vector<8x1x1xf32>
    %225 = vector.broadcast %224 : vector<8x1x1xf32> to vector<8x16x1xf32>
    %226 = arith.cmpf oeq, %80, %225 : vector<8x16x1xf32>
    %227 = arith.extui %226 : vector<8x16x1xi1> to vector<8x16x1xi32>
    %228 = arith.sitofp %227 : vector<8x16x1xi32> to vector<8x16x1xf32>
    %229 = vector.broadcast %228 : vector<8x16x1xf32> to vector<8x16x16xf32>
    %230 = arith.mulf %229, %78 : vector<8x16x16xf32>
    %cst_85 = arith.constant dense<0.000000e+00> : vector<8x16xf32>
    %231 = vector.multi_reduction <add>, %230, %cst_85 [1] : vector<8x16x16xf32> to vector<8x16xf32>
    %cst_86 = arith.constant -1.000000e+30 : f32
    %232 = vector.broadcast %cst_86 : f32 to vector<8x16x1xf32>
    %233 = arith.select %226, %232, %216 : vector<8x16x1xi1>, vector<8x16x1xf32>
    %cst_87 = arith.constant dense<0xFF800000> : vector<8x1xf32>
    %234 = vector.multi_reduction <maximumf>, %233, %cst_87 [1] : vector<8x16x1xf32> to vector<8x1xf32>
    %235 = vector.shape_cast %234 : vector<8x1xf32> to vector<8x1x1xf32>
    %236 = vector.broadcast %235 : vector<8x1x1xf32> to vector<8x16x1xf32>
    %237 = arith.cmpf oeq, %233, %236 : vector<8x16x1xf32>
    %cst_88 = arith.constant 1.600000e+01 : f32
    %238 = vector.broadcast %cst_88 : f32 to vector<8x16x1xf32>
    %239 = arith.select %237, %80, %238 : vector<8x16x1xi1>, vector<8x16x1xf32>
    %cst_89 = arith.constant dense<0x7F800000> : vector<8x1xf32>
    %240 = vector.multi_reduction <minimumf>, %239, %cst_89 [1] : vector<8x16x1xf32> to vector<8x1xf32>
    %241 = vector.shape_cast %240 : vector<8x1xf32> to vector<8x1x1xf32>
    %242 = vector.broadcast %241 : vector<8x1x1xf32> to vector<8x16x1xf32>
    %243 = arith.cmpf oeq, %80, %242 : vector<8x16x1xf32>
    %244 = arith.extui %243 : vector<8x16x1xi1> to vector<8x16x1xi32>
    %245 = arith.sitofp %244 : vector<8x16x1xi32> to vector<8x16x1xf32>
    %246 = vector.broadcast %245 : vector<8x16x1xf32> to vector<8x16x16xf32>
    %247 = arith.mulf %246, %78 : vector<8x16x16xf32>
    %cst_90 = arith.constant dense<0.000000e+00> : vector<8x16xf32>
    %248 = vector.multi_reduction <add>, %247, %cst_90 [1] : vector<8x16x16xf32> to vector<8x16xf32>
    %cst_91 = arith.constant -1.000000e+30 : f32
    %249 = vector.broadcast %cst_91 : f32 to vector<8x16x1xf32>
    %250 = arith.select %243, %249, %233 : vector<8x16x1xi1>, vector<8x16x1xf32>
    %cst_92 = arith.constant dense<0xFF800000> : vector<8x1xf32>
    %251 = vector.multi_reduction <maximumf>, %250, %cst_92 [1] : vector<8x16x1xf32> to vector<8x1xf32>
    %252 = vector.shape_cast %251 : vector<8x1xf32> to vector<8x1x1xf32>
    %253 = vector.broadcast %252 : vector<8x1x1xf32> to vector<8x16x1xf32>
    %254 = arith.cmpf oeq, %250, %253 : vector<8x16x1xf32>
    %cst_93 = arith.constant 1.600000e+01 : f32
    %255 = vector.broadcast %cst_93 : f32 to vector<8x16x1xf32>
    %256 = arith.select %254, %80, %255 : vector<8x16x1xi1>, vector<8x16x1xf32>
    %cst_94 = arith.constant dense<0x7F800000> : vector<8x1xf32>
    %257 = vector.multi_reduction <minimumf>, %256, %cst_94 [1] : vector<8x16x1xf32> to vector<8x1xf32>
    %258 = vector.shape_cast %257 : vector<8x1xf32> to vector<8x1x1xf32>
    %259 = vector.broadcast %258 : vector<8x1x1xf32> to vector<8x16x1xf32>
    %260 = arith.cmpf oeq, %80, %259 : vector<8x16x1xf32>
    %261 = arith.extui %260 : vector<8x16x1xi1> to vector<8x16x1xi32>
    %262 = arith.sitofp %261 : vector<8x16x1xi32> to vector<8x16x1xf32>
    %263 = vector.broadcast %262 : vector<8x16x1xf32> to vector<8x16x16xf32>
    %264 = arith.mulf %263, %78 : vector<8x16x16xf32>
    %cst_95 = arith.constant dense<0.000000e+00> : vector<8x16xf32>
    %265 = vector.multi_reduction <add>, %264, %cst_95 [1] : vector<8x16x16xf32> to vector<8x16xf32>
    %cst_96 = arith.constant -1.000000e+30 : f32
    %266 = vector.broadcast %cst_96 : f32 to vector<8x16x1xf32>
    %267 = arith.select %260, %266, %250 : vector<8x16x1xi1>, vector<8x16x1xf32>
    %cst_97 = arith.constant dense<0xFF800000> : vector<8x1xf32>
    %268 = vector.multi_reduction <maximumf>, %267, %cst_97 [1] : vector<8x16x1xf32> to vector<8x1xf32>
    %269 = vector.shape_cast %268 : vector<8x1xf32> to vector<8x1x1xf32>
    %270 = vector.broadcast %269 : vector<8x1x1xf32> to vector<8x16x1xf32>
    %271 = arith.cmpf oeq, %267, %270 : vector<8x16x1xf32>
    %cst_98 = arith.constant 1.600000e+01 : f32
    %272 = vector.broadcast %cst_98 : f32 to vector<8x16x1xf32>
    %273 = arith.select %271, %80, %272 : vector<8x16x1xi1>, vector<8x16x1xf32>
    %cst_99 = arith.constant dense<0x7F800000> : vector<8x1xf32>
    %274 = vector.multi_reduction <minimumf>, %273, %cst_99 [1] : vector<8x16x1xf32> to vector<8x1xf32>
    %275 = vector.shape_cast %274 : vector<8x1xf32> to vector<8x1x1xf32>
    %276 = vector.broadcast %275 : vector<8x1x1xf32> to vector<8x16x1xf32>
    %277 = arith.cmpf oeq, %80, %276 : vector<8x16x1xf32>
    %278 = arith.extui %277 : vector<8x16x1xi1> to vector<8x16x1xi32>
    %279 = arith.sitofp %278 : vector<8x16x1xi32> to vector<8x16x1xf32>
    %280 = vector.broadcast %279 : vector<8x16x1xf32> to vector<8x16x16xf32>
    %281 = arith.mulf %280, %78 : vector<8x16x16xf32>
    %cst_100 = arith.constant dense<0.000000e+00> : vector<8x16xf32>
    %282 = vector.multi_reduction <add>, %281, %cst_100 [1] : vector<8x16x16xf32> to vector<8x16xf32>
    %283 = arith.maximumf %95, %112 : vector<8x16xf32>
    %284 = arith.maximumf %129, %146 : vector<8x16xf32>
    %285 = arith.maximumf %163, %180 : vector<8x16xf32>
    %286 = arith.maximumf %197, %214 : vector<8x16xf32>
    %287 = arith.maximumf %231, %248 : vector<8x16xf32>
    %288 = arith.maximumf %265, %282 : vector<8x16xf32>
    %c0_101 = arith.constant 0 : index
    %c0_102 = arith.constant 0 : index
    %289 = vector.load %arg14[%c0_101, %c0_102] : memref<1x32xf32, #tpu.memory_space<vmem>>, vector<1x32xf32>
    %c0_103 = arith.constant 0 : index
    %c0_104 = arith.constant 0 : index
    %290 = vector.load %arg16[%c0_103, %c0_104] : memref<1x32xf32, #tpu.memory_space<vmem>>, vector<1x32xf32>
    %c0_105 = arith.constant 0 : index
    %c0_106 = arith.constant 0 : index
    %291 = vector.load %arg13[%c0_105, %c0_106] : memref<80x32xf32, #tpu.memory_space<vmem>>, vector<16x32xf32>
    %cst_107 = arith.constant dense<0.000000e+00> : vector<8x32xf32>
    %292 = tpu.matmul %283, %291, %cst_107 {dimension_numbers = #tpu.dot_dimension_numbers<[1], [0], [0], [1], [0, 0, 1, 1], [], []>} : vector<8x16xf32>, vector<16x32xf32>, vector<8x32xf32> -> vector<8x32xf32>
    %293 = vector.broadcast %289 : vector<1x32xf32> to vector<8x32xf32>
    %294 = arith.addf %293, %292 : vector<8x32xf32>
    %c16 = arith.constant 16 : index
    %c0_108 = arith.constant 0 : index
    %295 = vector.load %arg13[%c16, %c0_108] : memref<80x32xf32, #tpu.memory_space<vmem>>, vector<16x32xf32>
    %cst_109 = arith.constant dense<0.000000e+00> : vector<8x32xf32>
    %296 = tpu.matmul %284, %295, %cst_109 {dimension_numbers = #tpu.dot_dimension_numbers<[1], [0], [0], [1], [0, 0, 1, 1], [], []>} : vector<8x16xf32>, vector<16x32xf32>, vector<8x32xf32> -> vector<8x32xf32>
    %297 = arith.addf %294, %296 : vector<8x32xf32>
    %c32_110 = arith.constant 32 : index
    %c0_111 = arith.constant 0 : index
    %298 = vector.load %arg13[%c32_110, %c0_111] : memref<80x32xf32, #tpu.memory_space<vmem>>, vector<16x32xf32>
    %cst_112 = arith.constant dense<0.000000e+00> : vector<8x32xf32>
    %299 = tpu.matmul %285, %298, %cst_112 {dimension_numbers = #tpu.dot_dimension_numbers<[1], [0], [0], [1], [0, 0, 1, 1], [], []>} : vector<8x16xf32>, vector<16x32xf32>, vector<8x32xf32> -> vector<8x32xf32>
    %300 = arith.addf %297, %299 : vector<8x32xf32>
    %c48 = arith.constant 48 : index
    %c0_113 = arith.constant 0 : index
    %301 = vector.load %arg13[%c48, %c0_113] : memref<80x32xf32, #tpu.memory_space<vmem>>, vector<16x32xf32>
    %cst_114 = arith.constant dense<0.000000e+00> : vector<8x32xf32>
    %302 = tpu.matmul %286, %301, %cst_114 {dimension_numbers = #tpu.dot_dimension_numbers<[1], [0], [0], [1], [0, 0, 1, 1], [], []>} : vector<8x16xf32>, vector<16x32xf32>, vector<8x32xf32> -> vector<8x32xf32>
    %303 = arith.addf %300, %302 : vector<8x32xf32>
    %c64_115 = arith.constant 64 : index
    %c0_116 = arith.constant 0 : index
    %304 = vector.load %arg13[%c64_115, %c0_116] : memref<80x32xf32, #tpu.memory_space<vmem>>, vector<16x32xf32>
    %cst_117 = arith.constant dense<0.000000e+00> : vector<8x32xf32>
    %305 = tpu.matmul %287, %304, %cst_117 {dimension_numbers = #tpu.dot_dimension_numbers<[1], [0], [0], [1], [0, 0, 1, 1], [], []>} : vector<8x16xf32>, vector<16x32xf32>, vector<8x32xf32> -> vector<8x32xf32>
    %306 = arith.addf %303, %305 : vector<8x32xf32>
    %cst_118 = arith.constant 0.000000e+00 : f32
    %307 = vector.broadcast %cst_118 : f32 to vector<8x32xf32>
    %308 = arith.maximumf %306, %307 : vector<8x32xf32>
    %c0_119 = arith.constant 0 : index
    %c0_120 = arith.constant 0 : index
    %309 = vector.load %arg15[%c0_119, %c0_120] : memref<64x32xf32, #tpu.memory_space<vmem>>, vector<32x32xf32>
    %cst_121 = arith.constant dense<0.000000e+00> : vector<8x32xf32>
    %310 = tpu.matmul %308, %309, %cst_121 {dimension_numbers = #tpu.dot_dimension_numbers<[1], [0], [0], [1], [0, 0, 1, 1], [], []>} : vector<8x32xf32>, vector<32x32xf32>, vector<8x32xf32> -> vector<8x32xf32>
    %311 = vector.broadcast %290 : vector<1x32xf32> to vector<8x32xf32>
    %312 = arith.addf %311, %310 : vector<8x32xf32>
    %c0_122 = arith.constant 0 : index
    %c0_123 = arith.constant 0 : index
    %313 = vector.load %arg13[%c0_122, %c0_123] : memref<80x32xf32, #tpu.memory_space<vmem>>, vector<16x32xf32>
    %cst_124 = arith.constant dense<0.000000e+00> : vector<8x32xf32>
    %314 = tpu.matmul %284, %313, %cst_124 {dimension_numbers = #tpu.dot_dimension_numbers<[1], [0], [0], [1], [0, 0, 1, 1], [], []>} : vector<8x16xf32>, vector<16x32xf32>, vector<8x32xf32> -> vector<8x32xf32>
    %315 = vector.broadcast %289 : vector<1x32xf32> to vector<8x32xf32>
    %316 = arith.addf %315, %314 : vector<8x32xf32>
    %c16_125 = arith.constant 16 : index
    %c0_126 = arith.constant 0 : index
    %317 = vector.load %arg13[%c16_125, %c0_126] : memref<80x32xf32, #tpu.memory_space<vmem>>, vector<16x32xf32>
    %cst_127 = arith.constant dense<0.000000e+00> : vector<8x32xf32>
    %318 = tpu.matmul %285, %317, %cst_127 {dimension_numbers = #tpu.dot_dimension_numbers<[1], [0], [0], [1], [0, 0, 1, 1], [], []>} : vector<8x16xf32>, vector<16x32xf32>, vector<8x32xf32> -> vector<8x32xf32>
    %319 = arith.addf %316, %318 : vector<8x32xf32>
    %c32_128 = arith.constant 32 : index
    %c0_129 = arith.constant 0 : index
    %320 = vector.load %arg13[%c32_128, %c0_129] : memref<80x32xf32, #tpu.memory_space<vmem>>, vector<16x32xf32>
    %cst_130 = arith.constant dense<0.000000e+00> : vector<8x32xf32>
    %321 = tpu.matmul %286, %320, %cst_130 {dimension_numbers = #tpu.dot_dimension_numbers<[1], [0], [0], [1], [0, 0, 1, 1], [], []>} : vector<8x16xf32>, vector<16x32xf32>, vector<8x32xf32> -> vector<8x32xf32>
    %322 = arith.addf %319, %321 : vector<8x32xf32>
    %c48_131 = arith.constant 48 : index
    %c0_132 = arith.constant 0 : index
    %323 = vector.load %arg13[%c48_131, %c0_132] : memref<80x32xf32, #tpu.memory_space<vmem>>, vector<16x32xf32>
    %cst_133 = arith.constant dense<0.000000e+00> : vector<8x32xf32>
    %324 = tpu.matmul %287, %323, %cst_133 {dimension_numbers = #tpu.dot_dimension_numbers<[1], [0], [0], [1], [0, 0, 1, 1], [], []>} : vector<8x16xf32>, vector<16x32xf32>, vector<8x32xf32> -> vector<8x32xf32>
    %325 = arith.addf %322, %324 : vector<8x32xf32>
    %c64_134 = arith.constant 64 : index
    %c0_135 = arith.constant 0 : index
    %326 = vector.load %arg13[%c64_134, %c0_135] : memref<80x32xf32, #tpu.memory_space<vmem>>, vector<16x32xf32>
    %cst_136 = arith.constant dense<0.000000e+00> : vector<8x32xf32>
    %327 = tpu.matmul %288, %326, %cst_136 {dimension_numbers = #tpu.dot_dimension_numbers<[1], [0], [0], [1], [0, 0, 1, 1], [], []>} : vector<8x16xf32>, vector<16x32xf32>, vector<8x32xf32> -> vector<8x32xf32>
    %328 = arith.addf %325, %327 : vector<8x32xf32>
    %cst_137 = arith.constant 0.000000e+00 : f32
    %329 = vector.broadcast %cst_137 : f32 to vector<8x32xf32>
    %330 = arith.maximumf %328, %329 : vector<8x32xf32>
    %c32_138 = arith.constant 32 : index
    %c0_139 = arith.constant 0 : index
    %331 = vector.load %arg15[%c32_138, %c0_139] : memref<64x32xf32, #tpu.memory_space<vmem>>, vector<32x32xf32>
    %cst_140 = arith.constant dense<0.000000e+00> : vector<8x32xf32>
    %332 = tpu.matmul %330, %331, %cst_140 {dimension_numbers = #tpu.dot_dimension_numbers<[1], [0], [0], [1], [0, 0, 1, 1], [], []>} : vector<8x32xf32>, vector<32x32xf32>, vector<8x32xf32> -> vector<8x32xf32>
    %333 = arith.addf %312, %332 : vector<8x32xf32>
    %cst_141 = arith.constant 0.000000e+00 : f32
    %334 = vector.broadcast %cst_141 : f32 to vector<8x32xf32>
    %335 = arith.maximumf %333, %334 : vector<8x32xf32>
    %c0_142 = arith.constant 0 : index
    %c0_143 = arith.constant 0 : index
    %336 = vector.load %arg17[%c0_142, %c0_143] : memref<32x2xf32, #tpu.memory_space<vmem>>, vector<32x2xf32>
    %cst_144 = arith.constant dense<0.000000e+00> : vector<8x2xf32>
    %337 = tpu.matmul %335, %336, %cst_144 {dimension_numbers = #tpu.dot_dimension_numbers<[1], [0], [0], [1], [0, 0, 1, 1], [], []>} : vector<8x32xf32>, vector<32x2xf32>, vector<8x2xf32> -> vector<8x2xf32>
    %c0_145 = arith.constant 0 : index
    %c0_146 = arith.constant 0 : index
    %338 = vector.load %arg18[%c0_145, %c0_146] : memref<1x2xf32, #tpu.memory_space<vmem>>, vector<1x2xf32>
    %339 = vector.broadcast %338 : vector<1x2xf32> to vector<8x2xf32>
    %340 = arith.addf %337, %339 : vector<8x2xf32>
    %cst_147 = arith.constant dense<0xFF800000> : vector<8xf32>
    %341 = vector.multi_reduction <maximumf>, %340, %cst_147 [1] : vector<8x2xf32> to vector<8xf32>
    %342 = vector.shape_cast %341 : vector<8xf32> to vector<8x1xf32>
    %343 = vector.broadcast %342 : vector<8x1xf32> to vector<8x2xf32>
    %344 = arith.subf %340, %343 : vector<8x2xf32>
    %345 = math.exp %344 : vector<8x2xf32>
    %cst_148 = arith.constant dense<0.000000e+00> : vector<8xf32>
    %346 = vector.multi_reduction <add>, %345, %cst_148 [1] : vector<8x2xf32> to vector<8xf32>
    %347 = vector.shape_cast %346 : vector<8xf32> to vector<8x1xf32>
    %348 = math.log %347 : vector<8x1xf32>
    %349 = vector.broadcast %348 : vector<8x1xf32> to vector<8x2xf32>
    %350 = arith.subf %344, %349 : vector<8x2xf32>
    %cst_149 = arith.constant 0.000000e+00 : f32
    %351 = vector.broadcast %cst_149 : f32 to vector<8x126xf32>
    %352 = tpu.concatenate %350, %351 in 1 : vector<8x2xf32>, vector<8x126xf32> -> vector<8x128xf32>
    %c0_150 = arith.constant 0 : index
    %c0_151 = arith.constant 0 : index
    %353 = vector.load %arg19[%c0_150, %c0_151] : memref<8x128xf32, #tpu.memory_space<vmem>>, vector<8x128xf32>
    tpu.vector_store %arg19[%c0_150, %c0_151], %352 {strides = array<i32>} : memref<8x128xf32, #tpu.memory_space<vmem>>, vector<8x128xf32>,
    return
  }
  func.func @transform_0(%arg0: i32) -> (i32, i32, i32) {
    %c0_i32 = arith.constant 0 : i32
    %c0_i32_0 = arith.constant 0 : i32
    %c0_i32_1 = arith.constant 0 : i32
    return %arg0, %c0_i32, %c0_i32_0 : i32, i32, i32
  }
  func.func @transform_1(%arg0: i32) -> (i32, i32, i32) {
    %c0_i32 = arith.constant 0 : i32
    %c0_i32_0 = arith.constant 0 : i32
    %c0_i32_1 = arith.constant 0 : i32
    return %arg0, %c0_i32, %c0_i32_0 : i32, i32, i32
  }
  func.func @transform_2(%arg0: i32) -> (i32, i32) {
    %c0_i32 = arith.constant 0 : i32
    %c0_i32_0 = arith.constant 0 : i32
    %c0_i32_1 = arith.constant 0 : i32
    return %c0_i32, %c0_i32_0 : i32, i32
  }
  func.func @transform_3(%arg0: i32) -> (i32, i32) {
    %c0_i32 = arith.constant 0 : i32
    %c0_i32_0 = arith.constant 0 : i32
    %c0_i32_1 = arith.constant 0 : i32
    return %c0_i32, %c0_i32_0 : i32, i32
  }
  func.func @transform_4(%arg0: i32) -> (i32, i32) {
    %c0_i32 = arith.constant 0 : i32
    %c0_i32_0 = arith.constant 0 : i32
    %c0_i32_1 = arith.constant 0 : i32
    return %c0_i32, %c0_i32_0 : i32, i32
  }
  func.func @transform_5(%arg0: i32) -> (i32, i32) {
    %c0_i32 = arith.constant 0 : i32
    %c0_i32_0 = arith.constant 0 : i32
    %c0_i32_1 = arith.constant 0 : i32
    return %c0_i32, %c0_i32_0 : i32, i32
  }
  func.func @transform_6(%arg0: i32) -> (i32, i32) {
    %c0_i32 = arith.constant 0 : i32
    %c0_i32_0 = arith.constant 0 : i32
    %c0_i32_1 = arith.constant 0 : i32
    return %c0_i32, %c0_i32_0 : i32, i32
  }
  func.func @transform_7(%arg0: i32) -> (i32, i32) {
    %c0_i32 = arith.constant 0 : i32
    %c0_i32_0 = arith.constant 0 : i32
    %c0_i32_1 = arith.constant 0 : i32
    return %c0_i32, %c0_i32_0 : i32, i32
  }
  func.func @transform_8(%arg0: i32) -> (i32, i32) {
    %c0_i32 = arith.constant 0 : i32
    %c0_i32_0 = arith.constant 0 : i32
    %c0_i32_1 = arith.constant 0 : i32
    return %c0_i32, %c0_i32_0 : i32, i32
  }
  func.func @transform_9(%arg0: i32) -> (i32, i32) {
    %c0_i32 = arith.constant 0 : i32
    %c0_i32_0 = arith.constant 0 : i32
    %c0_i32_1 = arith.constant 0 : i32
    return %c0_i32, %c0_i32_0 : i32, i32
  }
  func.func @transform_10(%arg0: i32) -> (i32, i32) {
    %c0_i32 = arith.constant 0 : i32
    %c0_i32_0 = arith.constant 0 : i32
    %c0_i32_1 = arith.constant 0 : i32
    return %c0_i32, %c0_i32_0 : i32, i32
  }
  func.func @transform_11(%arg0: i32) -> (i32, i32) {
    %c0_i32 = arith.constant 0 : i32
    %c0_i32_0 = arith.constant 0 : i32
    %c0_i32_1 = arith.constant 0 : i32
    return %c0_i32, %c0_i32_0 : i32, i32
  }
  func.func @transform_12(%arg0: i32) -> (i32, i32) {
    %c0_i32 = arith.constant 0 : i32
    %c0_i32_0 = arith.constant 0 : i32
    %c0_i32_1 = arith.constant 0 : i32
    return %c0_i32, %c0_i32_0 : i32, i32
  }
  func.func @transform_13(%arg0: i32) -> (i32, i32) {
    %c0_i32 = arith.constant 0 : i32
    %c0_i32_0 = arith.constant 0 : i32
    %c0_i32_1 = arith.constant 0 : i32
    return %c0_i32, %c0_i32_0 : i32, i32
  }
  func.func @transform_14(%arg0: i32) -> (i32, i32) {
    %c0_i32 = arith.constant 0 : i32
    %c0_i32_0 = arith.constant 0 : i32
    %c0_i32_1 = arith.constant 0 : i32
    return %c0_i32, %c0_i32_0 : i32, i32
  }
  func.func @transform_15(%arg0: i32) -> (i32, i32) {
    %c0_i32 = arith.constant 0 : i32
    %c0_i32_0 = arith.constant 0 : i32
    %c0_i32_1 = arith.constant 0 : i32
    return %c0_i32, %c0_i32_0 : i32, i32
  }
  func.func @transform_16(%arg0: i32) -> (i32, i32) {
    %c0_i32 = arith.constant 0 : i32
    %c0_i32_0 = arith.constant 0 : i32
    %c0_i32_1 = arith.constant 0 : i32
    return %c0_i32, %c0_i32_0 : i32, i32
  }
  func.func @transform_17(%arg0: i32) -> (i32, i32) {
    %c0_i32 = arith.constant 0 : i32
    %c0_i32_0 = arith.constant 0 : i32
    %c0_i32_1 = arith.constant 0 : i32
    return %c0_i32, %c0_i32_0 : i32, i32
  }
  func.func @transform_18(%arg0: i32) -> (i32, i32) {
    %c0_i32 = arith.constant 0 : i32
    %c0_i32_0 = arith.constant 0 : i32
    return %arg0, %c0_i32 : i32, i32
  }
}

</mosaic_0001>

<llo_original>
// kernel: classifier_forward.1
$region0: #{classifier_forward.1}
  #allocation0 [shape = 'u32[]', space=smem, size = 0x4, offset = 0x4, fixed_abs, tag = 'smem constant byte address 0x4 - core index']
  #allocation1 [shape = 'u32[144,128]{1,0:T(1,128)}', space=vmem, size = 0x12000, scoped, tag = 'internal scratch']
  #allocation2 [shape = 'f32[1,1]{1,0:T(1,128)S(1)}', space=vmem, size = 0x200, scoped, tag = 'scoped memory for classifier_forward.1']
  %s0 = inlined_call_operand.vmem [shape: f32[16,16,16], index: 0, kind: input, shape index: {}]
  %s1 = inlined_call_operand.vmem [shape: f32[16,16,8], index: 1, kind: input, shape index: {}]
  %s2 = inlined_call_operand.vmem [shape: f32[8,32], index: 2, kind: input, shape index: {}]
  %s3 = inlined_call_operand.vmem [shape: f32[1,32], index: 3, kind: input, shape index: {}]
  %s4 = inlined_call_operand.vmem [shape: f32[32,32], index: 4, kind: input, shape index: {}]
  %s5 = inlined_call_operand.vmem [shape: f32[1,32], index: 5, kind: input, shape index: {}]
  %s6 = inlined_call_operand.vmem [shape: f32[32,32], index: 6, kind: input, shape index: {}]
  %s7 = inlined_call_operand.vmem [shape: f32[1,32], index: 7, kind: input, shape index: {}]
  %s8 = inlined_call_operand.vmem [shape: f32[32,1], index: 8, kind: input, shape index: {}]
  %s9 = inlined_call_operand.<no memory space> [shape: f32[1,1], index: 9, kind: input, shape index: {}]
  %s10 = inlined_call_operand.vmem [shape: f32[97,16], index: 10, kind: input, shape index: {}]
  %s11 = inlined_call_operand.vmem [shape: f32[1,16], index: 11, kind: input, shape index: {}]
  %s12 = inlined_call_operand.vmem [shape: f32[80,32], index: 12, kind: input, shape index: {}]
  %s13 = inlined_call_operand.vmem [shape: f32[1,32], index: 13, kind: input, shape index: {}]
  %s14 = inlined_call_operand.vmem [shape: f32[64,32], index: 14, kind: input, shape index: {}]
  %s15 = inlined_call_operand.vmem [shape: f32[1,32], index: 15, kind: input, shape index: {}]
  %s16 = inlined_call_operand.vmem [shape: f32[32,2], index: 16, kind: input, shape index: {}]
  %s17 = inlined_call_operand.vmem [shape: f32[1,2], index: 17, kind: input, shape index: {}]
  %s18 = inlined_call_operand.vmem [shape: f32[16,128], index: 18, kind: output, shape index: {}]
  %s19 = sld [smem:[#allocation0]]
  $region105: #{classifier_forward.1} parent=0
    _
  %s21 = ssub.s32 1, %s19
  %s22 = scalar_select 0, %s21, %s19
  %v23 = vstv %s9
  %24 = vst [vmem:[#allocation2] sm:$0x1] %v23
  loop: start=0, step=1, limit=4
  $region2: #{classifier_forward.1} parent=0 // loop_pre_header
    _
  $region3: #{classifier_forward.1} parent=0 // loop_header
    %s26 = sphi 0, %s30
    %p27 = scmp.ge.s32.totalorder %s26, 4
    %s36 = sphi 0, %s38
    %s39 = sphi 0, %s36
    %s40 = sphi 0, %s39
    %s56 = sphi 0, %s40
    %s62 = sphi 0, %s64
    %s65 = sphi 0, %s62
    %s66 = sphi 0, %s65
    %s82 = sphi 0, %s66
    %s86 = sphi 0, %s86
    %s88 = sphi 0, %s86
    %s89 = sphi 0, %s88
    %s103 = sphi 0, %s89
    %s107 = sphi 0, %s107
    %s109 = sphi 0, %s107
    %s110 = sphi 0, %s109
    %s124 = sphi 0, %s110
    %s128 = sphi 0, %s128
    %s130 = sphi 0, %s128
    %s131 = sphi 0, %s130
    %s145 = sphi 0, %s131
    %s149 = sphi 0, %s149
    %s151 = sphi 0, %s149
    %s152 = sphi 0, %s151
    %s166 = sphi 0, %s152
    %s170 = sphi 0, %s170
    %s172 = sphi 0, %s170
    %s173 = sphi 0, %s172
    %s187 = sphi 0, %s173
    %s191 = sphi 0, %s191
    %s193 = sphi 0, %s191
    %s194 = sphi 0, %s193
    %s208 = sphi 0, %s194
    %s212 = sphi 0, %s212
    %s214 = sphi 0, %s212
    %s215 = sphi 0, %s214
    %s229 = sphi 0, %s215
    %s233 = sphi 0, %s233
    %s235 = sphi 0, %s233
    %s236 = sphi 0, %s235
    %s250 = sphi 0, %s236
    %s254 = sphi 0, %s254
    %s256 = sphi 0, %s254
    %s257 = sphi 0, %s256
    %s271 = sphi 0, %s257
    %s275 = sphi 0, %s275
    %s277 = sphi 0, %s275
    %s278 = sphi 0, %s277
    %s292 = sphi 0, %s278
    %s296 = sphi 0, %s296
    %s298 = sphi 0, %s296
    %s299 = sphi 0, %s298
    %s313 = sphi 0, %s299
    %s317 = sphi 0, %s317
    %s319 = sphi 0, %s317
    %s320 = sphi 0, %s319
    %s334 = sphi 0, %s320
    %s338 = sphi 0, %s338
    %s340 = sphi 0, %s338
    %s341 = sphi 0, %s340
    %s355 = sphi 0, %s341
    %s359 = sphi 0, %s359
    %s361 = sphi 0, %s359
    %s362 = sphi 0, %s361
    %s376 = sphi 0, %s362
    %s380 = sphi 0, %s380
    %s382 = sphi 0, %s380
    %s383 = sphi 0, %s382
    %s397 = sphi 0, %s383
    %s401 = sphi 0, %s401
    %s403 = sphi 0, %s401
    %s404 = sphi 0, %s403
    %s418 = sphi 0, %s404
    %s424 = sphi 0, %s426
    %s427 = sphi 0, %s424
    %s428 = sphi 0, %s427
    %s444 = sphi 0, %s428
  $region4: #{classifier_forward.1} parent=0 // loop_header_branch
    %29 = sbr.rel (%p27) target = $region8
  $region5: #{classifier_forward.1} parent=0 // loop_body
    %s31 = ssub.s32 %s26, 1
    %s32 = ssub.s32 %s26, 2
    %s33 = sadd.s32 %s26, 1
    %s34 = ssub.s32 %s26, %s33
    %p35 = scmp.eq.s32.totalorder %s34, 0
    %s37 = sadd.s32 %s36, 1
    %s38 = scalar_select %p35, %s36, %s37
    %p41 = pneg %p35
    %p42 = scmp.eq.s32.totalorder %s26, 1
    %p43 = por %p41, %p42
    %p44 = scmp.ne.s32.totalorder %s36, %s39
    %p45 = scmp.eq.s32.totalorder %s26, 0
    %p46 = por %p44, %p45
    %p47 = scmp.ne.s32.totalorder %s36, %s39
    %p48 = scmp.eq.s32.totalorder %s31, 1
    %p49 = por %p47, %p48
    %p50 = scmp.ne.s32.totalorder %s39, %s40
    %p51 = scmp.eq.s32.totalorder %s31, 0
    %p52 = por %p50, %p51
    %p53 = scmp.ne.s32.totalorder %s39, %s40
    %p54 = scmp.eq.s32.totalorder %s32, 1
    %p55 = por %p53, %p54
    %p57 = scmp.ne.s32.totalorder %s40, %s56
    %p58 = scmp.eq.s32.totalorder %s32, 0
    %p59 = por %p57, %p58
    %s60 = ssub.s32 %s26, %s33
    %p61 = scmp.eq.s32.totalorder %s60, 0
    %s63 = sadd.s32 %s62, 1
    %s64 = scalar_select %p61, %s62, %s63
    %p67 = pneg %p61
    %p68 = scmp.eq.s32.totalorder %s26, 1
    %p69 = por %p67, %p68
    %p70 = scmp.ne.s32.totalorder %s62, %s65
    %p71 = scmp.eq.s32.totalorder %s26, 0
    %p72 = por %p70, %p71
    %p73 = scmp.ne.s32.totalorder %s62, %s65
    %p74 = scmp.eq.s32.totalorder %s31, 1
    %p75 = por %p73, %p74
    %p76 = scmp.ne.s32.totalorder %s65, %s66
    %p77 = scmp.eq.s32.totalorder %s31, 0
    %p78 = por %p76, %p77
    %p79 = scmp.ne.s32.totalorder %s65, %s66
    %p80 = scmp.eq.s32.totalorder %s32, 1
    %p81 = por %p79, %p80
    %p83 = scmp.ne.s32.totalorder %s66, %s82
    %p84 = scmp.eq.s32.totalorder %s32, 0
    %p85 = por %p83, %p84
    %s87 = sadd.s32 %s86, 1
    %p90 = scmp.eq.s32.totalorder %s26, 1
    %p91 = scmp.ne.s32.totalorder %s86, %s88
    %p92 = scmp.eq.s32.totalorder %s26, 0
    %p93 = por %p91, %p92
    %p94 = scmp.ne.s32.totalorder %s86, %s88
    %p95 = scmp.eq.s32.totalorder %s31, 1
    %p96 = por %p94, %p95
    %p97 = scmp.ne.s32.totalorder %s88, %s89
    %p98 = scmp.eq.s32.totalorder %s31, 0
    %p99 = por %p97, %p98
    %p100 = scmp.ne.s32.totalorder %s88, %s89
    %p101 = scmp.eq.s32.totalorder %s32, 1
    %p102 = por %p100, %p101
    %p104 = scmp.ne.s32.totalorder %s89, %s103
    %p105 = scmp.eq.s32.totalorder %s32, 0
    %p106 = por %p104, %p105
    %s108 = sadd.s32 %s107, 1
    %p111 = scmp.eq.s32.totalorder %s26, 1
    %p112 = scmp.ne.s32.totalorder %s107, %s109
    %p113 = scmp.eq.s32.totalorder %s26, 0
    %p114 = por %p112, %p113
    %p115 = scmp.ne.s32.totalorder %s107, %s109
    %p116 = scmp.eq.s32.totalorder %s31, 1
    %p117 = por %p115, %p116
    %p118 = scmp.ne.s32.totalorder %s109, %s110
    %p119 = scmp.eq.s32.totalorder %s31, 0
    %p120 = por %p118, %p119
    %p121 = scmp.ne.s32.totalorder %s109, %s110
    %p122 = scmp.eq.s32.totalorder %s32, 1
    %p123 = por %p121, %p122
    %p125 = scmp.ne.s32.totalorder %s110, %s124
    %p126 = scmp.eq.s32.totalorder %s32, 0
    %p127 = por %p125, %p126
    %s129 = sadd.s32 %s128, 1
    %p132 = scmp.eq.s32.totalorder %s26, 1
    %p133 = scmp.ne.s32.totalorder %s128, %s130
    %p134 = scmp.eq.s32.totalorder %s26, 0
    %p135 = por %p133, %p134
    %p136 = scmp.ne.s32.totalorder %s128, %s130
    %p137 = scmp.eq.s32.totalorder %s31, 1
    %p138 = por %p136, %p137
    %p139 = scmp.ne.s32.totalorder %s130, %s131
    %p140 = scmp.eq.s32.totalorder %s31, 0
    %p141 = por %p139, %p140
    %p142 = scmp.ne.s32.totalorder %s130, %s131
    %p143 = scmp.eq.s32.totalorder %s32, 1
    %p144 = por %p142, %p143
    %p146 = scmp.ne.s32.totalorder %s131, %s145
    %p147 = scmp.eq.s32.totalorder %s32, 0
    %p148 = por %p146, %p147
    %s150 = sadd.s32 %s149, 1
    %p153 = scmp.eq.s32.totalorder %s26, 1
    %p154 = scmp.ne.s32.totalorder %s149, %s151
    %p155 = scmp.eq.s32.totalorder %s26, 0
    %p156 = por %p154, %p155
    %p157 = scmp.ne.s32.totalorder %s149, %s151
    %p158 = scmp.eq.s32.totalorder %s31, 1
    %p159 = por %p157, %p158
    %p160 = scmp.ne.s32.totalorder %s151, %s152
    %p161 = scmp.eq.s32.totalorder %s31, 0
    %p162 = por %p160, %p161
    %p163 = scmp.ne.s32.totalorder %s151, %s152
    %p164 = scmp.eq.s32.totalorder %s32, 1
    %p165 = por %p163, %p164
    %p167 = scmp.ne.s32.totalorder %s152, %s166
    %p168 = scmp.eq.s32.totalorder %s32, 0
    %p169 = por %p167, %p168
    %s171 = sadd.s32 %s170, 1
    %p174 = scmp.eq.s32.totalorder %s26, 1
    %p175 = scmp.ne.s32.totalorder %s170, %s172
    %p176 = scmp.eq.s32.totalorder %s26, 0
    %p177 = por %p175, %p176
    %p178 = scmp.ne.s32.totalorder %s170, %s172
    %p179 = scmp.eq.s32.totalorder %s31, 1
    %p180 = por %p178, %p179
    %p181 = scmp.ne.s32.totalorder %s172, %s173
    %p182 = scmp.eq.s32.totalorder %s31, 0
    %p183 = por %p181, %p182
    %p184 = scmp.ne.s32.totalorder %s172, %s173
    %p185 = scmp.eq.s32.totalorder %s32, 1
    %p186 = por %p184, %p185
    %p188 = scmp.ne.s32.totalorder %s173, %s187
    %p189 = scmp.eq.s32.totalorder %s32, 0
    %p190 = por %p188, %p189
    %s192 = sadd.s32 %s191, 1
    %p195 = scmp.eq.s32.totalorder %s26, 1
    %p196 = scmp.ne.s32.totalorder %s191, %s193
    %p197 = scmp.eq.s32.totalorder %s26, 0
    %p198 = por %p196, %p197
    %p199 = scmp.ne.s32.totalorder %s191, %s193
    %p200 = scmp.eq.s32.totalorder %s31, 1
    %p201 = por %p199, %p200
    %p202 = scmp.ne.s32.totalorder %s193, %s194
    %p203 = scmp.eq.s32.totalorder %s31, 0
    %p204 = por %p202, %p203
    %p205 = scmp.ne.s32.totalorder %s193, %s194
    %p206 = scmp.eq.s32.totalorder %s32, 1
    %p207 = por %p205, %p206
    %p209 = scmp.ne.s32.totalorder %s194, %s208
    %p210 = scmp.eq.s32.totalorder %s32, 0
    %p211 = por %p209, %p210
    %s213 = sadd.s32 %s212, 1
    %p216 = scmp.eq.s32.totalorder %s26, 1
    %p217 = scmp.ne.s32.totalorder %s212, %s214
    %p218 = scmp.eq.s32.totalorder %s26, 0
    %p219 = por %p217, %p218
    %p220 = scmp.ne.s32.totalorder %s212, %s214
    %p221 = scmp.eq.s32.totalorder %s31, 1
    %p222 = por %p220, %p221
    %p223 = scmp.ne.s32.totalorder %s214, %s215
    %p224 = scmp.eq.s32.totalorder %s31, 0
    %p225 = por %p223, %p224
    %p226 = scmp.ne.s32.totalorder %s214, %s215
    %p227 = scmp.eq.s32.totalorder %s32, 1
    %p228 = por %p226, %p227
    %p230 = scmp.ne.s32.totalorder %s215, %s229
    %p231 = scmp.eq.s32.totalorder %s32, 0
    %p232 = por %p230, %p231
    %s234 = sadd.s32 %s233, 1
    %p237 = scmp.eq.s32.totalorder %s26, 1
    %p238 = scmp.ne.s32.totalorder %s233, %s235
    %p239 = scmp.eq.s32.totalorder %s26, 0
    %p240 = por %p238, %p239
    %p241 = scmp.ne.s32.totalorder %s233, %s235
    %p242 = scmp.eq.s32.totalorder %s31, 1
    %p243 = por %p241, %p242
    %p244 = scmp.ne.s32.totalorder %s235, %s236
    %p245 = scmp.eq.s32.totalorder %s31, 0
    %p246 = por %p244, %p245
    %p247 = scmp.ne.s32.totalorder %s235, %s236
    %p248 = scmp.eq.s32.totalorder %s32, 1
    %p249 = por %p247, %p248
    %p251 = scmp.ne.s32.totalorder %s236, %s250
    %p252 = scmp.eq.s32.totalorder %s32, 0
    %p253 = por %p251, %p252
    %s255 = sadd.s32 %s254, 1
    %p258 = scmp.eq.s32.totalorder %s26, 1
    %p259 = scmp.ne.s32.totalorder %s254, %s256
    %p260 = scmp.eq.s32.totalorder %s26, 0
    %p261 = por %p259, %p260
    %p262 = scmp.ne.s32.totalorder %s254, %s256
    %p263 = scmp.eq.s32.totalorder %s31, 1
    %p264 = por %p262, %p263
    %p265 = scmp.ne.s32.totalorder %s256, %s257
    %p266 = scmp.eq.s32.totalorder %s31, 0
    %p267 = por %p265, %p266
    %p268 = scmp.ne.s32.totalorder %s256, %s257
    %p269 = scmp.eq.s32.totalorder %s32, 1
    %p270 = por %p268, %p269
    %p272 = scmp.ne.s32.totalorder %s257, %s271
    %p273 = scmp.eq.s32.totalorder %s32, 0
    %p274 = por %p272, %p273
    %s276 = sadd.s32 %s275, 1
    %p279 = scmp.eq.s32.totalorder %s26, 1
    %p280 = scmp.ne.s32.totalorder %s275, %s277
    %p281 = scmp.eq.s32.totalorder %s26, 0
    %p282 = por %p280, %p281
    %p283 = scmp.ne.s32.totalorder %s275, %s277
    %p284 = scmp.eq.s32.totalorder %s31, 1
    %p285 = por %p283, %p284
    %p286 = scmp.ne.s32.totalorder %s277, %s278
    %p287 = scmp.eq.s32.totalorder %s31, 0
    %p288 = por %p286, %p287
    %p289 = scmp.ne.s32.totalorder %s277, %s278
    %p290 = scmp.eq.s32.totalorder %s32, 1
    %p291 = por %p289, %p290
    %p293 = scmp.ne.s32.totalorder %s278, %s292
    %p294 = scmp.eq.s32.totalorder %s32, 0
    %p295 = por %p293, %p294
    %s297 = sadd.s32 %s296, 1
    %p300 = scmp.eq.s32.totalorder %s26, 1
    %p301 = scmp.ne.s32.totalorder %s296, %s298
    %p302 = scmp.eq.s32.totalorder %s26, 0
    %p303 = por %p301, %p302
    %p304 = scmp.ne.s32.totalorder %s296, %s298
    %p305 = scmp.eq.s32.totalorder %s31, 1
    %p306 = por %p304, %p305
    %p307 = scmp.ne.s32.totalorder %s298, %s299
    %p308 = scmp.eq.s32.totalorder %s31, 0
    %p309 = por %p307, %p308
    %p310 = scmp.ne.s32.totalorder %s298, %s299
    %p311 = scmp.eq.s32.totalorder %s32, 1
    %p312 = por %p310, %p311
    %p314 = scmp.ne.s32.totalorder %s299, %s313
    %p315 = scmp.eq.s32.totalorder %s32, 0
    %p316 = por %p314, %p315
    %s318 = sadd.s32 %s317, 1
    %p321 = scmp.eq.s32.totalorder %s26, 1
    %p322 = scmp.ne.s32.totalorder %s317, %s319
    %p323 = scmp.eq.s32.totalorder %s26, 0
    %p324 = por %p322, %p323
    %p325 = scmp.ne.s32.totalorder %s317, %s319
    %p326 = scmp.eq.s32.totalorder %s31, 1
    %p327 = por %p325, %p326
    %p328 = scmp.ne.s32.totalorder %s319, %s320
    %p329 = scmp.eq.s32.totalorder %s31, 0
    %p330 = por %p328, %p329
    %p331 = scmp.ne.s32.totalorder %s319, %s320
    %p332 = scmp.eq.s32.totalorder %s32, 1
    %p333 = por %p331, %p332
    %p335 = scmp.ne.s32.totalorder %s320, %s334
    %p336 = scmp.eq.s32.totalorder %s32, 0
    %p337 = por %p335, %p336
    %s339 = sadd.s32 %s338, 1
    %p342 = scmp.eq.s32.totalorder %s26, 1
    %p343 = scmp.ne.s32.totalorder %s338, %s340
    %p344 = scmp.eq.s32.totalorder %s26, 0
    %p345 = por %p343, %p344
    %p346 = scmp.ne.s32.totalorder %s338, %s340
    %p347 = scmp.eq.s32.totalorder %s31, 1
    %p348 = por %p346, %p347
    %p349 = scmp.ne.s32.totalorder %s340, %s341
    %p350 = scmp.eq.s32.totalorder %s31, 0
    %p351 = por %p349, %p350
    %p352 = scmp.ne.s32.totalorder %s340, %s341
    %p353 = scmp.eq.s32.totalorder %s32, 1
    %p354 = por %p352, %p353
    %p356 = scmp.ne.s32.totalorder %s341, %s355
    %p357 = scmp.eq.s32.totalorder %s32, 0
    %p358 = por %p356, %p357
    %s360 = sadd.s32 %s359, 1
    %p363 = scmp.eq.s32.totalorder %s26, 1
    %p364 = scmp.ne.s32.totalorder %s359, %s361
    %p365 = scmp.eq.s32.totalorder %s26, 0
    %p366 = por %p364, %p365
    %p367 = scmp.ne.s32.totalorder %s359, %s361
    %p368 = scmp.eq.s32.totalorder %s31, 1
    %p369 = por %p367, %p368
    %p370 = scmp.ne.s32.totalorder %s361, %s362
    %p371 = scmp.eq.s32.totalorder %s31, 0
    %p372 = por %p370, %p371
    %p373 = scmp.ne.s32.totalorder %s361, %s362
    %p374 = scmp.eq.s32.totalorder %s32, 1
    %p375 = por %p373, %p374
    %p377 = scmp.ne.s32.totalorder %s362, %s376
    %p378 = scmp.eq.s32.totalorder %s32, 0
    %p379 = por %p377, %p378
    %s381 = sadd.s32 %s380, 1
    %p384 = scmp.eq.s32.totalorder %s26, 1
    %p385 = scmp.ne.s32.totalorder %s380, %s382
    %p386 = scmp.eq.s32.totalorder %s26, 0
    %p387 = por %p385, %p386
    %p388 = scmp.ne.s32.totalorder %s380, %s382
    %p389 = scmp.eq.s32.totalorder %s31, 1
    %p390 = por %p388, %p389
    %p391 = scmp.ne.s32.totalorder %s382, %s383
    %p392 = scmp.eq.s32.totalorder %s31, 0
    %p393 = por %p391, %p392
    %p394 = scmp.ne.s32.totalorder %s382, %s383
    %p395 = scmp.eq.s32.totalorder %s32, 1
    %p396 = por %p394, %p395
    %p398 = scmp.ne.s32.totalorder %s383, %s397
    %p399 = scmp.eq.s32.totalorder %s32, 0
    %p400 = por %p398, %p399
    %s402 = sadd.s32 %s401, 1
    %p405 = scmp.eq.s32.totalorder %s26, 1
    %p406 = scmp.ne.s32.totalorder %s401, %s403
    %p407 = scmp.eq.s32.totalorder %s26, 0
    %p408 = por %p406, %p407
    %p409 = scmp.ne.s32.totalorder %s401, %s403
    %p410 = scmp.eq.s32.totalorder %s31, 1
    %p411 = por %p409, %p410
    %p412 = scmp.ne.s32.totalorder %s403, %s404
    %p413 = scmp.eq.s32.totalorder %s31, 0
    %p414 = por %p412, %p413
    %p415 = scmp.ne.s32.totalorder %s403, %s404
    %p416 = scmp.eq.s32.totalorder %s32, 1
    %p417 = por %p415, %p416
    %p419 = scmp.ne.s32.totalorder %s404, %s418
    %p420 = scmp.eq.s32.totalorder %s32, 0
    %p421 = por %p419, %p420
    %s422 = ssub.s32 %s26, %s33
    %p423 = scmp.eq.s32.totalorder %s422, 0
    %s425 = sadd.s32 %s424, 1
    %s426 = scalar_select %p423, %s424, %s425
    %p429 = pneg %p423
    %p430 = scmp.eq.s32.totalorder %s26, 1
    %p431 = por %p429, %p430
    %p432 = scmp.ne.s32.totalorder %s424, %s427
    %p433 = scmp.eq.s32.totalorder %s26, 0
    %p434 = por %p432, %p433
    %p435 = scmp.ne.s32.totalorder %s424, %s427
    %p436 = scmp.eq.s32.totalorder %s31, 1
    %p437 = por %p435, %p436
    %p438 = scmp.ne.s32.totalorder %s427, %s428
    %p439 = scmp.eq.s32.totalorder %s31, 0
    %p440 = por %p438, %p439
    %p441 = scmp.ne.s32.totalorder %s427, %s428
    %p442 = scmp.eq.s32.totalorder %s32, 1
    %p443 = por %p441, %p442
    %p445 = scmp.ne.s32.totalorder %s428, %s444
    %p446 = scmp.eq.s32.totalorder %s32, 0
    %p447 = por %p445, %p446
    %p448 = scmp.le.s32.totalorder 1, %s26
    %p449 = scmp.lt.s32.totalorder %s26, 3
    %p450 = pnand %p448, %p449
    %p451 = pneg %p450
    // Predicated region
    $region9: #{classifier_forward.1} parent=5 // pred_check
      _
    $region10: #{classifier_forward.1} parent=5 // pred_check_branch
      %453 = sbr.rel (%p450) target = $region12
    $region11: #{classifier_forward.1} parent=5 // pred_region
      %s454 = ssub.s32 %s26, 1
      // Predicated region
      $region13: #{classifier_forward.1} parent=11 // pred_check
        %p455 = pneg %p99
      $region14: #{classifier_forward.1} parent=11 // pred_check_branch
        %457 = sbr.rel (%p455) target = $region16
      $region15: #{classifier_forward.1} parent=11 // pred_region
        _
      $region16: #{classifier_forward.1} parent=11 // pred_fallthru
        _
      // Predicated region
      $region17: #{classifier_forward.1} parent=11 // pred_check
        %p458 = pneg %p120
      $region18: #{classifier_forward.1} parent=11 // pred_check_branch
        %460 = sbr.rel (%p458) target = $region20
      $region19: #{classifier_forward.1} parent=11 // pred_region
        _
      $region20: #{classifier_forward.1} parent=11 // pred_fallthru
        _
      // Predicated region
      $region21: #{classifier_forward.1} parent=11 // pred_check
        %p461 = pneg %p141
      $region22: #{classifier_forward.1} parent=11 // pred_check_branch
        %463 = sbr.rel (%p461) target = $region24
      $region23: #{classifier_forward.1} parent=11 // pred_region
        _
      $region24: #{classifier_forward.1} parent=11 // pred_fallthru
        _
      // Predicated region
      $region25: #{classifier_forward.1} parent=11 // pred_check
        %p464 = pneg %p162
      $region26: #{classifier_forward.1} parent=11 // pred_check_branch
        %466 = sbr.rel (%p464) target = $region28
      $region27: #{classifier_forward.1} parent=11 // pred_region
        _
      $region28: #{classifier_forward.1} parent=11 // pred_fallthru
        _
      // Predicated region
      $region29: #{classifier_forward.1} parent=11 // pred_check
        %p467 = pneg %p183
      $region30: #{classifier_forward.1} parent=11 // pred_check_branch
        %469 = sbr.rel (%p467) target = $region32
      $region31: #{classifier_forward.1} parent=11 // pred_region
        _
      $region32: #{classifier_forward.1} parent=11 // pred_fallthru
        _
      // Predicated region
      $region33: #{classifier_forward.1} parent=11 // pred_check
        %p470 = pneg %p204
      $region34: #{classifier_forward.1} parent=11 // pred_check_branch
        %472 = sbr.rel (%p470) target = $region36
      $region35: #{classifier_forward.1} parent=11 // pred_region
        _
      $region36: #{classifier_forward.1} parent=11 // pred_fallthru
        _
      // Predicated region
      $region37: #{classifier_forward.1} parent=11 // pred_check
        %p473 = pneg %p225
      $region38: #{classifier_forward.1} parent=11 // pred_check_branch
        %475 = sbr.rel (%p473) target = $region40
      $region39: #{classifier_forward.1} parent=11 // pred_region
        _
      $region40: #{classifier_forward.1} parent=11 // pred_fallthru
        _
      // Predicated region
      $region41: #{classifier_forward.1} parent=11 // pred_check
        %p476 = pneg %p246
      $region42: #{classifier_forward.1} parent=11 // pred_check_branch
        %478 = sbr.rel (%p476) target = $region44
      $region43: #{classifier_forward.1} parent=11 // pred_region
        _
      $region44: #{classifier_forward.1} parent=11 // pred_fallthru
        _
      // Predicated region
      $region45: #{classifier_forward.1} parent=11 // pred_check
        %p479 = pneg %p267
      $region46: #{classifier_forward.1} parent=11 // pred_check_branch
        %481 = sbr.rel (%p479) target = $region48
      $region47: #{classifier_forward.1} parent=11 // pred_region
        _
      $region48: #{classifier_forward.1} parent=11 // pred_fallthru
        _
      // Predicated region
      $region49: #{classifier_forward.1} parent=11 // pred_check
        %p482 = pneg %p288
      $region50: #{classifier_forward.1} parent=11 // pred_check_branch
        %484 = sbr.rel (%p482) target = $region52
      $region51: #{classifier_forward.1} parent=11 // pred_region
        _
      $region52: #{classifier_forward.1} parent=11 // pred_fallthru
        _
      // Predicated region
      $region53: #{classifier_forward.1} parent=11 // pred_check
        %p485 = pneg %p309
      $region54: #{classifier_forward.1} parent=11 // pred_check_branch
        %487 = sbr.rel (%p485) target = $region56
      $region55: #{classifier_forward.1} parent=11 // pred_region
        _
      $region56: #{classifier_forward.1} parent=11 // pred_fallthru
        _
      // Predicated region
      $region57: #{classifier_forward.1} parent=11 // pred_check
        %p488 = pneg %p330
      $region58: #{classifier_forward.1} parent=11 // pred_check_branch
        %490 = sbr.rel (%p488) target = $region60
      $region59: #{classifier_forward.1} parent=11 // pred_region
        _
      $region60: #{classifier_forward.1} parent=11 // pred_fallthru
        _
      // Predicated region
      $region61: #{classifier_forward.1} parent=11 // pred_check
        %p491 = pneg %p351
      $region62: #{classifier_forward.1} parent=11 // pred_check_branch
        %493 = sbr.rel (%p491) target = $region64
      $region63: #{classifier_forward.1} parent=11 // pred_region
        _
      $region64: #{classifier_forward.1} parent=11 // pred_fallthru
        _
      // Predicated region
      $region65: #{classifier_forward.1} parent=11 // pred_check
        %p494 = pneg %p372
      $region66: #{classifier_forward.1} parent=11 // pred_check_branch
        %496 = sbr.rel (%p494) target = $region68
      $region67: #{classifier_forward.1} parent=11 // pred_region
        _
      $region68: #{classifier_forward.1} parent=11 // pred_fallthru
        _
      // Predicated region
      $region69: #{classifier_forward.1} parent=11 // pred_check
        %p497 = pneg %p393
      $region70: #{classifier_forward.1} parent=11 // pred_check_branch
        %499 = sbr.rel (%p497) target = $region72
      $region71: #{classifier_forward.1} parent=11 // pred_region
        _
      $region72: #{classifier_forward.1} parent=11 // pred_fallthru
        _
      // Predicated region
      $region73: #{classifier_forward.1} parent=11 // pred_check
        %p500 = pneg %p414
      $region74: #{classifier_forward.1} parent=11 // pred_check_branch
        %502 = sbr.rel (%p500) target = $region76
      $region75: #{classifier_forward.1} parent=11 // pred_region
        _
      $region76: #{classifier_forward.1} parent=11 // pred_fallthru
        _
    $region12: #{classifier_forward.1} parent=5 // pred_fallthru
      _
    %p503 = scmp.lt.s32.totalorder %s26, 2
    // Predicated region
    $region77: #{classifier_forward.1} parent=5 // pred_check
      %p504 = pneg %p503
    $region78: #{classifier_forward.1} parent=5 // pred_check_branch
      %506 = sbr.rel (%p504) target = $region80
    $region79: #{classifier_forward.1} parent=5 // pred_region
      // Predicated region
      $region81: #{classifier_forward.1} parent=79 // pred_check
        %p507 = pneg %p46
      $region82: #{classifier_forward.1} parent=79 // pred_check_branch
        %509 = sbr.rel (%p507) target = $region84
      $region83: #{classifier_forward.1} parent=79 // pred_region
        %s510 = smul.u32 8, %s26
        %p511 = scmp.lt.s32.totalorder %s510, 15
        %s512 = scalar_select %p511, %s510, 15
        %s513 = smul.addr %s512, 2
        %s514 = smul.addr %s513, 8
        %s515 = scalar_lea.vmem %s0, %s514
        %s516 = smul.u32 8, %s26
      $region84: #{classifier_forward.1} parent=79 // pred_fallthru
        _
      // Predicated region
      $region85: #{classifier_forward.1} parent=79 // pred_check
        %p517 = pneg %p72
      $region86: #{classifier_forward.1} parent=79 // pred_check_branch
        %519 = sbr.rel (%p517) target = $region88
      $region87: #{classifier_forward.1} parent=79 // pred_region
        %s520 = smul.u32 8, %s26
        %p521 = scmp.lt.s32.totalorder %s520, 15
        %s522 = scalar_select %p521, %s520, 15
        %s523 = smul.addr %s522, 2
        %s524 = smul.addr %s523, 8
        %s525 = scalar_lea.vmem %s1, %s524
        %s526 = smul.u32 8, %s26
      $region88: #{classifier_forward.1} parent=79 // pred_fallthru
        _
    $region80: #{classifier_forward.1} parent=5 // pred_fallthru
      _
    %p527 = scmp.le.s32.totalorder 1, %s26
    %p528 = scmp.lt.s32.totalorder %s26, 3
    %p529 = pnand %p527, %p528
    %p530 = pneg %p529
    // Predicated region
    $region89: #{classifier_forward.1} parent=5 // pred_check
      _
    $region90: #{classifier_forward.1} parent=5 // pred_check_branch
      %532 = sbr.rel (%p529) target = $region92
    $region91: #{classifier_forward.1} parent=5 // pred_region
      %s533 = ssub.s32 %s26, 1
      %s534 = smul.u32 8, %s31
      %p535 = scmp.lt.s32.totalorder %s534, 15
      %s536 = scalar_select %p535, %s534, 15
      %s537 = smul.addr %s536, 2
      %s538 = smul.addr %s537, 8
      %s539 = scalar_lea.vmem %s0, %s538
      %p540 = pneg %p52
      %p541 = pneg %p49
      %s542 = smul.u32 8, %s31
      %p543 = scmp.lt.s32.totalorder %s542, 15
      %s544 = scalar_select %p543, %s542, 15
      %s545 = smul.addr %s544, 2
      %s546 = smul.addr %s545, 8
      %s547 = scalar_lea.vmem %s1, %s546
      %p548 = pneg %p78
      %p549 = pneg %p75
      %p550 = pneg %p99
      %p551 = pneg %p96
      %p552 = pneg %p120
      %p553 = pneg %p117
      %p554 = pneg %p141
      %p555 = pneg %p138
      %p556 = pneg %p162
      %p557 = pneg %p159
      %p558 = pneg %p183
      %p559 = pneg %p180
      %p560 = pneg %p204
      %p561 = pneg %p201
      %p562 = pneg %p225
      %p563 = pneg %p222
      %p564 = pneg %p246
      %p565 = pneg %p243
      %p566 = pneg %p267
      %p567 = pneg %p264
      %p568 = pneg %p288
      %p569 = pneg %p285
      %p570 = pneg %p309
      %p571 = pneg %p306
      %p572 = pneg %p330
      %p573 = pneg %p327
      %p574 = pneg %p351
      %p575 = pneg %p348
      %p576 = pneg %p372
      %p577 = pneg %p369
      %p578 = pneg %p393
      %p579 = pneg %p390
      %p580 = pneg %p414
      %p581 = pneg %p411
      %p582 = pneg %p440
      %p583 = pneg %p437
      %p584 = scmp.lt.s32.totalorder %s31, 1
      %s585 = scalar_select %p584, %s31, 1
      %s586 = smul.addr %s585, 8
      %s587 = scalar_lea.vmem %s18, %s586
      %s588 = smul.u32 8, %s31
      %p589 = scmp.lt.s32.totalorder %s588, 15
      %s590 = scalar_select %p589, %s588, 15
      %s591 = smul.addr %s590, 2
      %s592 = smul.addr %s591, 8
      %s593 = scalar_lea.vmem %s0, %s592
      %s594 = smul.u32 8, %s31
      %s595 = smul.u32 8, %s31
      %p596 = scmp.lt.s32.totalorder %s595, 15
      %s597 = scalar_select %p596, %s595, 15
      %s598 = smul.addr %s597, 2
      %s599 = smul.addr %s598, 8
      %s600 = scalar_lea.vmem %s1, %s599
      %s601 = smul.u32 8, %s31
      %p602 = scmp.lt.s32.totalorder %s31, 1
      %s603 = scalar_select %p602, %s31, 1
      %s604 = smul.addr %s603, 8
      %s605 = scalar_lea.vmem %s18, %s604
      %v606 = vld [vmem:[%s593] sm:$0xff]
      %v607 = vld [vmem:[%s593 + $0x8] sm:$0xff]
      %v608 = vld [vmem:[%s593 + $0x10] sm:$0xff]
      %v609 = vld [vmem:[%s593 + $0x18] sm:$0xff]
      %v610 = vld [vmem:[%s593 + $0x20] sm:$0xff]
      %v611 = vld [vmem:[%s593 + $0x28] sm:$0xff]
      %v612 = vld [vmem:[%s593 + $0x30] sm:$0xff]
      %v613 = vld [vmem:[%s593 + $0x38] sm:$0xff]
      %v614 = vld [vmem:[%s593 + $0x40] sm:$0xff]
      %v615 = vld [vmem:[%s593 + $0x48] sm:$0xff]
      %v616 = vld [vmem:[%s593 + $0x50] sm:$0xff]
      %v617 = vld [vmem:[%s593 + $0x58] sm:$0xff]
      %v618 = vld [vmem:[%s593 + $0x60] sm:$0xff]
      %v619 = vld [vmem:[%s593 + $0x68] sm:$0xff]
      %v620 = vld [vmem:[%s593 + $0x70] sm:$0xff]
      %v621 = vld [vmem:[%s593 + $0x78] sm:$0xff]
      %vm622 = vcmask 130048
      %v623 = vsel %vm622, %v606, 0.0
      %624 = vadd.xlane.f32.xlu0 %v623
      %v625 = vpop.xlane.xlu0 %624
      %v626 = vsel %vm622, %v607, 0.0
      %627 = vadd.xlane.f32.xlu0 %v626
      %v628 = vpop.xlane.xlu0 %627
      %v629 = vsel %vm622, %v608, 0.0
      %630 = vadd.xlane.f32.xlu0 %v629
      %v631 = vpop.xlane.xlu0 %630
      %v632 = vsel %vm622, %v609, 0.0
      %633 = vadd.xlane.f32.xlu0 %v632
      %v634 = vpop.xlane.xlu0 %633
      %v635 = vsel %vm622, %v610, 0.0
      %636 = vadd.xlane.f32.xlu0 %v635
      %v637 = vpop.xlane.xlu0 %636
      %v638 = vsel %vm622, %v611, 0.0
      %639 = vadd.xlane.f32.xlu0 %v638
      %v640 = vpop.xlane.xlu0 %639
      %v641 = vsel %vm622, %v612, 0.0
      %642 = vadd.xlane.f32.xlu0 %v641
      %v643 = vpop.xlane.xlu0 %642
      %v644 = vsel %vm622, %v613, 0.0
      %645 = vadd.xlane.f32.xlu0 %v644
      %v646 = vpop.xlane.xlu0 %645
      %v647 = vsel %vm622, %v614, 0.0
      %648 = vadd.xlane.f32.xlu0 %v647
      %v649 = vpop.xlane.xlu0 %648
      %v650 = vsel %vm622, %v615, 0.0
      %651 = vadd.xlane.f32.xlu0 %v650
      %v652 = vpop.xlane.xlu0 %651
      %v653 = vsel %vm622, %v616, 0.0
      %654 = vadd.xlane.f32.xlu0 %v653
      %v655 = vpop.xlane.xlu0 %654
      %v656 = vsel %vm622, %v617, 0.0
      %657 = vadd.xlane.f32.xlu0 %v656
      %v658 = vpop.xlane.xlu0 %657
      %v659 = vsel %vm622, %v618, 0.0
      %660 = vadd.xlane.f32.xlu0 %v659
      %v661 = vpop.xlane.xlu0 %660
      %v662 = vsel %vm622, %v619, 0.0
      %663 = vadd.xlane.f32.xlu0 %v662
      %v664 = vpop.xlane.xlu0 %663
      %v665 = vsel %vm622, %v620, 0.0
      %666 = vadd.xlane.f32.xlu0 %v665
      %v667 = vpop.xlane.xlu0 %666
      %v668 = vsel %vm622, %v621, 0.0
      %669 = vadd.xlane.f32.xlu0 %v668
      %v670 = vpop.xlane.xlu0 %669
      %v671 = vadd.f32 %v625, 1.0
      %v672 = vadd.f32 %v628, 1.0
      %v673 = vadd.f32 %v631, 1.0
      %v674 = vadd.f32 %v634, 1.0
      %v675 = vadd.f32 %v637, 1.0
      %v676 = vadd.f32 %v640, 1.0
      %v677 = vadd.f32 %v643, 1.0
      %v678 = vadd.f32 %v646, 1.0
      %v679 = vadd.f32 %v649, 1.0
      %v680 = vadd.f32 %v652, 1.0
      %v681 = vadd.f32 %v655, 1.0
      %v682 = vadd.f32 %v658, 1.0
      %v683 = vadd.f32 %v661, 1.0
      %v684 = vadd.f32 %v664, 1.0
      %v685 = vadd.f32 %v667, 1.0
      %v686 = vadd.f32 %v670, 1.0
      %v687 = vrcp.pop %v671
      %v688 = vmul.f32 1.0, %v687
      %v689 = vrcp.pop %v672
      %v690 = vmul.f32 1.0, %v689
      %v691 = vrcp.pop %v673
      %v692 = vmul.f32 1.0, %v691
      %v693 = vrcp.pop %v674
      %v694 = vmul.f32 1.0, %v693
      %v695 = vrcp.pop %v675
      %v696 = vmul.f32 1.0, %v695
      %v697 = vrcp.pop %v676
      %v698 = vmul.f32 1.0, %v697
      %v699 = vrcp.pop %v677
      %v700 = vmul.f32 1.0, %v699
      %v701 = vrcp.pop %v678
      %v702 = vmul.f32 1.0, %v701
      %v703 = vrcp.pop %v679
      %v704 = vmul.f32 1.0, %v703
      %v705 = vrcp.pop %v680
      %v706 = vmul.f32 1.0, %v705
      %v707 = vrcp.pop %v681
      %v708 = vmul.f32 1.0, %v707
      %v709 = vrcp.pop %v682
      %v710 = vmul.f32 1.0, %v709
      %v711 = vrcp.pop %v683
      %v712 = vmul.f32 1.0, %v711
      %v713 = vrcp.pop %v684
      %v714 = vmul.f32 1.0, %v713
      %v715 = vrcp.pop %v685
      %v716 = vmul.f32 1.0, %v715
      %v717 = vrcp.pop %v686
      %v718 = vmul.f32 1.0, %v717
      %v719 = vld [vmem:[%s600] sm:$0xff]
      %v720 = vld [vmem:[%s600 + $0x8] sm:$0xff]
      %v721 = vld [vmem:[%s600 + $0x10] sm:$0xff]
      %v722 = vld [vmem:[%s600 + $0x18] sm:$0xff]
      %v723 = vld [vmem:[%s600 + $0x20] sm:$0xff]
      %v724 = vld [vmem:[%s600 + $0x28] sm:$0xff]
      %v725 = vld [vmem:[%s600 + $0x30] sm:$0xff]
      %v726 = vld [vmem:[%s600 + $0x38] sm:$0xff]
      %v727 = vld [vmem:[%s600 + $0x40] sm:$0xff]
      %v728 = vld [vmem:[%s600 + $0x48] sm:$0xff]
      %v729 = vld [vmem:[%s600 + $0x50] sm:$0xff]
      %v730 = vld [vmem:[%s600 + $0x58] sm:$0xff]
      %v731 = vld [vmem:[%s600 + $0x60] sm:$0xff]
      %v732 = vld [vmem:[%s600 + $0x68] sm:$0xff]
      %v733 = vld [vmem:[%s600 + $0x70] sm:$0xff]
      %v734 = vld [vmem:[%s600 + $0x78] sm:$0xff]
      %v735 = vld [vmem:[%s2] sm:$0xff]
      %vm736 = vcmask 64512
      %v738 = vsel %vm736, %v719, 0
      %v741 = vsel %vm736, %v720, 0
      %v744 = vsel %vm736, %v721, 0
      %v747 = vsel %vm736, %v722, 0
      %v750 = vsel %vm736, %v723, 0
      %v753 = vsel %vm736, %v724, 0
      %v756 = vsel %vm736, %v725, 0
      %v759 = vsel %vm736, %v726, 0
      %v762 = vsel %vm736, %v727, 0
      %v765 = vsel %vm736, %v728, 0
      %v768 = vsel %vm736, %v729, 0
      %v771 = vsel %vm736, %v730, 0
      %v774 = vsel %vm736, %v731, 0
      %v777 = vsel %vm736, %v732, 0
      %v780 = vsel %vm736, %v733, 0
      %v783 = vsel %vm736, %v734, 0
      %785 = vmatprep.subr.mxu0 0.0
      %786 = vmatpush1.msra.mxu0 %v735
      %787 = vmatprep.subr.mxu0 0.0
      %788 = vmatpush1.msra.mxu0 0.0
      %789 = vmatprep.subr.mxu0 0.0
      %790 = vmatpush1.msra.mxu0 0.0
      %791 = vmatprep.subr.mxu0 0.0
      %792 = vmatpush1.msra.mxu0 0.0
      %793 = vmatprep.subr.mxu0 0.0
      %794 = vmatpush1.msra.mxu0 0.0
      %795 = vmatprep.subr.mxu0 0.0
      %796 = vmatpush1.msra.mxu0 0.0
      %797 = vmatprep.subr.mxu0 0.0
      %798 = vmatpush1.msra.mxu0 0.0
      %799 = vmatprep.subr.mxu0 0.0
      %800 = vmatpush1.msra.mxu0 0.0
      %801 = vmatprep.subr.mxu0 0.0
      %802 = vmatpush1.msra.mxu0 0.0
      %803 = vmatprep.subr.mxu0 0.0
      %804 = vmatpush1.msra.mxu0 0.0
      %805 = vmatprep.subr.mxu0 0.0
      %806 = vmatpush1.msra.mxu0 0.0
      %807 = vmatprep.subr.mxu0 0.0
      %808 = vmatpush1.msra.mxu0 0.0
      %809 = vmatprep.subr.mxu0 0.0
      %810 = vmatpush1.msra.mxu0 0.0
      %811 = vmatprep.subr.mxu0 0.0
      %812 = vmatpush1.msra.mxu0 0.0
      %813 = vmatprep.subr.mxu0 0.0
      %814 = vmatpush1.msra.mxu0 0.0
      %815 = vmatprep.subr.mxu0 0.0
      %816 = vmatpush1.msra.mxu0 0.0
      %817 = vmatprep.subr.mxu0 0.0
      %818 = vmatpush1.msra.mxu0 0.0
      %819 = vmatprep.subr.mxu0 0.0
      %820 = vmatpush1.msra.mxu0 0.0
      %821 = vmatprep.subr.mxu0 0.0
      %822 = vmatpush1.msra.mxu0 0.0
      %823 = vmatprep.subr.mxu0 0.0
      %824 = vmatpush1.msra.mxu0 0.0
      %825 = vmatprep.subr.mxu0 0.0
      %826 = vmatpush1.msra.mxu0 0.0
      %827 = vmatprep.subr.mxu0 0.0
      %828 = vmatpush1.msra.mxu0 0.0
      %829 = vmatprep.subr.mxu0 0.0
      %830 = vmatpush1.msra.mxu0 0.0
      %831 = vmatprep.subr.mxu0 0.0
      %832 = vmatpush1.msra.mxu0 0.0
      %833 = vmatprep.subr.mxu0 0.0
      %834 = vmatpush1.msra.mxu0 0.0
      %835 = vmatprep.subr.mxu0 0.0
      %836 = vmatpush1.msra.mxu0 0.0
      %837 = vmatprep.subr.mxu0 0.0
      %838 = vmatpush1.msra.mxu0 0.0
      %839 = vmatprep.subr.mxu0 0.0
      %840 = vmatpush1.msra.mxu0 0.0
      %841 = vmatprep.subr.mxu0 0.0
      %842 = vmatpush1.msra.mxu0 0.0
      %843 = vmatprep.subr.mxu0 0.0
      %844 = vmatpush1.msra.mxu0 0.0
      %845 = vmatprep.subr.mxu0 0.0
      %846 = vmatpush1.msra.mxu0 0.0
      %847 = vmatprep.subr.mxu0 0.0
      %848 = vmatpush1.msra.mxu0 0.0
      %849 = vmatprep.mubr.f32.mxu0 0.0
      %850 = vmatmul.mubr.f32.gmra.mrb[0].mxu0 %v738
      %v851 = vpop.f32.mrb[0].mxu0
      %v852 = vadd.f32 0.0, %v851
      %v853 = vpop.f32.mrb[0].mxu0
      %854 = vmatprep.mubr.f32.mxu0 0.0
      %855 = vmatmul.mubr.f32.gmra.mrb[0].mxu0 %v741
      %v856 = vpop.f32.mrb[0].mxu0
      %v857 = vadd.f32 0.0, %v856
      %v858 = vpop.f32.mrb[0].mxu0
      %859 = vmatprep.mubr.f32.mxu0 0.0
      %860 = vmatmul.mubr.f32.gmra.mrb[0].mxu0 %v744
      %v861 = vpop.f32.mrb[0].mxu0
      %v862 = vadd.f32 0.0, %v861
      %v863 = vpop.f32.mrb[0].mxu0
      %864 = vmatprep.mubr.f32.mxu0 0.0
      %865 = vmatmul.mubr.f32.gmra.mrb[0].mxu0 %v747
      %v866 = vpop.f32.mrb[0].mxu0
      %v867 = vadd.f32 0.0, %v866
      %v868 = vpop.f32.mrb[0].mxu0
      %869 = vmatprep.mubr.f32.mxu0 0.0
      %870 = vmatmul.mubr.f32.gmra.mrb[0].mxu0 %v750
      %v871 = vpop.f32.mrb[0].mxu0
      %v872 = vadd.f32 0.0, %v871
      %v873 = vpop.f32.mrb[0].mxu0
      %874 = vmatprep.mubr.f32.mxu0 0.0
      %875 = vmatmul.mubr.f32.gmra.mrb[0].mxu0 %v753
      %v876 = vpop.f32.mrb[0].mxu0
      %v877 = vadd.f32 0.0, %v876
      %v878 = vpop.f32.mrb[0].mxu0
      %879 = vmatprep.mubr.f32.mxu0 0.0
      %880 = vmatmul.mubr.f32.gmra.mrb[0].mxu0 %v756
      %v881 = vpop.f32.mrb[0].mxu0
      %v882 = vadd.f32 0.0, %v881
      %v883 = vpop.f32.mrb[0].mxu0
      %884 = vmatprep.mubr.f32.mxu0 0.0
      %885 = vmatmul.mubr.f32.gmra.mrb[0].mxu0 %v759
      %v886 = vpop.f32.mrb[0].mxu0
      %v887 = vadd.f32 0.0, %v886
      %v888 = vpop.f32.mrb[0].mxu0
      %889 = vmatprep.mubr.f32.mxu0 0.0
      %890 = vmatmul.mubr.f32.gmra.mrb[0].mxu0 %v762
      %v891 = vpop.f32.mrb[0].mxu0
      %v892 = vadd.f32 0.0, %v891
      %v893 = vpop.f32.mrb[0].mxu0
      %894 = vmatprep.mubr.f32.mxu0 0.0
      %895 = vmatmul.mubr.f32.gmra.mrb[0].mxu0 %v765
      %v896 = vpop.f32.mrb[0].mxu0
      %v897 = vadd.f32 0.0, %v896
      %v898 = vpop.f32.mrb[0].mxu0
      %899 = vmatprep.mubr.f32.mxu0 0.0
      %900 = vmatmul.mubr.f32.gmra.mrb[0].mxu0 %v768
      %v901 = vpop.f32.mrb[0].mxu0
      %v902 = vadd.f32 0.0, %v901
      %v903 = vpop.f32.mrb[0].mxu0
      %904 = vmatprep.mubr.f32.mxu0 0.0
      %905 = vmatmul.mubr.f32.gmra.mrb[0].mxu0 %v771
      %v906 = vpop.f32.mrb[0].mxu0
      %v907 = vadd.f32 0.0, %v906
      %v908 = vpop.f32.mrb[0].mxu0
      %909 = vmatprep.mubr.f32.mxu0 0.0
      %910 = vmatmul.mubr.f32.gmra.mrb[0].mxu0 %v774
      %v911 = vpop.f32.mrb[0].mxu0
      %v912 = vadd.f32 0.0, %v911
      %v913 = vpop.f32.mrb[0].mxu0
      %914 = vmatprep.mubr.f32.mxu0 0.0
      %915 = vmatmul.mubr.f32.gmra.mrb[0].mxu0 %v777
      %v916 = vpop.f32.mrb[0].mxu0
      %v917 = vadd.f32 0.0, %v916
      %v918 = vpop.f32.mrb[0].mxu0
      %919 = vmatprep.mubr.f32.mxu0 0.0
      %920 = vmatmul.mubr.f32.gmra.mrb[0].mxu0 %v780
      %v921 = vpop.f32.mrb[0].mxu0
      %v922 = vadd.f32 0.0, %v921
      %v923 = vpop.f32.mrb[0].mxu0
      %924 = vmatprep.mubr.f32.mxu0 0.0
      %925 = vmatmul.mubr.f32.gmra.mrb[0].mxu0 %v783
      %v926 = vpop.f32.mrb[0].mxu0
      %v927 = vadd.f32 0.0, %v926
      %v928 = vpop.f32.mrb[0].mxu0
      %929 = vdwg.mxu0
      %v931 = vsel %vm622, %v606, 0
      %v934 = vsel %vm622, %v607, 0
      %936 = vmatprep.subr.mxu0 0.0
      %937 = vmatpush1.msra.mxu0 %v852
      %938 = vmatprep.subr.mxu0 0.0
      %939 = vmatpush1.msra.mxu0 %v857
      %940 = vmatprep.subr.mxu0 0.0
      %941 = vmatpush1.msra.mxu0 0.0
      %942 = vmatprep.subr.mxu0 0.0
      %943 = vmatpush1.msra.mxu0 0.0
      %944 = vmatprep.subr.mxu0 0.0
      %945 = vmatpush1.msra.mxu0 0.0
      %946 = vmatprep.subr.mxu0 0.0
      %947 = vmatpush1.msra.mxu0 0.0
      %948 = vmatprep.subr.mxu0 0.0
      %949 = vmatpush1.msra.mxu0 0.0
      %950 = vmatprep.subr.mxu0 0.0
      %951 = vmatpush1.msra.mxu0 0.0
      %952 = vmatprep.subr.mxu0 0.0
      %953 = vmatpush1.msra.mxu0 0.0
      %954 = vmatprep.subr.mxu0 0.0
      %955 = vmatpush1.msra.mxu0 0.0
      %956 = vmatprep.subr.mxu0 0.0
      %957 = vmatpush1.msra.mxu0 0.0
      %958 = vmatprep.subr.mxu0 0.0
      %959 = vmatpush1.msra.mxu0 0.0
      %960 = vmatprep.subr.mxu0 0.0
      %961 = vmatpush1.msra.mxu0 0.0
      %962 = vmatprep.subr.mxu0 0.0
      %963 = vmatpush1.msra.mxu0 0.0
      %964 = vmatprep.subr.mxu0 0.0
      %965 = vmatpush1.msra.mxu0 0.0
      %966 = vmatprep.subr.mxu0 0.0
      %967 = vmatpush1.msra.mxu0 0.0
      %968 = vmatprep.subr.mxu0 0.0
      %969 = vmatpush1.msra.mxu0 0.0
      %970 = vmatprep.subr.mxu0 0.0
      %971 = vmatpush1.msra.mxu0 0.0
      %972 = vmatprep.subr.mxu0 0.0
      %973 = vmatpush1.msra.mxu0 0.0
      %974 = vmatprep.subr.mxu0 0.0
      %975 = vmatpush1.msra.mxu0 0.0
      %976 = vmatprep.subr.mxu0 0.0
      %977 = vmatpush1.msra.mxu0 0.0
      %978 = vmatprep.subr.mxu0 0.0
      %979 = vmatpush1.msra.mxu0 0.0
      %980 = vmatprep.subr.mxu0 0.0
      %981 = vmatpush1.msra.mxu0 0.0
      %982 = vmatprep.subr.mxu0 0.0
      %983 = vmatpush1.msra.mxu0 0.0
      %984 = vmatprep.subr.mxu0 0.0
      %985 = vmatpush1.msra.mxu0 0.0
      %986 = vmatprep.subr.mxu0 0.0
      %987 = vmatpush1.msra.mxu0 0.0
      %988 = vmatprep.subr.mxu0 0.0
      %989 = vmatpush1.msra.mxu0 0.0
      %990 = vmatprep.subr.mxu0 0.0
      %991 = vmatpush1.msra.mxu0 0.0
      %992 = vmatprep.subr.mxu0 0.0
      %993 = vmatpush1.msra.mxu0 0.0
      %994 = vmatprep.subr.mxu0 0.0
      %995 = vmatpush1.msra.mxu0 0.0
      %996 = vmatprep.subr.mxu0 0.0
      %997 = vmatpush1.msra.mxu0 0.0
      %998 = vmatprep.subr.mxu0 0.0
      %999 = vmatpush1.msra.mxu0 0.0
      %1000 = vmatprep.mubr.f32.mxu0 0.0
      %1001 = vmatmul.mubr.f32.gmra.mrb[0].mxu0 %v931
      %v1002 = vpop.f32.mrb[0].mxu0
      %v1003 = vadd.f32 %v852, %v1002
      %v1004 = vpop.f32.mrb[0].mxu0
      %1005 = vmatprep.mubr.f32.mxu0 0.0
      %1006 = vmatmul.mubr.f32.gmra.mrb[0].mxu0 %v934
      %v1007 = vpop.f32.mrb[0].mxu0
      %v1008 = vadd.f32 %v857, %v1007
      %v1009 = vpop.f32.mrb[0].mxu0
      %1010 = vdwg.mxu0
      %v1012 = vsel %vm622, %v608, 0
      %v1015 = vsel %vm622, %v609, 0
      %1017 = vmatprep.subr.mxu0 0.0
      %1018 = vmatpush1.msra.mxu0 %v862
      %1019 = vmatprep.subr.mxu0 0.0
      %1020 = vmatpush1.msra.mxu0 %v867
      %1021 = vmatprep.subr.mxu0 0.0
      %1022 = vmatpush1.msra.mxu0 0.0
      %1023 = vmatprep.subr.mxu0 0.0
      %1024 = vmatpush1.msra.mxu0 0.0
      %1025 = vmatprep.subr.mxu0 0.0
      %1026 = vmatpush1.msra.mxu0 0.0
      %1027 = vmatprep.subr.mxu0 0.0
      %1028 = vmatpush1.msra.mxu0 0.0
      %1029 = vmatprep.subr.mxu0 0.0
      %1030 = vmatpush1.msra.mxu0 0.0
      %1031 = vmatprep.subr.mxu0 0.0
      %1032 = vmatpush1.msra.mxu0 0.0
      %1033 = vmatprep.subr.mxu0 0.0
      %1034 = vmatpush1.msra.mxu0 0.0
      %1035 = vmatprep.subr.mxu0 0.0
      %1036 = vmatpush1.msra.mxu0 0.0
      %1037 = vmatprep.subr.mxu0 0.0
      %1038 = vmatpush1.msra.mxu0 0.0
      %1039 = vmatprep.subr.mxu0 0.0
      %1040 = vmatpush1.msra.mxu0 0.0
      %1041 = vmatprep.subr.mxu0 0.0
      %1042 = vmatpush1.msra.mxu0 0.0
      %1043 = vmatprep.subr.mxu0 0.0
      %1044 = vmatpush1.msra.mxu0 0.0
      %1045 = vmatprep.subr.mxu0 0.0
      %1046 = vmatpush1.msra.mxu0 0.0
      %1047 = vmatprep.subr.mxu0 0.0
      %1048 = vmatpush1.msra.mxu0 0.0
      %1049 = vmatprep.subr.mxu0 0.0
      %1050 = vmatpush1.msra.mxu0 0.0
      %1051 = vmatprep.subr.mxu0 0.0
      %1052 = vmatpush1.msra.mxu0 0.0
      %1053 = vmatprep.subr.mxu0 0.0
      %1054 = vmatpush1.msra.mxu0 0.0
      %1055 = vmatprep.subr.mxu0 0.0
      %1056 = vmatpush1.msra.mxu0 0.0
      %1057 = vmatprep.subr.mxu0 0.0
      %1058 = vmatpush1.msra.mxu0 0.0
      %1059 = vmatprep.subr.mxu0 0.0
      %1060 = vmatpush1.msra.mxu0 0.0
      %1061 = vmatprep.subr.mxu0 0.0
      %1062 = vmatpush1.msra.mxu0 0.0
      %1063 = vmatprep.subr.mxu0 0.0
      %1064 = vmatpush1.msra.mxu0 0.0
      %1065 = vmatprep.subr.mxu0 0.0
      %1066 = vmatpush1.msra.mxu0 0.0
      %1067 = vmatprep.subr.mxu0 0.0
      %1068 = vmatpush1.msra.mxu0 0.0
      %1069 = vmatprep.subr.mxu0 0.0
      %1070 = vmatpush1.msra.mxu0 0.0
      %1071 = vmatprep.subr.mxu0 0.0
      %1072 = vmatpush1.msra.mxu0 0.0
      %1073 = vmatprep.subr.mxu0 0.0
      %1074 = vmatpush1.msra.mxu0 0.0
      %1075 = vmatprep.subr.mxu0 0.0
      %1076 = vmatpush1.msra.mxu0 0.0
      %1077 = vmatprep.subr.mxu0 0.0
      %1078 = vmatpush1.msra.mxu0 0.0
      %1079 = vmatprep.subr.mxu0 0.0
      %1080 = vmatpush1.msra.mxu0 0.0
      %1081 = vmatprep.mubr.f32.mxu0 0.0
      %1082 = vmatmul.mubr.f32.gmra.mrb[0].mxu0 %v1012
      %v1083 = vpop.f32.mrb[0].mxu0
      %v1084 = vadd.f32 %v862, %v1083
      %v1085 = vpop.f32.mrb[0].mxu0
      %1086 = vmatprep.mubr.f32.mxu0 0.0
      %1087 = vmatmul.mubr.f32.gmra.mrb[0].mxu0 %v1015
      %v1088 = vpop.f32.mrb[0].mxu0
      %v1089 = vadd.f32 %v867, %v1088
      %v1090 = vpop.f32.mrb[0].mxu0
      %1091 = vdwg.mxu0
      %v1093 = vsel %vm622, %v610, 0
      %v1096 = vsel %vm622, %v611, 0
      %1098 = vmatprep.subr.mxu0 0.0
      %1099 = vmatpush1.msra.mxu0 %v872
      %1100 = vmatprep.subr.mxu0 0.0
      %1101 = vmatpush1.msra.mxu0 %v877
      %1102 = vmatprep.subr.mxu0 0.0
      %1103 = vmatpush1.msra.mxu0 0.0
      %1104 = vmatprep.subr.mxu0 0.0
      %1105 = vmatpush1.msra.mxu0 0.0
      %1106 = vmatprep.subr.mxu0 0.0
      %1107 = vmatpush1.msra.mxu0 0.0
      %1108 = vmatprep.subr.mxu0 0.0
      %1109 = vmatpush1.msra.mxu0 0.0
      %1110 = vmatprep.subr.mxu0 0.0
      %1111 = vmatpush1.msra.mxu0 0.0
      %1112 = vmatprep.subr.mxu0 0.0
      %1113 = vmatpush1.msra.mxu0 0.0
      %1114 = vmatprep.subr.mxu0 0.0
      %1115 = vmatpush1.msra.mxu0 0.0
      %1116 = vmatprep.subr.mxu0 0.0
      %1117 = vmatpush1.msra.mxu0 0.0
      %1118 = vmatprep.subr.mxu0 0.0
      %1119 = vmatpush1.msra.mxu0 0.0
      %1120 = vmatprep.subr.mxu0 0.0
      %1121 = vmatpush1.msra.mxu0 0.0
      %1122 = vmatprep.subr.mxu0 0.0
      %1123 = vmatpush1.msra.mxu0 0.0
      %1124 = vmatprep.subr.mxu0 0.0
      %1125 = vmatpush1.msra.mxu0 0.0
      %1126 = vmatprep.subr.mxu0 0.0
      %1127 = vmatpush1.msra.mxu0 0.0
      %1128 = vmatprep.subr.mxu0 0.0
      %1129 = vmatpush1.msra.mxu0 0.0
      %1130 = vmatprep.subr.mxu0 0.0
      %1131 = vmatpush1.msra.mxu0 0.0
      %1132 = vmatprep.subr.mxu0 0.0
      %1133 = vmatpush1.msra.mxu0 0.0
      %1134 = vmatprep.subr.mxu0 0.0
      %1135 = vmatpush1.msra.mxu0 0.0
      %1136 = vmatprep.subr.mxu0 0.0
      %1137 = vmatpush1.msra.mxu0 0.0
      %1138 = vmatprep.subr.mxu0 0.0
      %1139 = vmatpush1.msra.mxu0 0.0
      %1140 = vmatprep.subr.mxu0 0.0
      %1141 = vmatpush1.msra.mxu0 0.0
      %1142 = vmatprep.subr.mxu0 0.0
      %1143 = vmatpush1.msra.mxu0 0.0
      %1144 = vmatprep.subr.mxu0 0.0
      %1145 = vmatpush1.msra.mxu0 0.0
      %1146 = vmatprep.subr.mxu0 0.0
      %1147 = vmatpush1.msra.mxu0 0.0
      %1148 = vmatprep.subr.mxu0 0.0
      %1149 = vmatpush1.msra.mxu0 0.0
      %1150 = vmatprep.subr.mxu0 0.0
      %1151 = vmatpush1.msra.mxu0 0.0
      %1152 = vmatprep.subr.mxu0 0.0
      %1153 = vmatpush1.msra.mxu0 0.0
      %1154 = vmatprep.subr.mxu0 0.0
      %1155 = vmatpush1.msra.mxu0 0.0
      %1156 = vmatprep.subr.mxu0 0.0
      %1157 = vmatpush1.msra.mxu0 0.0
      %1158 = vmatprep.subr.mxu0 0.0
      %1159 = vmatpush1.msra.mxu0 0.0
      %1160 = vmatprep.subr.mxu0 0.0
      %1161 = vmatpush1.msra.mxu0 0.0
      %1162 = vmatprep.mubr.f32.mxu0 0.0
      %1163 = vmatmul.mubr.f32.gmra.mrb[0].mxu0 %v1093
      %v1164 = vpop.f32.mrb[0].mxu0
      %v1165 = vadd.f32 %v872, %v1164
      %v1166 = vpop.f32.mrb[0].mxu0
      %1167 = vmatprep.mubr.f32.mxu0 0.0
      %1168 = vmatmul.mubr.f32.gmra.mrb[0].mxu0 %v1096
      %v1169 = vpop.f32.mrb[0].mxu0
      %v1170 = vadd.f32 %v877, %v1169
      %v1171 = vpop.f32.mrb[0].mxu0
      %1172 = vdwg.mxu0
      %v1174 = vsel %vm622, %v612, 0
      %v1177 = vsel %vm622, %v613, 0
      %1179 = vmatprep.subr.mxu0 0.0
      %1180 = vmatpush1.msra.mxu0 %v882
      %1181 = vmatprep.subr.mxu0 0.0
      %1182 = vmatpush1.msra.mxu0 %v887
      %1183 = vmatprep.subr.mxu0 0.0
      %1184 = vmatpush1.msra.mxu0 0.0
      %1185 = vmatprep.subr.mxu0 0.0
      %1186 = vmatpush1.msra.mxu0 0.0
      %1187 = vmatprep.subr.mxu0 0.0
      %1188 = vmatpush1.msra.mxu0 0.0
      %1189 = vmatprep.subr.mxu0 0.0
      %1190 = vmatpush1.msra.mxu0 0.0
      %1191 = vmatprep.subr.mxu0 0.0
      %1192 = vmatpush1.msra.mxu0 0.0
      %1193 = vmatprep.subr.mxu0 0.0
      %1194 = vmatpush1.msra.mxu0 0.0
      %1195 = vmatprep.subr.mxu0 0.0
      %1196 = vmatpush1.msra.mxu0 0.0
      %1197 = vmatprep.subr.mxu0 0.0
      %1198 = vmatpush1.msra.mxu0 0.0
      %1199 = vmatprep.subr.mxu0 0.0
      %1200 = vmatpush1.msra.mxu0 0.0
      %1201 = vmatprep.subr.mxu0 0.0
      %1202 = vmatpush1.msra.mxu0 0.0
      %1203 = vmatprep.subr.mxu0 0.0
      %1204 = vmatpush1.msra.mxu0 0.0
      %1205 = vmatprep.subr.mxu0 0.0
      %1206 = vmatpush1.msra.mxu0 0.0
      %1207 = vmatprep.subr.mxu0 0.0
      %1208 = vmatpush1.msra.mxu0 0.0
      %1209 = vmatprep.subr.mxu0 0.0
      %1210 = vmatpush1.msra.mxu0 0.0
      %1211 = vmatprep.subr.mxu0 0.0
      %1212 = vmatpush1.msra.mxu0 0.0
      %1213 = vmatprep.subr.mxu0 0.0
      %1214 = vmatpush1.msra.mxu0 0.0
      %1215 = vmatprep.subr.mxu0 0.0
      %1216 = vmatpush1.msra.mxu0 0.0
      %1217 = vmatprep.subr.mxu0 0.0
      %1218 = vmatpush1.msra.mxu0 0.0
      %1219 = vmatprep.subr.mxu0 0.0
      %1220 = vmatpush1.msra.mxu0 0.0
      %1221 = vmatprep.subr.mxu0 0.0
      %1222 = vmatpush1.msra.mxu0 0.0
      %1223 = vmatprep.subr.mxu0 0.0
      %1224 = vmatpush1.msra.mxu0 0.0
      %1225 = vmatprep.subr.mxu0 0.0
      %1226 = vmatpush1.msra.mxu0 0.0
      %1227 = vmatprep.subr.mxu0 0.0
      %1228 = vmatpush1.msra.mxu0 0.0
      %1229 = vmatprep.subr.mxu0 0.0
      %1230 = vmatpush1.msra.mxu0 0.0
      %1231 = vmatprep.subr.mxu0 0.0
      %1232 = vmatpush1.msra.mxu0 0.0
      %1233 = vmatprep.subr.mxu0 0.0
      %1234 = vmatpush1.msra.mxu0 0.0
      %1235 = vmatprep.subr.mxu0 0.0
      %1236 = vmatpush1.msra.mxu0 0.0
      %1237 = vmatprep.subr.mxu0 0.0
      %1238 = vmatpush1.msra.mxu0 0.0
      %1239 = vmatprep.subr.mxu0 0.0
      %1240 = vmatpush1.msra.mxu0 0.0
      %1241 = vmatprep.subr.mxu0 0.0
      %1242 = vmatpush1.msra.mxu0 0.0
      %1243 = vmatprep.mubr.f32.mxu0 0.0
      %1244 = vmatmul.mubr.f32.gmra.mrb[0].mxu0 %v1174
      %v1245 = vpop.f32.mrb[0].mxu0
      %v1246 = vadd.f32 %v882, %v1245
      %v1247 = vpop.f32.mrb[0].mxu0
      %1248 = vmatprep.mubr.f32.mxu0 0.0
      %1249 = vmatmul.mubr.f32.gmra.mrb[0].mxu0 %v1177
      %v1250 = vpop.f32.mrb[0].mxu0
      %v1251 = vadd.f32 %v887, %v1250
      %v1252 = vpop.f32.mrb[0].mxu0
      %1253 = vdwg.mxu0
      %v1255 = vsel %vm622, %v614, 0
      %v1258 = vsel %vm622, %v615, 0
      %1260 = vmatprep.subr.mxu0 0.0
      %1261 = vmatpush1.msra.mxu0 %v892
      %1262 = vmatprep.subr.mxu0 0.0
      %1263 = vmatpush1.msra.mxu0 %v897
      %1264 = vmatprep.subr.mxu0 0.0
      %1265 = vmatpush1.msra.mxu0 0.0
      %1266 = vmatprep.subr.mxu0 0.0
      %1267 = vmatpush1.msra.mxu0 0.0
      %1268 = vmatprep.subr.mxu0 0.0
      %1269 = vmatpush1.msra.mxu0 0.0
      %1270 = vmatprep.subr.mxu0 0.0
      %1271 = vmatpush1.msra.mxu0 0.0
      %1272 = vmatprep.subr.mxu0 0.0
      %1273 = vmatpush1.msra.mxu0 0.0
      %1274 = vmatprep.subr.mxu0 0.0
      %1275 = vmatpush1.msra.mxu0 0.0
      %1276 = vmatprep.subr.mxu0 0.0
      %1277 = vmatpush1.msra.mxu0 0.0
      %1278 = vmatprep.subr.mxu0 0.0
      %1279 = vmatpush1.msra.mxu0 0.0
      %1280 = vmatprep.subr.mxu0 0.0
      %1281 = vmatpush1.msra.mxu0 0.0
      %1282 = vmatprep.subr.mxu0 0.0
      %1283 = vmatpush1.msra.mxu0 0.0
      %1284 = vmatprep.subr.mxu0 0.0
      %1285 = vmatpush1.msra.mxu0 0.0
      %1286 = vmatprep.subr.mxu0 0.0
      %1287 = vmatpush1.msra.mxu0 0.0
      %1288 = vmatprep.subr.mxu0 0.0
      %1289 = vmatpush1.msra.mxu0 0.0
      %1290 = vmatprep.subr.mxu0 0.0
      %1291 = vmatpush1.msra.mxu0 0.0
      %1292 = vmatprep.subr.mxu0 0.0
      %1293 = vmatpush1.msra.mxu0 0.0
      %1294 = vmatprep.subr.mxu0 0.0
      %1295 = vmatpush1.msra.mxu0 0.0
      %1296 = vmatprep.subr.mxu0 0.0
      %1297 = vmatpush1.msra.mxu0 0.0
      %1298 = vmatprep.subr.mxu0 0.0
      %1299 = vmatpush1.msra.mxu0 0.0
      %1300 = vmatprep.subr.mxu0 0.0
      %1301 = vmatpush1.msra.mxu0 0.0
      %1302 = vmatprep.subr.mxu0 0.0
      %1303 = vmatpush1.msra.mxu0 0.0
      %1304 = vmatprep.subr.mxu0 0.0
      %1305 = vmatpush1.msra.mxu0 0.0
      %1306 = vmatprep.subr.mxu0 0.0
      %1307 = vmatpush1.msra.mxu0 0.0
      %1308 = vmatprep.subr.mxu0 0.0
      %1309 = vmatpush1.msra.mxu0 0.0
      %1310 = vmatprep.subr.mxu0 0.0
      %1311 = vmatpush1.msra.mxu0 0.0
      %1312 = vmatprep.subr.mxu0 0.0
      %1313 = vmatpush1.msra.mxu0 0.0
      %1314 = vmatprep.subr.mxu0 0.0
      %1315 = vmatpush1.msra.mxu0 0.0
      %1316 = vmatprep.subr.mxu0 0.0
      %1317 = vmatpush1.msra.mxu0 0.0
      %1318 = vmatprep.subr.mxu0 0.0
      %1319 = vmatpush1.msra.mxu0 0.0
      %1320 = vmatprep.subr.mxu0 0.0
      %1321 = vmatpush1.msra.mxu0 0.0
      %1322 = vmatprep.subr.mxu0 0.0
      %1323 = vmatpush1.msra.mxu0 0.0
      %1324 = vmatprep.mubr.f32.mxu0 0.0
      %1325 = vmatmul.mubr.f32.gmra.mrb[0].mxu0 %v1255
      %v1326 = vpop.f32.mrb[0].mxu0
      %v1327 = vadd.f32 %v892, %v1326
      %v1328 = vpop.f32.mrb[0].mxu0
      %1329 = vmatprep.mubr.f32.mxu0 0.0
      %1330 = vmatmul.mubr.f32.gmra.mrb[0].mxu0 %v1258
      %v1331 = vpop.f32.mrb[0].mxu0
      %v1332 = vadd.f32 %v897, %v1331
      %v1333 = vpop.f32.mrb[0].mxu0
      %1334 = vdwg.mxu0
      %v1336 = vsel %vm622, %v616, 0
      %v1339 = vsel %vm622, %v617, 0
      %1341 = vmatprep.subr.mxu0 0.0
      %1342 = vmatpush1.msra.mxu0 %v902
      %1343 = vmatprep.subr.mxu0 0.0
      %1344 = vmatpush1.msra.mxu0 %v907
      %1345 = vmatprep.subr.mxu0 0.0
      %1346 = vmatpush1.msra.mxu0 0.0
      %1347 = vmatprep.subr.mxu0 0.0
      %1348 = vmatpush1.msra.mxu0 0.0
      %1349 = vmatprep.subr.mxu0 0.0
      %1350 = vmatpush1.msra.mxu0 0.0
      %1351 = vmatprep.subr.mxu0 0.0
      %1352 = vmatpush1.msra.mxu0 0.0
      %1353 = vmatprep.subr.mxu0 0.0
      %1354 = vmatpush1.msra.mxu0 0.0
      %1355 = vmatprep.subr.mxu0 0.0
      %1356 = vmatpush1.msra.mxu0 0.0
      %1357 = vmatprep.subr.mxu0 0.0
      %1358 = vmatpush1.msra.mxu0 0.0
      %1359 = vmatprep.subr.mxu0 0.0
      %1360 = vmatpush1.msra.mxu0 0.0
      %1361 = vmatprep.subr.mxu0 0.0
      %1362 = vmatpush1.msra.mxu0 0.0
      %1363 = vmatprep.subr.mxu0 0.0
      %1364 = vmatpush1.msra.mxu0 0.0
      %1365 = vmatprep.subr.mxu0 0.0
      %1366 = vmatpush1.msra.mxu0 0.0
      %1367 = vmatprep.subr.mxu0 0.0
      %1368 = vmatpush1.msra.mxu0 0.0
      %1369 = vmatprep.subr.mxu0 0.0
      %1370 = vmatpush1.msra.mxu0 0.0
      %1371 = vmatprep.subr.mxu0 0.0
      %1372 = vmatpush1.msra.mxu0 0.0
      %1373 = vmatprep.subr.mxu0 0.0
      %1374 = vmatpush1.msra.mxu0 0.0
      %1375 = vmatprep.subr.mxu0 0.0
      %1376 = vmatpush1.msra.mxu0 0.0
      %1377 = vmatprep.subr.mxu0 0.0
      %1378 = vmatpush1.msra.mxu0 0.0
      %1379 = vmatprep.subr.mxu0 0.0
      %1380 = vmatpush1.msra.mxu0 0.0
      %1381 = vmatprep.subr.mxu0 0.0
      %1382 = vmatpush1.msra.mxu0 0.0
      %1383 = vmatprep.subr.mxu0 0.0
      %1384 = vmatpush1.msra.mxu0 0.0
      %1385 = vmatprep.subr.mxu0 0.0
      %1386 = vmatpush1.msra.mxu0 0.0
      %1387 = vmatprep.subr.mxu0 0.0
      %1388 = vmatpush1.msra.mxu0 0.0
      %1389 = vmatprep.subr.mxu0 0.0
      %1390 = vmatpush1.msra.mxu0 0.0
      %1391 = vmatprep.subr.mxu0 0.0
      %1392 = vmatpush1.msra.mxu0 0.0
      %1393 = vmatprep.subr.mxu0 0.0
      %1394 = vmatpush1.msra.mxu0 0.0
      %1395 = vmatprep.subr.mxu0 0.0
      %1396 = vmatpush1.msra.mxu0 0.0
      %1397 = vmatprep.subr.mxu0 0.0
      %1398 = vmatpush1.msra.mxu0 0.0
      %1399 = vmatprep.subr.mxu0 0.0
      %1400 = vmatpush1.msra.mxu0 0.0
      %1401 = vmatprep.subr.mxu0 0.0
      %1402 = vmatpush1.msra.mxu0 0.0
      %1403 = vmatprep.subr.mxu0 0.0
      %1404 = vmatpush1.msra.mxu0 0.0
      %1405 = vmatprep.mubr.f32.mxu0 0.0
      %1406 = vmatmul.mubr.f32.gmra.mrb[0].mxu0 %v1336
      %v1407 = vpop.f32.mrb[0].mxu0
      %v1408 = vadd.f32 %v902, %v1407
      %v1409 = vpop.f32.mrb[0].mxu0
      %1410 = vmatprep.mubr.f32.mxu0 0.0
      %1411 = vmatmul.mubr.f32.gmra.mrb[0].mxu0 %v1339
      %v1412 = vpop.f32.mrb[0].mxu0
      %v1413 = vadd.f32 %v907, %v1412
      %v1414 = vpop.f32.mrb[0].mxu0
      %1415 = vdwg.mxu0
      %v1417 = vsel %vm622, %v618, 0
      %v1420 = vsel %vm622, %v619, 0
      %1422 = vmatprep.subr.mxu0 0.0
      %1423 = vmatpush1.msra.mxu0 %v912
      %1424 = vmatprep.subr.mxu0 0.0
      %1425 = vmatpush1.msra.mxu0 %v917
      %1426 = vmatprep.subr.mxu0 0.0
      %1427 = vmatpush1.msra.mxu0 0.0
      %1428 = vmatprep.subr.mxu0 0.0
      %1429 = vmatpush1.msra.mxu0 0.0
      %1430 = vmatprep.subr.mxu0 0.0
      %1431 = vmatpush1.msra.mxu0 0.0
      %1432 = vmatprep.subr.mxu0 0.0
      %1433 = vmatpush1.msra.mxu0 0.0
      %1434 = vmatprep.subr.mxu0 0.0
      %1435 = vmatpush1.msra.mxu0 0.0
      %1436 = vmatprep.subr.mxu0 0.0
      %1437 = vmatpush1.msra.mxu0 0.0
      %1438 = vmatprep.subr.mxu0 0.0
      %1439 = vmatpush1.msra.mxu0 0.0
      %1440 = vmatprep.subr.mxu0 0.0
      %1441 = vmatpush1.msra.mxu0 0.0
      %1442 = vmatprep.subr.mxu0 0.0
      %1443 = vmatpush1.msra.mxu0 0.0
      %1444 = vmatprep.subr.mxu0 0.0
      %1445 = vmatpush1.msra.mxu0 0.0
      %1446 = vmatprep.subr.mxu0 0.0
      %1447 = vmatpush1.msra.mxu0 0.0
      %1448 = vmatprep.subr.mxu0 0.0
      %1449 = vmatpush1.msra.mxu0 0.0
      %1450 = vmatprep.subr.mxu0 0.0
      %1451 = vmatpush1.msra.mxu0 0.0
      %1452 = vmatprep.subr.mxu0 0.0
      %1453 = vmatpush1.msra.mxu0 0.0
      %1454 = vmatprep.subr.mxu0 0.0
      %1455 = vmatpush1.msra.mxu0 0.0
      %1456 = vmatprep.subr.mxu0 0.0
      %1457 = vmatpush1.msra.mxu0 0.0
      %1458 = vmatprep.subr.mxu0 0.0
      %1459 = vmatpush1.msra.mxu0 0.0
      %1460 = vmatprep.subr.mxu0 0.0
      %1461 = vmatpush1.msra.mxu0 0.0
      %1462 = vmatprep.subr.mxu0 0.0
      %1463 = vmatpush1.msra.mxu0 0.0
      %1464 = vmatprep.subr.mxu0 0.0
      %1465 = vmatpush1.msra.mxu0 0.0
      %1466 = vmatprep.subr.mxu0 0.0
      %1467 = vmatpush1.msra.mxu0 0.0
      %1468 = vmatprep.subr.mxu0 0.0
      %1469 = vmatpush1.msra.mxu0 0.0
      %1470 = vmatprep.subr.mxu0 0.0
      %1471 = vmatpush1.msra.mxu0 0.0
      %1472 = vmatprep.subr.mxu0 0.0
      %1473 = vmatpush1.msra.mxu0 0.0
      %1474 = vmatprep.subr.mxu0 0.0
      %1475 = vmatpush1.msra.mxu0 0.0
      %1476 = vmatprep.subr.mxu0 0.0
      %1477 = vmatpush1.msra.mxu0 0.0
      %1478 = vmatprep.subr.mxu0 0.0
      %1479 = vmatpush1.msra.mxu0 0.0
      %1480 = vmatprep.subr.mxu0 0.0
      %1481 = vmatpush1.msra.mxu0 0.0
      %1482 = vmatprep.subr.mxu0 0.0
      %1483 = vmatpush1.msra.mxu0 0.0
      %1484 = vmatprep.subr.mxu0 0.0
      %1485 = vmatpush1.msra.mxu0 0.0
      %1486 = vmatprep.mubr.f32.mxu0 0.0
      %1487 = vmatmul.mubr.f32.gmra.mrb[0].mxu0 %v1417
      %v1488 = vpop.f32.mrb[0].mxu0
      %v1489 = vadd.f32 %v912, %v1488
      %v1490 = vpop.f32.mrb[0].mxu0
      %1491 = vmatprep.mubr.f32.mxu0 0.0
      %1492 = vmatmul.mubr.f32.gmra.mrb[0].mxu0 %v1420
      %v1493 = vpop.f32.mrb[0].mxu0
      %v1494 = vadd.f32 %v917, %v1493
      %v1495 = vpop.f32.mrb[0].mxu0
      %1496 = vdwg.mxu0
      %v1498 = vsel %vm622, %v620, 0
      %v1501 = vsel %vm622, %v621, 0
      %1503 = vmatprep.subr.mxu0 0.0
      %1504 = vmatpush1.msra.mxu0 %v922
      %1505 = vmatprep.subr.mxu0 0.0
      %1506 = vmatpush1.msra.mxu0 %v927
      %1507 = vmatprep.subr.mxu0 0.0
      %1508 = vmatpush1.msra.mxu0 0.0
      %1509 = vmatprep.subr.mxu0 0.0
      %1510 = vmatpush1.msra.mxu0 0.0
      %1511 = vmatprep.subr.mxu0 0.0
      %1512 = vmatpush1.msra.mxu0 0.0
      %1513 = vmatprep.subr.mxu0 0.0
      %1514 = vmatpush1.msra.mxu0 0.0
      %1515 = vmatprep.subr.mxu0 0.0
      %1516 = vmatpush1.msra.mxu0 0.0
      %1517 = vmatprep.subr.mxu0 0.0
      %1518 = vmatpush1.msra.mxu0 0.0
      %1519 = vmatprep.subr.mxu0 0.0
      %1520 = vmatpush1.msra.mxu0 0.0
      %1521 = vmatprep.subr.mxu0 0.0
      %1522 = vmatpush1.msra.mxu0 0.0
      %1523 = vmatprep.subr.mxu0 0.0
      %1524 = vmatpush1.msra.mxu0 0.0
      %1525 = vmatprep.subr.mxu0 0.0
      %1526 = vmatpush1.msra.mxu0 0.0
      %1527 = vmatprep.subr.mxu0 0.0
      %1528 = vmatpush1.msra.mxu0 0.0
      %1529 = vmatprep.subr.mxu0 0.0
      %1530 = vmatpush1.msra.mxu0 0.0
      %1531 = vmatprep.subr.mxu0 0.0
      %1532 = vmatpush1.msra.mxu0 0.0
      %1533 = vmatprep.subr.mxu0 0.0
      %1534 = vmatpush1.msra.mxu0 0.0
      %1535 = vmatprep.subr.mxu0 0.0
      %1536 = vmatpush1.msra.mxu0 0.0
      %1537 = vmatprep.subr.mxu0 0.0
      %1538 = vmatpush1.msra.mxu0 0.0
      %1539 = vmatprep.subr.mxu0 0.0
      %1540 = vmatpush1.msra.mxu0 0.0
      %1541 = vmatprep.subr.mxu0 0.0
      %1542 = vmatpush1.msra.mxu0 0.0
      %1543 = vmatprep.subr.mxu0 0.0
      %1544 = vmatpush1.msra.mxu0 0.0
      %1545 = vmatprep.subr.mxu0 0.0
      %1546 = vmatpush1.msra.mxu0 0.0
      %1547 = vmatprep.subr.mxu0 0.0
      %1548 = vmatpush1.msra.mxu0 0.0
      %1549 = vmatprep.subr.mxu0 0.0
      %1550 = vmatpush1.msra.mxu0 0.0
      %1551 = vmatprep.subr.mxu0 0.0
      %1552 = vmatpush1.msra.mxu0 0.0
      %1553 = vmatprep.subr.mxu0 0.0
      %1554 = vmatpush1.msra.mxu0 0.0
      %1555 = vmatprep.subr.mxu0 0.0
      %1556 = vmatpush1.msra.mxu0 0.0
      %1557 = vmatprep.subr.mxu0 0.0
      %1558 = vmatpush1.msra.mxu0 0.0
      %1559 = vmatprep.subr.mxu0 0.0
      %1560 = vmatpush1.msra.mxu0 0.0
      %1561 = vmatprep.subr.mxu0 0.0
      %1562 = vmatpush1.msra.mxu0 0.0
      %1563 = vmatprep.subr.mxu0 0.0
      %1564 = vmatpush1.msra.mxu0 0.0
      %1565 = vmatprep.subr.mxu0 0.0
      %1566 = vmatpush1.msra.mxu0 0.0
      %1567 = vmatprep.mubr.f32.mxu0 0.0
      %1568 = vmatmul.mubr.f32.gmra.mrb[0].mxu0 %v1498
      %v1569 = vpop.f32.mrb[0].mxu0
      %v1570 = vadd.f32 %v922, %v1569
      %v1571 = vpop.f32.mrb[0].mxu0
      %1572 = vmatprep.mubr.f32.mxu0 0.0
      %1573 = vmatmul.mubr.f32.gmra.mrb[0].mxu0 %v1501
      %v1574 = vpop.f32.mrb[0].mxu0
      %v1575 = vadd.f32 %v927, %v1574
      %v1576 = vpop.f32.mrb[0].mxu0
      %1577 = vdwg.mxu0
      %v1578 = vld [vmem:[%s3] sm:$0x1]
      %v1580 = vlaneseq
      %v1581 = vshrl.u32 %v1580, 7
      %v1582 = vsub.s32 0, %v1581
      %v1583 = vrot.slane %v1578, %v1582
      %v1585 = vadd.f32 %v1003, %v1583
      %v1586 = vadd.f32 %v1008, %v1583
      %v1587 = vadd.f32 %v1084, %v1583
      %v1588 = vadd.f32 %v1089, %v1583
      %v1589 = vadd.f32 %v1165, %v1583
      %v1590 = vadd.f32 %v1170, %v1583
      %v1591 = vadd.f32 %v1246, %v1583
      %v1592 = vadd.f32 %v1251, %v1583
      %v1593 = vadd.f32 %v1327, %v1583
      %v1594 = vadd.f32 %v1332, %v1583
      %v1595 = vadd.f32 %v1408, %v1583
      %v1596 = vadd.f32 %v1413, %v1583
      %v1597 = vadd.f32 %v1489, %v1583
      %v1598 = vadd.f32 %v1494, %v1583
      %v1599 = vadd.f32 %v1570, %v1583
      %v1600 = vadd.f32 %v1575, %v1583
      %v1601 = vmul.f32 %v1585, %v688
      %v1602 = vmul.f32 %v1586, %v690
      %v1603 = vmul.f32 %v1587, %v692
      %v1604 = vmul.f32 %v1588, %v694
      %v1605 = vmul.f32 %v1589, %v696
      %v1606 = vmul.f32 %v1590, %v698
      %v1607 = vmul.f32 %v1591, %v700
      %v1608 = vmul.f32 %v1592, %v702
      %v1609 = vmul.f32 %v1593, %v704
      %v1610 = vmul.f32 %v1594, %v706
      %v1611 = vmul.f32 %v1595, %v708
      %v1612 = vmul.f32 %v1596, %v710
      %v1613 = vmul.f32 %v1597, %v712
      %v1614 = vmul.f32 %v1598, %v714
      %v1615 = vmul.f32 %v1599, %v716
      %v1616 = vmul.f32 %v1600, %v718
      %v1617 = vtanh.pop %v1601
      %v1618 = vtanh.pop %v1602
      %v1619 = vtanh.pop %v1603
      %v1620 = vtanh.pop %v1604
      %v1621 = vtanh.pop %v1605
      %v1622 = vtanh.pop %v1606
      %v1623 = vtanh.pop %v1607
      %v1624 = vtanh.pop %v1608
      %v1625 = vtanh.pop %v1609
      %v1626 = vtanh.pop %v1610
      %v1627 = vtanh.pop %v1611
      %v1628 = vtanh.pop %v1612
      %v1629 = vtanh.pop %v1613
      %v1630 = vtanh.pop %v1614
      %v1631 = vtanh.pop %v1615
      %v1632 = vtanh.pop %v1616
      %v1633 = vld [vmem:[%s4] sm:$0xff]
      %v1634 = vld [vmem:[%s4 + $0x8] sm:$0xff]
      %v1635 = vld [vmem:[%s4 + $0x10] sm:$0xff]
      %v1636 = vld [vmem:[%s4 + $0x18] sm:$0xff]
      %vm1637 = vcmask 261120
      %v1639 = vsel %vm1637, %v1617, 0
      %v1642 = vsel %vm1637, %v1618, 0
      %v1645 = vsel %vm1637, %v1619, 0
      %v1648 = vsel %vm1637, %v1620, 0
      %v1651 = vsel %vm1637, %v1621, 0
      %v1654 = vsel %vm1637, %v1622, 0
      %v1657 = vsel %vm1637, %v1623, 0
      %v1660 = vsel %vm1637, %v1624, 0
      %v1663 = vsel %vm1637, %v1625, 0
      %v1666 = vsel %vm1637, %v1626, 0
      %v1669 = vsel %vm1637, %v1627, 0
      %v1672 = vsel %vm1637, %v1628, 0
      %v1675 = vsel %vm1637, %v1629, 0
      %v1678 = vsel %vm1637, %v1630, 0
      %v1681 = vsel %vm1637, %v1631, 0
      %v1684 = vsel %vm1637, %v1632, 0
      %1686 = vmatprep.subr.mxu0 0.0
      %1687 = vmatpush1.msra.mxu0 %v1633
      %1688 = vmatprep.subr.mxu0 0.0
      %1689 = vmatpush1.msra.mxu0 %v1634
      %1690 = vmatprep.subr.mxu0 0.0
      %1691 = vmatpush1.msra.mxu0 %v1635
      %1692 = vmatprep.subr.mxu0 0.0
      %1693 = vmatpush1.msra.mxu0 %v1636
      %1694 = vmatprep.subr.mxu0 0.0
      %1695 = vmatpush1.msra.mxu0 0.0
      %1696 = vmatprep.subr.mxu0 0.0
      %1697 = vmatpush1.msra.mxu0 0.0
      %1698 = vmatprep.subr.mxu0 0.0
      %1699 = vmatpush1.msra.mxu0 0.0
      %1700 = vmatprep.subr.mxu0 0.0
      %1701 = vmatpush1.msra.mxu0 0.0
      %1702 = vmatprep.subr.mxu0 0.0
      %1703 = vmatpush1.msra.mxu0 0.0
      %1704 = vmatprep.subr.mxu0 0.0
      %1705 = vmatpush1.msra.mxu0 0.0
      %1706 = vmatprep.subr.mxu0 0.0
      %1707 = vmatpush1.msra.mxu0 0.0
      %1708 = vmatprep.subr.mxu0 0.0
      %1709 = vmatpush1.msra.mxu0 0.0
      %1710 = vmatprep.subr.mxu0 0.0
      %1711 = vmatpush1.msra.mxu0 0.0
      %1712 = vmatprep.subr.mxu0 0.0
      %1713 = vmatpush1.msra.mxu0 0.0
      %1714 = vmatprep.subr.mxu0 0.0
      %1715 = vmatpush1.msra.mxu0 0.0
      %1716 = vmatprep.subr.mxu0 0.0
      %1717 = vmatpush1.msra.mxu0 0.0
      %1718 = vmatprep.subr.mxu0 0.0
      %1719 = vmatpush1.msra.mxu0 0.0
      %1720 = vmatprep.subr.mxu0 0.0
      %1721 = vmatpush1.msra.mxu0 0.0
      %1722 = vmatprep.subr.mxu0 0.0
      %1723 = vmatpush1.msra.mxu0 0.0
      %1724 = vmatprep.subr.mxu0 0.0
      %1725 = vmatpush1.msra.mxu0 0.0
      %1726 = vmatprep.subr.mxu0 0.0
      %1727 = vmatpush1.msra.mxu0 0.0
      %1728 = vmatprep.subr.mxu0 0.0
      %1729 = vmatpush1.msra.mxu0 0.0
      %1730 = vmatprep.subr.mxu0 0.0
      %1731 = vmatpush1.msra.mxu0 0.0
      %1732 = vmatprep.subr.mxu0 0.0
      %1733 = vmatpush1.msra.mxu0 0.0
      %1734 = vmatprep.subr.mxu0 0.0
      %1735 = vmatpush1.msra.mxu0 0.0
      %1736 = vmatprep.subr.mxu0 0.0
      %1737 = vmatpush1.msra.mxu0 0.0
      %1738 = vmatprep.subr.mxu0 0.0
      %1739 = vmatpush1.msra.mxu0 0.0
      %1740 = vmatprep.subr.mxu0 0.0
      %1741 = vmatpush1.msra.mxu0 0.0
      %1742 = vmatprep.subr.mxu0 0.0
      %1743 = vmatpush1.msra.mxu0 0.0
      %1744 = vmatprep.subr.mxu0 0.0
      %1745 = vmatpush1.msra.mxu0 0.0
      %1746 = vmatprep.subr.mxu0 0.0
      %1747 = vmatpush1.msra.mxu0 0.0
      %1748 = vmatprep.subr.mxu0 0.0
      %1749 = vmatpush1.msra.mxu0 0.0
      %1750 = vmatprep.mubr.f32.mxu0 0.0
      %1751 = vmatmul.mubr.f32.gmra.mrb[0].mxu0 %v1639
      %v1752 = vpop.f32.mrb[0].mxu0
      %v1753 = vadd.f32 0.0, %v1752
      %v1754 = vpop.f32.mrb[0].mxu0
      %1755 = vmatprep.mubr.f32.mxu0 0.0
      %1756 = vmatmul.mubr.f32.gmra.mrb[0].mxu0 %v1642
      %v1757 = vpop.f32.mrb[0].mxu0
      %v1758 = vadd.f32 0.0, %v1757
      %v1759 = vpop.f32.mrb[0].mxu0
      %1760 = vmatprep.mubr.f32.mxu0 0.0
      %1761 = vmatmul.mubr.f32.gmra.mrb[0].mxu0 %v1645
      %v1762 = vpop.f32.mrb[0].mxu0
      %v1763 = vadd.f32 0.0, %v1762
      %v1764 = vpop.f32.mrb[0].mxu0
      %1765 = vmatprep.mubr.f32.mxu0 0.0
      %1766 = vmatmul.mubr.f32.gmra.mrb[0].mxu0 %v1648
      %v1767 = vpop.f32.mrb[0].mxu0
      %v1768 = vadd.f32 0.0, %v1767
      %v1769 = vpop.f32.mrb[0].mxu0
      %1770 = vmatprep.mubr.f32.mxu0 0.0
      %1771 = vmatmul.mubr.f32.gmra.mrb[0].mxu0 %v1651
      %v1772 = vpop.f32.mrb[0].mxu0
      %v1773 = vadd.f32 0.0, %v1772
      %v1774 = vpop.f32.mrb[0].mxu0
      %1775 = vmatprep.mubr.f32.mxu0 0.0
      %1776 = vmatmul.mubr.f32.gmra.mrb[0].mxu0 %v1654
      %v1777 = vpop.f32.mrb[0].mxu0
      %v1778 = vadd.f32 0.0, %v1777
      %v1779 = vpop.f32.mrb[0].mxu0
      %1780 = vmatprep.mubr.f32.mxu0 0.0
      %1781 = vmatmul.mubr.f32.gmra.mrb[0].mxu0 %v1657
      %v1782 = vpop.f32.mrb[0].mxu0
      %v1783 = vadd.f32 0.0, %v1782
      %v1784 = vpop.f32.mrb[0].mxu0
      %1785 = vmatprep.mubr.f32.mxu0 0.0
      %1786 = vmatmul.mubr.f32.gmra.mrb[0].mxu0 %v1660
      %v1787 = vpop.f32.mrb[0].mxu0
      %v1788 = vadd.f32 0.0, %v1787
      %v1789 = vpop.f32.mrb[0].mxu0
      %1790 = vmatprep.mubr.f32.mxu0 0.0
      %1791 = vmatmul.mubr.f32.gmra.mrb[0].mxu0 %v1663
      %v1792 = vpop.f32.mrb[0].mxu0
      %v1793 = vadd.f32 0.0, %v1792
      %v1794 = vpop.f32.mrb[0].mxu0
      %1795 = vmatprep.mubr.f32.mxu0 0.0
      %1796 = vmatmul.mubr.f32.gmra.mrb[0].mxu0 %v1666
      %v1797 = vpop.f32.mrb[0].mxu0
      %v1798 = vadd.f32 0.0, %v1797
      %v1799 = vpop.f32.mrb[0].mxu0
      %1800 = vmatprep.mubr.f32.mxu0 0.0
      %1801 = vmatmul.mubr.f32.gmra.mrb[0].mxu0 %v1669
      %v1802 = vpop.f32.mrb[0].mxu0
      %v1803 = vadd.f32 0.0, %v1802
      %v1804 = vpop.f32.mrb[0].mxu0
      %1805 = vmatprep.mubr.f32.mxu0 0.0
      %1806 = vmatmul.mubr.f32.gmra.mrb[0].mxu0 %v1672
      %v1807 = vpop.f32.mrb[0].mxu0
      %v1808 = vadd.f32 0.0, %v1807
      %v1809 = vpop.f32.mrb[0].mxu0
      %1810 = vmatprep.mubr.f32.mxu0 0.0
      %1811 = vmatmul.mubr.f32.gmra.mrb[0].mxu0 %v1675
      %v1812 = vpop.f32.mrb[0].mxu0
      %v1813 = vadd.f32 0.0, %v1812
      %v1814 = vpop.f32.mrb[0].mxu0
      %1815 = vmatprep.mubr.f32.mxu0 0.0
      %1816 = vmatmul.mubr.f32.gmra.mrb[0].mxu0 %v1678
      %v1817 = vpop.f32.mrb[0].mxu0
      %v1818 = vadd.f32 0.0, %v1817
      %v1819 = vpop.f32.mrb[0].mxu0
      %1820 = vmatprep.mubr.f32.mxu0 0.0
      %1821 = vmatmul.mubr.f32.gmra.mrb[0].mxu0 %v1681
      %v1822 = vpop.f32.mrb[0].mxu0
      %v1823 = vadd.f32 0.0, %v1822
      %v1824 = vpop.f32.mrb[0].mxu0
      %1825 = vmatprep.mubr.f32.mxu0 0.0
      %1826 = vmatmul.mubr.f32.gmra.mrb[0].mxu0 %v1684
      %v1827 = vpop.f32.mrb[0].mxu0
      %v1828 = vadd.f32 0.0, %v1827
      %v1829 = vpop.f32.mrb[0].mxu0
      %1830 = vdwg.mxu0
      %1831 = vmatprep.subr.mxu0 0.0
      %1832 = vmatpush1.msra.mxu0 %v1753
      %1833 = vmatprep.subr.mxu0 0.0
      %1834 = vmatpush1.msra.mxu0 %v1758
      %1835 = vmatprep.subr.mxu0 0.0
      %1836 = vmatpush1.msra.mxu0 0.0
      %1837 = vmatprep.subr.mxu0 0.0
      %1838 = vmatpush1.msra.mxu0 0.0
      %1839 = vmatprep.subr.mxu0 0.0
      %1840 = vmatpush1.msra.mxu0 0.0
      %1841 = vmatprep.subr.mxu0 0.0
      %1842 = vmatpush1.msra.mxu0 0.0
      %1843 = vmatprep.subr.mxu0 0.0
      %1844 = vmatpush1.msra.mxu0 0.0
      %1845 = vmatprep.subr.mxu0 0.0
      %1846 = vmatpush1.msra.mxu0 0.0
      %1847 = vmatprep.subr.mxu0 0.0
      %1848 = vmatpush1.msra.mxu0 0.0
      %1849 = vmatprep.subr.mxu0 0.0
      %1850 = vmatpush1.msra.mxu0 0.0
      %1851 = vmatprep.subr.mxu0 0.0
      %1852 = vmatpush1.msra.mxu0 0.0
      %1853 = vmatprep.subr.mxu0 0.0
      %1854 = vmatpush1.msra.mxu0 0.0
      %1855 = vmatprep.subr.mxu0 0.0
      %1856 = vmatpush1.msra.mxu0 0.0
      %1857 = vmatprep.subr.mxu0 0.0
      %1858 = vmatpush1.msra.mxu0 0.0
      %1859 = vmatprep.subr.mxu0 0.0
      %1860 = vmatpush1.msra.mxu0 0.0
      %1861 = vmatprep.subr.mxu0 0.0
      %1862 = vmatpush1.msra.mxu0 0.0
      %1863 = vmatprep.subr.mxu0 0.0
      %1864 = vmatpush1.msra.mxu0 0.0
      %1865 = vmatprep.subr.mxu0 0.0
      %1866 = vmatpush1.msra.mxu0 0.0
      %1867 = vmatprep.subr.mxu0 0.0
      %1868 = vmatpush1.msra.mxu0 0.0
      %1869 = vmatprep.subr.mxu0 0.0
      %1870 = vmatpush1.msra.mxu0 0.0
      %1871 = vmatprep.subr.mxu0 0.0
      %1872 = vmatpush1.msra.mxu0 0.0
      %1873 = vmatprep.subr.mxu0 0.0
      %1874 = vmatpush1.msra.mxu0 0.0
      %1875 = vmatprep.subr.mxu0 0.0
      %1876 = vmatpush1.msra.mxu0 0.0
      %1877 = vmatprep.subr.mxu0 0.0
      %1878 = vmatpush1.msra.mxu0 0.0
      %1879 = vmatprep.subr.mxu0 0.0
      %1880 = vmatpush1.msra.mxu0 0.0
      %1881 = vmatprep.subr.mxu0 0.0
      %1882 = vmatpush1.msra.mxu0 0.0
      %1883 = vmatprep.subr.mxu0 0.0
      %1884 = vmatpush1.msra.mxu0 0.0
      %1885 = vmatprep.subr.mxu0 0.0
      %1886 = vmatpush1.msra.mxu0 0.0
      %1887 = vmatprep.subr.mxu0 0.0
      %1888 = vmatpush1.msra.mxu0 0.0
      %1889 = vmatprep.subr.mxu0 0.0
      %1890 = vmatpush1.msra.mxu0 0.0
      %1891 = vmatprep.subr.mxu0 0.0
      %1892 = vmatpush1.msra.mxu0 0.0
      %1893 = vmatprep.subr.mxu0 0.0
      %1894 = vmatpush1.msra.mxu0 0.0
      %1895 = vmatprep.mubr.f32.mxu0 0.0
      %1896 = vmatmul.mubr.f32.gmra.mrb[0].mxu0 %v931
      %v1897 = vpop.f32.mrb[0].mxu0
      %v1898 = vadd.f32 %v1753, %v1897
      %v1899 = vpop.f32.mrb[0].mxu0
      %1900 = vmatprep.mubr.f32.mxu0 0.0
      %1901 = vmatmul.mubr.f32.gmra.mrb[0].mxu0 %v934
      %v1902 = vpop.f32.mrb[0].mxu0
      %v1903 = vadd.f32 %v1758, %v1902
      %v1904 = vpop.f32.mrb[0].mxu0
      %1905 = vdwg.mxu0
      %1906 = vmatprep.subr.mxu0 0.0
      %1907 = vmatpush1.msra.mxu0 %v1763
      %1908 = vmatprep.subr.mxu0 0.0
      %1909 = vmatpush1.msra.mxu0 %v1768
      %1910 = vmatprep.subr.mxu0 0.0
      %1911 = vmatpush1.msra.mxu0 0.0
      %1912 = vmatprep.subr.mxu0 0.0
      %1913 = vmatpush1.msra.mxu0 0.0
      %1914 = vmatprep.subr.mxu0 0.0
      %1915 = vmatpush1.msra.mxu0 0.0
      %1916 = vmatprep.subr.mxu0 0.0
      %1917 = vmatpush1.msra.mxu0 0.0
      %1918 = vmatprep.subr.mxu0 0.0
      %1919 = vmatpush1.msra.mxu0 0.0
      %1920 = vmatprep.subr.mxu0 0.0
      %1921 = vmatpush1.msra.mxu0 0.0
      %1922 = vmatprep.subr.mxu0 0.0
      %1923 = vmatpush1.msra.mxu0 0.0
      %1924 = vmatprep.subr.mxu0 0.0
      %1925 = vmatpush1.msra.mxu0 0.0
      %1926 = vmatprep.subr.mxu0 0.0
      %1927 = vmatpush1.msra.mxu0 0.0
      %1928 = vmatprep.subr.mxu0 0.0
      %1929 = vmatpush1.msra.mxu0 0.0
      %1930 = vmatprep.subr.mxu0 0.0
      %1931 = vmatpush1.msra.mxu0 0.0
      %1932 = vmatprep.subr.mxu0 0.0
      %1933 = vmatpush1.msra.mxu0 0.0
      %1934 = vmatprep.subr.mxu0 0.0
      %1935 = vmatpush1.msra.mxu0 0.0
      %1936 = vmatprep.subr.mxu0 0.0
      %1937 = vmatpush1.msra.mxu0 0.0
      %1938 = vmatprep.subr.mxu0 0.0
      %1939 = vmatpush1.msra.mxu0 0.0
      %1940 = vmatprep.subr.mxu0 0.0
      %1941 = vmatpush1.msra.mxu0 0.0
      %1942 = vmatprep.subr.mxu0 0.0
      %1943 = vmatpush1.msra.mxu0 0.0
      %1944 = vmatprep.subr.mxu0 0.0
      %1945 = vmatpush1.msra.mxu0 0.0
      %1946 = vmatprep.subr.mxu0 0.0
      %1947 = vmatpush1.msra.mxu0 0.0
      %1948 = vmatprep.subr.mxu0 0.0
      %1949 = vmatpush1.msra.mxu0 0.0
      %1950 = vmatprep.subr.mxu0 0.0
      %1951 = vmatpush1.msra.mxu0 0.0
      %1952 = vmatprep.subr.mxu0 0.0
      %1953 = vmatpush1.msra.mxu0 0.0
      %1954 = vmatprep.subr.mxu0 0.0
      %1955 = vmatpush1.msra.mxu0 0.0
      %1956 = vmatprep.subr.mxu0 0.0
      %1957 = vmatpush1.msra.mxu0 0.0
      %1958 = vmatprep.subr.mxu0 0.0
      %1959 = vmatpush1.msra.mxu0 0.0
      %1960 = vmatprep.subr.mxu0 0.0
      %1961 = vmatpush1.msra.mxu0 0.0
      %1962 = vmatprep.subr.mxu0 0.0
      %1963 = vmatpush1.msra.mxu0 0.0
      %1964 = vmatprep.subr.mxu0 0.0
      %1965 = vmatpush1.msra.mxu0 0.0
      %1966 = vmatprep.subr.mxu0 0.0
      %1967 = vmatpush1.msra.mxu0 0.0
      %1968 = vmatprep.subr.mxu0 0.0
      %1969 = vmatpush1.msra.mxu0 0.0
      %1970 = vmatprep.mubr.f32.mxu0 0.0
      %1971 = vmatmul.mubr.f32.gmra.mrb[0].mxu0 %v1012
      %v1972 = vpop.f32.mrb[0].mxu0
      %v1973 = vadd.f32 %v1763, %v1972
      %v1974 = vpop.f32.mrb[0].mxu0
      %1975 = vmatprep.mubr.f32.mxu0 0.0
      %1976 = vmatmul.mubr.f32.gmra.mrb[0].mxu0 %v1015
      %v1977 = vpop.f32.mrb[0].mxu0
      %v1978 = vadd.f32 %v1768, %v1977
      %v1979 = vpop.f32.mrb[0].mxu0
      %1980 = vdwg.mxu0
      %1981 = vmatprep.subr.mxu0 0.0
      %1982 = vmatpush1.msra.mxu0 %v1773
      %1983 = vmatprep.subr.mxu0 0.0
      %1984 = vmatpush1.msra.mxu0 %v1778
      %1985 = vmatprep.subr.mxu0 0.0
      %1986 = vmatpush1.msra.mxu0 0.0
      %1987 = vmatprep.subr.mxu0 0.0
      %1988 = vmatpush1.msra.mxu0 0.0
      %1989 = vmatprep.subr.mxu0 0.0
      %1990 = vmatpush1.msra.mxu0 0.0
      %1991 = vmatprep.subr.mxu0 0.0
      %1992 = vmatpush1.msra.mxu0 0.0
      %1993 = vmatprep.subr.mxu0 0.0
      %1994 = vmatpush1.msra.mxu0 0.0
      %1995 = vmatprep.subr.mxu0 0.0
      %1996 = vmatpush1.msra.mxu0 0.0
      %1997 = vmatprep.subr.mxu0 0.0
      %1998 = vmatpush1.msra.mxu0 0.0
      %1999 = vmatprep.subr.mxu0 0.0
      %2000 = vmatpush1.msra.mxu0 0.0
      %2001 = vmatprep.subr.mxu0 0.0
      %2002 = vmatpush1.msra.mxu0 0.0
      %2003 = vmatprep.subr.mxu0 0.0
      %2004 = vmatpush1.msra.mxu0 0.0
      %2005 = vmatprep.subr.mxu0 0.0
      %2006 = vmatpush1.msra.mxu0 0.0
      %2007 = vmatprep.subr.mxu0 0.0
      %2008 = vmatpush1.msra.mxu0 0.0
      %2009 = vmatprep.subr.mxu0 0.0
      %2010 = vmatpush1.msra.mxu0 0.0
      %2011 = vmatprep.subr.mxu0 0.0
      %2012 = vmatpush1.msra.mxu0 0.0
      %2013 = vmatprep.subr.mxu0 0.0
      %2014 = vmatpush1.msra.mxu0 0.0
      %2015 = vmatprep.subr.mxu0 0.0
      %2016 = vmatpush1.msra.mxu0 0.0
      %2017 = vmatprep.subr.mxu0 0.0
      %2018 = vmatpush1.msra.mxu0 0.0
      %2019 = vmatprep.subr.mxu0 0.0
      %2020 = vmatpush1.msra.mxu0 0.0
      %2021 = vmatprep.subr.mxu0 0.0
      %2022 = vmatpush1.msra.mxu0 0.0
      %2023 = vmatprep.subr.mxu0 0.0
      %2024 = vmatpush1.msra.mxu0 0.0
      %2025 = vmatprep.subr.mxu0 0.0
      %2026 = vmatpush1.msra.mxu0 0.0
      %2027 = vmatprep.subr.mxu0 0.0
      %2028 = vmatpush1.msra.mxu0 0.0
      %2029 = vmatprep.subr.mxu0 0.0
      %2030 = vmatpush1.msra.mxu0 0.0
      %2031 = vmatprep.subr.mxu0 0.0
      %2032 = vmatpush1.msra.mxu0 0.0
      %2033 = vmatprep.subr.mxu0 0.0
      %2034 = vmatpush1.msra.mxu0 0.0
      %2035 = vmatprep.subr.mxu0 0.0
      %2036 = vmatpush1.msra.mxu0 0.0
      %2037 = vmatprep.subr.mxu0 0.0
      %2038 = vmatpush1.msra.mxu0 0.0
      %2039 = vmatprep.subr.mxu0 0.0
      %2040 = vmatpush1.msra.mxu0 0.0
      %2041 = vmatprep.subr.mxu0 0.0
      %2042 = vmatpush1.msra.mxu0 0.0
      %2043 = vmatprep.subr.mxu0 0.0
      %2044 = vmatpush1.msra.mxu0 0.0
      %2045 = vmatprep.mubr.f32.mxu0 0.0
      %2046 = vmatmul.mubr.f32.gmra.mrb[0].mxu0 %v1093
      %v2047 = vpop.f32.mrb[0].mxu0
      %v2048 = vadd.f32 %v1773, %v2047
      %v2049 = vpop.f32.mrb[0].mxu0
      %2050 = vmatprep.mubr.f32.mxu0 0.0
      %2051 = vmatmul.mubr.f32.gmra.mrb[0].mxu0 %v1096
      %v2052 = vpop.f32.mrb[0].mxu0
      %v2053 = vadd.f32 %v1778, %v2052
      %v2054 = vpop.f32.mrb[0].mxu0
      %2055 = vdwg.mxu0
      %2056 = vmatprep.subr.mxu0 0.0
      %2057 = vmatpush1.msra.mxu0 %v1783
      %2058 = vmatprep.subr.mxu0 0.0
      %2059 = vmatpush1.msra.mxu0 %v1788
      %2060 = vmatprep.subr.mxu0 0.0
      %2061 = vmatpush1.msra.mxu0 0.0
      %2062 = vmatprep.subr.mxu0 0.0
      %2063 = vmatpush1.msra.mxu0 0.0
      %2064 = vmatprep.subr.mxu0 0.0
      %2065 = vmatpush1.msra.mxu0 0.0
      %2066 = vmatprep.subr.mxu0 0.0
      %2067 = vmatpush1.msra.mxu0 0.0
      %2068 = vmatprep.subr.mxu0 0.0
      %2069 = vmatpush1.msra.mxu0 0.0
      %2070 = vmatprep.subr.mxu0 0.0
      %2071 = vmatpush1.msra.mxu0 0.0
      %2072 = vmatprep.subr.mxu0 0.0
      %2073 = vmatpush1.msra.mxu0 0.0
      %2074 = vmatprep.subr.mxu0 0.0
      %2075 = vmatpush1.msra.mxu0 0.0
      %2076 = vmatprep.subr.mxu0 0.0
      %2077 = vmatpush1.msra.mxu0 0.0
      %2078 = vmatprep.subr.mxu0 0.0
      %2079 = vmatpush1.msra.mxu0 0.0
      %2080 = vmatprep.subr.mxu0 0.0
      %2081 = vmatpush1.msra.mxu0 0.0
      %2082 = vmatprep.subr.mxu0 0.0
      %2083 = vmatpush1.msra.mxu0 0.0
      %2084 = vmatprep.subr.mxu0 0.0
      %2085 = vmatpush1.msra.mxu0 0.0
      %2086 = vmatprep.subr.mxu0 0.0
      %2087 = vmatpush1.msra.mxu0 0.0
      %2088 = vmatprep.subr.mxu0 0.0
      %2089 = vmatpush1.msra.mxu0 0.0
      %2090 = vmatprep.subr.mxu0 0.0
      %2091 = vmatpush1.msra.mxu0 0.0
      %2092 = vmatprep.subr.mxu0 0.0
      %2093 = vmatpush1.msra.mxu0 0.0
      %2094 = vmatprep.subr.mxu0 0.0
      %2095 = vmatpush1.msra.mxu0 0.0
      %2096 = vmatprep.subr.mxu0 0.0
      %2097 = vmatpush1.msra.mxu0 0.0
      %2098 = vmatprep.subr.mxu0 0.0
      %2099 = vmatpush1.msra.mxu0 0.0
      %2100 = vmatprep.subr.mxu0 0.0
      %2101 = vmatpush1.msra.mxu0 0.0
      %2102 = vmatprep.subr.mxu0 0.0
      %2103 = vmatpush1.msra.mxu0 0.0
      %2104 = vmatprep.subr.mxu0 0.0
      %2105 = vmatpush1.msra.mxu0 0.0
      %2106 = vmatprep.subr.mxu0 0.0
      %2107 = vmatpush1.msra.mxu0 0.0
      %2108 = vmatprep.subr.mxu0 0.0
      %2109 = vmatpush1.msra.mxu0 0.0
      %2110 = vmatprep.subr.mxu0 0.0
      %2111 = vmatpush1.msra.mxu0 0.0
      %2112 = vmatprep.subr.mxu0 0.0
      %2113 = vmatpush1.msra.mxu0 0.0
      %2114 = vmatprep.subr.mxu0 0.0
      %2115 = vmatpush1.msra.mxu0 0.0
      %2116 = vmatprep.subr.mxu0 0.0
      %2117 = vmatpush1.msra.mxu0 0.0
      %2118 = vmatprep.subr.mxu0 0.0
      %2119 = vmatpush1.msra.mxu0 0.0
      %2120 = vmatprep.mubr.f32.mxu0 0.0
      %2121 = vmatmul.mubr.f32.gmra.mrb[0].mxu0 %v1174
      %v2122 = vpop.f32.mrb[0].mxu0
      %v2123 = vadd.f32 %v1783, %v2122
      %v2124 = vpop.f32.mrb[0].mxu0
      %2125 = vmatprep.mubr.f32.mxu0 0.0
      %2126 = vmatmul.mubr.f32.gmra.mrb[0].mxu0 %v1177
      %v2127 = vpop.f32.mrb[0].mxu0
      %v2128 = vadd.f32 %v1788, %v2127
      %v2129 = vpop.f32.mrb[0].mxu0
      %2130 = vdwg.mxu0
      %2131 = vmatprep.subr.mxu0 0.0
      %2132 = vmatpush1.msra.mxu0 %v1793
      %2133 = vmatprep.subr.mxu0 0.0
      %2134 = vmatpush1.msra.mxu0 %v1798
      %2135 = vmatprep.subr.mxu0 0.0
      %2136 = vmatpush1.msra.mxu0 0.0
      %2137 = vmatprep.subr.mxu0 0.0
      %2138 = vmatpush1.msra.mxu0 0.0
      %2139 = vmatprep.subr.mxu0 0.0
      %2140 = vmatpush1.msra.mxu0 0.0
      %2141 = vmatprep.subr.mxu0 0.0
      %2142 = vmatpush1.msra.mxu0 0.0
      %2143 = vmatprep.subr.mxu0 0.0
      %2144 = vmatpush1.msra.mxu0 0.0
      %2145 = vmatprep.subr.mxu0 0.0
      %2146 = vmatpush1.msra.mxu0 0.0
      %2147 = vmatprep.subr.mxu0 0.0
      %2148 = vmatpush1.msra.mxu0 0.0
      %2149 = vmatprep.subr.mxu0 0.0
      %2150 = vmatpush1.msra.mxu0 0.0
      %2151 = vmatprep.subr.mxu0 0.0
      %2152 = vmatpush1.msra.mxu0 0.0
      %2153 = vmatprep.subr.mxu0 0.0
      %2154 = vmatpush1.msra.mxu0 0.0
      %2155 = vmatprep.subr.mxu0 0.0
      %2156 = vmatpush1.msra.mxu0 0.0
      %2157 = vmatprep.subr.mxu0 0.0
      %2158 = vmatpush1.msra.mxu0 0.0
      %2159 = vmatprep.subr.mxu0 0.0
      %2160 = vmatpush1.msra.mxu0 0.0
      %2161 = vmatprep.subr.mxu0 0.0
      %2162 = vmatpush1.msra.mxu0 0.0
      %2163 = vmatprep.subr.mxu0 0.0
      %2164 = vmatpush1.msra.mxu0 0.0
      %2165 = vmatprep.subr.mxu0 0.0
      %2166 = vmatpush1.msra.mxu0 0.0
      %2167 = vmatprep.subr.mxu0 0.0
      %2168 = vmatpush1.msra.mxu0 0.0
      %2169 = vmatprep.subr.mxu0 0.0
      %2170 = vmatpush1.msra.mxu0 0.0
      %2171 = vmatprep.subr.mxu0 0.0
      %2172 = vmatpush1.msra.mxu0 0.0
      %2173 = vmatprep.subr.mxu0 0.0
      %2174 = vmatpush1.msra.mxu0 0.0
      %2175 = vmatprep.subr.mxu0 0.0
      %2176 = vmatpush1.msra.mxu0 0.0
      %2177 = vmatprep.subr.mxu0 0.0
      %2178 = vmatpush1.msra.mxu0 0.0
      %2179 = vmatprep.subr.mxu0 0.0
      %2180 = vmatpush1.msra.mxu0 0.0
      %2181 = vmatprep.subr.mxu0 0.0
      %2182 = vmatpush1.msra.mxu0 0.0
      %2183 = vmatprep.subr.mxu0 0.0
      %2184 = vmatpush1.msra.mxu0 0.0
      %2185 = vmatprep.subr.mxu0 0.0
      %2186 = vmatpush1.msra.mxu0 0.0
      %2187 = vmatprep.subr.mxu0 0.0
      %2188 = vmatpush1.msra.mxu0 0.0
      %2189 = vmatprep.subr.mxu0 0.0
      %2190 = vmatpush1.msra.mxu0 0.0
      %2191 = vmatprep.subr.mxu0 0.0
      %2192 = vmatpush1.msra.mxu0 0.0
      %2193 = vmatprep.subr.mxu0 0.0
      %2194 = vmatpush1.msra.mxu0 0.0
      %2195 = vmatprep.mubr.f32.mxu0 0.0
      %2196 = vmatmul.mubr.f32.gmra.mrb[0].mxu0 %v1255
      %v2197 = vpop.f32.mrb[0].mxu0
      %v2198 = vadd.f32 %v1793, %v2197
      %v2199 = vpop.f32.mrb[0].mxu0
      %2200 = vmatprep.mubr.f32.mxu0 0.0
      %2201 = vmatmul.mubr.f32.gmra.mrb[0].mxu0 %v1258
      %v2202 = vpop.f32.mrb[0].mxu0
      %v2203 = vadd.f32 %v1798, %v2202
      %v2204 = vpop.f32.mrb[0].mxu0
      %2205 = vdwg.mxu0
      %2206 = vmatprep.subr.mxu0 0.0
      %2207 = vmatpush1.msra.mxu0 %v1803
      %2208 = vmatprep.subr.mxu0 0.0
      %2209 = vmatpush1.msra.mxu0 %v1808
      %2210 = vmatprep.subr.mxu0 0.0
      %2211 = vmatpush1.msra.mxu0 0.0
      %2212 = vmatprep.subr.mxu0 0.0
      %2213 = vmatpush1.msra.mxu0 0.0
      %2214 = vmatprep.subr.mxu0 0.0
      %2215 = vmatpush1.msra.mxu0 0.0
      %2216 = vmatprep.subr.mxu0 0.0
      %2217 = vmatpush1.msra.mxu0 0.0
      %2218 = vmatprep.subr.mxu0 0.0
      %2219 = vmatpush1.msra.mxu0 0.0
      %2220 = vmatprep.subr.mxu0 0.0
      %2221 = vmatpush1.msra.mxu0 0.0
      %2222 = vmatprep.subr.mxu0 0.0
      %2223 = vmatpush1.msra.mxu0 0.0
      %2224 = vmatprep.subr.mxu0 0.0
      %2225 = vmatpush1.msra.mxu0 0.0
      %2226 = vmatprep.subr.mxu0 0.0
      %2227 = vmatpush1.msra.mxu0 0.0
      %2228 = vmatprep.subr.mxu0 0.0
      %2229 = vmatpush1.msra.mxu0 0.0
      %2230 = vmatprep.subr.mxu0 0.0
      %2231 = vmatpush1.msra.mxu0 0.0
      %2232 = vmatprep.subr.mxu0 0.0
      %2233 = vmatpush1.msra.mxu0 0.0
      %2234 = vmatprep.subr.mxu0 0.0
      %2235 = vmatpush1.msra.mxu0 0.0
      %2236 = vmatprep.subr.mxu0 0.0
      %2237 = vmatpush1.msra.mxu0 0.0
      %2238 = vmatprep.subr.mxu0 0.0
      %2239 = vmatpush1.msra.mxu0 0.0
      %2240 = vmatprep.subr.mxu0 0.0
      %2241 = vmatpush1.msra.mxu0 0.0
      %2242 = vmatprep.subr.mxu0 0.0
      %2243 = vmatpush1.msra.mxu0 0.0
      %2244 = vmatprep.subr.mxu0 0.0
      %2245 = vmatpush1.msra.mxu0 0.0
      %2246 = vmatprep.subr.mxu0 0.0
      %2247 = vmatpush1.msra.mxu0 0.0
      %2248 = vmatprep.subr.mxu0 0.0
      %2249 = vmatpush1.msra.mxu0 0.0
      %2250 = vmatprep.subr.mxu0 0.0
      %2251 = vmatpush1.msra.mxu0 0.0
      %2252 = vmatprep.subr.mxu0 0.0
      %2253 = vmatpush1.msra.mxu0 0.0
      %2254 = vmatprep.subr.mxu0 0.0
      %2255 = vmatpush1.msra.mxu0 0.0
      %2256 = vmatprep.subr.mxu0 0.0
      %2257 = vmatpush1.msra.mxu0 0.0
      %2258 = vmatprep.subr.mxu0 0.0
      %2259 = vmatpush1.msra.mxu0 0.0
      %2260 = vmatprep.subr.mxu0 0.0
      %2261 = vmatpush1.msra.mxu0 0.0
      %2262 = vmatprep.subr.mxu0 0.0
      %2263 = vmatpush1.msra.mxu0 0.0
      %2264 = vmatprep.subr.mxu0 0.0
      %2265 = vmatpush1.msra.mxu0 0.0
      %2266 = vmatprep.subr.mxu0 0.0
      %2267 = vmatpush1.msra.mxu0 0.0
      %2268 = vmatprep.subr.mxu0 0.0
      %2269 = vmatpush1.msra.mxu0 0.0
      %2270 = vmatprep.mubr.f32.mxu0 0.0
      %2271 = vmatmul.mubr.f32.gmra.mrb[0].mxu0 %v1336
      %v2272 = vpop.f32.mrb[0].mxu0
      %v2273 = vadd.f32 %v1803, %v2272
      %v2274 = vpop.f32.mrb[0].mxu0
      %2275 = vmatprep.mubr.f32.mxu0 0.0
      %2276 = vmatmul.mubr.f32.gmra.mrb[0].mxu0 %v1339
      %v2277 = vpop.f32.mrb[0].mxu0
      %v2278 = vadd.f32 %v1808, %v2277
      %v2279 = vpop.f32.mrb[0].mxu0
      %2280 = vdwg.mxu0
      %2281 = vmatprep.subr.mxu0 0.0
      %2282 = vmatpush1.msra.mxu0 %v1813
      %2283 = vmatprep.subr.mxu0 0.0
      %2284 = vmatpush1.msra.mxu0 %v1818
      %2285 = vmatprep.subr.mxu0 0.0
      %2286 = vmatpush1.msra.mxu0 0.0
      %2287 = vmatprep.subr.mxu0 0.0
      %2288 = vmatpush1.msra.mxu0 0.0
      %2289 = vmatprep.subr.mxu0 0.0
      %2290 = vmatpush1.msra.mxu0 0.0
      %2291 = vmatprep.subr.mxu0 0.0
      %2292 = vmatpush1.msra.mxu0 0.0
      %2293 = vmatprep.subr.mxu0 0.0
      %2294 = vmatpush1.msra.mxu0 0.0
      %2295 = vmatprep.subr.mxu0 0.0
      %2296 = vmatpush1.msra.mxu0 0.0
      %2297 = vmatprep.subr.mxu0 0.0
      %2298 = vmatpush1.msra.mxu0 0.0
      %2299 = vmatprep.subr.mxu0 0.0
      %2300 = vmatpush1.msra.mxu0 0.0
      %2301 = vmatprep.subr.mxu0 0.0
      %2302 = vmatpush1.msra.mxu0 0.0
      %2303 = vmatprep.subr.mxu0 0.0
      %2304 = vmatpush1.msra.mxu0 0.0
      %2305 = vmatprep.subr.mxu0 0.0
      %2306 = vmatpush1.msra.mxu0 0.0
      %2307 = vmatprep.subr.mxu0 0.0
      %2308 = vmatpush1.msra.mxu0 0.0
      %2309 = vmatprep.subr.mxu0 0.0
      %2310 = vmatpush1.msra.mxu0 0.0
      %2311 = vmatprep.subr.mxu0 0.0
      %2312 = vmatpush1.msra.mxu0 0.0
      %2313 = vmatprep.subr.mxu0 0.0
      %2314 = vmatpush1.msra.mxu0 0.0
      %2315 = vmatprep.subr.mxu0 0.0
      %2316 = vmatpush1.msra.mxu0 0.0
      %2317 = vmatprep.subr.mxu0 0.0
      %2318 = vmatpush1.msra.mxu0 0.0
      %2319 = vmatprep.subr.mxu0 0.0
      %2320 = vmatpush1.msra.mxu0 0.0
      %2321 = vmatprep.subr.mxu0 0.0
      %2322 = vmatpush1.msra.mxu0 0.0
      %2323 = vmatprep.subr.mxu0 0.0
      %2324 = vmatpush1.msra.mxu0 0.0
      %2325 = vmatprep.subr.mxu0 0.0
      %2326 = vmatpush1.msra.mxu0 0.0
      %2327 = vmatprep.subr.mxu0 0.0
      %2328 = vmatpush1.msra.mxu0 0.0
      %2329 = vmatprep.subr.mxu0 0.0
      %2330 = vmatpush1.msra.mxu0 0.0
      %2331 = vmatprep.subr.mxu0 0.0
      %2332 = vmatpush1.msra.mxu0 0.0
      %2333 = vmatprep.subr.mxu0 0.0
      %2334 = vmatpush1.msra.mxu0 0.0
      %2335 = vmatprep.subr.mxu0 0.0
      %2336 = vmatpush1.msra.mxu0 0.0
      %2337 = vmatprep.subr.mxu0 0.0
      %2338 = vmatpush1.msra.mxu0 0.0
      %2339 = vmatprep.subr.mxu0 0.0
      %2340 = vmatpush1.msra.mxu0 0.0
      %2341 = vmatprep.subr.mxu0 0.0
      %2342 = vmatpush1.msra.mxu0 0.0
      %2343 = vmatprep.subr.mxu0 0.0
      %2344 = vmatpush1.msra.mxu0 0.0
      %2345 = vmatprep.mubr.f32.mxu0 0.0
      %2346 = vmatmul.mubr.f32.gmra.mrb[0].mxu0 %v1417
      %v2347 = vpop.f32.mrb[0].mxu0
      %v2348 = vadd.f32 %v1813, %v2347
      %v2349 = vpop.f32.mrb[0].mxu0
      %2350 = vmatprep.mubr.f32.mxu0 0.0
      %2351 = vmatmul.mubr.f32.gmra.mrb[0].mxu0 %v1420
      %v2352 = vpop.f32.mrb[0].mxu0
      %v2353 = vadd.f32 %v1818, %v2352
      %v2354 = vpop.f32.mrb[0].mxu0
      %2355 = vdwg.mxu0
      %2356 = vmatprep.subr.mxu0 0.0
      %2357 = vmatpush1.msra.mxu0 %v1823
      %2358 = vmatprep.subr.mxu0 0.0
      %2359 = vmatpush1.msra.mxu0 %v1828
      %2360 = vmatprep.subr.mxu0 0.0
      %2361 = vmatpush1.msra.mxu0 0.0
      %2362 = vmatprep.subr.mxu0 0.0
      %2363 = vmatpush1.msra.mxu0 0.0
      %2364 = vmatprep.subr.mxu0 0.0
      %2365 = vmatpush1.msra.mxu0 0.0
      %2366 = vmatprep.subr.mxu0 0.0
      %2367 = vmatpush1.msra.mxu0 0.0
      %2368 = vmatprep.subr.mxu0 0.0
      %2369 = vmatpush1.msra.mxu0 0.0
      %2370 = vmatprep.subr.mxu0 0.0
      %2371 = vmatpush1.msra.mxu0 0.0
      %2372 = vmatprep.subr.mxu0 0.0
      %2373 = vmatpush1.msra.mxu0 0.0
      %2374 = vmatprep.subr.mxu0 0.0
      %2375 = vmatpush1.msra.mxu0 0.0
      %2376 = vmatprep.subr.mxu0 0.0
      %2377 = vmatpush1.msra.mxu0 0.0
      %2378 = vmatprep.subr.mxu0 0.0
      %2379 = vmatpush1.msra.mxu0 0.0
      %2380 = vmatprep.subr.mxu0 0.0
      %2381 = vmatpush1.msra.mxu0 0.0
      %2382 = vmatprep.subr.mxu0 0.0
      %2383 = vmatpush1.msra.mxu0 0.0
      %2384 = vmatprep.subr.mxu0 0.0
      %2385 = vmatpush1.msra.mxu0 0.0
      %2386 = vmatprep.subr.mxu0 0.0
      %2387 = vmatpush1.msra.mxu0 0.0
      %2388 = vmatprep.subr.mxu0 0.0
      %2389 = vmatpush1.msra.mxu0 0.0
      %2390 = vmatprep.subr.mxu0 0.0
      %2391 = vmatpush1.msra.mxu0 0.0
      %2392 = vmatprep.subr.mxu0 0.0
      %2393 = vmatpush1.msra.mxu0 0.0
      %2394 = vmatprep.subr.mxu0 0.0
      %2395 = vmatpush1.msra.mxu0 0.0
      %2396 = vmatprep.subr.mxu0 0.0
      %2397 = vmatpush1.msra.mxu0 0.0
      %2398 = vmatprep.subr.mxu0 0.0
      %2399 = vmatpush1.msra.mxu0 0.0
      %2400 = vmatprep.subr.mxu0 0.0
      %2401 = vmatpush1.msra.mxu0 0.0
      %2402 = vmatprep.subr.mxu0 0.0
      %2403 = vmatpush1.msra.mxu0 0.0
      %2404 = vmatprep.subr.mxu0 0.0
      %2405 = vmatpush1.msra.mxu0 0.0
      %2406 = vmatprep.subr.mxu0 0.0
      %2407 = vmatpush1.msra.mxu0 0.0
      %2408 = vmatprep.subr.mxu0 0.0
      %2409 = vmatpush1.msra.mxu0 0.0
      %2410 = vmatprep.subr.mxu0 0.0
      %2411 = vmatpush1.msra.mxu0 0.0
      %2412 = vmatprep.subr.mxu0 0.0
      %2413 = vmatpush1.msra.mxu0 0.0
      %2414 = vmatprep.subr.mxu0 0.0
      %2415 = vmatpush1.msra.mxu0 0.0
      %2416 = vmatprep.subr.mxu0 0.0
      %2417 = vmatpush1.msra.mxu0 0.0
      %2418 = vmatprep.subr.mxu0 0.0
      %2419 = vmatpush1.msra.mxu0 0.0
      %2420 = vmatprep.mubr.f32.mxu0 0.0
      %2421 = vmatmul.mubr.f32.gmra.mrb[0].mxu0 %v1498
      %v2422 = vpop.f32.mrb[0].mxu0
      %v2423 = vadd.f32 %v1823, %v2422
      %v2424 = vpop.f32.mrb[0].mxu0
      %2425 = vmatprep.mubr.f32.mxu0 0.0
      %2426 = vmatmul.mubr.f32.gmra.mrb[0].mxu0 %v1501
      %v2427 = vpop.f32.mrb[0].mxu0
      %v2428 = vadd.f32 %v1828, %v2427
      %v2429 = vpop.f32.mrb[0].mxu0
      %2430 = vdwg.mxu0
      %v2431 = vld [vmem:[%s5] sm:$0x1]
      %v2433 = vlaneseq
      %v2434 = vshrl.u32 %v2433, 7
      %v2435 = vsub.s32 0, %v2434
      %v2436 = vrot.slane %v2431, %v2435
      %v2438 = vadd.f32 %v1898, %v2436
      %v2439 = vadd.f32 %v1903, %v2436
      %v2440 = vadd.f32 %v1973, %v2436
      %v2441 = vadd.f32 %v1978, %v2436
      %v2442 = vadd.f32 %v2048, %v2436
      %v2443 = vadd.f32 %v2053, %v2436
      %v2444 = vadd.f32 %v2123, %v2436
      %v2445 = vadd.f32 %v2128, %v2436
      %v2446 = vadd.f32 %v2198, %v2436
      %v2447 = vadd.f32 %v2203, %v2436
      %v2448 = vadd.f32 %v2273, %v2436
      %v2449 = vadd.f32 %v2278, %v2436
      %v2450 = vadd.f32 %v2348, %v2436
      %v2451 = vadd.f32 %v2353, %v2436
      %v2452 = vadd.f32 %v2423, %v2436
      %v2453 = vadd.f32 %v2428, %v2436
      %v2454 = vmul.f32 %v2438, %v688
      %v2455 = vmul.f32 %v2439, %v690
      %v2456 = vmul.f32 %v2440, %v692
      %v2457 = vmul.f32 %v2441, %v694
      %v2458 = vmul.f32 %v2442, %v696
      %v2459 = vmul.f32 %v2443, %v698
      %v2460 = vmul.f32 %v2444, %v700
      %v2461 = vmul.f32 %v2445, %v702
      %v2462 = vmul.f32 %v2446, %v704
      %v2463 = vmul.f32 %v2447, %v706
      %v2464 = vmul.f32 %v2448, %v708
      %v2465 = vmul.f32 %v2449, %v710
      %v2466 = vmul.f32 %v2450, %v712
      %v2467 = vmul.f32 %v2451, %v714
      %v2468 = vmul.f32 %v2452, %v716
      %v2469 = vmul.f32 %v2453, %v718
      %v2470 = vtanh.pop %v2454
      %v2471 = vtanh.pop %v2455
      %v2472 = vtanh.pop %v2456
      %v2473 = vtanh.pop %v2457
      %v2474 = vtanh.pop %v2458
      %v2475 = vtanh.pop %v2459
      %v2476 = vtanh.pop %v2460
      %v2477 = vtanh.pop %v2461
      %v2478 = vtanh.pop %v2462
      %v2479 = vtanh.pop %v2463
      %v2480 = vtanh.pop %v2464
      %v2481 = vtanh.pop %v2465
      %v2482 = vtanh.pop %v2466
      %v2483 = vtanh.pop %v2467
      %v2484 = vtanh.pop %v2468
      %v2485 = vtanh.pop %v2469
      %v2486 = vld [vmem:[%s6] sm:$0xff]
      %v2487 = vld [vmem:[%s6 + $0x8] sm:$0xff]
      %v2488 = vld [vmem:[%s6 + $0x10] sm:$0xff]
      %v2489 = vld [vmem:[%s6 + $0x18] sm:$0xff]
      %v2491 = vsel %vm1637, %v2470, 0
      %v2494 = vsel %vm1637, %v2471, 0
      %v2497 = vsel %vm1637, %v2472, 0
      %v2500 = vsel %vm1637, %v2473, 0
      %v2503 = vsel %vm1637, %v2474, 0
      %v2506 = vsel %vm1637, %v2475, 0
      %v2509 = vsel %vm1637, %v2476, 0
      %v2512 = vsel %vm1637, %v2477, 0
      %v2515 = vsel %vm1637, %v2478, 0
      %v2518 = vsel %vm1637, %v2479, 0
      %v2521 = vsel %vm1637, %v2480, 0
      %v2524 = vsel %vm1637, %v2481, 0
      %v2527 = vsel %vm1637, %v2482, 0
      %v2530 = vsel %vm1637, %v2483, 0
      %v2533 = vsel %vm1637, %v2484, 0
      %v2536 = vsel %vm1637, %v2485, 0
      %2538 = vmatprep.subr.mxu0 0.0
      %2539 = vmatpush1.msra.mxu0 %v2486
      %2540 = vmatprep.subr.mxu0 0.0
      %2541 = vmatpush1.msra.mxu0 %v2487
      %2542 = vmatprep.subr.mxu0 0.0
      %2543 = vmatpush1.msra.mxu0 %v2488
      %2544 = vmatprep.subr.mxu0 0.0
      %2545 = vmatpush1.msra.mxu0 %v2489
      %2546 = vmatprep.subr.mxu0 0.0
      %2547 = vmatpush1.msra.mxu0 0.0
      %2548 = vmatprep.subr.mxu0 0.0
      %2549 = vmatpush1.msra.mxu0 0.0
      %2550 = vmatprep.subr.mxu0 0.0
      %2551 = vmatpush1.msra.mxu0 0.0
      %2552 = vmatprep.subr.mxu0 0.0
      %2553 = vmatpush1.msra.mxu0 0.0
      %2554 = vmatprep.subr.mxu0 0.0
      %2555 = vmatpush1.msra.mxu0 0.0
      %2556 = vmatprep.subr.mxu0 0.0
      %2557 = vmatpush1.msra.mxu0 0.0
      %2558 = vmatprep.subr.mxu0 0.0
      %2559 = vmatpush1.msra.mxu0 0.0
      %2560 = vmatprep.subr.mxu0 0.0
      %2561 = vmatpush1.msra.mxu0 0.0
      %2562 = vmatprep.subr.mxu0 0.0
      %2563 = vmatpush1.msra.mxu0 0.0
      %2564 = vmatprep.subr.mxu0 0.0
      %2565 = vmatpush1.msra.mxu0 0.0
      %2566 = vmatprep.subr.mxu0 0.0
      %2567 = vmatpush1.msra.mxu0 0.0
      %2568 = vmatprep.subr.mxu0 0.0
      %2569 = vmatpush1.msra.mxu0 0.0
      %2570 = vmatprep.subr.mxu0 0.0
      %2571 = vmatpush1.msra.mxu0 0.0
      %2572 = vmatprep.subr.mxu0 0.0
      %2573 = vmatpush1.msra.mxu0 0.0
      %2574 = vmatprep.subr.mxu0 0.0
      %2575 = vmatpush1.msra.mxu0 0.0
      %2576 = vmatprep.subr.mxu0 0.0
      %2577 = vmatpush1.msra.mxu0 0.0
      %2578 = vmatprep.subr.mxu0 0.0
      %2579 = vmatpush1.msra.mxu0 0.0
      %2580 = vmatprep.subr.mxu0 0.0
      %2581 = vmatpush1.msra.mxu0 0.0
      %2582 = vmatprep.subr.mxu0 0.0
      %2583 = vmatpush1.msra.mxu0 0.0
      %2584 = vmatprep.subr.mxu0 0.0
      %2585 = vmatpush1.msra.mxu0 0.0
      %2586 = vmatprep.subr.mxu0 0.0
      %2587 = vmatpush1.msra.mxu0 0.0
      %2588 = vmatprep.subr.mxu0 0.0
      %2589 = vmatpush1.msra.mxu0 0.0
      %2590 = vmatprep.subr.mxu0 0.0
      %2591 = vmatpush1.msra.mxu0 0.0
      %2592 = vmatprep.subr.mxu0 0.0
      %2593 = vmatpush1.msra.mxu0 0.0
      %2594 = vmatprep.subr.mxu0 0.0
      %2595 = vmatpush1.msra.mxu0 0.0
      %2596 = vmatprep.subr.mxu0 0.0
      %2597 = vmatpush1.msra.mxu0 0.0
      %2598 = vmatprep.subr.mxu0 0.0
      %2599 = vmatpush1.msra.mxu0 0.0
      %2600 = vmatprep.subr.mxu0 0.0
      %2601 = vmatpush1.msra.mxu0 0.0
      %2602 = vmatprep.mubr.f32.mxu0 0.0
      %2603 = vmatmul.mubr.f32.gmra.mrb[0].mxu0 %v2491
      %v2604 = vpop.f32.mrb[0].mxu0
      %v2605 = vadd.f32 0.0, %v2604
      %v2606 = vpop.f32.mrb[0].mxu0
      %2607 = vmatprep.mubr.f32.mxu0 0.0
      %2608 = vmatmul.mubr.f32.gmra.mrb[0].mxu0 %v2494
      %v2609 = vpop.f32.mrb[0].mxu0
      %v2610 = vadd.f32 0.0, %v2609
      %v2611 = vpop.f32.mrb[0].mxu0
      %2612 = vmatprep.mubr.f32.mxu0 0.0
      %2613 = vmatmul.mubr.f32.gmra.mrb[0].mxu0 %v2497
      %v2614 = vpop.f32.mrb[0].mxu0
      %v2615 = vadd.f32 0.0, %v2614
      %v2616 = vpop.f32.mrb[0].mxu0
      %2617 = vmatprep.mubr.f32.mxu0 0.0
      %2618 = vmatmul.mubr.f32.gmra.mrb[0].mxu0 %v2500
      %v2619 = vpop.f32.mrb[0].mxu0
      %v2620 = vadd.f32 0.0, %v2619
      %v2621 = vpop.f32.mrb[0].mxu0
      %2622 = vmatprep.mubr.f32.mxu0 0.0
      %2623 = vmatmul.mubr.f32.gmra.mrb[0].mxu0 %v2503
      %v2624 = vpop.f32.mrb[0].mxu0
      %v2625 = vadd.f32 0.0, %v2624
      %v2626 = vpop.f32.mrb[0].mxu0
      %2627 = vmatprep.mubr.f32.mxu0 0.0
      %2628 = vmatmul.mubr.f32.gmra.mrb[0].mxu0 %v2506
      %v2629 = vpop.f32.mrb[0].mxu0
      %v2630 = vadd.f32 0.0, %v2629
      %v2631 = vpop.f32.mrb[0].mxu0
      %2632 = vmatprep.mubr.f32.mxu0 0.0
      %2633 = vmatmul.mubr.f32.gmra.mrb[0].mxu0 %v2509
      %v2634 = vpop.f32.mrb[0].mxu0
      %v2635 = vadd.f32 0.0, %v2634
      %v2636 = vpop.f32.mrb[0].mxu0
      %2637 = vmatprep.mubr.f32.mxu0 0.0
      %2638 = vmatmul.mubr.f32.gmra.mrb[0].mxu0 %v2512
      %v2639 = vpop.f32.mrb[0].mxu0
      %v2640 = vadd.f32 0.0, %v2639
      %v2641 = vpop.f32.mrb[0].mxu0
      %2642 = vmatprep.mubr.f32.mxu0 0.0
      %2643 = vmatmul.mubr.f32.gmra.mrb[0].mxu0 %v2515
      %v2644 = vpop.f32.mrb[0].mxu0
      %v2645 = vadd.f32 0.0, %v2644
      %v2646 = vpop.f32.mrb[0].mxu0
      %2647 = vmatprep.mubr.f32.mxu0 0.0
      %2648 = vmatmul.mubr.f32.gmra.mrb[0].mxu0 %v2518
      %v2649 = vpop.f32.mrb[0].mxu0
      %v2650 = vadd.f32 0.0, %v2649
      %v2651 = vpop.f32.mrb[0].mxu0
      %2652 = vmatprep.mubr.f32.mxu0 0.0
      %2653 = vmatmul.mubr.f32.gmra.mrb[0].mxu0 %v2521
      %v2654 = vpop.f32.mrb[0].mxu0
      %v2655 = vadd.f32 0.0, %v2654
      %v2656 = vpop.f32.mrb[0].mxu0
      %2657 = vmatprep.mubr.f32.mxu0 0.0
      %2658 = vmatmul.mubr.f32.gmra.mrb[0].mxu0 %v2524
      %v2659 = vpop.f32.mrb[0].mxu0
      %v2660 = vadd.f32 0.0, %v2659
      %v2661 = vpop.f32.mrb[0].mxu0
      %2662 = vmatprep.mubr.f32.mxu0 0.0
      %2663 = vmatmul.mubr.f32.gmra.mrb[0].mxu0 %v2527
      %v2664 = vpop.f32.mrb[0].mxu0
      %v2665 = vadd.f32 0.0, %v2664
      %v2666 = vpop.f32.mrb[0].mxu0
      %2667 = vmatprep.mubr.f32.mxu0 0.0
      %2668 = vmatmul.mubr.f32.gmra.mrb[0].mxu0 %v2530
      %v2669 = vpop.f32.mrb[0].mxu0
      %v2670 = vadd.f32 0.0, %v2669
      %v2671 = vpop.f32.mrb[0].mxu0
      %2672 = vmatprep.mubr.f32.mxu0 0.0
      %2673 = vmatmul.mubr.f32.gmra.mrb[0].mxu0 %v2533
      %v2674 = vpop.f32.mrb[0].mxu0
      %v2675 = vadd.f32 0.0, %v2674
      %v2676 = vpop.f32.mrb[0].mxu0
      %2677 = vmatprep.mubr.f32.mxu0 0.0
      %2678 = vmatmul.mubr.f32.gmra.mrb[0].mxu0 %v2536
      %v2679 = vpop.f32.mrb[0].mxu0
      %v2680 = vadd.f32 0.0, %v2679
      %v2681 = vpop.f32.mrb[0].mxu0
      %2682 = vdwg.mxu0
      %2683 = vmatprep.subr.mxu0 0.0
      %2684 = vmatpush1.msra.mxu0 %v2605
      %2685 = vmatprep.subr.mxu0 0.0
      %2686 = vmatpush1.msra.mxu0 %v2610
      %2687 = vmatprep.subr.mxu0 0.0
      %2688 = vmatpush1.msra.mxu0 0.0
      %2689 = vmatprep.subr.mxu0 0.0
      %2690 = vmatpush1.msra.mxu0 0.0
      %2691 = vmatprep.subr.mxu0 0.0
      %2692 = vmatpush1.msra.mxu0 0.0
      %2693 = vmatprep.subr.mxu0 0.0
      %2694 = vmatpush1.msra.mxu0 0.0
      %2695 = vmatprep.subr.mxu0 0.0
      %2696 = vmatpush1.msra.mxu0 0.0
      %2697 = vmatprep.subr.mxu0 0.0
      %2698 = vmatpush1.msra.mxu0 0.0
      %2699 = vmatprep.subr.mxu0 0.0
      %2700 = vmatpush1.msra.mxu0 0.0
      %2701 = vmatprep.subr.mxu0 0.0
      %2702 = vmatpush1.msra.mxu0 0.0
      %2703 = vmatprep.subr.mxu0 0.0
      %2704 = vmatpush1.msra.mxu0 0.0
      %2705 = vmatprep.subr.mxu0 0.0
      %2706 = vmatpush1.msra.mxu0 0.0
      %2707 = vmatprep.subr.mxu0 0.0
      %2708 = vmatpush1.msra.mxu0 0.0
      %2709 = vmatprep.subr.mxu0 0.0
      %2710 = vmatpush1.msra.mxu0 0.0
      %2711 = vmatprep.subr.mxu0 0.0
      %2712 = vmatpush1.msra.mxu0 0.0
      %2713 = vmatprep.subr.mxu0 0.0
      %2714 = vmatpush1.msra.mxu0 0.0
      %2715 = vmatprep.subr.mxu0 0.0
      %2716 = vmatpush1.msra.mxu0 0.0
      %2717 = vmatprep.subr.mxu0 0.0
      %2718 = vmatpush1.msra.mxu0 0.0
      %2719 = vmatprep.subr.mxu0 0.0
      %2720 = vmatpush1.msra.mxu0 0.0
      %2721 = vmatprep.subr.mxu0 0.0
      %2722 = vmatpush1.msra.mxu0 0.0
      %2723 = vmatprep.subr.mxu0 0.0
      %2724 = vmatpush1.msra.mxu0 0.0
      %2725 = vmatprep.subr.mxu0 0.0
      %2726 = vmatpush1.msra.mxu0 0.0
      %2727 = vmatprep.subr.mxu0 0.0
      %2728 = vmatpush1.msra.mxu0 0.0
      %2729 = vmatprep.subr.mxu0 0.0
      %2730 = vmatpush1.msra.mxu0 0.0
      %2731 = vmatprep.subr.mxu0 0.0
      %2732 = vmatpush1.msra.mxu0 0.0
      %2733 = vmatprep.subr.mxu0 0.0
      %2734 = vmatpush1.msra.mxu0 0.0
      %2735 = vmatprep.subr.mxu0 0.0
      %2736 = vmatpush1.msra.mxu0 0.0
      %2737 = vmatprep.subr.mxu0 0.0
      %2738 = vmatpush1.msra.mxu0 0.0
      %2739 = vmatprep.subr.mxu0 0.0
      %2740 = vmatpush1.msra.mxu0 0.0
      %2741 = vmatprep.subr.mxu0 0.0
      %2742 = vmatpush1.msra.mxu0 0.0
      %2743 = vmatprep.subr.mxu0 0.0
      %2744 = vmatpush1.msra.mxu0 0.0
      %2745 = vmatprep.subr.mxu0 0.0
      %2746 = vmatpush1.msra.mxu0 0.0
      %2747 = vmatprep.mubr.f32.mxu0 0.0
      %2748 = vmatmul.mubr.f32.gmra.mrb[0].mxu0 %v931
      %v2749 = vpop.f32.mrb[0].mxu0
      %v2750 = vadd.f32 %v2605, %v2749
      %v2751 = vpop.f32.mrb[0].mxu0
      %2752 = vmatprep.mubr.f32.mxu0 0.0
      %2753 = vmatmul.mubr.f32.gmra.mrb[0].mxu0 %v934
      %v2754 = vpop.f32.mrb[0].mxu0
      %v2755 = vadd.f32 %v2610, %v2754
      %v2756 = vpop.f32.mrb[0].mxu0
      %2757 = vdwg.mxu0
      %2758 = vmatprep.subr.mxu0 0.0
      %2759 = vmatpush1.msra.mxu0 %v2615
      %2760 = vmatprep.subr.mxu0 0.0
      %2761 = vmatpush1.msra.mxu0 %v2620
      %2762 = vmatprep.subr.mxu0 0.0
      %2763 = vmatpush1.msra.mxu0 0.0
      %2764 = vmatprep.subr.mxu0 0.0
      %2765 = vmatpush1.msra.mxu0 0.0
      %2766 = vmatprep.subr.mxu0 0.0
      %2767 = vmatpush1.msra.mxu0 0.0
      %2768 = vmatprep.subr.mxu0 0.0
      %2769 = vmatpush1.msra.mxu0 0.0
      %2770 = vmatprep.subr.mxu0 0.0
      %2771 = vmatpush1.msra.mxu0 0.0
      %2772 = vmatprep.subr.mxu0 0.0
      %2773 = vmatpush1.msra.mxu0 0.0
      %2774 = vmatprep.subr.mxu0 0.0
      %2775 = vmatpush1.msra.mxu0 0.0
      %2776 = vmatprep.subr.mxu0 0.0
      %2777 = vmatpush1.msra.mxu0 0.0
      %2778 = vmatprep.subr.mxu0 0.0
      %2779 = vmatpush1.msra.mxu0 0.0
      %2780 = vmatprep.subr.mxu0 0.0
      %2781 = vmatpush1.msra.mxu0 0.0
      %2782 = vmatprep.subr.mxu0 0.0
      %2783 = vmatpush1.msra.mxu0 0.0
      %2784 = vmatprep.subr.mxu0 0.0
      %2785 = vmatpush1.msra.mxu0 0.0
      %2786 = vmatprep.subr.mxu0 0.0
      %2787 = vmatpush1.msra.mxu0 0.0
      %2788 = vmatprep.subr.mxu0 0.0
      %2789 = vmatpush1.msra.mxu0 0.0
      %2790 = vmatprep.subr.mxu0 0.0
      %2791 = vmatpush1.msra.mxu0 0.0
      %2792 = vmatprep.subr.mxu0 0.0
      %2793 = vmatpush1.msra.mxu0 0.0
      %2794 = vmatprep.subr.mxu0 0.0
      %2795 = vmatpush1.msra.mxu0 0.0
      %2796 = vmatprep.subr.mxu0 0.0
      %2797 = vmatpush1.msra.mxu0 0.0
      %2798 = vmatprep.subr.mxu0 0.0
      %2799 = vmatpush1.msra.mxu0 0.0
      %2800 = vmatprep.subr.mxu0 0.0
      %2801 = vmatpush1.msra.mxu0 0.0
      %2802 = vmatprep.subr.mxu0 0.0
      %2803 = vmatpush1.msra.mxu0 0.0
      %2804 = vmatprep.subr.mxu0 0.0
      %2805 = vmatpush1.msra.mxu0 0.0
      %2806 = vmatprep.subr.mxu0 0.0
      %2807 = vmatpush1.msra.mxu0 0.0
      %2808 = vmatprep.subr.mxu0 0.0
      %2809 = vmatpush1.msra.mxu0 0.0
      %2810 = vmatprep.subr.mxu0 0.0
      %2811 = vmatpush1.msra.mxu0 0.0
      %2812 = vmatprep.subr.mxu0 0.0
      %2813 = vmatpush1.msra.mxu0 0.0
      %2814 = vmatprep.subr.mxu0 0.0
      %2815 = vmatpush1.msra.mxu0 0.0
      %2816 = vmatprep.subr.mxu0 0.0
      %2817 = vmatpush1.msra.mxu0 0.0
      %2818 = vmatprep.subr.mxu0 0.0
      %2819 = vmatpush1.msra.mxu0 0.0
      %2820 = vmatprep.subr.mxu0 0.0
      %2821 = vmatpush1.msra.mxu0 0.0
      %2822 = vmatprep.mubr.f32.mxu0 0.0
      %2823 = vmatmul.mubr.f32.gmra.mrb[0].mxu0 %v1012
      %v2824 = vpop.f32.mrb[0].mxu0
      %v2825 = vadd.f32 %v2615, %v2824
      %v2826 = vpop.f32.mrb[0].mxu0
      %2827 = vmatprep.mubr.f32.mxu0 0.0
      %2828 = vmatmul.mubr.f32.gmra.mrb[0].mxu0 %v1015
      %v2829 = vpop.f32.mrb[0].mxu0
      %v2830 = vadd.f32 %v2620, %v2829
      %v2831 = vpop.f32.mrb[0].mxu0
      %2832 = vdwg.mxu0
      %2833 = vmatprep.subr.mxu0 0.0
      %2834 = vmatpush1.msra.mxu0 %v2625
      %2835 = vmatprep.subr.mxu0 0.0
      %2836 = vmatpush1.msra.mxu0 %v2630
      %2837 = vmatprep.subr.mxu0 0.0
      %2838 = vmatpush1.msra.mxu0 0.0
      %2839 = vmatprep.subr.mxu0 0.0
      %2840 = vmatpush1.msra.mxu0 0.0
      %2841 = vmatprep.subr.mxu0 0.0
      %2842 = vmatpush1.msra.mxu0 0.0
      %2843 = vmatprep.subr.mxu0 0.0
      %2844 = vmatpush1.msra.mxu0 0.0
      %2845 = vmatprep.subr.mxu0 0.0
      %2846 = vmatpush1.msra.mxu0 0.0
      %2847 = vmatprep.subr.mxu0 0.0
      %2848 = vmatpush1.msra.mxu0 0.0
      %2849 = vmatprep.subr.mxu0 0.0
      %2850 = vmatpush1.msra.mxu0 0.0
      %2851 = vmatprep.subr.mxu0 0.0
      %2852 = vmatpush1.msra.mxu0 0.0
      %2853 = vmatprep.subr.mxu0 0.0
      %2854 = vmatpush1.msra.mxu0 0.0
      %2855 = vmatprep.subr.mxu0 0.0
      %2856 = vmatpush1.msra.mxu0 0.0
      %2857 = vmatprep.subr.mxu0 0.0
      %2858 = vmatpush1.msra.mxu0 0.0
      %2859 = vmatprep.subr.mxu0 0.0
      %2860 = vmatpush1.msra.mxu0 0.0
      %2861 = vmatprep.subr.mxu0 0.0
      %2862 = vmatpush1.msra.mxu0 0.0
      %2863 = vmatprep.subr.mxu0 0.0
      %2864 = vmatpush1.msra.mxu0 0.0
      %2865 = vmatprep.subr.mxu0 0.0
      %2866 = vmatpush1.msra.mxu0 0.0
      %2867 = vmatprep.subr.mxu0 0.0
      %2868 = vmatpush1.msra.mxu0 0.0
      %2869 = vmatprep.subr.mxu0 0.0
      %2870 = vmatpush1.msra.mxu0 0.0
      %2871 = vmatprep.subr.mxu0 0.0
      %2872 = vmatpush1.msra.mxu0 0.0
      %2873 = vmatprep.subr.mxu0 0.0
      %2874 = vmatpush1.msra.mxu0 0.0
      %2875 = vmatprep.subr.mxu0 0.0
      %2876 = vmatpush1.msra.mxu0 0.0
      %2877 = vmatprep.subr.mxu0 0.0
      %2878 = vmatpush1.msra.mxu0 0.0
      %2879 = vmatprep.subr.mxu0 0.0
      %2880 = vmatpush1.msra.mxu0 0.0
      %2881 = vmatprep.subr.mxu0 0.0
      %2882 = vmatpush1.msra.mxu0 0.0
      %2883 = vmatprep.subr.mxu0 0.0
      %2884 = vmatpush1.msra.mxu0 0.0
      %2885 = vmatprep.subr.mxu0 0.0
      %2886 = vmatpush1.msra.mxu0 0.0
      %2887 = vmatprep.subr.mxu0 0.0
      %2888 = vmatpush1.msra.mxu0 0.0
      %2889 = vmatprep.subr.mxu0 0.0
      %2890 = vmatpush1.msra.mxu0 0.0
      %2891 = vmatprep.subr.mxu0 0.0
      %2892 = vmatpush1.msra.mxu0 0.0
      %2893 = vmatprep.subr.mxu0 0.0
      %2894 = vmatpush1.msra.mxu0 0.0
      %2895 = vmatprep.subr.mxu0 0.0
      %2896 = vmatpush1.msra.mxu0 0.0
      %2897 = vmatprep.mubr.f32.mxu0 0.0
      %2898 = vmatmul.mubr.f32.gmra.mrb[0].mxu0 %v1093
      %v2899 = vpop.f32.mrb[0].mxu0
      %v2900 = vadd.f32 %v2625, %v2899
      %v2901 = vpop.f32.mrb[0].mxu0
      %2902 = vmatprep.mubr.f32.mxu0 0.0
      %2903 = vmatmul.mubr.f32.gmra.mrb[0].mxu0 %v1096
      %v2904 = vpop.f32.mrb[0].mxu0
      %v2905 = vadd.f32 %v2630, %v2904
      %v2906 = vpop.f32.mrb[0].mxu0
      %2907 = vdwg.mxu0
      %2908 = vmatprep.subr.mxu0 0.0
      %2909 = vmatpush1.msra.mxu0 %v2635
      %2910 = vmatprep.subr.mxu0 0.0
      %2911 = vmatpush1.msra.mxu0 %v2640
      %2912 = vmatprep.subr.mxu0 0.0
      %2913 = vmatpush1.msra.mxu0 0.0
      %2914 = vmatprep.subr.mxu0 0.0
      %2915 = vmatpush1.msra.mxu0 0.0
      %2916 = vmatprep.subr.mxu0 0.0
      %2917 = vmatpush1.msra.mxu0 0.0
      %2918 = vmatprep.subr.mxu0 0.0
      %2919 = vmatpush1.msra.mxu0 0.0
      %2920 = vmatprep.subr.mxu0 0.0
      %2921 = vmatpush1.msra.mxu0 0.0
      %2922 = vmatprep.subr.mxu0 0.0
      %2923 = vmatpush1.msra.mxu0 0.0
      %2924 = vmatprep.subr.mxu0 0.0
      %2925 = vmatpush1.msra.mxu0 0.0
      %2926 = vmatprep.subr.mxu0 0.0
      %2927 = vmatpush1.msra.mxu0 0.0
      %2928 = vmatprep.subr.mxu0 0.0
      %2929 = vmatpush1.msra.mxu0 0.0
      %2930 = vmatprep.subr.mxu0 0.0
      %2931 = vmatpush1.msra.mxu0 0.0
      %2932 = vmatprep.subr.mxu0 0.0
      %2933 = vmatpush1.msra.mxu0 0.0
      %2934 = vmatprep.subr.mxu0 0.0
      %2935 = vmatpush1.msra.mxu0 0.0
      %2936 = vmatprep.subr.mxu0 0.0
      %2937 = vmatpush1.msra.mxu0 0.0
      %2938 = vmatprep.subr.mxu0 0.0
      %2939 = vmatpush1.msra.mxu0 0.0
      %2940 = vmatprep.subr.mxu0 0.0
      %2941 = vmatpush1.msra.mxu0 0.0
      %2942 = vmatprep.subr.mxu0 0.0
      %2943 = vmatpush1.msra.mxu0 0.0
      %2944 = vmatprep.subr.mxu0 0.0
      %2945 = vmatpush1.msra.mxu0 0.0
      %2946 = vmatprep.subr.mxu0 0.0
      %2947 = vmatpush1.msra.mxu0 0.0
      %2948 = vmatprep.subr.mxu0 0.0
      %2949 = vmatpush1.msra.mxu0 0.0
      %2950 = vmatprep.subr.mxu0 0.0
      %2951 = vmatpush1.msra.mxu0 0.0
      %2952 = vmatprep.subr.mxu0 0.0
      %2953 = vmatpush1.msra.mxu0 0.0
      %2954 = vmatprep.subr.mxu0 0.0
      %2955 = vmatpush1.msra.mxu0 0.0
      %2956 = vmatprep.subr.mxu0 0.0
      %2957 = vmatpush1.msra.mxu0 0.0
      %2958 = vmatprep.subr.mxu0 0.0
      %2959 = vmatpush1.msra.mxu0 0.0
      %2960 = vmatprep.subr.mxu0 0.0
      %2961 = vmatpush1.msra.mxu0 0.0
      %2962 = vmatprep.subr.mxu0 0.0
      %2963 = vmatpush1.msra.mxu0 0.0
      %2964 = vmatprep.subr.mxu0 0.0
      %2965 = vmatpush1.msra.mxu0 0.0
      %2966 = vmatprep.subr.mxu0 0.0
      %2967 = vmatpush1.msra.mxu0 0.0
      %2968 = vmatprep.subr.mxu0 0.0
      %2969 = vmatpush1.msra.mxu0 0.0
      %2970 = vmatprep.subr.mxu0 0.0
      %2971 = vmatpush1.msra.mxu0 0.0
      %2972 = vmatprep.mubr.f32.mxu0 0.0
      %2973 = vmatmul.mubr.f32.gmra.mrb[0].mxu0 %v1174
      %v2974 = vpop.f32.mrb[0].mxu0
      %v2975 = vadd.f32 %v2635, %v2974
      %v2976 = vpop.f32.mrb[0].mxu0
      %2977 = vmatprep.mubr.f32.mxu0 0.0
      %2978 = vmatmul.mubr.f32.gmra.mrb[0].mxu0 %v1177
      %v2979 = vpop.f32.mrb[0].mxu0
      %v2980 = vadd.f32 %v2640, %v2979
      %v2981 = vpop.f32.mrb[0].mxu0
      %2982 = vdwg.mxu0
      %2983 = vmatprep.subr.mxu0 0.0
      %2984 = vmatpush1.msra.mxu0 %v2645
      %2985 = vmatprep.subr.mxu0 0.0
      %2986 = vmatpush1.msra.mxu0 %v2650
      %2987 = vmatprep.subr.mxu0 0.0
      %2988 = vmatpush1.msra.mxu0 0.0
      %2989 = vmatprep.subr.mxu0 0.0
      %2990 = vmatpush1.msra.mxu0 0.0
      %2991 = vmatprep.subr.mxu0 0.0
      %2992 = vmatpush1.msra.mxu0 0.0
      %2993 = vmatprep.subr.mxu0 0.0
      %2994 = vmatpush1.msra.mxu0 0.0
      %2995 = vmatprep.subr.mxu0 0.0
      %2996 = vmatpush1.msra.mxu0 0.0
      %2997 = vmatprep.subr.mxu0 0.0
      %2998 = vmatpush1.msra.mxu0 0.0
      %2999 = vmatprep.subr.mxu0 0.0
      %3000 = vmatpush1.msra.mxu0 0.0
      %3001 = vmatprep.subr.mxu0 0.0
      %3002 = vmatpush1.msra.mxu0 0.0
      %3003 = vmatprep.subr.mxu0 0.0
      %3004 = vmatpush1.msra.mxu0 0.0
      %3005 = vmatprep.subr.mxu0 0.0
      %3006 = vmatpush1.msra.mxu0 0.0
      %3007 = vmatprep.subr.mxu0 0.0
      %3008 = vmatpush1.msra.mxu0 0.0
      %3009 = vmatprep.subr.mxu0 0.0
      %3010 = vmatpush1.msra.mxu0 0.0
      %3011 = vmatprep.subr.mxu0 0.0
      %3012 = vmatpush1.msra.mxu0 0.0
      %3013 = vmatprep.subr.mxu0 0.0
      %3014 = vmatpush1.msra.mxu0 0.0
      %3015 = vmatprep.subr.mxu0 0.0
      %3016 = vmatpush1.msra.mxu0 0.0
      %3017 = vmatprep.subr.mxu0 0.0
      %3018 = vmatpush1.msra.mxu0 0.0
      %3019 = vmatprep.subr.mxu0 0.0
      %3020 = vmatpush1.msra.mxu0 0.0
      %3021 = vmatprep.subr.mxu0 0.0
      %3022 = vmatpush1.msra.mxu0 0.0
      %3023 = vmatprep.subr.mxu0 0.0
      %3024 = vmatpush1.msra.mxu0 0.0
      %3025 = vmatprep.subr.mxu0 0.0
      %3026 = vmatpush1.msra.mxu0 0.0
      %3027 = vmatprep.subr.mxu0 0.0
      %3028 = vmatpush1.msra.mxu0 0.0
      %3029 = vmatprep.subr.mxu0 0.0
      %3030 = vmatpush1.msra.mxu0 0.0
      %3031 = vmatprep.subr.mxu0 0.0
      %3032 = vmatpush1.msra.mxu0 0.0
      %3033 = vmatprep.subr.mxu0 0.0
      %3034 = vmatpush1.msra.mxu0 0.0
      %3035 = vmatprep.subr.mxu0 0.0
      %3036 = vmatpush1.msra.mxu0 0.0
      %3037 = vmatprep.subr.mxu0 0.0
      %3038 = vmatpush1.msra.mxu0 0.0
      %3039 = vmatprep.subr.mxu0 0.0
      %3040 = vmatpush1.msra.mxu0 0.0
      %3041 = vmatprep.subr.mxu0 0.0
      %3042 = vmatpush1.msra.mxu0 0.0
      %3043 = vmatprep.subr.mxu0 0.0
      %3044 = vmatpush1.msra.mxu0 0.0
      %3045 = vmatprep.subr.mxu0 0.0
      %3046 = vmatpush1.msra.mxu0 0.0
      %3047 = vmatprep.mubr.f32.mxu0 0.0
      %3048 = vmatmul.mubr.f32.gmra.mrb[0].mxu0 %v1255
      %v3049 = vpop.f32.mrb[0].mxu0
      %v3050 = vadd.f32 %v2645, %v3049
      %v3051 = vpop.f32.mrb[0].mxu0
      %3052 = vmatprep.mubr.f32.mxu0 0.0
      %3053 = vmatmul.mubr.f32.gmra.mrb[0].mxu0 %v1258
      %v3054 = vpop.f32.mrb[0].mxu0
      %v3055 = vadd.f32 %v2650, %v3054
      %v3056 = vpop.f32.mrb[0].mxu0
      %3057 = vdwg.mxu0
      %3058 = vmatprep.subr.mxu0 0.0
      %3059 = vmatpush1.msra.mxu0 %v2655
      %3060 = vmatprep.subr.mxu0 0.0
      %3061 = vmatpush1.msra.mxu0 %v2660
      %3062 = vmatprep.subr.mxu0 0.0
      %3063 = vmatpush1.msra.mxu0 0.0
      %3064 = vmatprep.subr.mxu0 0.0
      %3065 = vmatpush1.msra.mxu0 0.0
      %3066 = vmatprep.subr.mxu0 0.0
      %3067 = vmatpush1.msra.mxu0 0.0
      %3068 = vmatprep.subr.mxu0 0.0
      %3069 = vmatpush1.msra.mxu0 0.0
      %3070 = vmatprep.subr.mxu0 0.0
      %3071 = vmatpush1.msra.mxu0 0.0
      %3072 = vmatprep.subr.mxu0 0.0
      %3073 = vmatpush1.msra.mxu0 0.0
      %3074 = vmatprep.subr.mxu0 0.0
      %3075 = vmatpush1.msra.mxu0 0.0
      %3076 = vmatprep.subr.mxu0 0.0
      %3077 = vmatpush1.msra.mxu0 0.0
      %3078 = vmatprep.subr.mxu0 0.0
      %3079 = vmatpush1.msra.mxu0 0.0
      %3080 = vmatprep.subr.mxu0 0.0
      %3081 = vmatpush1.msra.mxu0 0.0
      %3082 = vmatprep.subr.mxu0 0.0
      %3083 = vmatpush1.msra.mxu0 0.0
      %3084 = vmatprep.subr.mxu0 0.0
      %3085 = vmatpush1.msra.mxu0 0.0
      %3086 = vmatprep.subr.mxu0 0.0
      %3087 = vmatpush1.msra.mxu0 0.0
      %3088 = vmatprep.subr.mxu0 0.0
      %3089 = vmatpush1.msra.mxu0 0.0
      %3090 = vmatprep.subr.mxu0 0.0
      %3091 = vmatpush1.msra.mxu0 0.0
      %3092 = vmatprep.subr.mxu0 0.0
      %3093 = vmatpush1.msra.mxu0 0.0
      %3094 = vmatprep.subr.mxu0 0.0
      %3095 = vmatpush1.msra.mxu0 0.0
      %3096 = vmatprep.subr.mxu0 0.0
      %3097 = vmatpush1.msra.mxu0 0.0
      %3098 = vmatprep.subr.mxu0 0.0
      %3099 = vmatpush1.msra.mxu0 0.0
      %3100 = vmatprep.subr.mxu0 0.0
      %3101 = vmatpush1.msra.mxu0 0.0
      %3102 = vmatprep.subr.mxu0 0.0
      %3103 = vmatpush1.msra.mxu0 0.0
      %3104 = vmatprep.subr.mxu0 0.0
      %3105 = vmatpush1.msra.mxu0 0.0
      %3106 = vmatprep.subr.mxu0 0.0
      %3107 = vmatpush1.msra.mxu0 0.0
      %3108 = vmatprep.subr.mxu0 0.0
      %3109 = vmatpush1.msra.mxu0 0.0
      %3110 = vmatprep.subr.mxu0 0.0
      %3111 = vmatpush1.msra.mxu0 0.0
      %3112 = vmatprep.subr.mxu0 0.0
      %3113 = vmatpush1.msra.mxu0 0.0
      %3114 = vmatprep.subr.mxu0 0.0
      %3115 = vmatpush1.msra.mxu0 0.0
      %3116 = vmatprep.subr.mxu0 0.0
      %3117 = vmatpush1.msra.mxu0 0.0
      %3118 = vmatprep.subr.mxu0 0.0
      %3119 = vmatpush1.msra.mxu0 0.0
      %3120 = vmatprep.subr.mxu0 0.0
      %3121 = vmatpush1.msra.mxu0 0.0
      %3122 = vmatprep.mubr.f32.mxu0 0.0
      %3123 = vmatmul.mubr.f32.gmra.mrb[0].mxu0 %v1336
      %v3124 = vpop.f32.mrb[0].mxu0
      %v3125 = vadd.f32 %v2655, %v3124
      %v3126 = vpop.f32.mrb[0].mxu0
      %3127 = vmatprep.mubr.f32.mxu0 0.0
      %3128 = vmatmul.mubr.f32.gmra.mrb[0].mxu0 %v1339
      %v3129 = vpop.f32.mrb[0].mxu0
      %v3130 = vadd.f32 %v2660, %v3129
      %v3131 = vpop.f32.mrb[0].mxu0
      %3132 = vdwg.mxu0
      %3133 = vmatprep.subr.mxu0 0.0
      %3134 = vmatpush1.msra.mxu0 %v2665
      %3135 = vmatprep.subr.mxu0 0.0
      %3136 = vmatpush1.msra.mxu0 %v2670
      %3137 = vmatprep.subr.mxu0 0.0
      %3138 = vmatpush1.msra.mxu0 0.0
      %3139 = vmatprep.subr.mxu0 0.0
      %3140 = vmatpush1.msra.mxu0 0.0
      %3141 = vmatprep.subr.mxu0 0.0
      %3142 = vmatpush1.msra.mxu0 0.0
      %3143 = vmatprep.subr.mxu0 0.0
      %3144 = vmatpush1.msra.mxu0 0.0
      %3145 = vmatprep.subr.mxu0 0.0
      %3146 = vmatpush1.msra.mxu0 0.0
      %3147 = vmatprep.subr.mxu0 0.0
      %3148 = vmatpush1.msra.mxu0 0.0
      %3149 = vmatprep.subr.mxu0 0.0
      %3150 = vmatpush1.msra.mxu0 0.0
      %3151 = vmatprep.subr.mxu0 0.0
      %3152 = vmatpush1.msra.mxu0 0.0
      %3153 = vmatprep.subr.mxu0 0.0
      %3154 = vmatpush1.msra.mxu0 0.0
      %3155 = vmatprep.subr.mxu0 0.0
      %3156 = vmatpush1.msra.mxu0 0.0
      %3157 = vmatprep.subr.mxu0 0.0
      %3158 = vmatpush1.msra.mxu0 0.0
      %3159 = vmatprep.subr.mxu0 0.0
      %3160 = vmatpush1.msra.mxu0 0.0
      %3161 = vmatprep.subr.mxu0 0.0
      %3162 = vmatpush1.msra.mxu0 0.0
      %3163 = vmatprep.subr.mxu0 0.0
      %3164 = vmatpush1.msra.mxu0 0.0
      %3165 = vmatprep.subr.mxu0 0.0
      %3166 = vmatpush1.msra.mxu0 0.0
      %3167 = vmatprep.subr.mxu0 0.0
      %3168 = vmatpush1.msra.mxu0 0.0
      %3169 = vmatprep.subr.mxu0 0.0
      %3170 = vmatpush1.msra.mxu0 0.0
      %3171 = vmatprep.subr.mxu0 0.0
      %3172 = vmatpush1.msra.mxu0 0.0
      %3173 = vmatprep.subr.mxu0 0.0
      %3174 = vmatpush1.msra.mxu0 0.0
      %3175 = vmatprep.subr.mxu0 0.0
      %3176 = vmatpush1.msra.mxu0 0.0
      %3177 = vmatprep.subr.mxu0 0.0
      %3178 = vmatpush1.msra.mxu0 0.0
      %3179 = vmatprep.subr.mxu0 0.0
      %3180 = vmatpush1.msra.mxu0 0.0
      %3181 = vmatprep.subr.mxu0 0.0
      %3182 = vmatpush1.msra.mxu0 0.0
      %3183 = vmatprep.subr.mxu0 0.0
      %3184 = vmatpush1.msra.mxu0 0.0
      %3185 = vmatprep.subr.mxu0 0.0
      %3186 = vmatpush1.msra.mxu0 0.0
      %3187 = vmatprep.subr.mxu0 0.0
      %3188 = vmatpush1.msra.mxu0 0.0
      %3189 = vmatprep.subr.mxu0 0.0
      %3190 = vmatpush1.msra.mxu0 0.0
      %3191 = vmatprep.subr.mxu0 0.0
      %3192 = vmatpush1.msra.mxu0 0.0
      %3193 = vmatprep.subr.mxu0 0.0
      %3194 = vmatpush1.msra.mxu0 0.0
      %3195 = vmatprep.subr.mxu0 0.0
      %3196 = vmatpush1.msra.mxu0 0.0
      %3197 = vmatprep.mubr.f32.mxu0 0.0
      %3198 = vmatmul.mubr.f32.gmra.mrb[0].mxu0 %v1417
      %v3199 = vpop.f32.mrb[0].mxu0
      %v3200 = vadd.f32 %v2665, %v3199
      %v3201 = vpop.f32.mrb[0].mxu0
      %3202 = vmatprep.mubr.f32.mxu0 0.0
      %3203 = vmatmul.mubr.f32.gmra.mrb[0].mxu0 %v1420
      %v3204 = vpop.f32.mrb[0].mxu0
      %v3205 = vadd.f32 %v2670, %v3204
      %v3206 = vpop.f32.mrb[0].mxu0
      %3207 = vdwg.mxu0
      %3208 = vmatprep.subr.mxu0 0.0
      %3209 = vmatpush1.msra.mxu0 %v2675
      %3210 = vmatprep.subr.mxu0 0.0
      %3211 = vmatpush1.msra.mxu0 %v2680
      %3212 = vmatprep.subr.mxu0 0.0
      %3213 = vmatpush1.msra.mxu0 0.0
      %3214 = vmatprep.subr.mxu0 0.0
      %3215 = vmatpush1.msra.mxu0 0.0
      %3216 = vmatprep.subr.mxu0 0.0
      %3217 = vmatpush1.msra.mxu0 0.0
      %3218 = vmatprep.subr.mxu0 0.0
      %3219 = vmatpush1.msra.mxu0 0.0
      %3220 = vmatprep.subr.mxu0 0.0
      %3221 = vmatpush1.msra.mxu0 0.0
      %3222 = vmatprep.subr.mxu0 0.0
      %3223 = vmatpush1.msra.mxu0 0.0
      %3224 = vmatprep.subr.mxu0 0.0
      %3225 = vmatpush1.msra.mxu0 0.0
      %3226 = vmatprep.subr.mxu0 0.0
      %3227 = vmatpush1.msra.mxu0 0.0
      %3228 = vmatprep.subr.mxu0 0.0
      %3229 = vmatpush1.msra.mxu0 0.0
      %3230 = vmatprep.subr.mxu0 0.0
      %3231 = vmatpush1.msra.mxu0 0.0
      %3232 = vmatprep.subr.mxu0 0.0
      %3233 = vmatpush1.msra.mxu0 0.0
      %3234 = vmatprep.subr.mxu0 0.0
      %3235 = vmatpush1.msra.mxu0 0.0
      %3236 = vmatprep.subr.mxu0 0.0
      %3237 = vmatpush1.msra.mxu0 0.0
      %3238 = vmatprep.subr.mxu0 0.0
      %3239 = vmatpush1.msra.mxu0 0.0
      %3240 = vmatprep.subr.mxu0 0.0
      %3241 = vmatpush1.msra.mxu0 0.0
      %3242 = vmatprep.subr.mxu0 0.0
      %3243 = vmatpush1.msra.mxu0 0.0
      %3244 = vmatprep.subr.mxu0 0.0
      %3245 = vmatpush1.msra.mxu0 0.0
      %3246 = vmatprep.subr.mxu0 0.0
      %3247 = vmatpush1.msra.mxu0 0.0
      %3248 = vmatprep.subr.mxu0 0.0
      %3249 = vmatpush1.msra.mxu0 0.0
      %3250 = vmatprep.subr.mxu0 0.0
      %3251 = vmatpush1.msra.mxu0 0.0
      %3252 = vmatprep.subr.mxu0 0.0
      %3253 = vmatpush1.msra.mxu0 0.0
      %3254 = vmatprep.subr.mxu0 0.0
      %3255 = vmatpush1.msra.mxu0 0.0
      %3256 = vmatprep.subr.mxu0 0.0
      %3257 = vmatpush1.msra.mxu0 0.0
      %3258 = vmatprep.subr.mxu0 0.0
      %3259 = vmatpush1.msra.mxu0 0.0
      %3260 = vmatprep.subr.mxu0 0.0
      %3261 = vmatpush1.msra.mxu0 0.0
      %3262 = vmatprep.subr.mxu0 0.0
      %3263 = vmatpush1.msra.mxu0 0.0
      %3264 = vmatprep.subr.mxu0 0.0
      %3265 = vmatpush1.msra.mxu0 0.0
      %3266 = vmatprep.subr.mxu0 0.0
      %3267 = vmatpush1.msra.mxu0 0.0
      %3268 = vmatprep.subr.mxu0 0.0
      %3269 = vmatpush1.msra.mxu0 0.0
      %3270 = vmatprep.subr.mxu0 0.0
      %3271 = vmatpush1.msra.mxu0 0.0
      %3272 = vmatprep.mubr.f32.mxu0 0.0
      %3273 = vmatmul.mubr.f32.gmra.mrb[0].mxu0 %v1498
      %v3274 = vpop.f32.mrb[0].mxu0
      %v3275 = vadd.f32 %v2675, %v3274
      %v3276 = vpop.f32.mrb[0].mxu0
      %3277 = vmatprep.mubr.f32.mxu0 0.0
      %3278 = vmatmul.mubr.f32.gmra.mrb[0].mxu0 %v1501
      %v3279 = vpop.f32.mrb[0].mxu0
      %v3280 = vadd.f32 %v2680, %v3279
      %v3281 = vpop.f32.mrb[0].mxu0
      %3282 = vdwg.mxu0
      %v3283 = vld [vmem:[%s7] sm:$0x1]
      %v3285 = vlaneseq
      %v3286 = vshrl.u32 %v3285, 7
      %v3287 = vsub.s32 0, %v3286
      %v3288 = vrot.slane %v3283, %v3287
      %v3290 = vadd.f32 %v2750, %v3288
      %v3291 = vadd.f32 %v2755, %v3288
      %v3292 = vadd.f32 %v2825, %v3288
      %v3293 = vadd.f32 %v2830, %v3288
      %v3294 = vadd.f32 %v2900, %v3288
      %v3295 = vadd.f32 %v2905, %v3288
      %v3296 = vadd.f32 %v2975, %v3288
      %v3297 = vadd.f32 %v2980, %v3288
      %v3298 = vadd.f32 %v3050, %v3288
      %v3299 = vadd.f32 %v3055, %v3288
      %v3300 = vadd.f32 %v3125, %v3288
      %v3301 = vadd.f32 %v3130, %v3288
      %v3302 = vadd.f32 %v3200, %v3288
      %v3303 = vadd.f32 %v3205, %v3288
      %v3304 = vadd.f32 %v3275, %v3288
      %v3305 = vadd.f32 %v3280, %v3288
      %v3306 = vmul.f32 %v3290, %v688
      %v3307 = vmul.f32 %v3291, %v690
      %v3308 = vmul.f32 %v3292, %v692
      %v3309 = vmul.f32 %v3293, %v694
      %v3310 = vmul.f32 %v3294, %v696
      %v3311 = vmul.f32 %v3295, %v698
      %v3312 = vmul.f32 %v3296, %v700
      %v3313 = vmul.f32 %v3297, %v702
      %v3314 = vmul.f32 %v3298, %v704
      %v3315 = vmul.f32 %v3299, %v706
      %v3316 = vmul.f32 %v3300, %v708
      %v3317 = vmul.f32 %v3301, %v710
      %v3318 = vmul.f32 %v3302, %v712
      %v3319 = vmul.f32 %v3303, %v714
      %v3320 = vmul.f32 %v3304, %v716
      %v3321 = vmul.f32 %v3305, %v718
      %v3322 = vtanh.pop %v3306
      %v3323 = vtanh.pop %v3307
      %v3324 = vtanh.pop %v3308
      %v3325 = vtanh.pop %v3309
      %v3326 = vtanh.pop %v3310
      %v3327 = vtanh.pop %v3311
      %v3328 = vtanh.pop %v3312
      %v3329 = vtanh.pop %v3313
      %v3330 = vtanh.pop %v3314
      %v3331 = vtanh.pop %v3315
      %v3332 = vtanh.pop %v3316
      %v3333 = vtanh.pop %v3317
      %v3334 = vtanh.pop %v3318
      %v3335 = vtanh.pop %v3319
      %v3336 = vtanh.pop %v3320
      %v3337 = vtanh.pop %v3321
      %v3338 = vld [vmem:[%s8] sm:$0xff]
      %v3339 = vld [vmem:[%s8 + $0x8] sm:$0xff]
      %v3340 = vld [vmem:[%s8 + $0x10] sm:$0xff]
      %v3341 = vld [vmem:[%s8 + $0x18] sm:$0xff]
      %v3343 = vsel %vm1637, %v3322, 0
      %v3346 = vsel %vm1637, %v3323, 0
      %v3349 = vsel %vm1637, %v3324, 0
      %v3352 = vsel %vm1637, %v3325, 0
      %v3355 = vsel %vm1637, %v3326, 0
      %v3358 = vsel %vm1637, %v3327, 0
      %v3361 = vsel %vm1637, %v3328, 0
      %v3364 = vsel %vm1637, %v3329, 0
      %v3367 = vsel %vm1637, %v3330, 0
      %v3370 = vsel %vm1637, %v3331, 0
      %v3373 = vsel %vm1637, %v3332, 0
      %v3376 = vsel %vm1637, %v3333, 0
      %v3379 = vsel %vm1637, %v3334, 0
      %v3382 = vsel %vm1637, %v3335, 0
      %v3385 = vsel %vm1637, %v3336, 0
      %v3388 = vsel %vm1637, %v3337, 0
      %3390 = vmatprep.subr.mxu0 0.0
      %3391 = vmatpush1.msra.mxu0 %v3338
      %3392 = vmatprep.subr.mxu0 0.0
      %3393 = vmatpush1.msra.mxu0 %v3339
      %3394 = vmatprep.subr.mxu0 0.0
      %3395 = vmatpush1.msra.mxu0 %v3340
      %3396 = vmatprep.subr.mxu0 0.0
      %3397 = vmatpush1.msra.mxu0 %v3341
      %3398 = vmatprep.subr.mxu0 0.0
      %3399 = vmatpush1.msra.mxu0 0.0
      %3400 = vmatprep.subr.mxu0 0.0
      %3401 = vmatpush1.msra.mxu0 0.0
      %3402 = vmatprep.subr.mxu0 0.0
      %3403 = vmatpush1.msra.mxu0 0.0
      %3404 = vmatprep.subr.mxu0 0.0
      %3405 = vmatpush1.msra.mxu0 0.0
      %3406 = vmatprep.subr.mxu0 0.0
      %3407 = vmatpush1.msra.mxu0 0.0
      %3408 = vmatprep.subr.mxu0 0.0
      %3409 = vmatpush1.msra.mxu0 0.0
      %3410 = vmatprep.subr.mxu0 0.0
      %3411 = vmatpush1.msra.mxu0 0.0
      %3412 = vmatprep.subr.mxu0 0.0
      %3413 = vmatpush1.msra.mxu0 0.0
      %3414 = vmatprep.subr.mxu0 0.0
      %3415 = vmatpush1.msra.mxu0 0.0
      %3416 = vmatprep.subr.mxu0 0.0
      %3417 = vmatpush1.msra.mxu0 0.0
      %3418 = vmatprep.subr.mxu0 0.0
      %3419 = vmatpush1.msra.mxu0 0.0
      %3420 = vmatprep.subr.mxu0 0.0
      %3421 = vmatpush1.msra.mxu0 0.0
      %3422 = vmatprep.subr.mxu0 0.0
      %3423 = vmatpush1.msra.mxu0 0.0
      %3424 = vmatprep.subr.mxu0 0.0
      %3425 = vmatpush1.msra.mxu0 0.0
      %3426 = vmatprep.subr.mxu0 0.0
      %3427 = vmatpush1.msra.mxu0 0.0
      %3428 = vmatprep.subr.mxu0 0.0
      %3429 = vmatpush1.msra.mxu0 0.0
      %3430 = vmatprep.subr.mxu0 0.0
      %3431 = vmatpush1.msra.mxu0 0.0
      %3432 = vmatprep.subr.mxu0 0.0
      %3433 = vmatpush1.msra.mxu0 0.0
      %3434 = vmatprep.subr.mxu0 0.0
      %3435 = vmatpush1.msra.mxu0 0.0
      %3436 = vmatprep.subr.mxu0 0.0
      %3437 = vmatpush1.msra.mxu0 0.0
      %3438 = vmatprep.subr.mxu0 0.0
      %3439 = vmatpush1.msra.mxu0 0.0
      %3440 = vmatprep.subr.mxu0 0.0
      %3441 = vmatpush1.msra.mxu0 0.0
      %3442 = vmatprep.subr.mxu0 0.0
      %3443 = vmatpush1.msra.mxu0 0.0
      %3444 = vmatprep.subr.mxu0 0.0
      %3445 = vmatpush1.msra.mxu0 0.0
      %3446 = vmatprep.subr.mxu0 0.0
      %3447 = vmatpush1.msra.mxu0 0.0
      %3448 = vmatprep.subr.mxu0 0.0
      %3449 = vmatpush1.msra.mxu0 0.0
      %3450 = vmatprep.subr.mxu0 0.0
      %3451 = vmatpush1.msra.mxu0 0.0
      %3452 = vmatprep.subr.mxu0 0.0
      %3453 = vmatpush1.msra.mxu0 0.0
      %3454 = vmatprep.mubr.f32.mxu0 0.0
      %3455 = vmatmul.mubr.f32.gmra.mrb[0].mxu0 %v3343
      %v3456 = vpop.f32.mrb[0].mxu0
      %v3457 = vadd.f32 0.0, %v3456
      %v3458 = vpop.f32.mrb[0].mxu0
      %3459 = vmatprep.mubr.f32.mxu0 0.0
      %3460 = vmatmul.mubr.f32.gmra.mrb[0].mxu0 %v3346
      %v3461 = vpop.f32.mrb[0].mxu0
      %v3462 = vadd.f32 0.0, %v3461
      %v3463 = vpop.f32.mrb[0].mxu0
      %3464 = vmatprep.mubr.f32.mxu0 0.0
      %3465 = vmatmul.mubr.f32.gmra.mrb[0].mxu0 %v3349
      %v3466 = vpop.f32.mrb[0].mxu0
      %v3467 = vadd.f32 0.0, %v3466
      %v3468 = vpop.f32.mrb[0].mxu0
      %3469 = vmatprep.mubr.f32.mxu0 0.0
      %3470 = vmatmul.mubr.f32.gmra.mrb[0].mxu0 %v3352
      %v3471 = vpop.f32.mrb[0].mxu0
      %v3472 = vadd.f32 0.0, %v3471
      %v3473 = vpop.f32.mrb[0].mxu0
      %3474 = vmatprep.mubr.f32.mxu0 0.0
      %3475 = vmatmul.mubr.f32.gmra.mrb[0].mxu0 %v3355
      %v3476 = vpop.f32.mrb[0].mxu0
      %v3477 = vadd.f32 0.0, %v3476
      %v3478 = vpop.f32.mrb[0].mxu0
      %3479 = vmatprep.mubr.f32.mxu0 0.0
      %3480 = vmatmul.mubr.f32.gmra.mrb[0].mxu0 %v3358
      %v3481 = vpop.f32.mrb[0].mxu0
      %v3482 = vadd.f32 0.0, %v3481
      %v3483 = vpop.f32.mrb[0].mxu0
      %3484 = vmatprep.mubr.f32.mxu0 0.0
      %3485 = vmatmul.mubr.f32.gmra.mrb[0].mxu0 %v3361
      %v3486 = vpop.f32.mrb[0].mxu0
      %v3487 = vadd.f32 0.0, %v3486
      %v3488 = vpop.f32.mrb[0].mxu0
      %3489 = vmatprep.mubr.f32.mxu0 0.0
      %3490 = vmatmul.mubr.f32.gmra.mrb[0].mxu0 %v3364
      %v3491 = vpop.f32.mrb[0].mxu0
      %v3492 = vadd.f32 0.0, %v3491
      %v3493 = vpop.f32.mrb[0].mxu0
      %3494 = vmatprep.mubr.f32.mxu0 0.0
      %3495 = vmatmul.mubr.f32.gmra.mrb[0].mxu0 %v3367
      %v3496 = vpop.f32.mrb[0].mxu0
      %v3497 = vadd.f32 0.0, %v3496
      %v3498 = vpop.f32.mrb[0].mxu0
      %3499 = vmatprep.mubr.f32.mxu0 0.0
      %3500 = vmatmul.mubr.f32.gmra.mrb[0].mxu0 %v3370
      %v3501 = vpop.f32.mrb[0].mxu0
      %v3502 = vadd.f32 0.0, %v3501
      %v3503 = vpop.f32.mrb[0].mxu0
      %3504 = vmatprep.mubr.f32.mxu0 0.0
      %3505 = vmatmul.mubr.f32.gmra.mrb[0].mxu0 %v3373
      %v3506 = vpop.f32.mrb[0].mxu0
      %v3507 = vadd.f32 0.0, %v3506
      %v3508 = vpop.f32.mrb[0].mxu0
      %3509 = vmatprep.mubr.f32.mxu0 0.0
      %3510 = vmatmul.mubr.f32.gmra.mrb[0].mxu0 %v3376
      %v3511 = vpop.f32.mrb[0].mxu0
      %v3512 = vadd.f32 0.0, %v3511
      %v3513 = vpop.f32.mrb[0].mxu0
      %3514 = vmatprep.mubr.f32.mxu0 0.0
      %3515 = vmatmul.mubr.f32.gmra.mrb[0].mxu0 %v3379
      %v3516 = vpop.f32.mrb[0].mxu0
      %v3517 = vadd.f32 0.0, %v3516
      %v3518 = vpop.f32.mrb[0].mxu0
      %3519 = vmatprep.mubr.f32.mxu0 0.0
      %3520 = vmatmul.mubr.f32.gmra.mrb[0].mxu0 %v3382
      %v3521 = vpop.f32.mrb[0].mxu0
      %v3522 = vadd.f32 0.0, %v3521
      %v3523 = vpop.f32.mrb[0].mxu0
      %3524 = vmatprep.mubr.f32.mxu0 0.0
      %3525 = vmatmul.mubr.f32.gmra.mrb[0].mxu0 %v3385
      %v3526 = vpop.f32.mrb[0].mxu0
      %v3527 = vadd.f32 0.0, %v3526
      %v3528 = vpop.f32.mrb[0].mxu0
      %3529 = vmatprep.mubr.f32.mxu0 0.0
      %3530 = vmatmul.mubr.f32.gmra.mrb[0].mxu0 %v3388
      %v3531 = vpop.f32.mrb[0].mxu0
      %v3532 = vadd.f32 0.0, %v3531
      %v3533 = vpop.f32.mrb[0].mxu0
      %3534 = vdwg.mxu0
      %3535 = vmatprep.subr.mxu0 0.0
      %3536 = vmatpush1.msra.mxu0 %v3457
      %3537 = vmatprep.subr.mxu0 0.0
      %3538 = vmatpush1.msra.mxu0 %v3462
      %3539 = vmatprep.subr.mxu0 0.0
      %3540 = vmatpush1.msra.mxu0 0.0
      %3541 = vmatprep.subr.mxu0 0.0
      %3542 = vmatpush1.msra.mxu0 0.0
      %3543 = vmatprep.subr.mxu0 0.0
      %3544 = vmatpush1.msra.mxu0 0.0
      %3545 = vmatprep.subr.mxu0 0.0
      %3546 = vmatpush1.msra.mxu0 0.0
      %3547 = vmatprep.subr.mxu0 0.0
      %3548 = vmatpush1.msra.mxu0 0.0
      %3549 = vmatprep.subr.mxu0 0.0
      %3550 = vmatpush1.msra.mxu0 0.0
      %3551 = vmatprep.subr.mxu0 0.0
      %3552 = vmatpush1.msra.mxu0 0.0
      %3553 = vmatprep.subr.mxu0 0.0
      %3554 = vmatpush1.msra.mxu0 0.0
      %3555 = vmatprep.subr.mxu0 0.0
      %3556 = vmatpush1.msra.mxu0 0.0
      %3557 = vmatprep.subr.mxu0 0.0
      %3558 = vmatpush1.msra.mxu0 0.0
      %3559 = vmatprep.subr.mxu0 0.0
      %3560 = vmatpush1.msra.mxu0 0.0
      %3561 = vmatprep.subr.mxu0 0.0
      %3562 = vmatpush1.msra.mxu0 0.0
      %3563 = vmatprep.subr.mxu0 0.0
      %3564 = vmatpush1.msra.mxu0 0.0
      %3565 = vmatprep.subr.mxu0 0.0
      %3566 = vmatpush1.msra.mxu0 0.0
      %3567 = vmatprep.subr.mxu0 0.0
      %3568 = vmatpush1.msra.mxu0 0.0
      %3569 = vmatprep.subr.mxu0 0.0
      %3570 = vmatpush1.msra.mxu0 0.0
      %3571 = vmatprep.subr.mxu0 0.0
      %3572 = vmatpush1.msra.mxu0 0.0
      %3573 = vmatprep.subr.mxu0 0.0
      %3574 = vmatpush1.msra.mxu0 0.0
      %3575 = vmatprep.subr.mxu0 0.0
      %3576 = vmatpush1.msra.mxu0 0.0
      %3577 = vmatprep.subr.mxu0 0.0
      %3578 = vmatpush1.msra.mxu0 0.0
      %3579 = vmatprep.subr.mxu0 0.0
      %3580 = vmatpush1.msra.mxu0 0.0
      %3581 = vmatprep.subr.mxu0 0.0
      %3582 = vmatpush1.msra.mxu0 0.0
      %3583 = vmatprep.subr.mxu0 0.0
      %3584 = vmatpush1.msra.mxu0 0.0
      %3585 = vmatprep.subr.mxu0 0.0
      %3586 = vmatpush1.msra.mxu0 0.0
      %3587 = vmatprep.subr.mxu0 0.0
      %3588 = vmatpush1.msra.mxu0 0.0
      %3589 = vmatprep.subr.mxu0 0.0
      %3590 = vmatpush1.msra.mxu0 0.0
      %3591 = vmatprep.subr.mxu0 0.0
      %3592 = vmatpush1.msra.mxu0 0.0
      %3593 = vmatprep.subr.mxu0 0.0
      %3594 = vmatpush1.msra.mxu0 0.0
      %3595 = vmatprep.subr.mxu0 0.0
      %3596 = vmatpush1.msra.mxu0 0.0
      %3597 = vmatprep.subr.mxu0 0.0
      %3598 = vmatpush1.msra.mxu0 0.0
      %3599 = vmatprep.mubr.f32.mxu0 0.0
      %3600 = vmatmul.mubr.f32.gmra.mrb[0].mxu0 %v931
      %v3601 = vpop.f32.mrb[0].mxu0
      %v3602 = vadd.f32 %v3457, %v3601
      %v3603 = vpop.f32.mrb[0].mxu0
      %3604 = vmatprep.mubr.f32.mxu0 0.0
      %3605 = vmatmul.mubr.f32.gmra.mrb[0].mxu0 %v934
      %v3606 = vpop.f32.mrb[0].mxu0
      %v3607 = vadd.f32 %v3462, %v3606
      %v3608 = vpop.f32.mrb[0].mxu0
      %3609 = vdwg.mxu0
      %3610 = vmatprep.subr.mxu0 0.0
      %3611 = vmatpush1.msra.mxu0 %v3467
      %3612 = vmatprep.subr.mxu0 0.0
      %3613 = vmatpush1.msra.mxu0 %v3472
      %3614 = vmatprep.subr.mxu0 0.0
      %3615 = vmatpush1.msra.mxu0 0.0
      %3616 = vmatprep.subr.mxu0 0.0
      %3617 = vmatpush1.msra.mxu0 0.0
      %3618 = vmatprep.subr.mxu0 0.0
      %3619 = vmatpush1.msra.mxu0 0.0
      %3620 = vmatprep.subr.mxu0 0.0
      %3621 = vmatpush1.msra.mxu0 0.0
      %3622 = vmatprep.subr.mxu0 0.0
      %3623 = vmatpush1.msra.mxu0 0.0
      %3624 = vmatprep.subr.mxu0 0.0
      %3625 = vmatpush1.msra.mxu0 0.0
      %3626 = vmatprep.subr.mxu0 0.0
      %3627 = vmatpush1.msra.mxu0 0.0
      %3628 = vmatprep.subr.mxu0 0.0
      %3629 = vmatpush1.msra.mxu0 0.0
      %3630 = vmatprep.subr.mxu0 0.0
      %3631 = vmatpush1.msra.mxu0 0.0
      %3632 = vmatprep.subr.mxu0 0.0
      %3633 = vmatpush1.msra.mxu0 0.0
      %3634 = vmatprep.subr.mxu0 0.0
      %3635 = vmatpush1.msra.mxu0 0.0
      %3636 = vmatprep.subr.mxu0 0.0
      %3637 = vmatpush1.msra.mxu0 0.0
      %3638 = vmatprep.subr.mxu0 0.0
      %3639 = vmatpush1.msra.mxu0 0.0
      %3640 = vmatprep.subr.mxu0 0.0
      %3641 = vmatpush1.msra.mxu0 0.0
      %3642 = vmatprep.subr.mxu0 0.0
      %3643 = vmatpush1.msra.mxu0 0.0
      %3644 = vmatprep.subr.mxu0 0.0
      %3645 = vmatpush1.msra.mxu0 0.0
      %3646 = vmatprep.subr.mxu0 0.0
      %3647 = vmatpush1.msra.mxu0 0.0
      %3648 = vmatprep.subr.mxu0 0.0
      %3649 = vmatpush1.msra.mxu0 0.0
      %3650 = vmatprep.subr.mxu0 0.0
      %3651 = vmatpush1.msra.mxu0 0.0
      %3652 = vmatprep.subr.mxu0 0.0
      %3653 = vmatpush1.msra.mxu0 0.0
      %3654 = vmatprep.subr.mxu0 0.0
      %3655 = vmatpush1.msra.mxu0 0.0
      %3656 = vmatprep.subr.mxu0 0.0
      %3657 = vmatpush1.msra.mxu0 0.0
      %3658 = vmatprep.subr.mxu0 0.0
      %3659 = vmatpush1.msra.mxu0 0.0
      %3660 = vmatprep.subr.mxu0 0.0
      %3661 = vmatpush1.msra.mxu0 0.0
      %3662 = vmatprep.subr.mxu0 0.0
      %3663 = vmatpush1.msra.mxu0 0.0
      %3664 = vmatprep.subr.mxu0 0.0
      %3665 = vmatpush1.msra.mxu0 0.0
      %3666 = vmatprep.subr.mxu0 0.0
      %3667 = vmatpush1.msra.mxu0 0.0
      %3668 = vmatprep.subr.mxu0 0.0
      %3669 = vmatpush1.msra.mxu0 0.0
      %3670 = vmatprep.subr.mxu0 0.0
      %3671 = vmatpush1.msra.mxu0 0.0
      %3672 = vmatprep.subr.mxu0 0.0
      %3673 = vmatpush1.msra.mxu0 0.0
      %3674 = vmatprep.mubr.f32.mxu0 0.0
      %3675 = vmatmul.mubr.f32.gmra.mrb[0].mxu0 %v1012
      %v3676 = vpop.f32.mrb[0].mxu0
      %v3677 = vadd.f32 %v3467, %v3676
      %v3678 = vpop.f32.mrb[0].mxu0
      %3679 = vmatprep.mubr.f32.mxu0 0.0
      %3680 = vmatmul.mubr.f32.gmra.mrb[0].mxu0 %v1015
      %v3681 = vpop.f32.mrb[0].mxu0
      %v3682 = vadd.f32 %v3472, %v3681
      %v3683 = vpop.f32.mrb[0].mxu0
      %3684 = vdwg.mxu0
      %3685 = vmatprep.subr.mxu0 0.0
      %3686 = vmatpush1.msra.mxu0 %v3477
      %3687 = vmatprep.subr.mxu0 0.0
      %3688 = vmatpush1.msra.mxu0 %v3482
      %3689 = vmatprep.subr.mxu0 0.0
      %3690 = vmatpush1.msra.mxu0 0.0
      %3691 = vmatprep.subr.mxu0 0.0
      %3692 = vmatpush1.msra.mxu0 0.0
      %3693 = vmatprep.subr.mxu0 0.0
      %3694 = vmatpush1.msra.mxu0 0.0
      %3695 = vmatprep.subr.mxu0 0.0
      %3696 = vmatpush1.msra.mxu0 0.0
      %3697 = vmatprep.subr.mxu0 0.0
      %3698 = vmatpush1.msra.mxu0 0.0
      %3699 = vmatprep.subr.mxu0 0.0
      %3700 = vmatpush1.msra.mxu0 0.0
      %3701 = vmatprep.subr.mxu0 0.0
      %3702 = vmatpush1.msra.mxu0 0.0
      %3703 = vmatprep.subr.mxu0 0.0
      %3704 = vmatpush1.msra.mxu0 0.0
      %3705 = vmatprep.subr.mxu0 0.0
      %3706 = vmatpush1.msra.mxu0 0.0
      %3707 = vmatprep.subr.mxu0 0.0
      %3708 = vmatpush1.msra.mxu0 0.0
      %3709 = vmatprep.subr.mxu0 0.0
      %3710 = vmatpush1.msra.mxu0 0.0
      %3711 = vmatprep.subr.mxu0 0.0
      %3712 = vmatpush1.msra.mxu0 0.0
      %3713 = vmatprep.subr.mxu0 0.0
      %3714 = vmatpush1.msra.mxu0 0.0
      %3715 = vmatprep.subr.mxu0 0.0
      %3716 = vmatpush1.msra.mxu0 0.0
      %3717 = vmatprep.subr.mxu0 0.0
      %3718 = vmatpush1.msra.mxu0 0.0
      %3719 = vmatprep.subr.mxu0 0.0
      %3720 = vmatpush1.msra.mxu0 0.0
      %3721 = vmatprep.subr.mxu0 0.0
      %3722 = vmatpush1.msra.mxu0 0.0
      %3723 = vmatprep.subr.mxu0 0.0
      %3724 = vmatpush1.msra.mxu0 0.0
      %3725 = vmatprep.subr.mxu0 0.0
      %3726 = vmatpush1.msra.mxu0 0.0
      %3727 = vmatprep.subr.mxu0 0.0
      %3728 = vmatpush1.msra.mxu0 0.0
      %3729 = vmatprep.subr.mxu0 0.0
      %3730 = vmatpush1.msra.mxu0 0.0
      %3731 = vmatprep.subr.mxu0 0.0
      %3732 = vmatpush1.msra.mxu0 0.0
      %3733 = vmatprep.subr.mxu0 0.0
      %3734 = vmatpush1.msra.mxu0 0.0
      %3735 = vmatprep.subr.mxu0 0.0
      %3736 = vmatpush1.msra.mxu0 0.0
      %3737 = vmatprep.subr.mxu0 0.0
      %3738 = vmatpush1.msra.mxu0 0.0
      %3739 = vmatprep.subr.mxu0 0.0
      %3740 = vmatpush1.msra.mxu0 0.0
      %3741 = vmatprep.subr.mxu0 0.0
      %3742 = vmatpush1.msra.mxu0 0.0
      %3743 = vmatprep.subr.mxu0 0.0
      %3744 = vmatpush1.msra.mxu0 0.0
      %3745 = vmatprep.subr.mxu0 0.0
      %3746 = vmatpush1.msra.mxu0 0.0
      %3747 = vmatprep.subr.mxu0 0.0
      %3748 = vmatpush1.msra.mxu0 0.0
      %3749 = vmatprep.mubr.f32.mxu0 0.0
      %3750 = vmatmul.mubr.f32.gmra.mrb[0].mxu0 %v1093
      %v3751 = vpop.f32.mrb[0].mxu0
      %v3752 = vadd.f32 %v3477, %v3751
      %v3753 = vpop.f32.mrb[0].mxu0
      %3754 = vmatprep.mubr.f32.mxu0 0.0
      %3755 = vmatmul.mubr.f32.gmra.mrb[0].mxu0 %v1096
      %v3756 = vpop.f32.mrb[0].mxu0
      %v3757 = vadd.f32 %v3482, %v3756
      %v3758 = vpop.f32.mrb[0].mxu0
      %3759 = vdwg.mxu0
      %3760 = vmatprep.subr.mxu0 0.0
      %3761 = vmatpush1.msra.mxu0 %v3487
      %3762 = vmatprep.subr.mxu0 0.0
      %3763 = vmatpush1.msra.mxu0 %v3492
      %3764 = vmatprep.subr.mxu0 0.0
      %3765 = vmatpush1.msra.mxu0 0.0
      %3766 = vmatprep.subr.mxu0 0.0
      %3767 = vmatpush1.msra.mxu0 0.0
      %3768 = vmatprep.subr.mxu0 0.0
      %3769 = vmatpush1.msra.mxu0 0.0
      %3770 = vmatprep.subr.mxu0 0.0
      %3771 = vmatpush1.msra.mxu0 0.0
      %3772 = vmatprep.subr.mxu0 0.0
      %3773 = vmatpush1.msra.mxu0 0.0
      %3774 = vmatprep.subr.mxu0 0.0
      %3775 = vmatpush1.msra.mxu0 0.0
      %3776 = vmatprep.subr.mxu0 0.0
      %3777 = vmatpush1.msra.mxu0 0.0
      %3778 = vmatprep.subr.mxu0 0.0
      %3779 = vmatpush1.msra.mxu0 0.0
      %3780 = vmatprep.subr.mxu0 0.0
      %3781 = vmatpush1.msra.mxu0 0.0
      %3782 = vmatprep.subr.mxu0 0.0
      %3783 = vmatpush1.msra.mxu0 0.0
      %3784 = vmatprep.subr.mxu0 0.0
      %3785 = vmatpush1.msra.mxu0 0.0
      %3786 = vmatprep.subr.mxu0 0.0
      %3787 = vmatpush1.msra.mxu0 0.0
      %3788 = vmatprep.subr.mxu0 0.0
      %3789 = vmatpush1.msra.mxu0 0.0
      %3790 = vmatprep.subr.mxu0 0.0
      %3791 = vmatpush1.msra.mxu0 0.0
      %3792 = vmatprep.subr.mxu0 0.0
      %3793 = vmatpush1.msra.mxu0 0.0
      %3794 = vmatprep.subr.mxu0 0.0
      %3795 = vmatpush1.msra.mxu0 0.0
      %3796 = vmatprep.subr.mxu0 0.0
      %3797 = vmatpush1.msra.mxu0 0.0
      %3798 = vmatprep.subr.mxu0 0.0
      %3799 = vmatpush1.msra.mxu0 0.0
      %3800 = vmatprep.subr.mxu0 0.0
      %3801 = vmatpush1.msra.mxu0 0.0
      %3802 = vmatprep.subr.mxu0 0.0
      %3803 = vmatpush1.msra.mxu0 0.0
      %3804 = vmatprep.subr.mxu0 0.0
      %3805 = vmatpush1.msra.mxu0 0.0
      %3806 = vmatprep.subr.mxu0 0.0
      %3807 = vmatpush1.msra.mxu0 0.0
      %3808 = vmatprep.subr.mxu0 0.0
      %3809 = vmatpush1.msra.mxu0 0.0
      %3810 = vmatprep.subr.mxu0 0.0
      %3811 = vmatpush1.msra.mxu0 0.0
      %3812 = vmatprep.subr.mxu0 0.0
      %3813 = vmatpush1.msra.mxu0 0.0
      %3814 = vmatprep.subr.mxu0 0.0
      %3815 = vmatpush1.msra.mxu0 0.0
      %3816 = vmatprep.subr.mxu0 0.0
      %3817 = vmatpush1.msra.mxu0 0.0
      %3818 = vmatprep.subr.mxu0 0.0
      %3819 = vmatpush1.msra.mxu0 0.0
      %3820 = vmatprep.subr.mxu0 0.0
      %3821 = vmatpush1.msra.mxu0 0.0
      %3822 = vmatprep.subr.mxu0 0.0
      %3823 = vmatpush1.msra.mxu0 0.0
      %3824 = vmatprep.mubr.f32.mxu0 0.0
      %3825 = vmatmul.mubr.f32.gmra.mrb[0].mxu0 %v1174
      %v3826 = vpop.f32.mrb[0].mxu0
      %v3827 = vadd.f32 %v3487, %v3826
      %v3828 = vpop.f32.mrb[0].mxu0
      %3829 = vmatprep.mubr.f32.mxu0 0.0
      %3830 = vmatmul.mubr.f32.gmra.mrb[0].mxu0 %v1177
      %v3831 = vpop.f32.mrb[0].mxu0
      %v3832 = vadd.f32 %v3492, %v3831
      %v3833 = vpop.f32.mrb[0].mxu0
      %3834 = vdwg.mxu0
      %3835 = vmatprep.subr.mxu0 0.0
      %3836 = vmatpush1.msra.mxu0 %v3497
      %3837 = vmatprep.subr.mxu0 0.0
      %3838 = vmatpush1.msra.mxu0 %v3502
      %3839 = vmatprep.subr.mxu0 0.0
      %3840 = vmatpush1.msra.mxu0 0.0
      %3841 = vmatprep.subr.mxu0 0.0
      %3842 = vmatpush1.msra.mxu0 0.0
      %3843 = vmatprep.subr.mxu0 0.0
      %3844 = vmatpush1.msra.mxu0 0.0
      %3845 = vmatprep.subr.mxu0 0.0
      %3846 = vmatpush1.msra.mxu0 0.0
      %3847 = vmatprep.subr.mxu0 0.0
      %3848 = vmatpush1.msra.mxu0 0.0
      %3849 = vmatprep.subr.mxu0 0.0
      %3850 = vmatpush1.msra.mxu0 0.0
      %3851 = vmatprep.subr.mxu0 0.0
      %3852 = vmatpush1.msra.mxu0 0.0
      %3853 = vmatprep.subr.mxu0 0.0
      %3854 = vmatpush1.msra.mxu0 0.0
      %3855 = vmatprep.subr.mxu0 0.0
      %3856 = vmatpush1.msra.mxu0 0.0
      %3857 = vmatprep.subr.mxu0 0.0
      %3858 = vmatpush1.msra.mxu0 0.0
      %3859 = vmatprep.subr.mxu0 0.0
      %3860 = vmatpush1.msra.mxu0 0.0
      %3861 = vmatprep.subr.mxu0 0.0
      %3862 = vmatpush1.msra.mxu0 0.0
      %3863 = vmatprep.subr.mxu0 0.0
      %3864 = vmatpush1.msra.mxu0 0.0
      %3865 = vmatprep.subr.mxu0 0.0
      %3866 = vmatpush1.msra.mxu0 0.0
      %3867 = vmatprep.subr.mxu0 0.0
      %3868 = vmatpush1.msra.mxu0 0.0
      %3869 = vmatprep.subr.mxu0 0.0
      %3870 = vmatpush1.msra.mxu0 0.0
      %3871 = vmatprep.subr.mxu0 0.0
      %3872 = vmatpush1.msra.mxu0 0.0
      %3873 = vmatprep.subr.mxu0 0.0
      %3874 = vmatpush1.msra.mxu0 0.0
      %3875 = vmatprep.subr.mxu0 0.0
      %3876 = vmatpush1.msra.mxu0 0.0
      %3877 = vmatprep.subr.mxu0 0.0
      %3878 = vmatpush1.msra.mxu0 0.0
      %3879 = vmatprep.subr.mxu0 0.0
      %3880 = vmatpush1.msra.mxu0 0.0
      %3881 = vmatprep.subr.mxu0 0.0
      %3882 = vmatpush1.msra.mxu0 0.0
      %3883 = vmatprep.subr.mxu0 0.0
      %3884 = vmatpush1.msra.mxu0 0.0
      %3885 = vmatprep.subr.mxu0 0.0
      %3886 = vmatpush1.msra.mxu0 0.0
      %3887 = vmatprep.subr.mxu0 0.0
      %3888 = vmatpush1.msra.mxu0 0.0
      %3889 = vmatprep.subr.mxu0 0.0
      %3890 = vmatpush1.msra.mxu0 0.0
      %3891 = vmatprep.subr.mxu0 0.0
      %3892 = vmatpush1.msra.mxu0 0.0
      %3893 = vmatprep.subr.mxu0 0.0
      %3894 = vmatpush1.msra.mxu0 0.0
      %3895 = vmatprep.subr.mxu0 0.0
      %3896 = vmatpush1.msra.mxu0 0.0
      %3897 = vmatprep.subr.mxu0 0.0
      %3898 = vmatpush1.msra.mxu0 0.0
      %3899 = vmatprep.mubr.f32.mxu0 0.0
      %3900 = vmatmul.mubr.f32.gmra.mrb[0].mxu0 %v1255
      %v3901 = vpop.f32.mrb[0].mxu0
      %v3902 = vadd.f32 %v3497, %v3901
      %v3903 = vpop.f32.mrb[0].mxu0
      %3904 = vmatprep.mubr.f32.mxu0 0.0
      %3905 = vmatmul.mubr.f32.gmra.mrb[0].mxu0 %v1258
      %v3906 = vpop.f32.mrb[0].mxu0
      %v3907 = vadd.f32 %v3502, %v3906
      %v3908 = vpop.f32.mrb[0].mxu0
      %3909 = vdwg.mxu0
      %3910 = vmatprep.subr.mxu0 0.0
      %3911 = vmatpush1.msra.mxu0 %v3507
      %3912 = vmatprep.subr.mxu0 0.0
      %3913 = vmatpush1.msra.mxu0 %v3512
      %3914 = vmatprep.subr.mxu0 0.0
      %3915 = vmatpush1.msra.mxu0 0.0
      %3916 = vmatprep.subr.mxu0 0.0
      %3917 = vmatpush1.msra.mxu0 0.0
      %3918 = vmatprep.subr.mxu0 0.0
      %3919 = vmatpush1.msra.mxu0 0.0
      %3920 = vmatprep.subr.mxu0 0.0
      %3921 = vmatpush1.msra.mxu0 0.0
      %3922 = vmatprep.subr.mxu0 0.0
      %3923 = vmatpush1.msra.mxu0 0.0
      %3924 = vmatprep.subr.mxu0 0.0
      %3925 = vmatpush1.msra.mxu0 0.0
      %3926 = vmatprep.subr.mxu0 0.0
      %3927 = vmatpush1.msra.mxu0 0.0
      %3928 = vmatprep.subr.mxu0 0.0
      %3929 = vmatpush1.msra.mxu0 0.0
      %3930 = vmatprep.subr.mxu0 0.0
      %3931 = vmatpush1.msra.mxu0 0.0
      %3932 = vmatprep.subr.mxu0 0.0
      %3933 = vmatpush1.msra.mxu0 0.0
      %3934 = vmatprep.subr.mxu0 0.0
      %3935 = vmatpush1.msra.mxu0 0.0
      %3936 = vmatprep.subr.mxu0 0.0
      %3937 = vmatpush1.msra.mxu0 0.0
      %3938 = vmatprep.subr.mxu0 0.0
      %3939 = vmatpush1.msra.mxu0 0.0
      %3940 = vmatprep.subr.mxu0 0.0
      %3941 = vmatpush1.msra.mxu0 0.0
      %3942 = vmatprep.subr.mxu0 0.0
      %3943 = vmatpush1.msra.mxu0 0.0
      %3944 = vmatprep.subr.mxu0 0.0
      %3945 = vmatpush1.msra.mxu0 0.0
      %3946 = vmatprep.subr.mxu0 0.0
      %3947 = vmatpush1.msra.mxu0 0.0
      %3948 = vmatprep.subr.mxu0 0.0
      %3949 = vmatpush1.msra.mxu0 0.0
      %3950 = vmatprep.subr.mxu0 0.0
      %3951 = vmatpush1.msra.mxu0 0.0
      %3952 = vmatprep.subr.mxu0 0.0
      %3953 = vmatpush1.msra.mxu0 0.0
      %3954 = vmatprep.subr.mxu0 0.0
      %3955 = vmatpush1.msra.mxu0 0.0
      %3956 = vmatprep.subr.mxu0 0.0
      %3957 = vmatpush1.msra.mxu0 0.0
      %3958 = vmatprep.subr.mxu0 0.0
      %3959 = vmatpush1.msra.mxu0 0.0
      %3960 = vmatprep.subr.mxu0 0.0
      %3961 = vmatpush1.msra.mxu0 0.0
      %3962 = vmatprep.subr.mxu0 0.0
      %3963 = vmatpush1.msra.mxu0 0.0
      %3964 = vmatprep.subr.mxu0 0.0
      %3965 = vmatpush1.msra.mxu0 0.0
      %3966 = vmatprep.subr.mxu0 0.0
      %3967 = vmatpush1.msra.mxu0 0.0
      %3968 = vmatprep.subr.mxu0 0.0
      %3969 = vmatpush1.msra.mxu0 0.0
      %3970 = vmatprep.subr.mxu0 0.0
      %3971 = vmatpush1.msra.mxu0 0.0
      %3972 = vmatprep.subr.mxu0 0.0
      %3973 = vmatpush1.msra.mxu0 0.0
      %3974 = vmatprep.mubr.f32.mxu0 0.0
      %3975 = vmatmul.mubr.f32.gmra.mrb[0].mxu0 %v1336
      %v3976 = vpop.f32.mrb[0].mxu0
      %v3977 = vadd.f32 %v3507, %v3976
      %v3978 = vpop.f32.mrb[0].mxu0
      %3979 = vmatprep.mubr.f32.mxu0 0.0
      %3980 = vmatmul.mubr.f32.gmra.mrb[0].mxu0 %v1339
      %v3981 = vpop.f32.mrb[0].mxu0
      %v3982 = vadd.f32 %v3512, %v3981
      %v3983 = vpop.f32.mrb[0].mxu0
      %3984 = vdwg.mxu0
      %3985 = vmatprep.subr.mxu0 0.0
      %3986 = vmatpush1.msra.mxu0 %v3517
      %3987 = vmatprep.subr.mxu0 0.0
      %3988 = vmatpush1.msra.mxu0 %v3522
      %3989 = vmatprep.subr.mxu0 0.0
      %3990 = vmatpush1.msra.mxu0 0.0
      %3991 = vmatprep.subr.mxu0 0.0
      %3992 = vmatpush1.msra.mxu0 0.0
      %3993 = vmatprep.subr.mxu0 0.0
      %3994 = vmatpush1.msra.mxu0 0.0
      %3995 = vmatprep.subr.mxu0 0.0
      %3996 = vmatpush1.msra.mxu0 0.0
      %3997 = vmatprep.subr.mxu0 0.0
      %3998 = vmatpush1.msra.mxu0 0.0
      %3999 = vmatprep.subr.mxu0 0.0
      %4000 = vmatpush1.msra.mxu0 0.0
      %4001 = vmatprep.subr.mxu0 0.0
      %4002 = vmatpush1.msra.mxu0 0.0
      %4003 = vmatprep.subr.mxu0 0.0
      %4004 = vmatpush1.msra.mxu0 0.0
      %4005 = vmatprep.subr.mxu0 0.0
      %4006 = vmatpush1.msra.mxu0 0.0
      %4007 = vmatprep.subr.mxu0 0.0
      %4008 = vmatpush1.msra.mxu0 0.0
      %4009 = vmatprep.subr.mxu0 0.0
      %4010 = vmatpush1.msra.mxu0 0.0
      %4011 = vmatprep.subr.mxu0 0.0
      %4012 = vmatpush1.msra.mxu0 0.0
      %4013 = vmatprep.subr.mxu0 0.0
      %4014 = vmatpush1.msra.mxu0 0.0
      %4015 = vmatprep.subr.mxu0 0.0
      %4016 = vmatpush1.msra.mxu0 0.0
      %4017 = vmatprep.subr.mxu0 0.0
      %4018 = vmatpush1.msra.mxu0 0.0
      %4019 = vmatprep.subr.mxu0 0.0
      %4020 = vmatpush1.msra.mxu0 0.0
      %4021 = vmatprep.subr.mxu0 0.0
      %4022 = vmatpush1.msra.mxu0 0.0
      %4023 = vmatprep.subr.mxu0 0.0
      %4024 = vmatpush1.msra.mxu0 0.0
      %4025 = vmatprep.subr.mxu0 0.0
      %4026 = vmatpush1.msra.mxu0 0.0
      %4027 = vmatprep.subr.mxu0 0.0
      %4028 = vmatpush1.msra.mxu0 0.0
      %4029 = vmatprep.subr.mxu0 0.0
      %4030 = vmatpush1.msra.mxu0 0.0
      %4031 = vmatprep.subr.mxu0 0.0
      %4032 = vmatpush1.msra.mxu0 0.0
      %4033 = vmatprep.subr.mxu0 0.0
      %4034 = vmatpush1.msra.mxu0 0.0
      %4035 = vmatprep.subr.mxu0 0.0
      %4036 = vmatpush1.msra.mxu0 0.0
      %4037 = vmatprep.subr.mxu0 0.0
      %4038 = vmatpush1.msra.mxu0 0.0
      %4039 = vmatprep.subr.mxu0 0.0
      %4040 = vmatpush1.msra.mxu0 0.0
      %4041 = vmatprep.subr.mxu0 0.0
      %4042 = vmatpush1.msra.mxu0 0.0
      %4043 = vmatprep.subr.mxu0 0.0
      %4044 = vmatpush1.msra.mxu0 0.0
      %4045 = vmatprep.subr.mxu0 0.0
      %4046 = vmatpush1.msra.mxu0 0.0
      %4047 = vmatprep.subr.mxu0 0.0
      %4048 = vmatpush1.msra.mxu0 0.0
      %4049 = vmatprep.mubr.f32.mxu0 0.0
      %4050 = vmatmul.mubr.f32.gmra.mrb[0].mxu0 %v1417
      %v4051 = vpop.f32.mrb[0].mxu0
      %v4052 = vadd.f32 %v3517, %v4051
      %v4053 = vpop.f32.mrb[0].mxu0
      %4054 = vmatprep.mubr.f32.mxu0 0.0
      %4055 = vmatmul.mubr.f32.gmra.mrb[0].mxu0 %v1420
      %v4056 = vpop.f32.mrb[0].mxu0
      %v4057 = vadd.f32 %v3522, %v4056
      %v4058 = vpop.f32.mrb[0].mxu0
      %4059 = vdwg.mxu0
      %4060 = vmatprep.subr.mxu0 0.0
      %4061 = vmatpush1.msra.mxu0 %v3527
      %4062 = vmatprep.subr.mxu0 0.0
      %4063 = vmatpush1.msra.mxu0 %v3532
      %4064 = vmatprep.subr.mxu0 0.0
      %4065 = vmatpush1.msra.mxu0 0.0
      %4066 = vmatprep.subr.mxu0 0.0
      %4067 = vmatpush1.msra.mxu0 0.0
      %4068 = vmatprep.subr.mxu0 0.0
      %4069 = vmatpush1.msra.mxu0 0.0
      %4070 = vmatprep.subr.mxu0 0.0
      %4071 = vmatpush1.msra.mxu0 0.0
      %4072 = vmatprep.subr.mxu0 0.0
      %4073 = vmatpush1.msra.mxu0 0.0
      %4074 = vmatprep.subr.mxu0 0.0
      %4075 = vmatpush1.msra.mxu0 0.0
      %4076 = vmatprep.subr.mxu0 0.0
      %4077 = vmatpush1.msra.mxu0 0.0
      %4078 = vmatprep.subr.mxu0 0.0
      %4079 = vmatpush1.msra.mxu0 0.0
      %4080 = vmatprep.subr.mxu0 0.0
      %4081 = vmatpush1.msra.mxu0 0.0
      %4082 = vmatprep.subr.mxu0 0.0
      %4083 = vmatpush1.msra.mxu0 0.0
      %4084 = vmatprep.subr.mxu0 0.0
      %4085 = vmatpush1.msra.mxu0 0.0
      %4086 = vmatprep.subr.mxu0 0.0
      %4087 = vmatpush1.msra.mxu0 0.0
      %4088 = vmatprep.subr.mxu0 0.0
      %4089 = vmatpush1.msra.mxu0 0.0
      %4090 = vmatprep.subr.mxu0 0.0
      %4091 = vmatpush1.msra.mxu0 0.0
      %4092 = vmatprep.subr.mxu0 0.0
      %4093 = vmatpush1.msra.mxu0 0.0
      %4094 = vmatprep.subr.mxu0 0.0
      %4095 = vmatpush1.msra.mxu0 0.0
      %4096 = vmatprep.subr.mxu0 0.0
      %4097 = vmatpush1.msra.mxu0 0.0
      %4098 = vmatprep.subr.mxu0 0.0
      %4099 = vmatpush1.msra.mxu0 0.0
      %4100 = vmatprep.subr.mxu0 0.0
      %4101 = vmatpush1.msra.mxu0 0.0
      %4102 = vmatprep.subr.mxu0 0.0
      %4103 = vmatpush1.msra.mxu0 0.0
      %4104 = vmatprep.subr.mxu0 0.0
      %4105 = vmatpush1.msra.mxu0 0.0
      %4106 = vmatprep.subr.mxu0 0.0
      %4107 = vmatpush1.msra.mxu0 0.0
      %4108 = vmatprep.subr.mxu0 0.0
      %4109 = vmatpush1.msra.mxu0 0.0
      %4110 = vmatprep.subr.mxu0 0.0
      %4111 = vmatpush1.msra.mxu0 0.0
      %4112 = vmatprep.subr.mxu0 0.0
      %4113 = vmatpush1.msra.mxu0 0.0
      %4114 = vmatprep.subr.mxu0 0.0
      %4115 = vmatpush1.msra.mxu0 0.0
      %4116 = vmatprep.subr.mxu0 0.0
      %4117 = vmatpush1.msra.mxu0 0.0
      %4118 = vmatprep.subr.mxu0 0.0
      %4119 = vmatpush1.msra.mxu0 0.0
      %4120 = vmatprep.subr.mxu0 0.0
      %4121 = vmatpush1.msra.mxu0 0.0
      %4122 = vmatprep.subr.mxu0 0.0
      %4123 = vmatpush1.msra.mxu0 0.0
      %4124 = vmatprep.mubr.f32.mxu0 0.0
      %4125 = vmatmul.mubr.f32.gmra.mrb[0].mxu0 %v1498
      %v4126 = vpop.f32.mrb[0].mxu0
      %v4127 = vadd.f32 %v3527, %v4126
      %v4128 = vpop.f32.mrb[0].mxu0
      %4129 = vmatprep.mubr.f32.mxu0 0.0
      %4130 = vmatmul.mubr.f32.gmra.mrb[0].mxu0 %v1501
      %v4131 = vpop.f32.mrb[0].mxu0
      %v4132 = vadd.f32 %v3532, %v4131
      %v4133 = vpop.f32.mrb[0].mxu0
      %4134 = vdwg.mxu0
      %v4135 = vld [vmem:[#allocation2] sm:$0x1]
      %v4137 = vlaneseq
      %v4138 = vshrl.u32 %v4137, 7
      %v4139 = vsub.s32 0, %v4138
      %v4140 = vrot.slane %v4135, %v4139
      %v4142 = vadd.f32 %v3602, %v4140
      %v4143 = vadd.f32 %v3607, %v4140
      %v4144 = vadd.f32 %v3677, %v4140
      %v4145 = vadd.f32 %v3682, %v4140
      %v4146 = vadd.f32 %v3752, %v4140
      %v4147 = vadd.f32 %v3757, %v4140
      %v4148 = vadd.f32 %v3827, %v4140
      %v4149 = vadd.f32 %v3832, %v4140
      %v4150 = vadd.f32 %v3902, %v4140
      %v4151 = vadd.f32 %v3907, %v4140
      %v4152 = vadd.f32 %v3977, %v4140
      %v4153 = vadd.f32 %v3982, %v4140
      %v4154 = vadd.f32 %v4052, %v4140
      %v4155 = vadd.f32 %v4057, %v4140
      %v4156 = vadd.f32 %v4127, %v4140
      %v4157 = vadd.f32 %v4132, %v4140
      %v4158 = vmul.f32 %v4142, %v688
      %v4159 = vmul.f32 %v4143, %v690
      %v4160 = vmul.f32 %v4144, %v692
      %v4161 = vmul.f32 %v4145, %v694
      %v4162 = vmul.f32 %v4146, %v696
      %v4163 = vmul.f32 %v4147, %v698
      %v4164 = vmul.f32 %v4148, %v700
      %v4165 = vmul.f32 %v4149, %v702
      %v4166 = vmul.f32 %v4150, %v704
      %v4167 = vmul.f32 %v4151, %v706
      %v4168 = vmul.f32 %v4152, %v708
      %v4169 = vmul.f32 %v4153, %v710
      %v4170 = vmul.f32 %v4154, %v712
      %v4171 = vmul.f32 %v4155, %v714
      %v4172 = vmul.f32 %v4156, %v716
      %v4173 = vmul.f32 %v4157, %v718
      %v4174 = vtanh.pop %v4158
      %v4175 = vtanh.pop %v4159
      %v4176 = vtanh.pop %v4160
      %v4177 = vtanh.pop %v4161
      %v4178 = vtanh.pop %v4162
      %v4179 = vtanh.pop %v4163
      %v4180 = vtanh.pop %v4164
      %v4181 = vtanh.pop %v4165
      %v4182 = vtanh.pop %v4166
      %v4183 = vtanh.pop %v4167
      %v4184 = vtanh.pop %v4168
      %v4185 = vtanh.pop %v4169
      %v4186 = vtanh.pop %v4170
      %v4187 = vtanh.pop %v4171
      %v4188 = vtanh.pop %v4172
      %v4189 = vtanh.pop %v4173
      %v4190 = vld [vmem:[%s11] sm:$0x1]
      %v4191 = vld [vmem:[%s10] sm:$0xff]
      %v4192 = vld [vmem:[%s10 + $0x8] sm:$0xff]
      %v4193 = vld [vmem:[%s10 + $0x10] sm:$0xff]
      %v4194 = vld [vmem:[%s10 + $0x18] sm:$0xff]
      %4195 = vmatprep.subr.mxu0 0.0
      %4196 = vmatpush1.msra.mxu0 %v4191
      %4197 = vmatprep.subr.mxu0 0.0
      %4198 = vmatpush1.msra.mxu0 %v4192
      %4199 = vmatprep.subr.mxu0 0.0
      %4200 = vmatpush1.msra.mxu0 %v4193
      %4201 = vmatprep.subr.mxu0 0.0
      %4202 = vmatpush1.msra.mxu0 %v4194
      %4203 = vmatprep.subr.mxu0 0.0
      %4204 = vmatpush1.msra.mxu0 0.0
      %4205 = vmatprep.subr.mxu0 0.0
      %4206 = vmatpush1.msra.mxu0 0.0
      %4207 = vmatprep.subr.mxu0 0.0
      %4208 = vmatpush1.msra.mxu0 0.0
      %4209 = vmatprep.subr.mxu0 0.0
      %4210 = vmatpush1.msra.mxu0 0.0
      %4211 = vmatprep.subr.mxu0 0.0
      %4212 = vmatpush1.msra.mxu0 0.0
      %4213 = vmatprep.subr.mxu0 0.0
      %4214 = vmatpush1.msra.mxu0 0.0
      %4215 = vmatprep.subr.mxu0 0.0
      %4216 = vmatpush1.msra.mxu0 0.0
      %4217 = vmatprep.subr.mxu0 0.0
      %4218 = vmatpush1.msra.mxu0 0.0
      %4219 = vmatprep.subr.mxu0 0.0
      %4220 = vmatpush1.msra.mxu0 0.0
      %4221 = vmatprep.subr.mxu0 0.0
      %4222 = vmatpush1.msra.mxu0 0.0
      %4223 = vmatprep.subr.mxu0 0.0
      %4224 = vmatpush1.msra.mxu0 0.0
      %4225 = vmatprep.subr.mxu0 0.0
      %4226 = vmatpush1.msra.mxu0 0.0
      %4227 = vmatprep.subr.mxu0 0.0
      %4228 = vmatpush1.msra.mxu0 0.0
      %4229 = vmatprep.subr.mxu0 0.0
      %4230 = vmatpush1.msra.mxu0 0.0
      %4231 = vmatprep.subr.mxu0 0.0
      %4232 = vmatpush1.msra.mxu0 0.0
      %4233 = vmatprep.subr.mxu0 0.0
      %4234 = vmatpush1.msra.mxu0 0.0
      %4235 = vmatprep.subr.mxu0 0.0
      %4236 = vmatpush1.msra.mxu0 0.0
      %4237 = vmatprep.subr.mxu0 0.0
      %4238 = vmatpush1.msra.mxu0 0.0
      %4239 = vmatprep.subr.mxu0 0.0
      %4240 = vmatpush1.msra.mxu0 0.0
      %4241 = vmatprep.subr.mxu0 0.0
      %4242 = vmatpush1.msra.mxu0 0.0
      %4243 = vmatprep.subr.mxu0 0.0
      %4244 = vmatpush1.msra.mxu0 0.0
      %4245 = vmatprep.subr.mxu0 0.0
      %4246 = vmatpush1.msra.mxu0 0.0
      %4247 = vmatprep.subr.mxu0 0.0
      %4248 = vmatpush1.msra.mxu0 0.0
      %4249 = vmatprep.subr.mxu0 0.0
      %4250 = vmatpush1.msra.mxu0 0.0
      %4251 = vmatprep.subr.mxu0 0.0
      %4252 = vmatpush1.msra.mxu0 0.0
      %4253 = vmatprep.subr.mxu0 0.0
      %4254 = vmatpush1.msra.mxu0 0.0
      %4255 = vmatprep.subr.mxu0 0.0
      %4256 = vmatpush1.msra.mxu0 0.0
      %4257 = vmatprep.subr.mxu0 0.0
      %4258 = vmatpush1.msra.mxu0 0.0
      %4259 = vmatprep.mubr.f32.mxu0 0.0
      %4260 = vmatmul.mubr.f32.gmra.mrb[0].mxu0 %v1639
      %v4261 = vpop.f32.mrb[0].mxu0
      %v4262 = vadd.f32 0.0, %v4261
      %v4263 = vpop.f32.mrb[0].mxu0
      %4264 = vmatprep.mubr.f32.mxu0 0.0
      %4265 = vmatmul.mubr.f32.gmra.mrb[0].mxu0 %v1642
      %v4266 = vpop.f32.mrb[0].mxu0
      %v4267 = vadd.f32 0.0, %v4266
      %v4268 = vpop.f32.mrb[0].mxu0
      %4269 = vmatprep.mubr.f32.mxu0 0.0
      %4270 = vmatmul.mubr.f32.gmra.mrb[0].mxu0 %v1645
      %v4271 = vpop.f32.mrb[0].mxu0
      %v4272 = vadd.f32 0.0, %v4271
      %v4273 = vpop.f32.mrb[0].mxu0
      %4274 = vmatprep.mubr.f32.mxu0 0.0
      %4275 = vmatmul.mubr.f32.gmra.mrb[0].mxu0 %v1648
      %v4276 = vpop.f32.mrb[0].mxu0
      %v4277 = vadd.f32 0.0, %v4276
      %v4278 = vpop.f32.mrb[0].mxu0
      %4279 = vmatprep.mubr.f32.mxu0 0.0
      %4280 = vmatmul.mubr.f32.gmra.mrb[0].mxu0 %v1651
      %v4281 = vpop.f32.mrb[0].mxu0
      %v4282 = vadd.f32 0.0, %v4281
      %v4283 = vpop.f32.mrb[0].mxu0
      %4284 = vmatprep.mubr.f32.mxu0 0.0
      %4285 = vmatmul.mubr.f32.gmra.mrb[0].mxu0 %v1654
      %v4286 = vpop.f32.mrb[0].mxu0
      %v4287 = vadd.f32 0.0, %v4286
      %v4288 = vpop.f32.mrb[0].mxu0
      %4289 = vmatprep.mubr.f32.mxu0 0.0
      %4290 = vmatmul.mubr.f32.gmra.mrb[0].mxu0 %v1657
      %v4291 = vpop.f32.mrb[0].mxu0
      %v4292 = vadd.f32 0.0, %v4291
      %v4293 = vpop.f32.mrb[0].mxu0
      %4294 = vmatprep.mubr.f32.mxu0 0.0
      %4295 = vmatmul.mubr.f32.gmra.mrb[0].mxu0 %v1660
      %v4296 = vpop.f32.mrb[0].mxu0
      %v4297 = vadd.f32 0.0, %v4296
      %v4298 = vpop.f32.mrb[0].mxu0
      %4299 = vmatprep.mubr.f32.mxu0 0.0
      %4300 = vmatmul.mubr.f32.gmra.mrb[0].mxu0 %v1663
      %v4301 = vpop.f32.mrb[0].mxu0
      %v4302 = vadd.f32 0.0, %v4301
      %v4303 = vpop.f32.mrb[0].mxu0
      %4304 = vmatprep.mubr.f32.mxu0 0.0
      %4305 = vmatmul.mubr.f32.gmra.mrb[0].mxu0 %v1666
      %v4306 = vpop.f32.mrb[0].mxu0
      %v4307 = vadd.f32 0.0, %v4306
      %v4308 = vpop.f32.mrb[0].mxu0
      %4309 = vmatprep.mubr.f32.mxu0 0.0
      %4310 = vmatmul.mubr.f32.gmra.mrb[0].mxu0 %v1669
      %v4311 = vpop.f32.mrb[0].mxu0
      %v4312 = vadd.f32 0.0, %v4311
      %v4313 = vpop.f32.mrb[0].mxu0
      %4314 = vmatprep.mubr.f32.mxu0 0.0
      %4315 = vmatmul.mubr.f32.gmra.mrb[0].mxu0 %v1672
      %v4316 = vpop.f32.mrb[0].mxu0
      %v4317 = vadd.f32 0.0, %v4316
      %v4318 = vpop.f32.mrb[0].mxu0
      %4319 = vmatprep.mubr.f32.mxu0 0.0
      %4320 = vmatmul.mubr.f32.gmra.mrb[0].mxu0 %v1675
      %v4321 = vpop.f32.mrb[0].mxu0
      %v4322 = vadd.f32 0.0, %v4321
      %v4323 = vpop.f32.mrb[0].mxu0
      %4324 = vmatprep.mubr.f32.mxu0 0.0
      %4325 = vmatmul.mubr.f32.gmra.mrb[0].mxu0 %v1678
      %v4326 = vpop.f32.mrb[0].mxu0
      %v4327 = vadd.f32 0.0, %v4326
      %v4328 = vpop.f32.mrb[0].mxu0
      %4329 = vmatprep.mubr.f32.mxu0 0.0
      %4330 = vmatmul.mubr.f32.gmra.mrb[0].mxu0 %v1681
      %v4331 = vpop.f32.mrb[0].mxu0
      %v4332 = vadd.f32 0.0, %v4331
      %v4333 = vpop.f32.mrb[0].mxu0
      %4334 = vmatprep.mubr.f32.mxu0 0.0
      %4335 = vmatmul.mubr.f32.gmra.mrb[0].mxu0 %v1684
      %v4336 = vpop.f32.mrb[0].mxu0
      %v4337 = vadd.f32 0.0, %v4336
      %v4338 = vpop.f32.mrb[0].mxu0
      %4339 = vdwg.mxu0
      %v4341 = vlaneseq
      %v4342 = vshrl.u32 %v4341, 7
      %v4343 = vsub.s32 0, %v4342
      %v4344 = vrot.slane %v4190, %v4343
      %v4346 = vadd.f32 %v4344, %v4262
      %v4347 = vadd.f32 %v4344, %v4267
      %v4348 = vadd.f32 %v4344, %v4272
      %v4349 = vadd.f32 %v4344, %v4277
      %v4350 = vadd.f32 %v4344, %v4282
      %v4351 = vadd.f32 %v4344, %v4287
      %v4352 = vadd.f32 %v4344, %v4292
      %v4353 = vadd.f32 %v4344, %v4297
      %v4354 = vadd.f32 %v4344, %v4302
      %v4355 = vadd.f32 %v4344, %v4307
      %v4356 = vadd.f32 %v4344, %v4312
      %v4357 = vadd.f32 %v4344, %v4317
      %v4358 = vadd.f32 %v4344, %v4322
      %v4359 = vadd.f32 %v4344, %v4327
      %v4360 = vadd.f32 %v4344, %v4332
      %v4361 = vadd.f32 %v4344, %v4337
      %v4362 = vld [vmem:[%s10 + $0x20] sm:$0xff]
      %v4363 = vld [vmem:[%s10 + $0x28] sm:$0xff]
      %v4364 = vld [vmem:[%s10 + $0x30] sm:$0xff]
      %v4365 = vld [vmem:[%s10 + $0x38] sm:$0xff]
      %4366 = vmatprep.subr.mxu0 0.0
      %4367 = vmatpush1.msra.mxu0 %v4362
      %4368 = vmatprep.subr.mxu0 0.0
      %4369 = vmatpush1.msra.mxu0 %v4363
      %4370 = vmatprep.subr.mxu0 0.0
      %4371 = vmatpush1.msra.mxu0 %v4364
      %4372 = vmatprep.subr.mxu0 0.0
      %4373 = vmatpush1.msra.mxu0 %v4365
      %4374 = vmatprep.subr.mxu0 0.0
      %4375 = vmatpush1.msra.mxu0 0.0
      %4376 = vmatprep.subr.mxu0 0.0
      %4377 = vmatpush1.msra.mxu0 0.0
      %4378 = vmatprep.subr.mxu0 0.0
      %4379 = vmatpush1.msra.mxu0 0.0
      %4380 = vmatprep.subr.mxu0 0.0
      %4381 = vmatpush1.msra.mxu0 0.0
      %4382 = vmatprep.subr.mxu0 0.0
      %4383 = vmatpush1.msra.mxu0 0.0
      %4384 = vmatprep.subr.mxu0 0.0
      %4385 = vmatpush1.msra.mxu0 0.0
      %4386 = vmatprep.subr.mxu0 0.0
      %4387 = vmatpush1.msra.mxu0 0.0
      %4388 = vmatprep.subr.mxu0 0.0
      %4389 = vmatpush1.msra.mxu0 0.0
      %4390 = vmatprep.subr.mxu0 0.0
      %4391 = vmatpush1.msra.mxu0 0.0
      %4392 = vmatprep.subr.mxu0 0.0
      %4393 = vmatpush1.msra.mxu0 0.0
      %4394 = vmatprep.subr.mxu0 0.0
      %4395 = vmatpush1.msra.mxu0 0.0
      %4396 = vmatprep.subr.mxu0 0.0
      %4397 = vmatpush1.msra.mxu0 0.0
      %4398 = vmatprep.subr.mxu0 0.0
      %4399 = vmatpush1.msra.mxu0 0.0
      %4400 = vmatprep.subr.mxu0 0.0
      %4401 = vmatpush1.msra.mxu0 0.0
      %4402 = vmatprep.subr.mxu0 0.0
      %4403 = vmatpush1.msra.mxu0 0.0
      %4404 = vmatprep.subr.mxu0 0.0
      %4405 = vmatpush1.msra.mxu0 0.0
      %4406 = vmatprep.subr.mxu0 0.0
      %4407 = vmatpush1.msra.mxu0 0.0
      %4408 = vmatprep.subr.mxu0 0.0
      %4409 = vmatpush1.msra.mxu0 0.0
      %4410 = vmatprep.subr.mxu0 0.0
      %4411 = vmatpush1.msra.mxu0 0.0
      %4412 = vmatprep.subr.mxu0 0.0
      %4413 = vmatpush1.msra.mxu0 0.0
      %4414 = vmatprep.subr.mxu0 0.0
      %4415 = vmatpush1.msra.mxu0 0.0
      %4416 = vmatprep.subr.mxu0 0.0
      %4417 = vmatpush1.msra.mxu0 0.0
      %4418 = vmatprep.subr.mxu0 0.0
      %4419 = vmatpush1.msra.mxu0 0.0
      %4420 = vmatprep.subr.mxu0 0.0
      %4421 = vmatpush1.msra.mxu0 0.0
      %4422 = vmatprep.subr.mxu0 0.0
      %4423 = vmatpush1.msra.mxu0 0.0
      %4424 = vmatprep.subr.mxu0 0.0
      %4425 = vmatpush1.msra.mxu0 0.0
      %4426 = vmatprep.subr.mxu0 0.0
      %4427 = vmatpush1.msra.mxu0 0.0
      %4428 = vmatprep.subr.mxu0 0.0
      %4429 = vmatpush1.msra.mxu0 0.0
      %4430 = vmatprep.mubr.f32.mxu0 0.0
      %4431 = vmatmul.mubr.f32.gmra.mrb[0].mxu0 %v2491
      %v4432 = vpop.f32.mrb[0].mxu0
      %v4433 = vadd.f32 0.0, %v4432
      %v4434 = vpop.f32.mrb[0].mxu0
      %4435 = vmatprep.mubr.f32.mxu0 0.0
      %4436 = vmatmul.mubr.f32.gmra.mrb[0].mxu0 %v2494
      %v4437 = vpop.f32.mrb[0].mxu0
      %v4438 = vadd.f32 0.0, %v4437
      %v4439 = vpop.f32.mrb[0].mxu0
      %4440 = vmatprep.mubr.f32.mxu0 0.0
      %4441 = vmatmul.mubr.f32.gmra.mrb[0].mxu0 %v2497
      %v4442 = vpop.f32.mrb[0].mxu0
      %v4443 = vadd.f32 0.0, %v4442
      %v4444 = vpop.f32.mrb[0].mxu0
      %4445 = vmatprep.mubr.f32.mxu0 0.0
      %4446 = vmatmul.mubr.f32.gmra.mrb[0].mxu0 %v2500
      %v4447 = vpop.f32.mrb[0].mxu0
      %v4448 = vadd.f32 0.0, %v4447
      %v4449 = vpop.f32.mrb[0].mxu0
      %4450 = vmatprep.mubr.f32.mxu0 0.0
      %4451 = vmatmul.mubr.f32.gmra.mrb[0].mxu0 %v2503
      %v4452 = vpop.f32.mrb[0].mxu0
      %v4453 = vadd.f32 0.0, %v4452
      %v4454 = vpop.f32.mrb[0].mxu0
      %4455 = vmatprep.mubr.f32.mxu0 0.0
      %4456 = vmatmul.mubr.f32.gmra.mrb[0].mxu0 %v2506
      %v4457 = vpop.f32.mrb[0].mxu0
      %v4458 = vadd.f32 0.0, %v4457
      %v4459 = vpop.f32.mrb[0].mxu0
      %4460 = vmatprep.mubr.f32.mxu0 0.0
      %4461 = vmatmul.mubr.f32.gmra.mrb[0].mxu0 %v2509
      %v4462 = vpop.f32.mrb[0].mxu0
      %v4463 = vadd.f32 0.0, %v4462
      %v4464 = vpop.f32.mrb[0].mxu0
      %4465 = vmatprep.mubr.f32.mxu0 0.0
      %4466 = vmatmul.mubr.f32.gmra.mrb[0].mxu0 %v2512
      %v4467 = vpop.f32.mrb[0].mxu0
      %v4468 = vadd.f32 0.0, %v4467
      %v4469 = vpop.f32.mrb[0].mxu0
      %4470 = vmatprep.mubr.f32.mxu0 0.0
      %4471 = vmatmul.mubr.f32.gmra.mrb[0].mxu0 %v2515
      %v4472 = vpop.f32.mrb[0].mxu0
      %v4473 = vadd.f32 0.0, %v4472
      %v4474 = vpop.f32.mrb[0].mxu0
      %4475 = vmatprep.mubr.f32.mxu0 0.0
      %4476 = vmatmul.mubr.f32.gmra.mrb[0].mxu0 %v2518
      %v4477 = vpop.f32.mrb[0].mxu0
      %v4478 = vadd.f32 0.0, %v4477
      %v4479 = vpop.f32.mrb[0].mxu0
      %4480 = vmatprep.mubr.f32.mxu0 0.0
      %4481 = vmatmul.mubr.f32.gmra.mrb[0].mxu0 %v2521
      %v4482 = vpop.f32.mrb[0].mxu0
      %v4483 = vadd.f32 0.0, %v4482
      %v4484 = vpop.f32.mrb[0].mxu0
      %4485 = vmatprep.mubr.f32.mxu0 0.0
      %4486 = vmatmul.mubr.f32.gmra.mrb[0].mxu0 %v2524
      %v4487 = vpop.f32.mrb[0].mxu0
      %v4488 = vadd.f32 0.0, %v4487
      %v4489 = vpop.f32.mrb[0].mxu0
      %4490 = vmatprep.mubr.f32.mxu0 0.0
      %4491 = vmatmul.mubr.f32.gmra.mrb[0].mxu0 %v2527
      %v4492 = vpop.f32.mrb[0].mxu0
      %v4493 = vadd.f32 0.0, %v4492
      %v4494 = vpop.f32.mrb[0].mxu0
      %4495 = vmatprep.mubr.f32.mxu0 0.0
      %4496 = vmatmul.mubr.f32.gmra.mrb[0].mxu0 %v2530
      %v4497 = vpop.f32.mrb[0].mxu0
      %v4498 = vadd.f32 0.0, %v4497
      %v4499 = vpop.f32.mrb[0].mxu0
      %4500 = vmatprep.mubr.f32.mxu0 0.0
      %4501 = vmatmul.mubr.f32.gmra.mrb[0].mxu0 %v2533
      %v4502 = vpop.f32.mrb[0].mxu0
      %v4503 = vadd.f32 0.0, %v4502
      %v4504 = vpop.f32.mrb[0].mxu0
      %4505 = vmatprep.mubr.f32.mxu0 0.0
      %4506 = vmatmul.mubr.f32.gmra.mrb[0].mxu0 %v2536
      %v4507 = vpop.f32.mrb[0].mxu0
      %v4508 = vadd.f32 0.0, %v4507
      %v4509 = vpop.f32.mrb[0].mxu0
      %4510 = vdwg.mxu0
      %v4511 = vadd.f32 %v4346, %v4433
      %v4512 = vadd.f32 %v4347, %v4438
      %v4513 = vadd.f32 %v4348, %v4443
      %v4514 = vadd.f32 %v4349, %v4448
      %v4515 = vadd.f32 %v4350, %v4453
      %v4516 = vadd.f32 %v4351, %v4458
      %v4517 = vadd.f32 %v4352, %v4463
      %v4518 = vadd.f32 %v4353, %v4468
      %v4519 = vadd.f32 %v4354, %v4473
      %v4520 = vadd.f32 %v4355, %v4478
      %v4521 = vadd.f32 %v4356, %v4483
      %v4522 = vadd.f32 %v4357, %v4488
      %v4523 = vadd.f32 %v4358, %v4493
      %v4524 = vadd.f32 %v4359, %v4498
      %v4525 = vadd.f32 %v4360, %v4503
      %v4526 = vadd.f32 %v4361, %v4508
      %v4527 = vld [vmem:[%s10 + $0x40] sm:$0xff]
      %v4528 = vld [vmem:[%s10 + $0x48] sm:$0xff]
      %v4529 = vld [vmem:[%s10 + $0x50] sm:$0xff]
      %v4530 = vld [vmem:[%s10 + $0x58] sm:$0xff]
      %4531 = vmatprep.subr.mxu0 0.0
      %4532 = vmatpush1.msra.mxu0 %v4527
      %4533 = vmatprep.subr.mxu0 0.0
      %4534 = vmatpush1.msra.mxu0 %v4528
      %4535 = vmatprep.subr.mxu0 0.0
      %4536 = vmatpush1.msra.mxu0 %v4529
      %4537 = vmatprep.subr.mxu0 0.0
      %4538 = vmatpush1.msra.mxu0 %v4530
      %4539 = vmatprep.subr.mxu0 0.0
      %4540 = vmatpush1.msra.mxu0 0.0
      %4541 = vmatprep.subr.mxu0 0.0
      %4542 = vmatpush1.msra.mxu0 0.0
      %4543 = vmatprep.subr.mxu0 0.0
      %4544 = vmatpush1.msra.mxu0 0.0
      %4545 = vmatprep.subr.mxu0 0.0
      %4546 = vmatpush1.msra.mxu0 0.0
      %4547 = vmatprep.subr.mxu0 0.0
      %4548 = vmatpush1.msra.mxu0 0.0
      %4549 = vmatprep.subr.mxu0 0.0
      %4550 = vmatpush1.msra.mxu0 0.0
      %4551 = vmatprep.subr.mxu0 0.0
      %4552 = vmatpush1.msra.mxu0 0.0
      %4553 = vmatprep.subr.mxu0 0.0
      %4554 = vmatpush1.msra.mxu0 0.0
      %4555 = vmatprep.subr.mxu0 0.0
      %4556 = vmatpush1.msra.mxu0 0.0
      %4557 = vmatprep.subr.mxu0 0.0
      %4558 = vmatpush1.msra.mxu0 0.0
      %4559 = vmatprep.subr.mxu0 0.0
      %4560 = vmatpush1.msra.mxu0 0.0
      %4561 = vmatprep.subr.mxu0 0.0
      %4562 = vmatpush1.msra.mxu0 0.0
      %4563 = vmatprep.subr.mxu0 0.0
      %4564 = vmatpush1.msra.mxu0 0.0
      %4565 = vmatprep.subr.mxu0 0.0
      %4566 = vmatpush1.msra.mxu0 0.0
      %4567 = vmatprep.subr.mxu0 0.0
      %4568 = vmatpush1.msra.mxu0 0.0
      %4569 = vmatprep.subr.mxu0 0.0
      %4570 = vmatpush1.msra.mxu0 0.0
      %4571 = vmatprep.subr.mxu0 0.0
      %4572 = vmatpush1.msra.mxu0 0.0
      %4573 = vmatprep.subr.mxu0 0.0
      %4574 = vmatpush1.msra.mxu0 0.0
      %4575 = vmatprep.subr.mxu0 0.0
      %4576 = vmatpush1.msra.mxu0 0.0
      %4577 = vmatprep.subr.mxu0 0.0
      %4578 = vmatpush1.msra.mxu0 0.0
      %4579 = vmatprep.subr.mxu0 0.0
      %4580 = vmatpush1.msra.mxu0 0.0
      %4581 = vmatprep.subr.mxu0 0.0
      %4582 = vmatpush1.msra.mxu0 0.0
      %4583 = vmatprep.subr.mxu0 0.0
      %4584 = vmatpush1.msra.mxu0 0.0
      %4585 = vmatprep.subr.mxu0 0.0
      %4586 = vmatpush1.msra.mxu0 0.0
      %4587 = vmatprep.subr.mxu0 0.0
      %4588 = vmatpush1.msra.mxu0 0.0
      %4589 = vmatprep.subr.mxu0 0.0
      %4590 = vmatpush1.msra.mxu0 0.0
      %4591 = vmatprep.subr.mxu0 0.0
      %4592 = vmatpush1.msra.mxu0 0.0
      %4593 = vmatprep.subr.mxu0 0.0
      %4594 = vmatpush1.msra.mxu0 0.0
      %4595 = vmatprep.mubr.f32.mxu0 0.0
      %4596 = vmatmul.mubr.f32.gmra.mrb[0].mxu0 %v3343
      %v4597 = vpop.f32.mrb[0].mxu0
      %v4598 = vadd.f32 0.0, %v4597
      %v4599 = vpop.f32.mrb[0].mxu0
      %4600 = vmatprep.mubr.f32.mxu0 0.0
      %4601 = vmatmul.mubr.f32.gmra.mrb[0].mxu0 %v3346
      %v4602 = vpop.f32.mrb[0].mxu0
      %v4603 = vadd.f32 0.0, %v4602
      %v4604 = vpop.f32.mrb[0].mxu0
      %4605 = vmatprep.mubr.f32.mxu0 0.0
      %4606 = vmatmul.mubr.f32.gmra.mrb[0].mxu0 %v3349
      %v4607 = vpop.f32.mrb[0].mxu0
      %v4608 = vadd.f32 0.0, %v4607
      %v4609 = vpop.f32.mrb[0].mxu0
      %4610 = vmatprep.mubr.f32.mxu0 0.0
      %4611 = vmatmul.mubr.f32.gmra.mrb[0].mxu0 %v3352
      %v4612 = vpop.f32.mrb[0].mxu0
      %v4613 = vadd.f32 0.0, %v4612
      %v4614 = vpop.f32.mrb[0].mxu0
      %4615 = vmatprep.mubr.f32.mxu0 0.0
      %4616 = vmatmul.mubr.f32.gmra.mrb[0].mxu0 %v3355
      %v4617 = vpop.f32.mrb[0].mxu0
      %v4618 = vadd.f32 0.0, %v4617
      %v4619 = vpop.f32.mrb[0].mxu0
      %4620 = vmatprep.mubr.f32.mxu0 0.0
      %4621 = vmatmul.mubr.f32.gmra.mrb[0].mxu0 %v3358
      %v4622 = vpop.f32.mrb[0].mxu0
      %v4623 = vadd.f32 0.0, %v4622
      %v4624 = vpop.f32.mrb[0].mxu0
      %4625 = vmatprep.mubr.f32.mxu0 0.0
      %4626 = vmatmul.mubr.f32.gmra.mrb[0].mxu0 %v3361
      %v4627 = vpop.f32.mrb[0].mxu0
      %v4628 = vadd.f32 0.0, %v4627
      %v4629 = vpop.f32.mrb[0].mxu0
      %4630 = vmatprep.mubr.f32.mxu0 0.0
      %4631 = vmatmul.mubr.f32.gmra.mrb[0].mxu0 %v3364
      %v4632 = vpop.f32.mrb[0].mxu0
      %v4633 = vadd.f32 0.0, %v4632
      %v4634 = vpop.f32.mrb[0].mxu0
      %4635 = vmatprep.mubr.f32.mxu0 0.0
      %4636 = vmatmul.mubr.f32.gmra.mrb[0].mxu0 %v3367
      %v4637 = vpop.f32.mrb[0].mxu0
      %v4638 = vadd.f32 0.0, %v4637
      %v4639 = vpop.f32.mrb[0].mxu0
      %4640 = vmatprep.mubr.f32.mxu0 0.0
      %4641 = vmatmul.mubr.f32.gmra.mrb[0].mxu0 %v3370
      %v4642 = vpop.f32.mrb[0].mxu0
      %v4643 = vadd.f32 0.0, %v4642
      %v4644 = vpop.f32.mrb[0].mxu0
      %4645 = vmatprep.mubr.f32.mxu0 0.0
      %4646 = vmatmul.mubr.f32.gmra.mrb[0].mxu0 %v3373
      %v4647 = vpop.f32.mrb[0].mxu0
      %v4648 = vadd.f32 0.0, %v4647
      %v4649 = vpop.f32.mrb[0].mxu0
      %4650 = vmatprep.mubr.f32.mxu0 0.0
      %4651 = vmatmul.mubr.f32.gmra.mrb[0].mxu0 %v3376
      %v4652 = vpop.f32.mrb[0].mxu0
      %v4653 = vadd.f32 0.0, %v4652
      %v4654 = vpop.f32.mrb[0].mxu0
      %4655 = vmatprep.mubr.f32.mxu0 0.0
      %4656 = vmatmul.mubr.f32.gmra.mrb[0].mxu0 %v3379
      %v4657 = vpop.f32.mrb[0].mxu0
      %v4658 = vadd.f32 0.0, %v4657
      %v4659 = vpop.f32.mrb[0].mxu0
      %4660 = vmatprep.mubr.f32.mxu0 0.0
      %4661 = vmatmul.mubr.f32.gmra.mrb[0].mxu0 %v3382
      %v4662 = vpop.f32.mrb[0].mxu0
      %v4663 = vadd.f32 0.0, %v4662
      %v4664 = vpop.f32.mrb[0].mxu0
      %4665 = vmatprep.mubr.f32.mxu0 0.0
      %4666 = vmatmul.mubr.f32.gmra.mrb[0].mxu0 %v3385
      %v4667 = vpop.f32.mrb[0].mxu0
      %v4668 = vadd.f32 0.0, %v4667
      %v4669 = vpop.f32.mrb[0].mxu0
      %4670 = vmatprep.mubr.f32.mxu0 0.0
      %4671 = vmatmul.mubr.f32.gmra.mrb[0].mxu0 %v3388
      %v4672 = vpop.f32.mrb[0].mxu0
      %v4673 = vadd.f32 0.0, %v4672
      %v4674 = vpop.f32.mrb[0].mxu0
      %4675 = vdwg.mxu0
      %v4676 = vadd.f32 %v4511, %v4598
      %v4677 = vadd.f32 %v4512, %v4603
      %v4678 = vadd.f32 %v4513, %v4608
      %v4679 = vadd.f32 %v4514, %v4613
      %v4680 = vadd.f32 %v4515, %v4618
      %v4681 = vadd.f32 %v4516, %v4623
      %v4682 = vadd.f32 %v4517, %v4628
      %v4683 = vadd.f32 %v4518, %v4633
      %v4684 = vadd.f32 %v4519, %v4638
      %v4685 = vadd.f32 %v4520, %v4643
      %v4686 = vadd.f32 %v4521, %v4648
      %v4687 = vadd.f32 %v4522, %v4653
      %v4688 = vadd.f32 %v4523, %v4658
      %v4689 = vadd.f32 %v4524, %v4663
      %v4690 = vadd.f32 %v4525, %v4668
      %v4691 = vadd.f32 %v4526, %v4673
      %v4692 = vld [vmem:[%s10 + $0x60] sm:$0x1]
      %4694 = vset.pattern.permute.xlu0 0
      %4695 = vperm.xlu0 %4694, %v4174
      %v4696 = vpop.permute.xlu0 %4695
      %4699 = vset.pattern.permute.xlu0 0
      %4700 = vperm.xlu0 %4699, %v4175
      %v4701 = vpop.permute.xlu0 %4700
      %4704 = vset.pattern.permute.xlu0 0
      %4705 = vperm.xlu0 %4704, %v4176
      %v4706 = vpop.permute.xlu0 %4705
      %4709 = vset.pattern.permute.xlu0 0
      %4710 = vperm.xlu0 %4709, %v4177
      %v4711 = vpop.permute.xlu0 %4710
      %4714 = vset.pattern.permute.xlu0 0
      %4715 = vperm.xlu0 %4714, %v4178
      %v4716 = vpop.permute.xlu0 %4715
      %4719 = vset.pattern.permute.xlu0 0
      %4720 = vperm.xlu0 %4719, %v4179
      %v4721 = vpop.permute.xlu0 %4720
      %4724 = vset.pattern.permute.xlu0 0
      %4725 = vperm.xlu0 %4724, %v4180
      %v4726 = vpop.permute.xlu0 %4725
      %4729 = vset.pattern.permute.xlu0 0
      %4730 = vperm.xlu0 %4729, %v4181
      %v4731 = vpop.permute.xlu0 %4730
      %4734 = vset.pattern.permute.xlu0 0
      %4735 = vperm.xlu0 %4734, %v4182
      %v4736 = vpop.permute.xlu0 %4735
      %4739 = vset.pattern.permute.xlu0 0
      %4740 = vperm.xlu0 %4739, %v4183
      %v4741 = vpop.permute.xlu0 %4740
      %4744 = vset.pattern.permute.xlu0 0
      %4745 = vperm.xlu0 %4744, %v4184
      %v4746 = vpop.permute.xlu0 %4745
      %4749 = vset.pattern.permute.xlu0 0
      %4750 = vperm.xlu0 %4749, %v4185
      %v4751 = vpop.permute.xlu0 %4750
      %4754 = vset.pattern.permute.xlu0 0
      %4755 = vperm.xlu0 %4754, %v4186
      %v4756 = vpop.permute.xlu0 %4755
      %4759 = vset.pattern.permute.xlu0 0
      %4760 = vperm.xlu0 %4759, %v4187
      %v4761 = vpop.permute.xlu0 %4760
      %4764 = vset.pattern.permute.xlu0 0
      %4765 = vperm.xlu0 %4764, %v4188
      %v4766 = vpop.permute.xlu0 %4765
      %4769 = vset.pattern.permute.xlu0 0
      %4770 = vperm.xlu0 %4769, %v4189
      %v4771 = vpop.permute.xlu0 %4770
      %v4773 = vlaneseq
      %v4774 = vshrl.u32 %v4773, 7
      %v4775 = vsub.s32 0, %v4774
      %v4776 = vrot.slane %v4692, %v4775
      %v4777 = vmul.f32 %v4696, %v4776
      %v4778 = vmul.f32 %v4701, %v4776
      %v4779 = vmul.f32 %v4706, %v4776
      %v4780 = vmul.f32 %v4711, %v4776
      %v4781 = vmul.f32 %v4716, %v4776
      %v4782 = vmul.f32 %v4721, %v4776
      %v4783 = vmul.f32 %v4726, %v4776
      %v4784 = vmul.f32 %v4731, %v4776
      %v4785 = vmul.f32 %v4736, %v4776
      %v4786 = vmul.f32 %v4741, %v4776
      %v4787 = vmul.f32 %v4746, %v4776
      %v4788 = vmul.f32 %v4751, %v4776
      %v4789 = vmul.f32 %v4756, %v4776
      %v4790 = vmul.f32 %v4761, %v4776
      %v4791 = vmul.f32 %v4766, %v4776
      %v4792 = vmul.f32 %v4771, %v4776
      %v4793 = vadd.f32 %v4676, %v4777
      %v4794 = vadd.f32 %v4677, %v4778
      %v4795 = vadd.f32 %v4678, %v4779
      %v4796 = vadd.f32 %v4679, %v4780
      %v4797 = vadd.f32 %v4680, %v4781
      %v4798 = vadd.f32 %v4681, %v4782
      %v4799 = vadd.f32 %v4682, %v4783
      %v4800 = vadd.f32 %v4683, %v4784
      %v4801 = vadd.f32 %v4684, %v4785
      %v4802 = vadd.f32 %v4685, %v4786
      %v4803 = vadd.f32 %v4686, %v4787
      %v4804 = vadd.f32 %v4687, %v4788
      %v4805 = vadd.f32 %v4688, %v4789
      %v4806 = vadd.f32 %v4689, %v4790
      %v4807 = vadd.f32 %v4690, %v4791
      %v4808 = vadd.f32 %v4691, %v4792
      %v4809 = vmax.f32 %v4793, 0.0
      %v4810 = vmax.f32 %v4794, 0.0
      %v4811 = vmax.f32 %v4795, 0.0
      %v4812 = vmax.f32 %v4796, 0.0
      %v4813 = vmax.f32 %v4797, 0.0
      %v4814 = vmax.f32 %v4798, 0.0
      %v4815 = vmax.f32 %v4799, 0.0
      %v4816 = vmax.f32 %v4800, 0.0
      %v4817 = vmax.f32 %v4801, 0.0
      %v4818 = vmax.f32 %v4802, 0.0
      %v4819 = vmax.f32 %v4803, 0.0
      %v4820 = vmax.f32 %v4804, 0.0
      %v4821 = vmax.f32 %v4805, 0.0
      %v4822 = vmax.f32 %v4806, 0.0
      %v4823 = vmax.f32 %v4807, 0.0
      %v4824 = vmax.f32 %v4808, 0.0
      %v4825 = vlaneseq
      %v4826 = vshrl.u32 %v4825, 7
      %v4827 = vadd.s32 %v4826, 8
      %v4828 = vcvt.s32.f32 %v4826
      %v4829 = vcvt.s32.f32 %v4827
      %vm4830 = vcmask 7168
      %v4831 = vsel %vm4830, %v4174, -inf
      %v4832 = vsel %vm4830, %v4175, -inf
      %v4833 = vmax.f32 %v4831, %v4832
      %v4834 = vrot.slane %v4833, 4
      %v4835 = vmax.f32 %v4833, %v4834
      %v4836 = vrot.slane %v4835, 2
      %v4837 = vmax.f32 %v4835, %v4836
      %v4838 = vrot.slane %v4837, 1
      %v4839 = vmax.f32 %v4837, %v4838
      %v4840 = vsel %vm4830, %v4176, -inf
      %v4841 = vsel %vm4830, %v4177, -inf
      %v4842 = vmax.f32 %v4840, %v4841
      %v4843 = vrot.slane %v4842, 4
      %v4844 = vmax.f32 %v4842, %v4843
      %v4845 = vrot.slane %v4844, 2
      %v4846 = vmax.f32 %v4844, %v4845
      %v4847 = vrot.slane %v4846, 1
      %v4848 = vmax.f32 %v4846, %v4847
      %v4849 = vsel %vm4830, %v4178, -inf
      %v4850 = vsel %vm4830, %v4179, -inf
      %v4851 = vmax.f32 %v4849, %v4850
      %v4852 = vrot.slane %v4851, 4
      %v4853 = vmax.f32 %v4851, %v4852
      %v4854 = vrot.slane %v4853, 2
      %v4855 = vmax.f32 %v4853, %v4854
      %v4856 = vrot.slane %v4855, 1
      %v4857 = vmax.f32 %v4855, %v4856
      %v4858 = vsel %vm4830, %v4180, -inf
      %v4859 = vsel %vm4830, %v4181, -inf
      %v4860 = vmax.f32 %v4858, %v4859
      %v4861 = vrot.slane %v4860, 4
      %v4862 = vmax.f32 %v4860, %v4861
      %v4863 = vrot.slane %v4862, 2
      %v4864 = vmax.f32 %v4862, %v4863
      %v4865 = vrot.slane %v4864, 1
      %v4866 = vmax.f32 %v4864, %v4865
      %v4867 = vsel %vm4830, %v4182, -inf
      %v4868 = vsel %vm4830, %v4183, -inf
      %v4869 = vmax.f32 %v4867, %v4868
      %v4870 = vrot.slane %v4869, 4
      %v4871 = vmax.f32 %v4869, %v4870
      %v4872 = vrot.slane %v4871, 2
      %v4873 = vmax.f32 %v4871, %v4872
      %v4874 = vrot.slane %v4873, 1
      %v4875 = vmax.f32 %v4873, %v4874
      %v4876 = vsel %vm4830, %v4184, -inf
      %v4877 = vsel %vm4830, %v4185, -inf
      %v4878 = vmax.f32 %v4876, %v4877
      %v4879 = vrot.slane %v4878, 4
      %v4880 = vmax.f32 %v4878, %v4879
      %v4881 = vrot.slane %v4880, 2
      %v4882 = vmax.f32 %v4880, %v4881
      %v4883 = vrot.slane %v4882, 1
      %v4884 = vmax.f32 %v4882, %v4883
      %v4885 = vsel %vm4830, %v4186, -inf
      %v4886 = vsel %vm4830, %v4187, -inf
      %v4887 = vmax.f32 %v4885, %v4886
      %v4888 = vrot.slane %v4887, 4
      %v4889 = vmax.f32 %v4887, %v4888
      %v4890 = vrot.slane %v4889, 2
      %v4891 = vmax.f32 %v4889, %v4890
      %v4892 = vrot.slane %v4891, 1
      %v4893 = vmax.f32 %v4891, %v4892
      %v4894 = vsel %vm4830, %v4188, -inf
      %v4895 = vsel %vm4830, %v4189, -inf
      %v4896 = vmax.f32 %v4894, %v4895
      %v4897 = vrot.slane %v4896, 4
      %v4898 = vmax.f32 %v4896, %v4897
      %v4899 = vrot.slane %v4898, 2
      %v4900 = vmax.f32 %v4898, %v4899
      %v4901 = vrot.slane %v4900, 1
      %v4902 = vmax.f32 %v4900, %v4901
      %vm4903 = vcmp.eq.f32.partialorder %v4174, %v4839
      %vm4904 = vcmp.eq.f32.partialorder %v4175, %v4839
      %vm4905 = vcmp.eq.f32.partialorder %v4176, %v4848
      %vm4906 = vcmp.eq.f32.partialorder %v4177, %v4848
      %vm4907 = vcmp.eq.f32.partialorder %v4178, %v4857
      %vm4908 = vcmp.eq.f32.partialorder %v4179, %v4857
      %vm4909 = vcmp.eq.f32.partialorder %v4180, %v4866
      %vm4910 = vcmp.eq.f32.partialorder %v4181, %v4866
      %vm4911 = vcmp.eq.f32.partialorder %v4182, %v4875
      %vm4912 = vcmp.eq.f32.partialorder %v4183, %v4875
      %vm4913 = vcmp.eq.f32.partialorder %v4184, %v4884
      %vm4914 = vcmp.eq.f32.partialorder %v4185, %v4884
      %vm4915 = vcmp.eq.f32.partialorder %v4186, %v4893
      %vm4916 = vcmp.eq.f32.partialorder %v4187, %v4893
      %vm4917 = vcmp.eq.f32.partialorder %v4188, %v4902
      %vm4918 = vcmp.eq.f32.partialorder %v4189, %v4902
      %v4919 = vsel %vm4903, %v4828, 16.0
      %v4920 = vsel %vm4904, %v4829, 16.0
      %v4921 = vsel %vm4905, %v4828, 16.0
      %v4922 = vsel %vm4906, %v4829, 16.0
      %v4923 = vsel %vm4907, %v4828, 16.0
      %v4924 = vsel %vm4908, %v4829, 16.0
      %v4925 = vsel %vm4909, %v4828, 16.0
      %v4926 = vsel %vm4910, %v4829, 16.0
      %v4927 = vsel %vm4911, %v4828, 16.0
      %v4928 = vsel %vm4912, %v4829, 16.0
      %v4929 = vsel %vm4913, %v4828, 16.0
      %v4930 = vsel %vm4914, %v4829, 16.0
      %v4931 = vsel %vm4915, %v4828, 16.0
      %v4932 = vsel %vm4916, %v4829, 16.0
      %v4933 = vsel %vm4917, %v4828, 16.0
      %v4934 = vsel %vm4918, %v4829, 16.0
      %v4935 = vsel %vm4830, %v4919, inf
      %v4936 = vsel %vm4830, %v4920, inf
      %v4937 = vmin.f32 %v4935, %v4936
      %v4938 = vrot.slane %v4937, 4
      %v4939 = vmin.f32 %v4937, %v4938
      %v4940 = vrot.slane %v4939, 2
      %v4941 = vmin.f32 %v4939, %v4940
      %v4942 = vrot.slane %v4941, 1
      %v4943 = vmin.f32 %v4941, %v4942
      %v4944 = vsel %vm4830, %v4921, inf
      %v4945 = vsel %vm4830, %v4922, inf
      %v4946 = vmin.f32 %v4944, %v4945
      %v4947 = vrot.slane %v4946, 4
      %v4948 = vmin.f32 %v4946, %v4947
      %v4949 = vrot.slane %v4948, 2
      %v4950 = vmin.f32 %v4948, %v4949
      %v4951 = vrot.slane %v4950, 1
      %v4952 = vmin.f32 %v4950, %v4951
      %v4953 = vsel %vm4830, %v4923, inf
      %v4954 = vsel %vm4830, %v4924, inf
      %v4955 = vmin.f32 %v4953, %v4954
      %v4956 = vrot.slane %v4955, 4
      %v4957 = vmin.f32 %v4955, %v4956
      %v4958 = vrot.slane %v4957, 2
      %v4959 = vmin.f32 %v4957, %v4958
      %v4960 = vrot.slane %v4959, 1
      %v4961 = vmin.f32 %v4959, %v4960
      %v4962 = vsel %vm4830, %v4925, inf
      %v4963 = vsel %vm4830, %v4926, inf
      %v4964 = vmin.f32 %v4962, %v4963
      %v4965 = vrot.slane %v4964, 4
      %v4966 = vmin.f32 %v4964, %v4965
      %v4967 = vrot.slane %v4966, 2
      %v4968 = vmin.f32 %v4966, %v4967
      %v4969 = vrot.slane %v4968, 1
      %v4970 = vmin.f32 %v4968, %v4969
      %v4971 = vsel %vm4830, %v4927, inf
      %v4972 = vsel %vm4830, %v4928, inf
      %v4973 = vmin.f32 %v4971, %v4972
      %v4974 = vrot.slane %v4973, 4
      %v4975 = vmin.f32 %v4973, %v4974
      %v4976 = vrot.slane %v4975, 2
      %v4977 = vmin.f32 %v4975, %v4976
      %v4978 = vrot.slane %v4977, 1
      %v4979 = vmin.f32 %v4977, %v4978
      %v4980 = vsel %vm4830, %v4929, inf
      %v4981 = vsel %vm4830, %v4930, inf
      %v4982 = vmin.f32 %v4980, %v4981
      %v4983 = vrot.slane %v4982, 4
      %v4984 = vmin.f32 %v4982, %v4983
      %v4985 = vrot.slane %v4984, 2
      %v4986 = vmin.f32 %v4984, %v4985
      %v4987 = vrot.slane %v4986, 1
      %v4988 = vmin.f32 %v4986, %v4987
      %v4989 = vsel %vm4830, %v4931, inf
      %v4990 = vsel %vm4830, %v4932, inf
      %v4991 = vmin.f32 %v4989, %v4990
      %v4992 = vrot.slane %v4991, 4
      %v4993 = vmin.f32 %v4991, %v4992
      %v4994 = vrot.slane %v4993, 2
      %v4995 = vmin.f32 %v4993, %v4994
      %v4996 = vrot.slane %v4995, 1
      %v4997 = vmin.f32 %v4995, %v4996
      %v4998 = vsel %vm4830, %v4933, inf
      %v4999 = vsel %vm4830, %v4934, inf
      %v5000 = vmin.f32 %v4998, %v4999
      %v5001 = vrot.slane %v5000, 4
      %v5002 = vmin.f32 %v5000, %v5001
      %v5003 = vrot.slane %v5002, 2
      %v5004 = vmin.f32 %v5002, %v5003
      %v5005 = vrot.slane %v5004, 1
      %v5006 = vmin.f32 %v5004, %v5005
      %vm5007 = vcmp.eq.f32.partialorder %v4828, %v4943
      %vm5008 = vcmp.eq.f32.partialorder %v4829, %v4943
      %vm5009 = vcmp.eq.f32.partialorder %v4828, %v4952
      %vm5010 = vcmp.eq.f32.partialorder %v4829, %v4952
      %vm5011 = vcmp.eq.f32.partialorder %v4828, %v4961
      %vm5012 = vcmp.eq.f32.partialorder %v4829, %v4961
      %vm5013 = vcmp.eq.f32.partialorder %v4828, %v4970
      %vm5014 = vcmp.eq.f32.partialorder %v4829, %v4970
      %vm5015 = vcmp.eq.f32.partialorder %v4828, %v4979
      %vm5016 = vcmp.eq.f32.partialorder %v4829, %v4979
      %vm5017 = vcmp.eq.f32.partialorder %v4828, %v4988
      %vm5018 = vcmp.eq.f32.partialorder %v4829, %v4988
      %vm5019 = vcmp.eq.f32.partialorder %v4828, %v4997
      %vm5020 = vcmp.eq.f32.partialorder %v4829, %v4997
      %vm5021 = vcmp.eq.f32.partialorder %v4828, %v5006
      %vm5022 = vcmp.eq.f32.partialorder %v4829, %v5006
      %v5023 = vsel %vm5007, 1, 0
      %v5024 = vsel %vm5008, 1, 0
      %v5025 = vsel %vm5009, 1, 0
      %v5026 = vsel %vm5010, 1, 0
      %v5027 = vsel %vm5011, 1, 0
      %v5028 = vsel %vm5012, 1, 0
      %v5029 = vsel %vm5013, 1, 0
      %v5030 = vsel %vm5014, 1, 0
      %v5031 = vsel %vm5015, 1, 0
      %v5032 = vsel %vm5016, 1, 0
      %v5033 = vsel %vm5017, 1, 0
      %v5034 = vsel %vm5018, 1, 0
      %v5035 = vsel %vm5019, 1, 0
      %v5036 = vsel %vm5020, 1, 0
      %v5037 = vsel %vm5021, 1, 0
      %v5038 = vsel %vm5022, 1, 0
      %v5039 = vcvt.s32.f32 %v5023
      %v5040 = vcvt.s32.f32 %v5024
      %v5041 = vcvt.s32.f32 %v5025
      %v5042 = vcvt.s32.f32 %v5026
      %v5043 = vcvt.s32.f32 %v5027
      %v5044 = vcvt.s32.f32 %v5028
      %v5045 = vcvt.s32.f32 %v5029
      %v5046 = vcvt.s32.f32 %v5030
      %v5047 = vcvt.s32.f32 %v5031
      %v5048 = vcvt.s32.f32 %v5032
      %v5049 = vcvt.s32.f32 %v5033
      %v5050 = vcvt.s32.f32 %v5034
      %v5051 = vcvt.s32.f32 %v5035
      %v5052 = vcvt.s32.f32 %v5036
      %v5053 = vcvt.s32.f32 %v5037
      %v5054 = vcvt.s32.f32 %v5038
      %5056 = vset.pattern.permute.xlu0 0
      %5057 = vperm.xlu0 %5056, %v5039
      %v5058 = vpop.permute.xlu0 %5057
      %5061 = vset.pattern.permute.xlu0 0
      %5062 = vperm.xlu0 %5061, %v5040
      %v5063 = vpop.permute.xlu0 %5062
      %5066 = vset.pattern.permute.xlu0 0
      %5067 = vperm.xlu0 %5066, %v5041
      %v5068 = vpop.permute.xlu0 %5067
      %5071 = vset.pattern.permute.xlu0 0
      %5072 = vperm.xlu0 %5071, %v5042
      %v5073 = vpop.permute.xlu0 %5072
      %5076 = vset.pattern.permute.xlu0 0
      %5077 = vperm.xlu0 %5076, %v5043
      %v5078 = vpop.permute.xlu0 %5077
      %5081 = vset.pattern.permute.xlu0 0
      %5082 = vperm.xlu0 %5081, %v5044
      %v5083 = vpop.permute.xlu0 %5082
      %5086 = vset.pattern.permute.xlu0 0
      %5087 = vperm.xlu0 %5086, %v5045
      %v5088 = vpop.permute.xlu0 %5087
      %5091 = vset.pattern.permute.xlu0 0
      %5092 = vperm.xlu0 %5091, %v5046
      %v5093 = vpop.permute.xlu0 %5092
      %5096 = vset.pattern.permute.xlu0 0
      %5097 = vperm.xlu0 %5096, %v5047
      %v5098 = vpop.permute.xlu0 %5097
      %5101 = vset.pattern.permute.xlu0 0
      %5102 = vperm.xlu0 %5101, %v5048
      %v5103 = vpop.permute.xlu0 %5102
      %5106 = vset.pattern.permute.xlu0 0
      %5107 = vperm.xlu0 %5106, %v5049
      %v5108 = vpop.permute.xlu0 %5107
      %5111 = vset.pattern.permute.xlu0 0
      %5112 = vperm.xlu0 %5111, %v5050
      %v5113 = vpop.permute.xlu0 %5112
      %5116 = vset.pattern.permute.xlu0 0
      %5117 = vperm.xlu0 %5116, %v5051
      %v5118 = vpop.permute.xlu0 %5117
      %5121 = vset.pattern.permute.xlu0 0
      %5122 = vperm.xlu0 %5121, %v5052
      %v5123 = vpop.permute.xlu0 %5122
      %5126 = vset.pattern.permute.xlu0 0
      %5127 = vperm.xlu0 %5126, %v5053
      %v5128 = vpop.permute.xlu0 %5127
      %5131 = vset.pattern.permute.xlu0 0
      %5132 = vperm.xlu0 %5131, %v5054
      %v5133 = vpop.permute.xlu0 %5132
      %v5135 = vmul.f32 %v5058, %v4809
      %v5136 = vmul.f32 %v5063, %v4810
      %v5137 = vmul.f32 %v5068, %v4811
      %v5138 = vmul.f32 %v5073, %v4812
      %v5139 = vmul.f32 %v5078, %v4813
      %v5140 = vmul.f32 %v5083, %v4814
      %v5141 = vmul.f32 %v5088, %v4815
      %v5142 = vmul.f32 %v5093, %v4816
      %v5143 = vmul.f32 %v5098, %v4817
      %v5144 = vmul.f32 %v5103, %v4818
      %v5145 = vmul.f32 %v5108, %v4819
      %v5146 = vmul.f32 %v5113, %v4820
      %v5147 = vmul.f32 %v5118, %v4821
      %v5148 = vmul.f32 %v5123, %v4822
      %v5149 = vmul.f32 %v5128, %v4823
      %v5150 = vmul.f32 %v5133, %v4824
      %v5151 = vsel %vm622, %v5135, 0.0
      %v5152 = vsel %vm622, %v5136, 0.0
      %v5153 = vadd.f32 %v5151, %v5152
      %v5154 = vrot.slane %v5153, 4
      %v5155 = vadd.f32 %v5153, %v5154
      %v5156 = vrot.slane %v5155, 2
      %v5157 = vadd.f32 %v5155, %v5156
      %v5158 = vrot.slane %v5157, 1
      %v5159 = vadd.f32 %v5157, %v5158
      %v5160 = vsel %vm622, %v5137, 0.0
      %v5161 = vsel %vm622, %v5138, 0.0
      %v5162 = vadd.f32 %v5160, %v5161
      %v5163 = vrot.slane %v5162, 4
      %v5164 = vadd.f32 %v5162, %v5163
      %v5165 = vrot.slane %v5164, 2
      %v5166 = vadd.f32 %v5164, %v5165
      %v5167 = vrot.slane %v5166, 1
      %v5168 = vadd.f32 %v5166, %v5167
      %v5169 = vsel %vm622, %v5139, 0.0
      %v5170 = vsel %vm622, %v5140, 0.0
      %v5171 = vadd.f32 %v5169, %v5170
      %v5172 = vrot.slane %v5171, 4
      %v5173 = vadd.f32 %v5171, %v5172
      %v5174 = vrot.slane %v5173, 2
      %v5175 = vadd.f32 %v5173, %v5174
      %v5176 = vrot.slane %v5175, 1
      %v5177 = vadd.f32 %v5175, %v5176
      %v5178 = vsel %vm622, %v5141, 0.0
      %v5179 = vsel %vm622, %v5142, 0.0
      %v5180 = vadd.f32 %v5178, %v5179
      %v5181 = vrot.slane %v5180, 4
      %v5182 = vadd.f32 %v5180, %v5181
      %v5183 = vrot.slane %v5182, 2
      %v5184 = vadd.f32 %v5182, %v5183
      %v5185 = vrot.slane %v5184, 1
      %v5186 = vadd.f32 %v5184, %v5185
      %v5187 = vsel %vm622, %v5143, 0.0
      %v5188 = vsel %vm622, %v5144, 0.0
      %v5189 = vadd.f32 %v5187, %v5188
      %v5190 = vrot.slane %v5189, 4
      %v5191 = vadd.f32 %v5189, %v5190
      %v5192 = vrot.slane %v5191, 2
      %v5193 = vadd.f32 %v5191, %v5192
      %v5194 = vrot.slane %v5193, 1
      %v5195 = vadd.f32 %v5193, %v5194
      %v5196 = vsel %vm622, %v5145, 0.0
      %v5197 = vsel %vm622, %v5146, 0.0
      %v5198 = vadd.f32 %v5196, %v5197
      %v5199 = vrot.slane %v5198, 4
      %v5200 = vadd.f32 %v5198, %v5199
      %v5201 = vrot.slane %v5200, 2
      %v5202 = vadd.f32 %v5200, %v5201
      %v5203 = vrot.slane %v5202, 1
      %v5204 = vadd.f32 %v5202, %v5203
      %v5205 = vsel %vm622, %v5147, 0.0
      %v5206 = vsel %vm622, %v5148, 0.0
      %v5207 = vadd.f32 %v5205, %v5206
      %v5208 = vrot.slane %v5207, 4
      %v5209 = vadd.f32 %v5207, %v5208
      %v5210 = vrot.slane %v5209, 2
      %v5211 = vadd.f32 %v5209, %v5210
      %v5212 = vrot.slane %v5211, 1
      %v5213 = vadd.f32 %v5211, %v5212
      %v5214 = vsel %vm622, %v5149, 0.0
      %v5215 = vsel %vm622, %v5150, 0.0
      %v5216 = vadd.f32 %v5214, %v5215
      %v5217 = vrot.slane %v5216, 4
      %v5218 = vadd.f32 %v5216, %v5217
      %v5219 = vrot.slane %v5218, 2
      %v5220 = vadd.f32 %v5218, %v5219
      %v5221 = vrot.slane %v5220, 1
      %v5222 = vadd.f32 %v5220, %v5221
      %v5223 = vsel %vm5007, -1e+30, %v4174
      %v5224 = vsel %vm5008, -1e+30, %v4175
      %v5225 = vsel %vm5009, -1e+30, %v4176
      %v5226 = vsel %vm5010, -1e+30, %v4177
      %v5227 = vsel %vm5011, -1e+30, %v4178
      %v5228 = vsel %vm5012, -1e+30, %v4179
      %v5229 = vsel %vm5013, -1e+30, %v4180
      %v5230 = vsel %vm5014, -1e+30, %v4181
      %v5231 = vsel %vm5015, -1e+30, %v4182
      %v5232 = vsel %vm5016, -1e+30, %v4183
      %v5233 = vsel %vm5017, -1e+30, %v4184
      %v5234 = vsel %vm5018, -1e+30, %v4185
      %v5235 = vsel %vm5019, -1e+30, %v4186
      %v5236 = vsel %vm5020, -1e+30, %v4187
      %v5237 = vsel %vm5021, -1e+30, %v4188
      %v5238 = vsel %vm5022, -1e+30, %v4189
      %v5239 = vsel %vm4830, %v5223, -inf
      %v5240 = vsel %vm4830, %v5224, -inf
      %v5241 = vmax.f32 %v5239, %v5240
      %v5242 = vrot.slane %v5241, 4
      %v5243 = vmax.f32 %v5241, %v5242
      %v5244 = vrot.slane %v5243, 2
      %v5245 = vmax.f32 %v5243, %v5244
      %v5246 = vrot.slane %v5245, 1
      %v5247 = vmax.f32 %v5245, %v5246
      %v5248 = vsel %vm4830, %v5225, -inf
      %v5249 = vsel %vm4830, %v5226, -inf
      %v5250 = vmax.f32 %v5248, %v5249
      %v5251 = vrot.slane %v5250, 4
      %v5252 = vmax.f32 %v5250, %v5251
      %v5253 = vrot.slane %v5252, 2
      %v5254 = vmax.f32 %v5252, %v5253
      %v5255 = vrot.slane %v5254, 1
      %v5256 = vmax.f32 %v5254, %v5255
      %v5257 = vsel %vm4830, %v5227, -inf
      %v5258 = vsel %vm4830, %v5228, -inf
      %v5259 = vmax.f32 %v5257, %v5258
      %v5260 = vrot.slane %v5259, 4
      %v5261 = vmax.f32 %v5259, %v5260
      %v5262 = vrot.slane %v5261, 2
      %v5263 = vmax.f32 %v5261, %v5262
      %v5264 = vrot.slane %v5263, 1
      %v5265 = vmax.f32 %v5263, %v5264
      %v5266 = vsel %vm4830, %v5229, -inf
      %v5267 = vsel %vm4830, %v5230, -inf
      %v5268 = vmax.f32 %v5266, %v5267
      %v5269 = vrot.slane %v5268, 4
      %v5270 = vmax.f32 %v5268, %v5269
      %v5271 = vrot.slane %v5270, 2
      %v5272 = vmax.f32 %v5270, %v5271
      %v5273 = vrot.slane %v5272, 1
      %v5274 = vmax.f32 %v5272, %v5273
      %v5275 = vsel %vm4830, %v5231, -inf
      %v5276 = vsel %vm4830, %v5232, -inf
      %v5277 = vmax.f32 %v5275, %v5276
      %v5278 = vrot.slane %v5277, 4
      %v5279 = vmax.f32 %v5277, %v5278
      %v5280 = vrot.slane %v5279, 2
      %v5281 = vmax.f32 %v5279, %v5280
      %v5282 = vrot.slane %v5281, 1
      %v5283 = vmax.f32 %v5281, %v5282
      %v5284 = vsel %vm4830, %v5233, -inf
      %v5285 = vsel %vm4830, %v5234, -inf
      %v5286 = vmax.f32 %v5284, %v5285
      %v5287 = vrot.slane %v5286, 4
      %v5288 = vmax.f32 %v5286, %v5287
      %v5289 = vrot.slane %v5288, 2
      %v5290 = vmax.f32 %v5288, %v5289
      %v5291 = vrot.slane %v5290, 1
      %v5292 = vmax.f32 %v5290, %v5291
      %v5293 = vsel %vm4830, %v5235, -inf
      %v5294 = vsel %vm4830, %v5236, -inf
      %v5295 = vmax.f32 %v5293, %v5294
      %v5296 = vrot.slane %v5295, 4
      %v5297 = vmax.f32 %v5295, %v5296
      %v5298 = vrot.slane %v5297, 2
      %v5299 = vmax.f32 %v5297, %v5298
      %v5300 = vrot.slane %v5299, 1
      %v5301 = vmax.f32 %v5299, %v5300
      %v5302 = vsel %vm4830, %v5237, -inf
      %v5303 = vsel %vm4830, %v5238, -inf
      %v5304 = vmax.f32 %v5302, %v5303
      %v5305 = vrot.slane %v5304, 4
      %v5306 = vmax.f32 %v5304, %v5305
      %v5307 = vrot.slane %v5306, 2
      %v5308 = vmax.f32 %v5306, %v5307
      %v5309 = vrot.slane %v5308, 1
      %v5310 = vmax.f32 %v5308, %v5309
      %vm5311 = vcmp.eq.f32.partialorder %v5223, %v5247
      %vm5312 = vcmp.eq.f32.partialorder %v5224, %v5247
      %vm5313 = vcmp.eq.f32.partialorder %v5225, %v5256
      %vm5314 = vcmp.eq.f32.partialorder %v5226, %v5256
      %vm5315 = vcmp.eq.f32.partialorder %v5227, %v5265
      %vm5316 = vcmp.eq.f32.partialorder %v5228, %v5265
      %vm5317 = vcmp.eq.f32.partialorder %v5229, %v5274
      %vm5318 = vcmp.eq.f32.partialorder %v5230, %v5274
      %vm5319 = vcmp.eq.f32.partialorder %v5231, %v5283
      %vm5320 = vcmp.eq.f32.partialorder %v5232, %v5283
      %vm5321 = vcmp.eq.f32.partialorder %v5233, %v5292
      %vm5322 = vcmp.eq.f32.partialorder %v5234, %v5292
      %vm5323 = vcmp.eq.f32.partialorder %v5235, %v5301
      %vm5324 = vcmp.eq.f32.partialorder %v5236, %v5301
      %vm5325 = vcmp.eq.f32.partialorder %v5237, %v5310
      %vm5326 = vcmp.eq.f32.partialorder %v5238, %v5310
      %v5327 = vsel %vm5311, %v4828, 16.0
      %v5328 = vsel %vm5312, %v4829, 16.0
      %v5329 = vsel %vm5313, %v4828, 16.0
      %v5330 = vsel %vm5314, %v4829, 16.0
      %v5331 = vsel %vm5315, %v4828, 16.0
      %v5332 = vsel %vm5316, %v4829, 16.0
      %v5333 = vsel %vm5317, %v4828, 16.0
      %v5334 = vsel %vm5318, %v4829, 16.0
      %v5335 = vsel %vm5319, %v4828, 16.0
      %v5336 = vsel %vm5320, %v4829, 16.0
      %v5337 = vsel %vm5321, %v4828, 16.0
      %v5338 = vsel %vm5322, %v4829, 16.0
      %v5339 = vsel %vm5323, %v4828, 16.0
      %v5340 = vsel %vm5324, %v4829, 16.0
      %v5341 = vsel %vm5325, %v4828, 16.0
      %v5342 = vsel %vm5326, %v4829, 16.0
      %v5343 = vsel %vm4830, %v5327, inf
      %v5344 = vsel %vm4830, %v5328, inf
      %v5345 = vmin.f32 %v5343, %v5344
      %v5346 = vrot.slane %v5345, 4
      %v5347 = vmin.f32 %v5345, %v5346
      %v5348 = vrot.slane %v5347, 2
      %v5349 = vmin.f32 %v5347, %v5348
      %v5350 = vrot.slane %v5349, 1
      %v5351 = vmin.f32 %v5349, %v5350
      %v5352 = vsel %vm4830, %v5329, inf
      %v5353 = vsel %vm4830, %v5330, inf
      %v5354 = vmin.f32 %v5352, %v5353
      %v5355 = vrot.slane %v5354, 4
      %v5356 = vmin.f32 %v5354, %v5355
      %v5357 = vrot.slane %v5356, 2
      %v5358 = vmin.f32 %v5356, %v5357
      %v5359 = vrot.slane %v5358, 1
      %v5360 = vmin.f32 %v5358, %v5359
      %v5361 = vsel %vm4830, %v5331, inf
      %v5362 = vsel %vm4830, %v5332, inf
      %v5363 = vmin.f32 %v5361, %v5362
      %v5364 = vrot.slane %v5363, 4
      %v5365 = vmin.f32 %v5363, %v5364
      %v5366 = vrot.slane %v5365, 2
      %v5367 = vmin.f32 %v5365, %v5366
      %v5368 = vrot.slane %v5367, 1
      %v5369 = vmin.f32 %v5367, %v5368
      %v5370 = vsel %vm4830, %v5333, inf
      %v5371 = vsel %vm4830, %v5334, inf
      %v5372 = vmin.f32 %v5370, %v5371
      %v5373 = vrot.slane %v5372, 4
      %v5374 = vmin.f32 %v5372, %v5373
      %v5375 = vrot.slane %v5374, 2
      %v5376 = vmin.f32 %v5374, %v5375
      %v5377 = vrot.slane %v5376, 1
      %v5378 = vmin.f32 %v5376, %v5377
      %v5379 = vsel %vm4830, %v5335, inf
      %v5380 = vsel %vm4830, %v5336, inf
      %v5381 = vmin.f32 %v5379, %v5380
      %v5382 = vrot.slane %v5381, 4
      %v5383 = vmin.f32 %v5381, %v5382
      %v5384 = vrot.slane %v5383, 2
      %v5385 = vmin.f32 %v5383, %v5384
      %v5386 = vrot.slane %v5385, 1
      %v5387 = vmin.f32 %v5385, %v5386
      %v5388 = vsel %vm4830, %v5337, inf
      %v5389 = vsel %vm4830, %v5338, inf
      %v5390 = vmin.f32 %v5388, %v5389
      %v5391 = vrot.slane %v5390, 4
      %v5392 = vmin.f32 %v5390, %v5391
      %v5393 = vrot.slane %v5392, 2
      %v5394 = vmin.f32 %v5392, %v5393
      %v5395 = vrot.slane %v5394, 1
      %v5396 = vmin.f32 %v5394, %v5395
      %v5397 = vsel %vm4830, %v5339, inf
      %v5398 = vsel %vm4830, %v5340, inf
      %v5399 = vmin.f32 %v5397, %v5398
      %v5400 = vrot.slane %v5399, 4
      %v5401 = vmin.f32 %v5399, %v5400
      %v5402 = vrot.slane %v5401, 2
      %v5403 = vmin.f32 %v5401, %v5402
      %v5404 = vrot.slane %v5403, 1
      %v5405 = vmin.f32 %v5403, %v5404
      %v5406 = vsel %vm4830, %v5341, inf
      %v5407 = vsel %vm4830, %v5342, inf
      %v5408 = vmin.f32 %v5406, %v5407
      %v5409 = vrot.slane %v5408, 4
      %v5410 = vmin.f32 %v5408, %v5409
      %v5411 = vrot.slane %v5410, 2
      %v5412 = vmin.f32 %v5410, %v5411
      %v5413 = vrot.slane %v5412, 1
      %v5414 = vmin.f32 %v5412, %v5413
      %vm5415 = vcmp.eq.f32.partialorder %v4828, %v5351
      %vm5416 = vcmp.eq.f32.partialorder %v4829, %v5351
      %vm5417 = vcmp.eq.f32.partialorder %v4828, %v5360
      %vm5418 = vcmp.eq.f32.partialorder %v4829, %v5360
      %vm5419 = vcmp.eq.f32.partialorder %v4828, %v5369
      %vm5420 = vcmp.eq.f32.partialorder %v4829, %v5369
      %vm5421 = vcmp.eq.f32.partialorder %v4828, %v5378
      %vm5422 = vcmp.eq.f32.partialorder %v4829, %v5378
      %vm5423 = vcmp.eq.f32.partialorder %v4828, %v5387
      %vm5424 = vcmp.eq.f32.partialorder %v4829, %v5387
      %vm5425 = vcmp.eq.f32.partialorder %v4828, %v5396
      %vm5426 = vcmp.eq.f32.partialorder %v4829, %v5396
      %vm5427 = vcmp.eq.f32.partialorder %v4828, %v5405
      %vm5428 = vcmp.eq.f32.partialorder %v4829, %v5405
      %vm5429 = vcmp.eq.f32.partialorder %v4828, %v5414
      %vm5430 = vcmp.eq.f32.partialorder %v4829, %v5414
      %v5431 = vsel %vm5415, 1, 0
      %v5432 = vsel %vm5416, 1, 0
      %v5433 = vsel %vm5417, 1, 0
      %v5434 = vsel %vm5418, 1, 0
      %v5435 = vsel %vm5419, 1, 0
      %v5436 = vsel %vm5420, 1, 0
      %v5437 = vsel %vm5421, 1, 0
      %v5438 = vsel %vm5422, 1, 0
      %v5439 = vsel %vm5423, 1, 0
      %v5440 = vsel %vm5424, 1, 0
      %v5441 = vsel %vm5425, 1, 0
      %v5442 = vsel %vm5426, 1, 0
      %v5443 = vsel %vm5427, 1, 0
      %v5444 = vsel %vm5428, 1, 0
      %v5445 = vsel %vm5429, 1, 0
      %v5446 = vsel %vm5430, 1, 0
      %v5447 = vcvt.s32.f32 %v5431
      %v5448 = vcvt.s32.f32 %v5432
      %v5449 = vcvt.s32.f32 %v5433
      %v5450 = vcvt.s32.f32 %v5434
      %v5451 = vcvt.s32.f32 %v5435
      %v5452 = vcvt.s32.f32 %v5436
      %v5453 = vcvt.s32.f32 %v5437
      %v5454 = vcvt.s32.f32 %v5438
      %v5455 = vcvt.s32.f32 %v5439
      %v5456 = vcvt.s32.f32 %v5440
      %v5457 = vcvt.s32.f32 %v5441
      %v5458 = vcvt.s32.f32 %v5442
      %v5459 = vcvt.s32.f32 %v5443
      %v5460 = vcvt.s32.f32 %v5444
      %v5461 = vcvt.s32.f32 %v5445
      %v5462 = vcvt.s32.f32 %v5446
      %5464 = vset.pattern.permute.xlu0 0
      %5465 = vperm.xlu0 %5464, %v5447
      %v5466 = vpop.permute.xlu0 %5465
      %5469 = vset.pattern.permute.xlu0 0
      %5470 = vperm.xlu0 %5469, %v5448
      %v5471 = vpop.permute.xlu0 %5470
      %5474 = vset.pattern.permute.xlu0 0
      %5475 = vperm.xlu0 %5474, %v5449
      %v5476 = vpop.permute.xlu0 %5475
      %5479 = vset.pattern.permute.xlu0 0
      %5480 = vperm.xlu0 %5479, %v5450
      %v5481 = vpop.permute.xlu0 %5480
      %5484 = vset.pattern.permute.xlu0 0
      %5485 = vperm.xlu0 %5484, %v5451
      %v5486 = vpop.permute.xlu0 %5485
      %5489 = vset.pattern.permute.xlu0 0
      %5490 = vperm.xlu0 %5489, %v5452
      %v5491 = vpop.permute.xlu0 %5490
      %5494 = vset.pattern.permute.xlu0 0
      %5495 = vperm.xlu0 %5494, %v5453
      %v5496 = vpop.permute.xlu0 %5495
      %5499 = vset.pattern.permute.xlu0 0
      %5500 = vperm.xlu0 %5499, %v5454
      %v5501 = vpop.permute.xlu0 %5500
      %5504 = vset.pattern.permute.xlu0 0
      %5505 = vperm.xlu0 %5504, %v5455
      %v5506 = vpop.permute.xlu0 %5505
      %5509 = vset.pattern.permute.xlu0 0
      %5510 = vperm.xlu0 %5509, %v5456
      %v5511 = vpop.permute.xlu0 %5510
      %5514 = vset.pattern.permute.xlu0 0
      %5515 = vperm.xlu0 %5514, %v5457
      %v5516 = vpop.permute.xlu0 %5515
      %5519 = vset.pattern.permute.xlu0 0
      %5520 = vperm.xlu0 %5519, %v5458
      %v5521 = vpop.permute.xlu0 %5520
      %5524 = vset.pattern.permute.xlu0 0
      %5525 = vperm.xlu0 %5524, %v5459
      %v5526 = vpop.permute.xlu0 %5525
      %5529 = vset.pattern.permute.xlu0 0
      %5530 = vperm.xlu0 %5529, %v5460
      %v5531 = vpop.permute.xlu0 %5530
      %5534 = vset.pattern.permute.xlu0 0
      %5535 = vperm.xlu0 %5534, %v5461
      %v5536 = vpop.permute.xlu0 %5535
      %5539 = vset.pattern.permute.xlu0 0
      %5540 = vperm.xlu0 %5539, %v5462
      %v5541 = vpop.permute.xlu0 %5540
      %v5543 = vmul.f32 %v5466, %v4809
      %v5544 = vmul.f32 %v5471, %v4810
      %v5545 = vmul.f32 %v5476, %v4811
      %v5546 = vmul.f32 %v5481, %v4812
      %v5547 = vmul.f32 %v5486, %v4813
      %v5548 = vmul.f32 %v5491, %v4814
      %v5549 = vmul.f32 %v5496, %v4815
      %v5550 = vmul.f32 %v5501, %v4816
      %v5551 = vmul.f32 %v5506, %v4817
      %v5552 = vmul.f32 %v5511, %v4818
      %v5553 = vmul.f32 %v5516, %v4819
      %v5554 = vmul.f32 %v5521, %v4820
      %v5555 = vmul.f32 %v5526, %v4821
      %v5556 = vmul.f32 %v5531, %v4822
      %v5557 = vmul.f32 %v5536, %v4823
      %v5558 = vmul.f32 %v5541, %v4824
      %v5559 = vsel %vm622, %v5543, 0.0
      %v5560 = vsel %vm622, %v5544, 0.0
      %v5561 = vadd.f32 %v5559, %v5560
      %v5562 = vrot.slane %v5561, 4
      %v5563 = vadd.f32 %v5561, %v5562
      %v5564 = vrot.slane %v5563, 2
      %v5565 = vadd.f32 %v5563, %v5564
      %v5566 = vrot.slane %v5565, 1
      %v5567 = vadd.f32 %v5565, %v5566
      %v5568 = vsel %vm622, %v5545, 0.0
      %v5569 = vsel %vm622, %v5546, 0.0
      %v5570 = vadd.f32 %v5568, %v5569
      %v5571 = vrot.slane %v5570, 4
      %v5572 = vadd.f32 %v5570, %v5571
      %v5573 = vrot.slane %v5572, 2
      %v5574 = vadd.f32 %v5572, %v5573
      %v5575 = vrot.slane %v5574, 1
      %v5576 = vadd.f32 %v5574, %v5575
      %v5577 = vsel %vm622, %v5547, 0.0
      %v5578 = vsel %vm622, %v5548, 0.0
      %v5579 = vadd.f32 %v5577, %v5578
      %v5580 = vrot.slane %v5579, 4
      %v5581 = vadd.f32 %v5579, %v5580
      %v5582 = vrot.slane %v5581, 2
      %v5583 = vadd.f32 %v5581, %v5582
      %v5584 = vrot.slane %v5583, 1
      %v5585 = vadd.f32 %v5583, %v5584
      %v5586 = vsel %vm622, %v5549, 0.0
      %v5587 = vsel %vm622, %v5550, 0.0
      %v5588 = vadd.f32 %v5586, %v5587
      %v5589 = vrot.slane %v5588, 4
      %v5590 = vadd.f32 %v5588, %v5589
      %v5591 = vrot.slane %v5590, 2
      %v5592 = vadd.f32 %v5590, %v5591
      %v5593 = vrot.slane %v5592, 1
      %v5594 = vadd.f32 %v5592, %v5593
      %v5595 = vsel %vm622, %v5551, 0.0
      %v5596 = vsel %vm622, %v5552, 0.0
      %v5597 = vadd.f32 %v5595, %v5596
      %v5598 = vrot.slane %v5597, 4
      %v5599 = vadd.f32 %v5597, %v5598
      %v5600 = vrot.slane %v5599, 2
      %v5601 = vadd.f32 %v5599, %v5600
      %v5602 = vrot.slane %v5601, 1
      %v5603 = vadd.f32 %v5601, %v5602
      %v5604 = vsel %vm622, %v5553, 0.0
      %v5605 = vsel %vm622, %v5554, 0.0
      %v5606 = vadd.f32 %v5604, %v5605
      %v5607 = vrot.slane %v5606, 4
      %v5608 = vadd.f32 %v5606, %v5607
      %v5609 = vrot.slane %v5608, 2
      %v5610 = vadd.f32 %v5608, %v5609
      %v5611 = vrot.slane %v5610, 1
      %v5612 = vadd.f32 %v5610, %v5611
      %v5613 = vsel %vm622, %v5555, 0.0
      %v5614 = vsel %vm622, %v5556, 0.0
      %v5615 = vadd.f32 %v5613, %v5614
      %v5616 = vrot.slane %v5615, 4
      %v5617 = vadd.f32 %v5615, %v5616
      %v5618 = vrot.slane %v5617, 2
      %v5619 = vadd.f32 %v5617, %v5618
      %v5620 = vrot.slane %v5619, 1
      %v5621 = vadd.f32 %v5619, %v5620
      %v5622 = vsel %vm622, %v5557, 0.0
      %v5623 = vsel %vm622, %v5558, 0.0
      %v5624 = vadd.f32 %v5622, %v5623
      %v5625 = vrot.slane %v5624, 4
      %v5626 = vadd.f32 %v5624, %v5625
      %v5627 = vrot.slane %v5626, 2
      %v5628 = vadd.f32 %v5626, %v5627
      %v5629 = vrot.slane %v5628, 1
      %v5630 = vadd.f32 %v5628, %v5629
      %v5631 = vsel %vm5415, -1e+30, %v5223
      %v5632 = vsel %vm5416, -1e+30, %v5224
      %v5633 = vsel %vm5417, -1e+30, %v5225
      %v5634 = vsel %vm5418, -1e+30, %v5226
      %v5635 = vsel %vm5419, -1e+30, %v5227
      %v5636 = vsel %vm5420, -1e+30, %v5228
      %v5637 = vsel %vm5421, -1e+30, %v5229
      %v5638 = vsel %vm5422, -1e+30, %v5230
      %v5639 = vsel %vm5423, -1e+30, %v5231
      %v5640 = vsel %vm5424, -1e+30, %v5232
      %v5641 = vsel %vm5425, -1e+30, %v5233
      %v5642 = vsel %vm5426, -1e+30, %v5234
      %v5643 = vsel %vm5427, -1e+30, %v5235
      %v5644 = vsel %vm5428, -1e+30, %v5236
      %v5645 = vsel %vm5429, -1e+30, %v5237
      %v5646 = vsel %vm5430, -1e+30, %v5238
      %v5647 = vsel %vm4830, %v5631, -inf
      %v5648 = vsel %vm4830, %v5632, -inf
      %v5649 = vmax.f32 %v5647, %v5648
      %v5650 = vrot.slane %v5649, 4
      %v5651 = vmax.f32 %v5649, %v5650
      %v5652 = vrot.slane %v5651, 2
      %v5653 = vmax.f32 %v5651, %v5652
      %v5654 = vrot.slane %v5653, 1
      %v5655 = vmax.f32 %v5653, %v5654
      %v5656 = vsel %vm4830, %v5633, -inf
      %v5657 = vsel %vm4830, %v5634, -inf
      %v5658 = vmax.f32 %v5656, %v5657
      %v5659 = vrot.slane %v5658, 4
      %v5660 = vmax.f32 %v5658, %v5659
      %v5661 = vrot.slane %v5660, 2
      %v5662 = vmax.f32 %v5660, %v5661
      %v5663 = vrot.slane %v5662, 1
      %v5664 = vmax.f32 %v5662, %v5663
      %v5665 = vsel %vm4830, %v5635, -inf
      %v5666 = vsel %vm4830, %v5636, -inf
      %v5667 = vmax.f32 %v5665, %v5666
      %v5668 = vrot.slane %v5667, 4
      %v5669 = vmax.f32 %v5667, %v5668
      %v5670 = vrot.slane %v5669, 2
      %v5671 = vmax.f32 %v5669, %v5670
      %v5672 = vrot.slane %v5671, 1
      %v5673 = vmax.f32 %v5671, %v5672
      %v5674 = vsel %vm4830, %v5637, -inf
      %v5675 = vsel %vm4830, %v5638, -inf
      %v5676 = vmax.f32 %v5674, %v5675
      %v5677 = vrot.slane %v5676, 4
      %v5678 = vmax.f32 %v5676, %v5677
      %v5679 = vrot.slane %v5678, 2
      %v5680 = vmax.f32 %v5678, %v5679
      %v5681 = vrot.slane %v5680, 1
      %v5682 = vmax.f32 %v5680, %v5681
      %v5683 = vsel %vm4830, %v5639, -inf
      %v5684 = vsel %vm4830, %v5640, -inf
      %v5685 = vmax.f32 %v5683, %v5684
      %v5686 = vrot.slane %v5685, 4
      %v5687 = vmax.f32 %v5685, %v5686
      %v5688 = vrot.slane %v5687, 2
      %v5689 = vmax.f32 %v5687, %v5688
      %v5690 = vrot.slane %v5689, 1
      %v5691 = vmax.f32 %v5689, %v5690
      %v5692 = vsel %vm4830, %v5641, -inf
      %v5693 = vsel %vm4830, %v5642, -inf
      %v5694 = vmax.f32 %v5692, %v5693
      %v5695 = vrot.slane %v5694, 4
      %v5696 = vmax.f32 %v5694, %v5695
      %v5697 = vrot.slane %v5696, 2
      %v5698 = vmax.f32 %v5696, %v5697
      %v5699 = vrot.slane %v5698, 1
      %v5700 = vmax.f32 %v5698, %v5699
      %v5701 = vsel %vm4830, %v5643, -inf
      %v5702 = vsel %vm4830, %v5644, -inf
      %v5703 = vmax.f32 %v5701, %v5702
      %v5704 = vrot.slane %v5703, 4
      %v5705 = vmax.f32 %v5703, %v5704
      %v5706 = vrot.slane %v5705, 2
      %v5707 = vmax.f32 %v5705, %v5706
      %v5708 = vrot.slane %v5707, 1
      %v5709 = vmax.f32 %v5707, %v5708
      %v5710 = vsel %vm4830, %v5645, -inf
      %v5711 = vsel %vm4830, %v5646, -inf
      %v5712 = vmax.f32 %v5710, %v5711
      %v5713 = vrot.slane %v5712, 4
      %v5714 = vmax.f32 %v5712, %v5713
      %v5715 = vrot.slane %v5714, 2
      %v5716 = vmax.f32 %v5714, %v5715
      %v5717 = vrot.slane %v5716, 1
      %v5718 = vmax.f32 %v5716, %v5717
      %vm5719 = vcmp.eq.f32.partialorder %v5631, %v5655
      %vm5720 = vcmp.eq.f32.partialorder %v5632, %v5655
      %vm5721 = vcmp.eq.f32.partialorder %v5633, %v5664
      %vm5722 = vcmp.eq.f32.partialorder %v5634, %v5664
      %vm5723 = vcmp.eq.f32.partialorder %v5635, %v5673
      %vm5724 = vcmp.eq.f32.partialorder %v5636, %v5673
      %vm5725 = vcmp.eq.f32.partialorder %v5637, %v5682
      %vm5726 = vcmp.eq.f32.partialorder %v5638, %v5682
      %vm5727 = vcmp.eq.f32.partialorder %v5639, %v5691
      %vm5728 = vcmp.eq.f32.partialorder %v5640, %v5691
      %vm5729 = vcmp.eq.f32.partialorder %v5641, %v5700
      %vm5730 = vcmp.eq.f32.partialorder %v5642, %v5700
      %vm5731 = vcmp.eq.f32.partialorder %v5643, %v5709
      %vm5732 = vcmp.eq.f32.partialorder %v5644, %v5709
      %vm5733 = vcmp.eq.f32.partialorder %v5645, %v5718
      %vm5734 = vcmp.eq.f32.partialorder %v5646, %v5718
      %v5735 = vsel %vm5719, %v4828, 16.0
      %v5736 = vsel %vm5720, %v4829, 16.0
      %v5737 = vsel %vm5721, %v4828, 16.0
      %v5738 = vsel %vm5722, %v4829, 16.0
      %v5739 = vsel %vm5723, %v4828, 16.0
      %v5740 = vsel %vm5724, %v4829, 16.0
      %v5741 = vsel %vm5725, %v4828, 16.0
      %v5742 = vsel %vm5726, %v4829, 16.0
      %v5743 = vsel %vm5727, %v4828, 16.0
      %v5744 = vsel %vm5728, %v4829, 16.0
      %v5745 = vsel %vm5729, %v4828, 16.0
      %v5746 = vsel %vm5730, %v4829, 16.0
      %v5747 = vsel %vm5731, %v4828, 16.0
      %v5748 = vsel %vm5732, %v4829, 16.0
      %v5749 = vsel %vm5733, %v4828, 16.0
      %v5750 = vsel %vm5734, %v4829, 16.0
      %v5751 = vsel %vm4830, %v5735, inf
      %v5752 = vsel %vm4830, %v5736, inf
      %v5753 = vmin.f32 %v5751, %v5752
      %v5754 = vrot.slane %v5753, 4
      %v5755 = vmin.f32 %v5753, %v5754
      %v5756 = vrot.slane %v5755, 2
      %v5757 = vmin.f32 %v5755, %v5756
      %v5758 = vrot.slane %v5757, 1
      %v5759 = vmin.f32 %v5757, %v5758
      %v5760 = vsel %vm4830, %v5737, inf
      %v5761 = vsel %vm4830, %v5738, inf
      %v5762 = vmin.f32 %v5760, %v5761
      %v5763 = vrot.slane %v5762, 4
      %v5764 = vmin.f32 %v5762, %v5763
      %v5765 = vrot.slane %v5764, 2
      %v5766 = vmin.f32 %v5764, %v5765
      %v5767 = vrot.slane %v5766, 1
      %v5768 = vmin.f32 %v5766, %v5767
      %v5769 = vsel %vm4830, %v5739, inf
      %v5770 = vsel %vm4830, %v5740, inf
      %v5771 = vmin.f32 %v5769, %v5770
      %v5772 = vrot.slane %v5771, 4
      %v5773 = vmin.f32 %v5771, %v5772
      %v5774 = vrot.slane %v5773, 2
      %v5775 = vmin.f32 %v5773, %v5774
      %v5776 = vrot.slane %v5775, 1
      %v5777 = vmin.f32 %v5775, %v5776
      %v5778 = vsel %vm4830, %v5741, inf
      %v5779 = vsel %vm4830, %v5742, inf
      %v5780 = vmin.f32 %v5778, %v5779
      %v5781 = vrot.slane %v5780, 4
      %v5782 = vmin.f32 %v5780, %v5781
      %v5783 = vrot.slane %v5782, 2
      %v5784 = vmin.f32 %v5782, %v5783
      %v5785 = vrot.slane %v5784, 1
      %v5786 = vmin.f32 %v5784, %v5785
      %v5787 = vsel %vm4830, %v5743, inf
      %v5788 = vsel %vm4830, %v5744, inf
      %v5789 = vmin.f32 %v5787, %v5788
      %v5790 = vrot.slane %v5789, 4
      %v5791 = vmin.f32 %v5789, %v5790
      %v5792 = vrot.slane %v5791, 2
      %v5793 = vmin.f32 %v5791, %v5792
      %v5794 = vrot.slane %v5793, 1
      %v5795 = vmin.f32 %v5793, %v5794
      %v5796 = vsel %vm4830, %v5745, inf
      %v5797 = vsel %vm4830, %v5746, inf
      %v5798 = vmin.f32 %v5796, %v5797
      %v5799 = vrot.slane %v5798, 4
      %v5800 = vmin.f32 %v5798, %v5799
      %v5801 = vrot.slane %v5800, 2
      %v5802 = vmin.f32 %v5800, %v5801
      %v5803 = vrot.slane %v5802, 1
      %v5804 = vmin.f32 %v5802, %v5803
      %v5805 = vsel %vm4830, %v5747, inf
      %v5806 = vsel %vm4830, %v5748, inf
      %v5807 = vmin.f32 %v5805, %v5806
      %v5808 = vrot.slane %v5807, 4
      %v5809 = vmin.f32 %v5807, %v5808
      %v5810 = vrot.slane %v5809, 2
      %v5811 = vmin.f32 %v5809, %v5810
      %v5812 = vrot.slane %v5811, 1
      %v5813 = vmin.f32 %v5811, %v5812
      %v5814 = vsel %vm4830, %v5749, inf
      %v5815 = vsel %vm4830, %v5750, inf
      %v5816 = vmin.f32 %v5814, %v5815
      %v5817 = vrot.slane %v5816, 4
      %v5818 = vmin.f32 %v5816, %v5817
      %v5819 = vrot.slane %v5818, 2
      %v5820 = vmin.f32 %v5818, %v5819
      %v5821 = vrot.slane %v5820, 1
      %v5822 = vmin.f32 %v5820, %v5821
      %vm5823 = vcmp.eq.f32.partialorder %v4828, %v5759
      %vm5824 = vcmp.eq.f32.partialorder %v4829, %v5759
      %vm5825 = vcmp.eq.f32.partialorder %v4828, %v5768
      %vm5826 = vcmp.eq.f32.partialorder %v4829, %v5768
      %vm5827 = vcmp.eq.f32.partialorder %v4828, %v5777
      %vm5828 = vcmp.eq.f32.partialorder %v4829, %v5777
      %vm5829 = vcmp.eq.f32.partialorder %v4828, %v5786
      %vm5830 = vcmp.eq.f32.partialorder %v4829, %v5786
      %vm5831 = vcmp.eq.f32.partialorder %v4828, %v5795
      %vm5832 = vcmp.eq.f32.partialorder %v4829, %v5795
      %vm5833 = vcmp.eq.f32.partialorder %v4828, %v5804
      %vm5834 = vcmp.eq.f32.partialorder %v4829, %v5804
      %vm5835 = vcmp.eq.f32.partialorder %v4828, %v5813
      %vm5836 = vcmp.eq.f32.partialorder %v4829, %v5813
      %vm5837 = vcmp.eq.f32.partialorder %v4828, %v5822
      %vm5838 = vcmp.eq.f32.partialorder %v4829, %v5822
      %v5839 = vsel %vm5823, 1, 0
      %v5840 = vsel %vm5824, 1, 0
      %v5841 = vsel %vm5825, 1, 0
      %v5842 = vsel %vm5826, 1, 0
      %v5843 = vsel %vm5827, 1, 0
      %v5844 = vsel %vm5828, 1, 0
      %v5845 = vsel %vm5829, 1, 0
      %v5846 = vsel %vm5830, 1, 0
      %v5847 = vsel %vm5831, 1, 0
      %v5848 = vsel %vm5832, 1, 0
      %v5849 = vsel %vm5833, 1, 0
      %v5850 = vsel %vm5834, 1, 0
      %v5851 = vsel %vm5835, 1, 0
      %v5852 = vsel %vm5836, 1, 0
      %v5853 = vsel %vm5837, 1, 0
      %v5854 = vsel %vm5838, 1, 0
      %v5855 = vcvt.s32.f32 %v5839
      %v5856 = vcvt.s32.f32 %v5840
      %v5857 = vcvt.s32.f32 %v5841
      %v5858 = vcvt.s32.f32 %v5842
      %v5859 = vcvt.s32.f32 %v5843
      %v5860 = vcvt.s32.f32 %v5844
      %v5861 = vcvt.s32.f32 %v5845
      %v5862 = vcvt.s32.f32 %v5846
      %v5863 = vcvt.s32.f32 %v5847
      %v5864 = vcvt.s32.f32 %v5848
      %v5865 = vcvt.s32.f32 %v5849
      %v5866 = vcvt.s32.f32 %v5850
      %v5867 = vcvt.s32.f32 %v5851
      %v5868 = vcvt.s32.f32 %v5852
      %v5869 = vcvt.s32.f32 %v5853
      %v5870 = vcvt.s32.f32 %v5854
      %5872 = vset.pattern.permute.xlu0 0
      %5873 = vperm.xlu0 %5872, %v5855
      %v5874 = vpop.permute.xlu0 %5873
      %5877 = vset.pattern.permute.xlu0 0
      %5878 = vperm.xlu0 %5877, %v5856
      %v5879 = vpop.permute.xlu0 %5878
      %5882 = vset.pattern.permute.xlu0 0
      %5883 = vperm.xlu0 %5882, %v5857
      %v5884 = vpop.permute.xlu0 %5883
      %5887 = vset.pattern.permute.xlu0 0
      %5888 = vperm.xlu0 %5887, %v5858
      %v5889 = vpop.permute.xlu0 %5888
      %5892 = vset.pattern.permute.xlu0 0
      %5893 = vperm.xlu0 %5892, %v5859
      %v5894 = vpop.permute.xlu0 %5893
      %5897 = vset.pattern.permute.xlu0 0
      %5898 = vperm.xlu0 %5897, %v5860
      %v5899 = vpop.permute.xlu0 %5898
      %5902 = vset.pattern.permute.xlu0 0
      %5903 = vperm.xlu0 %5902, %v5861
      %v5904 = vpop.permute.xlu0 %5903
      %5907 = vset.pattern.permute.xlu0 0
      %5908 = vperm.xlu0 %5907, %v5862
      %v5909 = vpop.permute.xlu0 %5908
      %5912 = vset.pattern.permute.xlu0 0
      %5913 = vperm.xlu0 %5912, %v5863
      %v5914 = vpop.permute.xlu0 %5913
      %5917 = vset.pattern.permute.xlu0 0
      %5918 = vperm.xlu0 %5917, %v5864
      %v5919 = vpop.permute.xlu0 %5918
      %5922 = vset.pattern.permute.xlu0 0
      %5923 = vperm.xlu0 %5922, %v5865
      %v5924 = vpop.permute.xlu0 %5923
      %5927 = vset.pattern.permute.xlu0 0
      %5928 = vperm.xlu0 %5927, %v5866
      %v5929 = vpop.permute.xlu0 %5928
      %5932 = vset.pattern.permute.xlu0 0
      %5933 = vperm.xlu0 %5932, %v5867
      %v5934 = vpop.permute.xlu0 %5933
      %5937 = vset.pattern.permute.xlu0 0
      %5938 = vperm.xlu0 %5937, %v5868
      %v5939 = vpop.permute.xlu0 %5938
      %5942 = vset.pattern.permute.xlu0 0
      %5943 = vperm.xlu0 %5942, %v5869
      %v5944 = vpop.permute.xlu0 %5943
      %5947 = vset.pattern.permute.xlu0 0
      %5948 = vperm.xlu0 %5947, %v5870
      %v5949 = vpop.permute.xlu0 %5948
      %v5951 = vmul.f32 %v5874, %v4809
      %v5952 = vmul.f32 %v5879, %v4810
      %v5953 = vmul.f32 %v5884, %v4811
      %v5954 = vmul.f32 %v5889, %v4812
      %v5955 = vmul.f32 %v5894, %v4813
      %v5956 = vmul.f32 %v5899, %v4814
      %v5957 = vmul.f32 %v5904, %v4815
      %v5958 = vmul.f32 %v5909, %v4816
      %v5959 = vmul.f32 %v5914, %v4817
      %v5960 = vmul.f32 %v5919, %v4818
      %v5961 = vmul.f32 %v5924, %v4819
      %v5962 = vmul.f32 %v5929, %v4820
      %v5963 = vmul.f32 %v5934, %v4821
      %v5964 = vmul.f32 %v5939, %v4822
      %v5965 = vmul.f32 %v5944, %v4823
      %v5966 = vmul.f32 %v5949, %v4824
      %v5967 = vsel %vm622, %v5951, 0.0
      %v5968 = vsel %vm622, %v5952, 0.0
      %v5969 = vadd.f32 %v5967, %v5968
      %v5970 = vrot.slane %v5969, 4
      %v5971 = vadd.f32 %v5969, %v5970
      %v5972 = vrot.slane %v5971, 2
      %v5973 = vadd.f32 %v5971, %v5972
      %v5974 = vrot.slane %v5973, 1
      %v5975 = vadd.f32 %v5973, %v5974
      %v5976 = vsel %vm622, %v5953, 0.0
      %v5977 = vsel %vm622, %v5954, 0.0
      %v5978 = vadd.f32 %v5976, %v5977
      %v5979 = vrot.slane %v5978, 4
      %v5980 = vadd.f32 %v5978, %v5979
      %v5981 = vrot.slane %v5980, 2
      %v5982 = vadd.f32 %v5980, %v5981
      %v5983 = vrot.slane %v5982, 1
      %v5984 = vadd.f32 %v5982, %v5983
      %v5985 = vsel %vm622, %v5955, 0.0
      %v5986 = vsel %vm622, %v5956, 0.0
      %v5987 = vadd.f32 %v5985, %v5986
      %v5988 = vrot.slane %v5987, 4
      %v5989 = vadd.f32 %v5987, %v5988
      %v5990 = vrot.slane %v5989, 2
      %v5991 = vadd.f32 %v5989, %v5990
      %v5992 = vrot.slane %v5991, 1
      %v5993 = vadd.f32 %v5991, %v5992
      %v5994 = vsel %vm622, %v5957, 0.0
      %v5995 = vsel %vm622, %v5958, 0.0
      %v5996 = vadd.f32 %v5994, %v5995
      %v5997 = vrot.slane %v5996, 4
      %v5998 = vadd.f32 %v5996, %v5997
      %v5999 = vrot.slane %v5998, 2
      %v6000 = vadd.f32 %v5998, %v5999
      %v6001 = vrot.slane %v6000, 1
      %v6002 = vadd.f32 %v6000, %v6001
      %v6003 = vsel %vm622, %v5959, 0.0
      %v6004 = vsel %vm622, %v5960, 0.0
      %v6005 = vadd.f32 %v6003, %v6004
      %v6006 = vrot.slane %v6005, 4
      %v6007 = vadd.f32 %v6005, %v6006
      %v6008 = vrot.slane %v6007, 2
      %v6009 = vadd.f32 %v6007, %v6008
      %v6010 = vrot.slane %v6009, 1
      %v6011 = vadd.f32 %v6009, %v6010
      %v6012 = vsel %vm622, %v5961, 0.0
      %v6013 = vsel %vm622, %v5962, 0.0
      %v6014 = vadd.f32 %v6012, %v6013
      %v6015 = vrot.slane %v6014, 4
      %v6016 = vadd.f32 %v6014, %v6015
      %v6017 = vrot.slane %v6016, 2
      %v6018 = vadd.f32 %v6016, %v6017
      %v6019 = vrot.slane %v6018, 1
      %v6020 = vadd.f32 %v6018, %v6019
      %v6021 = vsel %vm622, %v5963, 0.0
      %v6022 = vsel %vm622, %v5964, 0.0
      %v6023 = vadd.f32 %v6021, %v6022
      %v6024 = vrot.slane %v6023, 4
      %v6025 = vadd.f32 %v6023, %v6024
      %v6026 = vrot.slane %v6025, 2
      %v6027 = vadd.f32 %v6025, %v6026
      %v6028 = vrot.slane %v6027, 1
      %v6029 = vadd.f32 %v6027, %v6028
      %v6030 = vsel %vm622, %v5965, 0.0
      %v6031 = vsel %vm622, %v5966, 0.0
      %v6032 = vadd.f32 %v6030, %v6031
      %v6033 = vrot.slane %v6032, 4
      %v6034 = vadd.f32 %v6032, %v6033
      %v6035 = vrot.slane %v6034, 2
      %v6036 = vadd.f32 %v6034, %v6035
      %v6037 = vrot.slane %v6036, 1
      %v6038 = vadd.f32 %v6036, %v6037
      %v6039 = vsel %vm5823, -1e+30, %v5631
      %v6040 = vsel %vm5824, -1e+30, %v5632
      %v6041 = vsel %vm5825, -1e+30, %v5633
      %v6042 = vsel %vm5826, -1e+30, %v5634
      %v6043 = vsel %vm5827, -1e+30, %v5635
      %v6044 = vsel %vm5828, -1e+30, %v5636
      %v6045 = vsel %vm5829, -1e+30, %v5637
      %v6046 = vsel %vm5830, -1e+30, %v5638
      %v6047 = vsel %vm5831, -1e+30, %v5639
      %v6048 = vsel %vm5832, -1e+30, %v5640
      %v6049 = vsel %vm5833, -1e+30, %v5641
      %v6050 = vsel %vm5834, -1e+30, %v5642
      %v6051 = vsel %vm5835, -1e+30, %v5643
      %v6052 = vsel %vm5836, -1e+30, %v5644
      %v6053 = vsel %vm5837, -1e+30, %v5645
      %v6054 = vsel %vm5838, -1e+30, %v5646
      %v6055 = vsel %vm4830, %v6039, -inf
      %v6056 = vsel %vm4830, %v6040, -inf
      %v6057 = vmax.f32 %v6055, %v6056
      %v6058 = vrot.slane %v6057, 4
      %v6059 = vmax.f32 %v6057, %v6058
      %v6060 = vrot.slane %v6059, 2
      %v6061 = vmax.f32 %v6059, %v6060
      %v6062 = vrot.slane %v6061, 1
      %v6063 = vmax.f32 %v6061, %v6062
      %v6064 = vsel %vm4830, %v6041, -inf
      %v6065 = vsel %vm4830, %v6042, -inf
      %v6066 = vmax.f32 %v6064, %v6065
      %v6067 = vrot.slane %v6066, 4
      %v6068 = vmax.f32 %v6066, %v6067
      %v6069 = vrot.slane %v6068, 2
      %v6070 = vmax.f32 %v6068, %v6069
      %v6071 = vrot.slane %v6070, 1
      %v6072 = vmax.f32 %v6070, %v6071
      %v6073 = vsel %vm4830, %v6043, -inf
      %v6074 = vsel %vm4830, %v6044, -inf
      %v6075 = vmax.f32 %v6073, %v6074
      %v6076 = vrot.slane %v6075, 4
      %v6077 = vmax.f32 %v6075, %v6076
      %v6078 = vrot.slane %v6077, 2
      %v6079 = vmax.f32 %v6077, %v6078
      %v6080 = vrot.slane %v6079, 1
      %v6081 = vmax.f32 %v6079, %v6080
      %v6082 = vsel %vm4830, %v6045, -inf
      %v6083 = vsel %vm4830, %v6046, -inf
      %v6084 = vmax.f32 %v6082, %v6083
      %v6085 = vrot.slane %v6084, 4
      %v6086 = vmax.f32 %v6084, %v6085
      %v6087 = vrot.slane %v6086, 2
      %v6088 = vmax.f32 %v6086, %v6087
      %v6089 = vrot.slane %v6088, 1
      %v6090 = vmax.f32 %v6088, %v6089
      %v6091 = vsel %vm4830, %v6047, -inf
      %v6092 = vsel %vm4830, %v6048, -inf
      %v6093 = vmax.f32 %v6091, %v6092
      %v6094 = vrot.slane %v6093, 4
      %v6095 = vmax.f32 %v6093, %v6094
      %v6096 = vrot.slane %v6095, 2
      %v6097 = vmax.f32 %v6095, %v6096
      %v6098 = vrot.slane %v6097, 1
      %v6099 = vmax.f32 %v6097, %v6098
      %v6100 = vsel %vm4830, %v6049, -inf
      %v6101 = vsel %vm4830, %v6050, -inf
      %v6102 = vmax.f32 %v6100, %v6101
      %v6103 = vrot.slane %v6102, 4
      %v6104 = vmax.f32 %v6102, %v6103
      %v6105 = vrot.slane %v6104, 2
      %v6106 = vmax.f32 %v6104, %v6105
      %v6107 = vrot.slane %v6106, 1
      %v6108 = vmax.f32 %v6106, %v6107
      %v6109 = vsel %vm4830, %v6051, -inf
      %v6110 = vsel %vm4830, %v6052, -inf
      %v6111 = vmax.f32 %v6109, %v6110
      %v6112 = vrot.slane %v6111, 4
      %v6113 = vmax.f32 %v6111, %v6112
      %v6114 = vrot.slane %v6113, 2
      %v6115 = vmax.f32 %v6113, %v6114
      %v6116 = vrot.slane %v6115, 1
      %v6117 = vmax.f32 %v6115, %v6116
      %v6118 = vsel %vm4830, %v6053, -inf
      %v6119 = vsel %vm4830, %v6054, -inf
      %v6120 = vmax.f32 %v6118, %v6119
      %v6121 = vrot.slane %v6120, 4
      %v6122 = vmax.f32 %v6120, %v6121
      %v6123 = vrot.slane %v6122, 2
      %v6124 = vmax.f32 %v6122, %v6123
      %v6125 = vrot.slane %v6124, 1
      %v6126 = vmax.f32 %v6124, %v6125
      %vm6127 = vcmp.eq.f32.partialorder %v6039, %v6063
      %vm6128 = vcmp.eq.f32.partialorder %v6040, %v6063
      %vm6129 = vcmp.eq.f32.partialorder %v6041, %v6072
      %vm6130 = vcmp.eq.f32.partialorder %v6042, %v6072
      %vm6131 = vcmp.eq.f32.partialorder %v6043, %v6081
      %vm6132 = vcmp.eq.f32.partialorder %v6044, %v6081
      %vm6133 = vcmp.eq.f32.partialorder %v6045, %v6090
      %vm6134 = vcmp.eq.f32.partialorder %v6046, %v6090
      %vm6135 = vcmp.eq.f32.partialorder %v6047, %v6099
      %vm6136 = vcmp.eq.f32.partialorder %v6048, %v6099
      %vm6137 = vcmp.eq.f32.partialorder %v6049, %v6108
      %vm6138 = vcmp.eq.f32.partialorder %v6050, %v6108
      %vm6139 = vcmp.eq.f32.partialorder %v6051, %v6117
      %vm6140 = vcmp.eq.f32.partialorder %v6052, %v6117
      %vm6141 = vcmp.eq.f32.partialorder %v6053, %v6126
      %vm6142 = vcmp.eq.f32.partialorder %v6054, %v6126
      %v6143 = vsel %vm6127, %v4828, 16.0
      %v6144 = vsel %vm6128, %v4829, 16.0
      %v6145 = vsel %vm6129, %v4828, 16.0
      %v6146 = vsel %vm6130, %v4829, 16.0
      %v6147 = vsel %vm6131, %v4828, 16.0
      %v6148 = vsel %vm6132, %v4829, 16.0
      %v6149 = vsel %vm6133, %v4828, 16.0
      %v6150 = vsel %vm6134, %v4829, 16.0
      %v6151 = vsel %vm6135, %v4828, 16.0
      %v6152 = vsel %vm6136, %v4829, 16.0
      %v6153 = vsel %vm6137, %v4828, 16.0
      %v6154 = vsel %vm6138, %v4829, 16.0
      %v6155 = vsel %vm6139, %v4828, 16.0
      %v6156 = vsel %vm6140, %v4829, 16.0
      %v6157 = vsel %vm6141, %v4828, 16.0
      %v6158 = vsel %vm6142, %v4829, 16.0
      %v6159 = vsel %vm4830, %v6143, inf
      %v6160 = vsel %vm4830, %v6144, inf
      %v6161 = vmin.f32 %v6159, %v6160
      %v6162 = vrot.slane %v6161, 4
      %v6163 = vmin.f32 %v6161, %v6162
      %v6164 = vrot.slane %v6163, 2
      %v6165 = vmin.f32 %v6163, %v6164
      %v6166 = vrot.slane %v6165, 1
      %v6167 = vmin.f32 %v6165, %v6166
      %v6168 = vsel %vm4830, %v6145, inf
      %v6169 = vsel %vm4830, %v6146, inf
      %v6170 = vmin.f32 %v6168, %v6169
      %v6171 = vrot.slane %v6170, 4
      %v6172 = vmin.f32 %v6170, %v6171
      %v6173 = vrot.slane %v6172, 2
      %v6174 = vmin.f32 %v6172, %v6173
      %v6175 = vrot.slane %v6174, 1
      %v6176 = vmin.f32 %v6174, %v6175
      %v6177 = vsel %vm4830, %v6147, inf
      %v6178 = vsel %vm4830, %v6148, inf
      %v6179 = vmin.f32 %v6177, %v6178
      %v6180 = vrot.slane %v6179, 4
      %v6181 = vmin.f32 %v6179, %v6180
      %v6182 = vrot.slane %v6181, 2
      %v6183 = vmin.f32 %v6181, %v6182
      %v6184 = vrot.slane %v6183, 1
      %v6185 = vmin.f32 %v6183, %v6184
      %v6186 = vsel %vm4830, %v6149, inf
      %v6187 = vsel %vm4830, %v6150, inf
      %v6188 = vmin.f32 %v6186, %v6187
      %v6189 = vrot.slane %v6188, 4
      %v6190 = vmin.f32 %v6188, %v6189
      %v6191 = vrot.slane %v6190, 2
      %v6192 = vmin.f32 %v6190, %v6191
      %v6193 = vrot.slane %v6192, 1
      %v6194 = vmin.f32 %v6192, %v6193
      %v6195 = vsel %vm4830, %v6151, inf
      %v6196 = vsel %vm4830, %v6152, inf
      %v6197 = vmin.f32 %v6195, %v6196
      %v6198 = vrot.slane %v6197, 4
      %v6199 = vmin.f32 %v6197, %v6198
      %v6200 = vrot.slane %v6199, 2
      %v6201 = vmin.f32 %v6199, %v6200
      %v6202 = vrot.slane %v6201, 1
      %v6203 = vmin.f32 %v6201, %v6202
      %v6204 = vsel %vm4830, %v6153, inf
      %v6205 = vsel %vm4830, %v6154, inf
      %v6206 = vmin.f32 %v6204, %v6205
      %v6207 = vrot.slane %v6206, 4
      %v6208 = vmin.f32 %v6206, %v6207
      %v6209 = vrot.slane %v6208, 2
      %v6210 = vmin.f32 %v6208, %v6209
      %v6211 = vrot.slane %v6210, 1
      %v6212 = vmin.f32 %v6210, %v6211
      %v6213 = vsel %vm4830, %v6155, inf
      %v6214 = vsel %vm4830, %v6156, inf
      %v6215 = vmin.f32 %v6213, %v6214
      %v6216 = vrot.slane %v6215, 4
      %v6217 = vmin.f32 %v6215, %v6216
      %v6218 = vrot.slane %v6217, 2
      %v6219 = vmin.f32 %v6217, %v6218
      %v6220 = vrot.slane %v6219, 1
      %v6221 = vmin.f32 %v6219, %v6220
      %v6222 = vsel %vm4830, %v6157, inf
      %v6223 = vsel %vm4830, %v6158, inf
      %v6224 = vmin.f32 %v6222, %v6223
      %v6225 = vrot.slane %v6224, 4
      %v6226 = vmin.f32 %v6224, %v6225
      %v6227 = vrot.slane %v6226, 2
      %v6228 = vmin.f32 %v6226, %v6227
      %v6229 = vrot.slane %v6228, 1
      %v6230 = vmin.f32 %v6228, %v6229
      %vm6231 = vcmp.eq.f32.partialorder %v4828, %v6167
      %vm6232 = vcmp.eq.f32.partialorder %v4829, %v6167
      %vm6233 = vcmp.eq.f32.partialorder %v4828, %v6176
      %vm6234 = vcmp.eq.f32.partialorder %v4829, %v6176
      %vm6235 = vcmp.eq.f32.partialorder %v4828, %v6185
      %vm6236 = vcmp.eq.f32.partialorder %v4829, %v6185
      %vm6237 = vcmp.eq.f32.partialorder %v4828, %v6194
      %vm6238 = vcmp.eq.f32.partialorder %v4829, %v6194
      %vm6239 = vcmp.eq.f32.partialorder %v4828, %v6203
      %vm6240 = vcmp.eq.f32.partialorder %v4829, %v6203
      %vm6241 = vcmp.eq.f32.partialorder %v4828, %v6212
      %vm6242 = vcmp.eq.f32.partialorder %v4829, %v6212
      %vm6243 = vcmp.eq.f32.partialorder %v4828, %v6221
      %vm6244 = vcmp.eq.f32.partialorder %v4829, %v6221
      %vm6245 = vcmp.eq.f32.partialorder %v4828, %v6230
      %vm6246 = vcmp.eq.f32.partialorder %v4829, %v6230
      %v6247 = vsel %vm6231, 1, 0
      %v6248 = vsel %vm6232, 1, 0
      %v6249 = vsel %vm6233, 1, 0
      %v6250 = vsel %vm6234, 1, 0
      %v6251 = vsel %vm6235, 1, 0
      %v6252 = vsel %vm6236, 1, 0
      %v6253 = vsel %vm6237, 1, 0
      %v6254 = vsel %vm6238, 1, 0
      %v6255 = vsel %vm6239, 1, 0
      %v6256 = vsel %vm6240, 1, 0
      %v6257 = vsel %vm6241, 1, 0
      %v6258 = vsel %vm6242, 1, 0
      %v6259 = vsel %vm6243, 1, 0
      %v6260 = vsel %vm6244, 1, 0
      %v6261 = vsel %vm6245, 1, 0
      %v6262 = vsel %vm6246, 1, 0
      %v6263 = vcvt.s32.f32 %v6247
      %v6264 = vcvt.s32.f32 %v6248
      %v6265 = vcvt.s32.f32 %v6249
      %v6266 = vcvt.s32.f32 %v6250
      %v6267 = vcvt.s32.f32 %v6251
      %v6268 = vcvt.s32.f32 %v6252
      %v6269 = vcvt.s32.f32 %v6253
      %v6270 = vcvt.s32.f32 %v6254
      %v6271 = vcvt.s32.f32 %v6255
      %v6272 = vcvt.s32.f32 %v6256
      %v6273 = vcvt.s32.f32 %v6257
      %v6274 = vcvt.s32.f32 %v6258
      %v6275 = vcvt.s32.f32 %v6259
      %v6276 = vcvt.s32.f32 %v6260
      %v6277 = vcvt.s32.f32 %v6261
      %v6278 = vcvt.s32.f32 %v6262
      %6280 = vset.pattern.permute.xlu0 0
      %6281 = vperm.xlu0 %6280, %v6263
      %v6282 = vpop.permute.xlu0 %6281
      %6285 = vset.pattern.permute.xlu0 0
      %6286 = vperm.xlu0 %6285, %v6264
      %v6287 = vpop.permute.xlu0 %6286
      %6290 = vset.pattern.permute.xlu0 0
      %6291 = vperm.xlu0 %6290, %v6265
      %v6292 = vpop.permute.xlu0 %6291
      %6295 = vset.pattern.permute.xlu0 0
      %6296 = vperm.xlu0 %6295, %v6266
      %v6297 = vpop.permute.xlu0 %6296
      %6300 = vset.pattern.permute.xlu0 0
      %6301 = vperm.xlu0 %6300, %v6267
      %v6302 = vpop.permute.xlu0 %6301
      %6305 = vset.pattern.permute.xlu0 0
      %6306 = vperm.xlu0 %6305, %v6268
      %v6307 = vpop.permute.xlu0 %6306
      %6310 = vset.pattern.permute.xlu0 0
      %6311 = vperm.xlu0 %6310, %v6269
      %v6312 = vpop.permute.xlu0 %6311
      %6315 = vset.pattern.permute.xlu0 0
      %6316 = vperm.xlu0 %6315, %v6270
      %v6317 = vpop.permute.xlu0 %6316
      %6320 = vset.pattern.permute.xlu0 0
      %6321 = vperm.xlu0 %6320, %v6271
      %v6322 = vpop.permute.xlu0 %6321
      %6325 = vset.pattern.permute.xlu0 0
      %6326 = vperm.xlu0 %6325, %v6272
      %v6327 = vpop.permute.xlu0 %6326
      %6330 = vset.pattern.permute.xlu0 0
      %6331 = vperm.xlu0 %6330, %v6273
      %v6332 = vpop.permute.xlu0 %6331
      %6335 = vset.pattern.permute.xlu0 0
      %6336 = vperm.xlu0 %6335, %v6274
      %v6337 = vpop.permute.xlu0 %6336
      %6340 = vset.pattern.permute.xlu0 0
      %6341 = vperm.xlu0 %6340, %v6275
      %v6342 = vpop.permute.xlu0 %6341
      %6345 = vset.pattern.permute.xlu0 0
      %6346 = vperm.xlu0 %6345, %v6276
      %v6347 = vpop.permute.xlu0 %6346
      %6350 = vset.pattern.permute.xlu0 0
      %6351 = vperm.xlu0 %6350, %v6277
      %v6352 = vpop.permute.xlu0 %6351
      %6355 = vset.pattern.permute.xlu0 0
      %6356 = vperm.xlu0 %6355, %v6278
      %v6357 = vpop.permute.xlu0 %6356
      %v6359 = vmul.f32 %v6282, %v4809
      %v6360 = vmul.f32 %v6287, %v4810
      %v6361 = vmul.f32 %v6292, %v4811
      %v6362 = vmul.f32 %v6297, %v4812
      %v6363 = vmul.f32 %v6302, %v4813
      %v6364 = vmul.f32 %v6307, %v4814
      %v6365 = vmul.f32 %v6312, %v4815
      %v6366 = vmul.f32 %v6317, %v4816
      %v6367 = vmul.f32 %v6322, %v4817
      %v6368 = vmul.f32 %v6327, %v4818
      %v6369 = vmul.f32 %v6332, %v4819
      %v6370 = vmul.f32 %v6337, %v4820
      %v6371 = vmul.f32 %v6342, %v4821
      %v6372 = vmul.f32 %v6347, %v4822
      %v6373 = vmul.f32 %v6352, %v4823
      %v6374 = vmul.f32 %v6357, %v4824
      %v6375 = vsel %vm622, %v6359, 0.0
      %v6376 = vsel %vm622, %v6360, 0.0
      %v6377 = vadd.f32 %v6375, %v6376
      %v6378 = vrot.slane %v6377, 4
      %v6379 = vadd.f32 %v6377, %v6378
      %v6380 = vrot.slane %v6379, 2
      %v6381 = vadd.f32 %v6379, %v6380
      %v6382 = vrot.slane %v6381, 1
      %v6383 = vadd.f32 %v6381, %v6382
      %v6384 = vsel %vm622, %v6361, 0.0
      %v6385 = vsel %vm622, %v6362, 0.0
      %v6386 = vadd.f32 %v6384, %v6385
      %v6387 = vrot.slane %v6386, 4
      %v6388 = vadd.f32 %v6386, %v6387
      %v6389 = vrot.slane %v6388, 2
      %v6390 = vadd.f32 %v6388, %v6389
      %v6391 = vrot.slane %v6390, 1
      %v6392 = vadd.f32 %v6390, %v6391
      %v6393 = vsel %vm622, %v6363, 0.0
      %v6394 = vsel %vm622, %v6364, 0.0
      %v6395 = vadd.f32 %v6393, %v6394
      %v6396 = vrot.slane %v6395, 4
      %v6397 = vadd.f32 %v6395, %v6396
      %v6398 = vrot.slane %v6397, 2
      %v6399 = vadd.f32 %v6397, %v6398
      %v6400 = vrot.slane %v6399, 1
      %v6401 = vadd.f32 %v6399, %v6400
      %v6402 = vsel %vm622, %v6365, 0.0
      %v6403 = vsel %vm622, %v6366, 0.0
      %v6404 = vadd.f32 %v6402, %v6403
      %v6405 = vrot.slane %v6404, 4
      %v6406 = vadd.f32 %v6404, %v6405
      %v6407 = vrot.slane %v6406, 2
      %v6408 = vadd.f32 %v6406, %v6407
      %v6409 = vrot.slane %v6408, 1
      %v6410 = vadd.f32 %v6408, %v6409
      %v6411 = vsel %vm622, %v6367, 0.0
      %v6412 = vsel %vm622, %v6368, 0.0
      %v6413 = vadd.f32 %v6411, %v6412
      %v6414 = vrot.slane %v6413, 4
      %v6415 = vadd.f32 %v6413, %v6414
      %v6416 = vrot.slane %v6415, 2
      %v6417 = vadd.f32 %v6415, %v6416
      %v6418 = vrot.slane %v6417, 1
      %v6419 = vadd.f32 %v6417, %v6418
      %v6420 = vsel %vm622, %v6369, 0.0
      %v6421 = vsel %vm622, %v6370, 0.0
      %v6422 = vadd.f32 %v6420, %v6421
      %v6423 = vrot.slane %v6422, 4
      %v6424 = vadd.f32 %v6422, %v6423
      %v6425 = vrot.slane %v6424, 2
      %v6426 = vadd.f32 %v6424, %v6425
      %v6427 = vrot.slane %v6426, 1
      %v6428 = vadd.f32 %v6426, %v6427
      %v6429 = vsel %vm622, %v6371, 0.0
      %v6430 = vsel %vm622, %v6372, 0.0
      %v6431 = vadd.f32 %v6429, %v6430
      %v6432 = vrot.slane %v6431, 4
      %v6433 = vadd.f32 %v6431, %v6432
      %v6434 = vrot.slane %v6433, 2
      %v6435 = vadd.f32 %v6433, %v6434
      %v6436 = vrot.slane %v6435, 1
      %v6437 = vadd.f32 %v6435, %v6436
      %v6438 = vsel %vm622, %v6373, 0.0
      %v6439 = vsel %vm622, %v6374, 0.0
      %v6440 = vadd.f32 %v6438, %v6439
      %v6441 = vrot.slane %v6440, 4
      %v6442 = vadd.f32 %v6440, %v6441
      %v6443 = vrot.slane %v6442, 2
      %v6444 = vadd.f32 %v6442, %v6443
      %v6445 = vrot.slane %v6444, 1
      %v6446 = vadd.f32 %v6444, %v6445
      %v6447 = vsel %vm6231, -1e+30, %v6039
      %v6448 = vsel %vm6232, -1e+30, %v6040
      %v6449 = vsel %vm6233, -1e+30, %v6041
      %v6450 = vsel %vm6234, -1e+30, %v6042
      %v6451 = vsel %vm6235, -1e+30, %v6043
      %v6452 = vsel %vm6236, -1e+30, %v6044
      %v6453 = vsel %vm6237, -1e+30, %v6045
      %v6454 = vsel %vm6238, -1e+30, %v6046
      %v6455 = vsel %vm6239, -1e+30, %v6047
      %v6456 = vsel %vm6240, -1e+30, %v6048
      %v6457 = vsel %vm6241, -1e+30, %v6049
      %v6458 = vsel %vm6242, -1e+30, %v6050
      %v6459 = vsel %vm6243, -1e+30, %v6051
      %v6460 = vsel %vm6244, -1e+30, %v6052
      %v6461 = vsel %vm6245, -1e+30, %v6053
      %v6462 = vsel %vm6246, -1e+30, %v6054
      %v6463 = vsel %vm4830, %v6447, -inf
      %v6464 = vsel %vm4830, %v6448, -inf
      %v6465 = vmax.f32 %v6463, %v6464
      %v6466 = vrot.slane %v6465, 4
      %v6467 = vmax.f32 %v6465, %v6466
      %v6468 = vrot.slane %v6467, 2
      %v6469 = vmax.f32 %v6467, %v6468
      %v6470 = vrot.slane %v6469, 1
      %v6471 = vmax.f32 %v6469, %v6470
      %v6472 = vsel %vm4830, %v6449, -inf
      %v6473 = vsel %vm4830, %v6450, -inf
      %v6474 = vmax.f32 %v6472, %v6473
      %v6475 = vrot.slane %v6474, 4
      %v6476 = vmax.f32 %v6474, %v6475
      %v6477 = vrot.slane %v6476, 2
      %v6478 = vmax.f32 %v6476, %v6477
      %v6479 = vrot.slane %v6478, 1
      %v6480 = vmax.f32 %v6478, %v6479
      %v6481 = vsel %vm4830, %v6451, -inf
      %v6482 = vsel %vm4830, %v6452, -inf
      %v6483 = vmax.f32 %v6481, %v6482
      %v6484 = vrot.slane %v6483, 4
      %v6485 = vmax.f32 %v6483, %v6484
      %v6486 = vrot.slane %v6485, 2
      %v6487 = vmax.f32 %v6485, %v6486
      %v6488 = vrot.slane %v6487, 1
      %v6489 = vmax.f32 %v6487, %v6488
      %v6490 = vsel %vm4830, %v6453, -inf
      %v6491 = vsel %vm4830, %v6454, -inf
      %v6492 = vmax.f32 %v6490, %v6491
      %v6493 = vrot.slane %v6492, 4
      %v6494 = vmax.f32 %v6492, %v6493
      %v6495 = vrot.slane %v6494, 2
      %v6496 = vmax.f32 %v6494, %v6495
      %v6497 = vrot.slane %v6496, 1
      %v6498 = vmax.f32 %v6496, %v6497
      %v6499 = vsel %vm4830, %v6455, -inf
      %v6500 = vsel %vm4830, %v6456, -inf
      %v6501 = vmax.f32 %v6499, %v6500
      %v6502 = vrot.slane %v6501, 4
      %v6503 = vmax.f32 %v6501, %v6502
      %v6504 = vrot.slane %v6503, 2
      %v6505 = vmax.f32 %v6503, %v6504
      %v6506 = vrot.slane %v6505, 1
      %v6507 = vmax.f32 %v6505, %v6506
      %v6508 = vsel %vm4830, %v6457, -inf
      %v6509 = vsel %vm4830, %v6458, -inf
      %v6510 = vmax.f32 %v6508, %v6509
      %v6511 = vrot.slane %v6510, 4
      %v6512 = vmax.f32 %v6510, %v6511
      %v6513 = vrot.slane %v6512, 2
      %v6514 = vmax.f32 %v6512, %v6513
      %v6515 = vrot.slane %v6514, 1
      %v6516 = vmax.f32 %v6514, %v6515
      %v6517 = vsel %vm4830, %v6459, -inf
      %v6518 = vsel %vm4830, %v6460, -inf
      %v6519 = vmax.f32 %v6517, %v6518
      %v6520 = vrot.slane %v6519, 4
      %v6521 = vmax.f32 %v6519, %v6520
      %v6522 = vrot.slane %v6521, 2
      %v6523 = vmax.f32 %v6521, %v6522
      %v6524 = vrot.slane %v6523, 1
      %v6525 = vmax.f32 %v6523, %v6524
      %v6526 = vsel %vm4830, %v6461, -inf
      %v6527 = vsel %vm4830, %v6462, -inf
      %v6528 = vmax.f32 %v6526, %v6527
      %v6529 = vrot.slane %v6528, 4
      %v6530 = vmax.f32 %v6528, %v6529
      %v6531 = vrot.slane %v6530, 2
      %v6532 = vmax.f32 %v6530, %v6531
      %v6533 = vrot.slane %v6532, 1
      %v6534 = vmax.f32 %v6532, %v6533
      %vm6535 = vcmp.eq.f32.partialorder %v6447, %v6471
      %vm6536 = vcmp.eq.f32.partialorder %v6448, %v6471
      %vm6537 = vcmp.eq.f32.partialorder %v6449, %v6480
      %vm6538 = vcmp.eq.f32.partialorder %v6450, %v6480
      %vm6539 = vcmp.eq.f32.partialorder %v6451, %v6489
      %vm6540 = vcmp.eq.f32.partialorder %v6452, %v6489
      %vm6541 = vcmp.eq.f32.partialorder %v6453, %v6498
      %vm6542 = vcmp.eq.f32.partialorder %v6454, %v6498
      %vm6543 = vcmp.eq.f32.partialorder %v6455, %v6507
      %vm6544 = vcmp.eq.f32.partialorder %v6456, %v6507
      %vm6545 = vcmp.eq.f32.partialorder %v6457, %v6516
      %vm6546 = vcmp.eq.f32.partialorder %v6458, %v6516
      %vm6547 = vcmp.eq.f32.partialorder %v6459, %v6525
      %vm6548 = vcmp.eq.f32.partialorder %v6460, %v6525
      %vm6549 = vcmp.eq.f32.partialorder %v6461, %v6534
      %vm6550 = vcmp.eq.f32.partialorder %v6462, %v6534
      %v6551 = vsel %vm6535, %v4828, 16.0
      %v6552 = vsel %vm6536, %v4829, 16.0
      %v6553 = vsel %vm6537, %v4828, 16.0
      %v6554 = vsel %vm6538, %v4829, 16.0
      %v6555 = vsel %vm6539, %v4828, 16.0
      %v6556 = vsel %vm6540, %v4829, 16.0
      %v6557 = vsel %vm6541, %v4828, 16.0
      %v6558 = vsel %vm6542, %v4829, 16.0
      %v6559 = vsel %vm6543, %v4828, 16.0
      %v6560 = vsel %vm6544, %v4829, 16.0
      %v6561 = vsel %vm6545, %v4828, 16.0
      %v6562 = vsel %vm6546, %v4829, 16.0
      %v6563 = vsel %vm6547, %v4828, 16.0
      %v6564 = vsel %vm6548, %v4829, 16.0
      %v6565 = vsel %vm6549, %v4828, 16.0
      %v6566 = vsel %vm6550, %v4829, 16.0
      %v6567 = vsel %vm4830, %v6551, inf
      %v6568 = vsel %vm4830, %v6552, inf
      %v6569 = vmin.f32 %v6567, %v6568
      %v6570 = vrot.slane %v6569, 4
      %v6571 = vmin.f32 %v6569, %v6570
      %v6572 = vrot.slane %v6571, 2
      %v6573 = vmin.f32 %v6571, %v6572
      %v6574 = vrot.slane %v6573, 1
      %v6575 = vmin.f32 %v6573, %v6574
      %v6576 = vsel %vm4830, %v6553, inf
      %v6577 = vsel %vm4830, %v6554, inf
      %v6578 = vmin.f32 %v6576, %v6577
      %v6579 = vrot.slane %v6578, 4
      %v6580 = vmin.f32 %v6578, %v6579
      %v6581 = vrot.slane %v6580, 2
      %v6582 = vmin.f32 %v6580, %v6581
      %v6583 = vrot.slane %v6582, 1
      %v6584 = vmin.f32 %v6582, %v6583
      %v6585 = vsel %vm4830, %v6555, inf
      %v6586 = vsel %vm4830, %v6556, inf
      %v6587 = vmin.f32 %v6585, %v6586
      %v6588 = vrot.slane %v6587, 4
      %v6589 = vmin.f32 %v6587, %v6588
      %v6590 = vrot.slane %v6589, 2
      %v6591 = vmin.f32 %v6589, %v6590
      %v6592 = vrot.slane %v6591, 1
      %v6593 = vmin.f32 %v6591, %v6592
      %v6594 = vsel %vm4830, %v6557, inf
      %v6595 = vsel %vm4830, %v6558, inf
      %v6596 = vmin.f32 %v6594, %v6595
      %v6597 = vrot.slane %v6596, 4
      %v6598 = vmin.f32 %v6596, %v6597
      %v6599 = vrot.slane %v6598, 2
      %v6600 = vmin.f32 %v6598, %v6599
      %v6601 = vrot.slane %v6600, 1
      %v6602 = vmin.f32 %v6600, %v6601
      %v6603 = vsel %vm4830, %v6559, inf
      %v6604 = vsel %vm4830, %v6560, inf
      %v6605 = vmin.f32 %v6603, %v6604
      %v6606 = vrot.slane %v6605, 4
      %v6607 = vmin.f32 %v6605, %v6606
      %v6608 = vrot.slane %v6607, 2
      %v6609 = vmin.f32 %v6607, %v6608
      %v6610 = vrot.slane %v6609, 1
      %v6611 = vmin.f32 %v6609, %v6610
      %v6612 = vsel %vm4830, %v6561, inf
      %v6613 = vsel %vm4830, %v6562, inf
      %v6614 = vmin.f32 %v6612, %v6613
      %v6615 = vrot.slane %v6614, 4
      %v6616 = vmin.f32 %v6614, %v6615
      %v6617 = vrot.slane %v6616, 2
      %v6618 = vmin.f32 %v6616, %v6617
      %v6619 = vrot.slane %v6618, 1
      %v6620 = vmin.f32 %v6618, %v6619
      %v6621 = vsel %vm4830, %v6563, inf
      %v6622 = vsel %vm4830, %v6564, inf
      %v6623 = vmin.f32 %v6621, %v6622
      %v6624 = vrot.slane %v6623, 4
      %v6625 = vmin.f32 %v6623, %v6624
      %v6626 = vrot.slane %v6625, 2
      %v6627 = vmin.f32 %v6625, %v6626
      %v6628 = vrot.slane %v6627, 1
      %v6629 = vmin.f32 %v6627, %v6628
      %v6630 = vsel %vm4830, %v6565, inf
      %v6631 = vsel %vm4830, %v6566, inf
      %v6632 = vmin.f32 %v6630, %v6631
      %v6633 = vrot.slane %v6632, 4
      %v6634 = vmin.f32 %v6632, %v6633
      %v6635 = vrot.slane %v6634, 2
      %v6636 = vmin.f32 %v6634, %v6635
      %v6637 = vrot.slane %v6636, 1
      %v6638 = vmin.f32 %v6636, %v6637
      %vm6639 = vcmp.eq.f32.partialorder %v4828, %v6575
      %vm6640 = vcmp.eq.f32.partialorder %v4829, %v6575
      %vm6641 = vcmp.eq.f32.partialorder %v4828, %v6584
      %vm6642 = vcmp.eq.f32.partialorder %v4829, %v6584
      %vm6643 = vcmp.eq.f32.partialorder %v4828, %v6593
      %vm6644 = vcmp.eq.f32.partialorder %v4829, %v6593
      %vm6645 = vcmp.eq.f32.partialorder %v4828, %v6602
      %vm6646 = vcmp.eq.f32.partialorder %v4829, %v6602
      %vm6647 = vcmp.eq.f32.partialorder %v4828, %v6611
      %vm6648 = vcmp.eq.f32.partialorder %v4829, %v6611
      %vm6649 = vcmp.eq.f32.partialorder %v4828, %v6620
      %vm6650 = vcmp.eq.f32.partialorder %v4829, %v6620
      %vm6651 = vcmp.eq.f32.partialorder %v4828, %v6629
      %vm6652 = vcmp.eq.f32.partialorder %v4829, %v6629
      %vm6653 = vcmp.eq.f32.partialorder %v4828, %v6638
      %vm6654 = vcmp.eq.f32.partialorder %v4829, %v6638
      %v6655 = vsel %vm6639, 1, 0
      %v6656 = vsel %vm6640, 1, 0
      %v6657 = vsel %vm6641, 1, 0
      %v6658 = vsel %vm6642, 1, 0
      %v6659 = vsel %vm6643, 1, 0
      %v6660 = vsel %vm6644, 1, 0
      %v6661 = vsel %vm6645, 1, 0
      %v6662 = vsel %vm6646, 1, 0
      %v6663 = vsel %vm6647, 1, 0
      %v6664 = vsel %vm6648, 1, 0
      %v6665 = vsel %vm6649, 1, 0
      %v6666 = vsel %vm6650, 1, 0
      %v6667 = vsel %vm6651, 1, 0
      %v6668 = vsel %vm6652, 1, 0
      %v6669 = vsel %vm6653, 1, 0
      %v6670 = vsel %vm6654, 1, 0
      %v6671 = vcvt.s32.f32 %v6655
      %v6672 = vcvt.s32.f32 %v6656
      %v6673 = vcvt.s32.f32 %v6657
      %v6674 = vcvt.s32.f32 %v6658
      %v6675 = vcvt.s32.f32 %v6659
      %v6676 = vcvt.s32.f32 %v6660
      %v6677 = vcvt.s32.f32 %v6661
      %v6678 = vcvt.s32.f32 %v6662
      %v6679 = vcvt.s32.f32 %v6663
      %v6680 = vcvt.s32.f32 %v6664
      %v6681 = vcvt.s32.f32 %v6665
      %v6682 = vcvt.s32.f32 %v6666
      %v6683 = vcvt.s32.f32 %v6667
      %v6684 = vcvt.s32.f32 %v6668
      %v6685 = vcvt.s32.f32 %v6669
      %v6686 = vcvt.s32.f32 %v6670
      %6688 = vset.pattern.permute.xlu0 0
      %6689 = vperm.xlu0 %6688, %v6671
      %v6690 = vpop.permute.xlu0 %6689
      %6693 = vset.pattern.permute.xlu0 0
      %6694 = vperm.xlu0 %6693, %v6672
      %v6695 = vpop.permute.xlu0 %6694
      %6698 = vset.pattern.permute.xlu0 0
      %6699 = vperm.xlu0 %6698, %v6673
      %v6700 = vpop.permute.xlu0 %6699
      %6703 = vset.pattern.permute.xlu0 0
      %6704 = vperm.xlu0 %6703, %v6674
      %v6705 = vpop.permute.xlu0 %6704
      %6708 = vset.pattern.permute.xlu0 0
      %6709 = vperm.xlu0 %6708, %v6675
      %v6710 = vpop.permute.xlu0 %6709
      %6713 = vset.pattern.permute.xlu0 0
      %6714 = vperm.xlu0 %6713, %v6676
      %v6715 = vpop.permute.xlu0 %6714
      %6718 = vset.pattern.permute.xlu0 0
      %6719 = vperm.xlu0 %6718, %v6677
      %v6720 = vpop.permute.xlu0 %6719
      %6723 = vset.pattern.permute.xlu0 0
      %6724 = vperm.xlu0 %6723, %v6678
      %v6725 = vpop.permute.xlu0 %6724
      %6728 = vset.pattern.permute.xlu0 0
      %6729 = vperm.xlu0 %6728, %v6679
      %v6730 = vpop.permute.xlu0 %6729
      %6733 = vset.pattern.permute.xlu0 0
      %6734 = vperm.xlu0 %6733, %v6680
      %v6735 = vpop.permute.xlu0 %6734
      %6738 = vset.pattern.permute.xlu0 0
      %6739 = vperm.xlu0 %6738, %v6681
      %v6740 = vpop.permute.xlu0 %6739
      %6743 = vset.pattern.permute.xlu0 0
      %6744 = vperm.xlu0 %6743, %v6682
      %v6745 = vpop.permute.xlu0 %6744
      %6748 = vset.pattern.permute.xlu0 0
      %6749 = vperm.xlu0 %6748, %v6683
      %v6750 = vpop.permute.xlu0 %6749
      %6753 = vset.pattern.permute.xlu0 0
      %6754 = vperm.xlu0 %6753, %v6684
      %v6755 = vpop.permute.xlu0 %6754
      %6758 = vset.pattern.permute.xlu0 0
      %6759 = vperm.xlu0 %6758, %v6685
      %v6760 = vpop.permute.xlu0 %6759
      %6763 = vset.pattern.permute.xlu0 0
      %6764 = vperm.xlu0 %6763, %v6686
      %v6765 = vpop.permute.xlu0 %6764
      %v6767 = vmul.f32 %v6690, %v4809
      %v6768 = vmul.f32 %v6695, %v4810
      %v6769 = vmul.f32 %v6700, %v4811
      %v6770 = vmul.f32 %v6705, %v4812
      %v6771 = vmul.f32 %v6710, %v4813
      %v6772 = vmul.f32 %v6715, %v4814
      %v6773 = vmul.f32 %v6720, %v4815
      %v6774 = vmul.f32 %v6725, %v4816
      %v6775 = vmul.f32 %v6730, %v4817
      %v6776 = vmul.f32 %v6735, %v4818
      %v6777 = vmul.f32 %v6740, %v4819
      %v6778 = vmul.f32 %v6745, %v4820
      %v6779 = vmul.f32 %v6750, %v4821
      %v6780 = vmul.f32 %v6755, %v4822
      %v6781 = vmul.f32 %v6760, %v4823
      %v6782 = vmul.f32 %v6765, %v4824
      %v6783 = vsel %vm622, %v6767, 0.0
      %v6784 = vsel %vm622, %v6768, 0.0
      %v6785 = vadd.f32 %v6783, %v6784
      %v6786 = vrot.slane %v6785, 4
      %v6787 = vadd.f32 %v6785, %v6786
      %v6788 = vrot.slane %v6787, 2
      %v6789 = vadd.f32 %v6787, %v6788
      %v6790 = vrot.slane %v6789, 1
      %v6791 = vadd.f32 %v6789, %v6790
      %v6792 = vsel %vm622, %v6769, 0.0
      %v6793 = vsel %vm622, %v6770, 0.0
      %v6794 = vadd.f32 %v6792, %v6793
      %v6795 = vrot.slane %v6794, 4
      %v6796 = vadd.f32 %v6794, %v6795
      %v6797 = vrot.slane %v6796, 2
      %v6798 = vadd.f32 %v6796, %v6797
      %v6799 = vrot.slane %v6798, 1
      %v6800 = vadd.f32 %v6798, %v6799
      %v6801 = vsel %vm622, %v6771, 0.0
      %v6802 = vsel %vm622, %v6772, 0.0
      %v6803 = vadd.f32 %v6801, %v6802
      %v6804 = vrot.slane %v6803, 4
      %v6805 = vadd.f32 %v6803, %v6804
      %v6806 = vrot.slane %v6805, 2
      %v6807 = vadd.f32 %v6805, %v6806
      %v6808 = vrot.slane %v6807, 1
      %v6809 = vadd.f32 %v6807, %v6808
      %v6810 = vsel %vm622, %v6773, 0.0
      %v6811 = vsel %vm622, %v6774, 0.0
      %v6812 = vadd.f32 %v6810, %v6811
      %v6813 = vrot.slane %v6812, 4
      %v6814 = vadd.f32 %v6812, %v6813
      %v6815 = vrot.slane %v6814, 2
      %v6816 = vadd.f32 %v6814, %v6815
      %v6817 = vrot.slane %v6816, 1
      %v6818 = vadd.f32 %v6816, %v6817
      %v6819 = vsel %vm622, %v6775, 0.0
      %v6820 = vsel %vm622, %v6776, 0.0
      %v6821 = vadd.f32 %v6819, %v6820
      %v6822 = vrot.slane %v6821, 4
      %v6823 = vadd.f32 %v6821, %v6822
      %v6824 = vrot.slane %v6823, 2
      %v6825 = vadd.f32 %v6823, %v6824
      %v6826 = vrot.slane %v6825, 1
      %v6827 = vadd.f32 %v6825, %v6826
      %v6828 = vsel %vm622, %v6777, 0.0
      %v6829 = vsel %vm622, %v6778, 0.0
      %v6830 = vadd.f32 %v6828, %v6829
      %v6831 = vrot.slane %v6830, 4
      %v6832 = vadd.f32 %v6830, %v6831
      %v6833 = vrot.slane %v6832, 2
      %v6834 = vadd.f32 %v6832, %v6833
      %v6835 = vrot.slane %v6834, 1
      %v6836 = vadd.f32 %v6834, %v6835
      %v6837 = vsel %vm622, %v6779, 0.0
      %v6838 = vsel %vm622, %v6780, 0.0
      %v6839 = vadd.f32 %v6837, %v6838
      %v6840 = vrot.slane %v6839, 4
      %v6841 = vadd.f32 %v6839, %v6840
      %v6842 = vrot.slane %v6841, 2
      %v6843 = vadd.f32 %v6841, %v6842
      %v6844 = vrot.slane %v6843, 1
      %v6845 = vadd.f32 %v6843, %v6844
      %v6846 = vsel %vm622, %v6781, 0.0
      %v6847 = vsel %vm622, %v6782, 0.0
      %v6848 = vadd.f32 %v6846, %v6847
      %v6849 = vrot.slane %v6848, 4
      %v6850 = vadd.f32 %v6848, %v6849
      %v6851 = vrot.slane %v6850, 2
      %v6852 = vadd.f32 %v6850, %v6851
      %v6853 = vrot.slane %v6852, 1
      %v6854 = vadd.f32 %v6852, %v6853
      %v6855 = vsel %vm6639, -1e+30, %v6447
      %v6856 = vsel %vm6640, -1e+30, %v6448
      %v6857 = vsel %vm6641, -1e+30, %v6449
      %v6858 = vsel %vm6642, -1e+30, %v6450
      %v6859 = vsel %vm6643, -1e+30, %v6451
      %v6860 = vsel %vm6644, -1e+30, %v6452
      %v6861 = vsel %vm6645, -1e+30, %v6453
      %v6862 = vsel %vm6646, -1e+30, %v6454
      %v6863 = vsel %vm6647, -1e+30, %v6455
      %v6864 = vsel %vm6648, -1e+30, %v6456
      %v6865 = vsel %vm6649, -1e+30, %v6457
      %v6866 = vsel %vm6650, -1e+30, %v6458
      %v6867 = vsel %vm6651, -1e+30, %v6459
      %v6868 = vsel %vm6652, -1e+30, %v6460
      %v6869 = vsel %vm6653, -1e+30, %v6461
      %v6870 = vsel %vm6654, -1e+30, %v6462
      %v6871 = vsel %vm4830, %v6855, -inf
      %v6872 = vsel %vm4830, %v6856, -inf
      %v6873 = vmax.f32 %v6871, %v6872
      %v6874 = vrot.slane %v6873, 4
      %v6875 = vmax.f32 %v6873, %v6874
      %v6876 = vrot.slane %v6875, 2
      %v6877 = vmax.f32 %v6875, %v6876
      %v6878 = vrot.slane %v6877, 1
      %v6879 = vmax.f32 %v6877, %v6878
      %v6880 = vsel %vm4830, %v6857, -inf
      %v6881 = vsel %vm4830, %v6858, -inf
      %v6882 = vmax.f32 %v6880, %v6881
      %v6883 = vrot.slane %v6882, 4
      %v6884 = vmax.f32 %v6882, %v6883
      %v6885 = vrot.slane %v6884, 2
      %v6886 = vmax.f32 %v6884, %v6885
      %v6887 = vrot.slane %v6886, 1
      %v6888 = vmax.f32 %v6886, %v6887
      %v6889 = vsel %vm4830, %v6859, -inf
      %v6890 = vsel %vm4830, %v6860, -inf
      %v6891 = vmax.f32 %v6889, %v6890
      %v6892 = vrot.slane %v6891, 4
      %v6893 = vmax.f32 %v6891, %v6892
      %v6894 = vrot.slane %v6893, 2
      %v6895 = vmax.f32 %v6893, %v6894
      %v6896 = vrot.slane %v6895, 1
      %v6897 = vmax.f32 %v6895, %v6896
      %v6898 = vsel %vm4830, %v6861, -inf
      %v6899 = vsel %vm4830, %v6862, -inf
      %v6900 = vmax.f32 %v6898, %v6899
      %v6901 = vrot.slane %v6900, 4
      %v6902 = vmax.f32 %v6900, %v6901
      %v6903 = vrot.slane %v6902, 2
      %v6904 = vmax.f32 %v6902, %v6903
      %v6905 = vrot.slane %v6904, 1
      %v6906 = vmax.f32 %v6904, %v6905
      %v6907 = vsel %vm4830, %v6863, -inf
      %v6908 = vsel %vm4830, %v6864, -inf
      %v6909 = vmax.f32 %v6907, %v6908
      %v6910 = vrot.slane %v6909, 4
      %v6911 = vmax.f32 %v6909, %v6910
      %v6912 = vrot.slane %v6911, 2
      %v6913 = vmax.f32 %v6911, %v6912
      %v6914 = vrot.slane %v6913, 1
      %v6915 = vmax.f32 %v6913, %v6914
      %v6916 = vsel %vm4830, %v6865, -inf
      %v6917 = vsel %vm4830, %v6866, -inf
      %v6918 = vmax.f32 %v6916, %v6917
      %v6919 = vrot.slane %v6918, 4
      %v6920 = vmax.f32 %v6918, %v6919
      %v6921 = vrot.slane %v6920, 2
      %v6922 = vmax.f32 %v6920, %v6921
      %v6923 = vrot.slane %v6922, 1
      %v6924 = vmax.f32 %v6922, %v6923
      %v6925 = vsel %vm4830, %v6867, -inf
      %v6926 = vsel %vm4830, %v6868, -inf
      %v6927 = vmax.f32 %v6925, %v6926
      %v6928 = vrot.slane %v6927, 4
      %v6929 = vmax.f32 %v6927, %v6928
      %v6930 = vrot.slane %v6929, 2
      %v6931 = vmax.f32 %v6929, %v6930
      %v6932 = vrot.slane %v6931, 1
      %v6933 = vmax.f32 %v6931, %v6932
      %v6934 = vsel %vm4830, %v6869, -inf
      %v6935 = vsel %vm4830, %v6870, -inf
      %v6936 = vmax.f32 %v6934, %v6935
      %v6937 = vrot.slane %v6936, 4
      %v6938 = vmax.f32 %v6936, %v6937
      %v6939 = vrot.slane %v6938, 2
      %v6940 = vmax.f32 %v6938, %v6939
      %v6941 = vrot.slane %v6940, 1
      %v6942 = vmax.f32 %v6940, %v6941
      %vm6943 = vcmp.eq.f32.partialorder %v6855, %v6879
      %vm6944 = vcmp.eq.f32.partialorder %v6856, %v6879
      %vm6945 = vcmp.eq.f32.partialorder %v6857, %v6888
      %vm6946 = vcmp.eq.f32.partialorder %v6858, %v6888
      %vm6947 = vcmp.eq.f32.partialorder %v6859, %v6897
      %vm6948 = vcmp.eq.f32.partialorder %v6860, %v6897
      %vm6949 = vcmp.eq.f32.partialorder %v6861, %v6906
      %vm6950 = vcmp.eq.f32.partialorder %v6862, %v6906
      %vm6951 = vcmp.eq.f32.partialorder %v6863, %v6915
      %vm6952 = vcmp.eq.f32.partialorder %v6864, %v6915
      %vm6953 = vcmp.eq.f32.partialorder %v6865, %v6924
      %vm6954 = vcmp.eq.f32.partialorder %v6866, %v6924
      %vm6955 = vcmp.eq.f32.partialorder %v6867, %v6933
      %vm6956 = vcmp.eq.f32.partialorder %v6868, %v6933
      %vm6957 = vcmp.eq.f32.partialorder %v6869, %v6942
      %vm6958 = vcmp.eq.f32.partialorder %v6870, %v6942
      %v6959 = vsel %vm6943, %v4828, 16.0
      %v6960 = vsel %vm6944, %v4829, 16.0
      %v6961 = vsel %vm6945, %v4828, 16.0
      %v6962 = vsel %vm6946, %v4829, 16.0
      %v6963 = vsel %vm6947, %v4828, 16.0
      %v6964 = vsel %vm6948, %v4829, 16.0
      %v6965 = vsel %vm6949, %v4828, 16.0
      %v6966 = vsel %vm6950, %v4829, 16.0
      %v6967 = vsel %vm6951, %v4828, 16.0
      %v6968 = vsel %vm6952, %v4829, 16.0
      %v6969 = vsel %vm6953, %v4828, 16.0
      %v6970 = vsel %vm6954, %v4829, 16.0
      %v6971 = vsel %vm6955, %v4828, 16.0
      %v6972 = vsel %vm6956, %v4829, 16.0
      %v6973 = vsel %vm6957, %v4828, 16.0
      %v6974 = vsel %vm6958, %v4829, 16.0
      %v6975 = vsel %vm4830, %v6959, inf
      %v6976 = vsel %vm4830, %v6960, inf
      %v6977 = vmin.f32 %v6975, %v6976
      %v6978 = vrot.slane %v6977, 4
      %v6979 = vmin.f32 %v6977, %v6978
      %v6980 = vrot.slane %v6979, 2
      %v6981 = vmin.f32 %v6979, %v6980
      %v6982 = vrot.slane %v6981, 1
      %v6983 = vmin.f32 %v6981, %v6982
      %v6984 = vsel %vm4830, %v6961, inf
      %v6985 = vsel %vm4830, %v6962, inf
      %v6986 = vmin.f32 %v6984, %v6985
      %v6987 = vrot.slane %v6986, 4
      %v6988 = vmin.f32 %v6986, %v6987
      %v6989 = vrot.slane %v6988, 2
      %v6990 = vmin.f32 %v6988, %v6989
      %v6991 = vrot.slane %v6990, 1
      %v6992 = vmin.f32 %v6990, %v6991
      %v6993 = vsel %vm4830, %v6963, inf
      %v6994 = vsel %vm4830, %v6964, inf
      %v6995 = vmin.f32 %v6993, %v6994
      %v6996 = vrot.slane %v6995, 4
      %v6997 = vmin.f32 %v6995, %v6996
      %v6998 = vrot.slane %v6997, 2
      %v6999 = vmin.f32 %v6997, %v6998
      %v7000 = vrot.slane %v6999, 1
      %v7001 = vmin.f32 %v6999, %v7000
      %v7002 = vsel %vm4830, %v6965, inf
      %v7003 = vsel %vm4830, %v6966, inf
      %v7004 = vmin.f32 %v7002, %v7003
      %v7005 = vrot.slane %v7004, 4
      %v7006 = vmin.f32 %v7004, %v7005
      %v7007 = vrot.slane %v7006, 2
      %v7008 = vmin.f32 %v7006, %v7007
      %v7009 = vrot.slane %v7008, 1
      %v7010 = vmin.f32 %v7008, %v7009
      %v7011 = vsel %vm4830, %v6967, inf
      %v7012 = vsel %vm4830, %v6968, inf
      %v7013 = vmin.f32 %v7011, %v7012
      %v7014 = vrot.slane %v7013, 4
      %v7015 = vmin.f32 %v7013, %v7014
      %v7016 = vrot.slane %v7015, 2
      %v7017 = vmin.f32 %v7015, %v7016
      %v7018 = vrot.slane %v7017, 1
      %v7019 = vmin.f32 %v7017, %v7018
      %v7020 = vsel %vm4830, %v6969, inf
      %v7021 = vsel %vm4830, %v6970, inf
      %v7022 = vmin.f32 %v7020, %v7021
      %v7023 = vrot.slane %v7022, 4
      %v7024 = vmin.f32 %v7022, %v7023
      %v7025 = vrot.slane %v7024, 2
      %v7026 = vmin.f32 %v7024, %v7025
      %v7027 = vrot.slane %v7026, 1
      %v7028 = vmin.f32 %v7026, %v7027
      %v7029 = vsel %vm4830, %v6971, inf
      %v7030 = vsel %vm4830, %v6972, inf
      %v7031 = vmin.f32 %v7029, %v7030
      %v7032 = vrot.slane %v7031, 4
      %v7033 = vmin.f32 %v7031, %v7032
      %v7034 = vrot.slane %v7033, 2
      %v7035 = vmin.f32 %v7033, %v7034
      %v7036 = vrot.slane %v7035, 1
      %v7037 = vmin.f32 %v7035, %v7036
      %v7038 = vsel %vm4830, %v6973, inf
      %v7039 = vsel %vm4830, %v6974, inf
      %v7040 = vmin.f32 %v7038, %v7039
      %v7041 = vrot.slane %v7040, 4
      %v7042 = vmin.f32 %v7040, %v7041
      %v7043 = vrot.slane %v7042, 2
      %v7044 = vmin.f32 %v7042, %v7043
      %v7045 = vrot.slane %v7044, 1
      %v7046 = vmin.f32 %v7044, %v7045
      %vm7047 = vcmp.eq.f32.partialorder %v4828, %v6983
      %vm7048 = vcmp.eq.f32.partialorder %v4829, %v6983
      %vm7049 = vcmp.eq.f32.partialorder %v4828, %v6992
      %vm7050 = vcmp.eq.f32.partialorder %v4829, %v6992
      %vm7051 = vcmp.eq.f32.partialorder %v4828, %v7001
      %vm7052 = vcmp.eq.f32.partialorder %v4829, %v7001
      %vm7053 = vcmp.eq.f32.partialorder %v4828, %v7010
      %vm7054 = vcmp.eq.f32.partialorder %v4829, %v7010
      %vm7055 = vcmp.eq.f32.partialorder %v4828, %v7019
      %vm7056 = vcmp.eq.f32.partialorder %v4829, %v7019
      %vm7057 = vcmp.eq.f32.partialorder %v4828, %v7028
      %vm7058 = vcmp.eq.f32.partialorder %v4829, %v7028
      %vm7059 = vcmp.eq.f32.partialorder %v4828, %v7037
      %vm7060 = vcmp.eq.f32.partialorder %v4829, %v7037
      %vm7061 = vcmp.eq.f32.partialorder %v4828, %v7046
      %vm7062 = vcmp.eq.f32.partialorder %v4829, %v7046
      %v7063 = vsel %vm7047, 1, 0
      %v7064 = vsel %vm7048, 1, 0
      %v7065 = vsel %vm7049, 1, 0
      %v7066 = vsel %vm7050, 1, 0
      %v7067 = vsel %vm7051, 1, 0
      %v7068 = vsel %vm7052, 1, 0
      %v7069 = vsel %vm7053, 1, 0
      %v7070 = vsel %vm7054, 1, 0
      %v7071 = vsel %vm7055, 1, 0
      %v7072 = vsel %vm7056, 1, 0
      %v7073 = vsel %vm7057, 1, 0
      %v7074 = vsel %vm7058, 1, 0
      %v7075 = vsel %vm7059, 1, 0
      %v7076 = vsel %vm7060, 1, 0
      %v7077 = vsel %vm7061, 1, 0
      %v7078 = vsel %vm7062, 1, 0
      %v7079 = vcvt.s32.f32 %v7063
      %v7080 = vcvt.s32.f32 %v7064
      %v7081 = vcvt.s32.f32 %v7065
      %v7082 = vcvt.s32.f32 %v7066
      %v7083 = vcvt.s32.f32 %v7067
      %v7084 = vcvt.s32.f32 %v7068
      %v7085 = vcvt.s32.f32 %v7069
      %v7086 = vcvt.s32.f32 %v7070
      %v7087 = vcvt.s32.f32 %v7071
      %v7088 = vcvt.s32.f32 %v7072
      %v7089 = vcvt.s32.f32 %v7073
      %v7090 = vcvt.s32.f32 %v7074
      %v7091 = vcvt.s32.f32 %v7075
      %v7092 = vcvt.s32.f32 %v7076
      %v7093 = vcvt.s32.f32 %v7077
      %v7094 = vcvt.s32.f32 %v7078
      %7096 = vset.pattern.permute.xlu0 0
      %7097 = vperm.xlu0 %7096, %v7079
      %v7098 = vpop.permute.xlu0 %7097
      %7101 = vset.pattern.permute.xlu0 0
      %7102 = vperm.xlu0 %7101, %v7080
      %v7103 = vpop.permute.xlu0 %7102
      %7106 = vset.pattern.permute.xlu0 0
      %7107 = vperm.xlu0 %7106, %v7081
      %v7108 = vpop.permute.xlu0 %7107
      %7111 = vset.pattern.permute.xlu0 0
      %7112 = vperm.xlu0 %7111, %v7082
      %v7113 = vpop.permute.xlu0 %7112
      %7116 = vset.pattern.permute.xlu0 0
      %7117 = vperm.xlu0 %7116, %v7083
      %v7118 = vpop.permute.xlu0 %7117
      %7121 = vset.pattern.permute.xlu0 0
      %7122 = vperm.xlu0 %7121, %v7084
      %v7123 = vpop.permute.xlu0 %7122
      %7126 = vset.pattern.permute.xlu0 0
      %7127 = vperm.xlu0 %7126, %v7085
      %v7128 = vpop.permute.xlu0 %7127
      %7131 = vset.pattern.permute.xlu0 0
      %7132 = vperm.xlu0 %7131, %v7086
      %v7133 = vpop.permute.xlu0 %7132
      %7136 = vset.pattern.permute.xlu0 0
      %7137 = vperm.xlu0 %7136, %v7087
      %v7138 = vpop.permute.xlu0 %7137
      %7141 = vset.pattern.permute.xlu0 0
      %7142 = vperm.xlu0 %7141, %v7088
      %v7143 = vpop.permute.xlu0 %7142
      %7146 = vset.pattern.permute.xlu0 0
      %7147 = vperm.xlu0 %7146, %v7089
      %v7148 = vpop.permute.xlu0 %7147
      %7151 = vset.pattern.permute.xlu0 0
      %7152 = vperm.xlu0 %7151, %v7090
      %v7153 = vpop.permute.xlu0 %7152
      %7156 = vset.pattern.permute.xlu0 0
      %7157 = vperm.xlu0 %7156, %v7091
      %v7158 = vpop.permute.xlu0 %7157
      %7161 = vset.pattern.permute.xlu0 0
      %7162 = vperm.xlu0 %7161, %v7092
      %v7163 = vpop.permute.xlu0 %7162
      %7166 = vset.pattern.permute.xlu0 0
      %7167 = vperm.xlu0 %7166, %v7093
      %v7168 = vpop.permute.xlu0 %7167
      %7171 = vset.pattern.permute.xlu0 0
      %7172 = vperm.xlu0 %7171, %v7094
      %v7173 = vpop.permute.xlu0 %7172
      %v7175 = vmul.f32 %v7098, %v4809
      %v7176 = vmul.f32 %v7103, %v4810
      %v7177 = vmul.f32 %v7108, %v4811
      %v7178 = vmul.f32 %v7113, %v4812
      %v7179 = vmul.f32 %v7118, %v4813
      %v7180 = vmul.f32 %v7123, %v4814
      %v7181 = vmul.f32 %v7128, %v4815
      %v7182 = vmul.f32 %v7133, %v4816
      %v7183 = vmul.f32 %v7138, %v4817
      %v7184 = vmul.f32 %v7143, %v4818
      %v7185 = vmul.f32 %v7148, %v4819
      %v7186 = vmul.f32 %v7153, %v4820
      %v7187 = vmul.f32 %v7158, %v4821
      %v7188 = vmul.f32 %v7163, %v4822
      %v7189 = vmul.f32 %v7168, %v4823
      %v7190 = vmul.f32 %v7173, %v4824
      %v7191 = vsel %vm622, %v7175, 0.0
      %v7192 = vsel %vm622, %v7176, 0.0
      %v7193 = vadd.f32 %v7191, %v7192
      %v7194 = vrot.slane %v7193, 4
      %v7195 = vadd.f32 %v7193, %v7194
      %v7196 = vrot.slane %v7195, 2
      %v7197 = vadd.f32 %v7195, %v7196
      %v7198 = vrot.slane %v7197, 1
      %v7199 = vadd.f32 %v7197, %v7198
      %v7200 = vsel %vm622, %v7177, 0.0
      %v7201 = vsel %vm622, %v7178, 0.0
      %v7202 = vadd.f32 %v7200, %v7201
      %v7203 = vrot.slane %v7202, 4
      %v7204 = vadd.f32 %v7202, %v7203
      %v7205 = vrot.slane %v7204, 2
      %v7206 = vadd.f32 %v7204, %v7205
      %v7207 = vrot.slane %v7206, 1
      %v7208 = vadd.f32 %v7206, %v7207
      %v7209 = vsel %vm622, %v7179, 0.0
      %v7210 = vsel %vm622, %v7180, 0.0
      %v7211 = vadd.f32 %v7209, %v7210
      %v7212 = vrot.slane %v7211, 4
      %v7213 = vadd.f32 %v7211, %v7212
      %v7214 = vrot.slane %v7213, 2
      %v7215 = vadd.f32 %v7213, %v7214
      %v7216 = vrot.slane %v7215, 1
      %v7217 = vadd.f32 %v7215, %v7216
      %v7218 = vsel %vm622, %v7181, 0.0
      %v7219 = vsel %vm622, %v7182, 0.0
      %v7220 = vadd.f32 %v7218, %v7219
      %v7221 = vrot.slane %v7220, 4
      %v7222 = vadd.f32 %v7220, %v7221
      %v7223 = vrot.slane %v7222, 2
      %v7224 = vadd.f32 %v7222, %v7223
      %v7225 = vrot.slane %v7224, 1
      %v7226 = vadd.f32 %v7224, %v7225
      %v7227 = vsel %vm622, %v7183, 0.0
      %v7228 = vsel %vm622, %v7184, 0.0
      %v7229 = vadd.f32 %v7227, %v7228
      %v7230 = vrot.slane %v7229, 4
      %v7231 = vadd.f32 %v7229, %v7230
      %v7232 = vrot.slane %v7231, 2
      %v7233 = vadd.f32 %v7231, %v7232
      %v7234 = vrot.slane %v7233, 1
      %v7235 = vadd.f32 %v7233, %v7234
      %v7236 = vsel %vm622, %v7185, 0.0
      %v7237 = vsel %vm622, %v7186, 0.0
      %v7238 = vadd.f32 %v7236, %v7237
      %v7239 = vrot.slane %v7238, 4
      %v7240 = vadd.f32 %v7238, %v7239
      %v7241 = vrot.slane %v7240, 2
      %v7242 = vadd.f32 %v7240, %v7241
      %v7243 = vrot.slane %v7242, 1
      %v7244 = vadd.f32 %v7242, %v7243
      %v7245 = vsel %vm622, %v7187, 0.0
      %v7246 = vsel %vm622, %v7188, 0.0
      %v7247 = vadd.f32 %v7245, %v7246
      %v7248 = vrot.slane %v7247, 4
      %v7249 = vadd.f32 %v7247, %v7248
      %v7250 = vrot.slane %v7249, 2
      %v7251 = vadd.f32 %v7249, %v7250
      %v7252 = vrot.slane %v7251, 1
      %v7253 = vadd.f32 %v7251, %v7252
      %v7254 = vsel %vm622, %v7189, 0.0
      %v7255 = vsel %vm622, %v7190, 0.0
      %v7256 = vadd.f32 %v7254, %v7255
      %v7257 = vrot.slane %v7256, 4
      %v7258 = vadd.f32 %v7256, %v7257
      %v7259 = vrot.slane %v7258, 2
      %v7260 = vadd.f32 %v7258, %v7259
      %v7261 = vrot.slane %v7260, 1
      %v7262 = vadd.f32 %v7260, %v7261
      %v7263 = vsel %vm7047, -1e+30, %v6855
      %v7264 = vsel %vm7048, -1e+30, %v6856
      %v7265 = vsel %vm7049, -1e+30, %v6857
      %v7266 = vsel %vm7050, -1e+30, %v6858
      %v7267 = vsel %vm7051, -1e+30, %v6859
      %v7268 = vsel %vm7052, -1e+30, %v6860
      %v7269 = vsel %vm7053, -1e+30, %v6861
      %v7270 = vsel %vm7054, -1e+30, %v6862
      %v7271 = vsel %vm7055, -1e+30, %v6863
      %v7272 = vsel %vm7056, -1e+30, %v6864
      %v7273 = vsel %vm7057, -1e+30, %v6865
      %v7274 = vsel %vm7058, -1e+30, %v6866
      %v7275 = vsel %vm7059, -1e+30, %v6867
      %v7276 = vsel %vm7060, -1e+30, %v6868
      %v7277 = vsel %vm7061, -1e+30, %v6869
      %v7278 = vsel %vm7062, -1e+30, %v6870
      %v7279 = vsel %vm4830, %v7263, -inf
      %v7280 = vsel %vm4830, %v7264, -inf
      %v7281 = vmax.f32 %v7279, %v7280
      %v7282 = vrot.slane %v7281, 4
      %v7283 = vmax.f32 %v7281, %v7282
      %v7284 = vrot.slane %v7283, 2
      %v7285 = vmax.f32 %v7283, %v7284
      %v7286 = vrot.slane %v7285, 1
      %v7287 = vmax.f32 %v7285, %v7286
      %v7288 = vsel %vm4830, %v7265, -inf
      %v7289 = vsel %vm4830, %v7266, -inf
      %v7290 = vmax.f32 %v7288, %v7289
      %v7291 = vrot.slane %v7290, 4
      %v7292 = vmax.f32 %v7290, %v7291
      %v7293 = vrot.slane %v7292, 2
      %v7294 = vmax.f32 %v7292, %v7293
      %v7295 = vrot.slane %v7294, 1
      %v7296 = vmax.f32 %v7294, %v7295
      %v7297 = vsel %vm4830, %v7267, -inf
      %v7298 = vsel %vm4830, %v7268, -inf
      %v7299 = vmax.f32 %v7297, %v7298
      %v7300 = vrot.slane %v7299, 4
      %v7301 = vmax.f32 %v7299, %v7300
      %v7302 = vrot.slane %v7301, 2
      %v7303 = vmax.f32 %v7301, %v7302
      %v7304 = vrot.slane %v7303, 1
      %v7305 = vmax.f32 %v7303, %v7304
      %v7306 = vsel %vm4830, %v7269, -inf
      %v7307 = vsel %vm4830, %v7270, -inf
      %v7308 = vmax.f32 %v7306, %v7307
      %v7309 = vrot.slane %v7308, 4
      %v7310 = vmax.f32 %v7308, %v7309
      %v7311 = vrot.slane %v7310, 2
      %v7312 = vmax.f32 %v7310, %v7311
      %v7313 = vrot.slane %v7312, 1
      %v7314 = vmax.f32 %v7312, %v7313
      %v7315 = vsel %vm4830, %v7271, -inf
      %v7316 = vsel %vm4830, %v7272, -inf
      %v7317 = vmax.f32 %v7315, %v7316
      %v7318 = vrot.slane %v7317, 4
      %v7319 = vmax.f32 %v7317, %v7318
      %v7320 = vrot.slane %v7319, 2
      %v7321 = vmax.f32 %v7319, %v7320
      %v7322 = vrot.slane %v7321, 1
      %v7323 = vmax.f32 %v7321, %v7322
      %v7324 = vsel %vm4830, %v7273, -inf
      %v7325 = vsel %vm4830, %v7274, -inf
      %v7326 = vmax.f32 %v7324, %v7325
      %v7327 = vrot.slane %v7326, 4
      %v7328 = vmax.f32 %v7326, %v7327
      %v7329 = vrot.slane %v7328, 2
      %v7330 = vmax.f32 %v7328, %v7329
      %v7331 = vrot.slane %v7330, 1
      %v7332 = vmax.f32 %v7330, %v7331
      %v7333 = vsel %vm4830, %v7275, -inf
      %v7334 = vsel %vm4830, %v7276, -inf
      %v7335 = vmax.f32 %v7333, %v7334
      %v7336 = vrot.slane %v7335, 4
      %v7337 = vmax.f32 %v7335, %v7336
      %v7338 = vrot.slane %v7337, 2
      %v7339 = vmax.f32 %v7337, %v7338
      %v7340 = vrot.slane %v7339, 1
      %v7341 = vmax.f32 %v7339, %v7340
      %v7342 = vsel %vm4830, %v7277, -inf
      %v7343 = vsel %vm4830, %v7278, -inf
      %v7344 = vmax.f32 %v7342, %v7343
      %v7345 = vrot.slane %v7344, 4
      %v7346 = vmax.f32 %v7344, %v7345
      %v7347 = vrot.slane %v7346, 2
      %v7348 = vmax.f32 %v7346, %v7347
      %v7349 = vrot.slane %v7348, 1
      %v7350 = vmax.f32 %v7348, %v7349
      %vm7351 = vcmp.eq.f32.partialorder %v7263, %v7287
      %vm7352 = vcmp.eq.f32.partialorder %v7264, %v7287
      %vm7353 = vcmp.eq.f32.partialorder %v7265, %v7296
      %vm7354 = vcmp.eq.f32.partialorder %v7266, %v7296
      %vm7355 = vcmp.eq.f32.partialorder %v7267, %v7305
      %vm7356 = vcmp.eq.f32.partialorder %v7268, %v7305
      %vm7357 = vcmp.eq.f32.partialorder %v7269, %v7314
      %vm7358 = vcmp.eq.f32.partialorder %v7270, %v7314
      %vm7359 = vcmp.eq.f32.partialorder %v7271, %v7323
      %vm7360 = vcmp.eq.f32.partialorder %v7272, %v7323
      %vm7361 = vcmp.eq.f32.partialorder %v7273, %v7332
      %vm7362 = vcmp.eq.f32.partialorder %v7274, %v7332
      %vm7363 = vcmp.eq.f32.partialorder %v7275, %v7341
      %vm7364 = vcmp.eq.f32.partialorder %v7276, %v7341
      %vm7365 = vcmp.eq.f32.partialorder %v7277, %v7350
      %vm7366 = vcmp.eq.f32.partialorder %v7278, %v7350
      %v7367 = vsel %vm7351, %v4828, 16.0
      %v7368 = vsel %vm7352, %v4829, 16.0
      %v7369 = vsel %vm7353, %v4828, 16.0
      %v7370 = vsel %vm7354, %v4829, 16.0
      %v7371 = vsel %vm7355, %v4828, 16.0
      %v7372 = vsel %vm7356, %v4829, 16.0
      %v7373 = vsel %vm7357, %v4828, 16.0
      %v7374 = vsel %vm7358, %v4829, 16.0
      %v7375 = vsel %vm7359, %v4828, 16.0
      %v7376 = vsel %vm7360, %v4829, 16.0
      %v7377 = vsel %vm7361, %v4828, 16.0
      %v7378 = vsel %vm7362, %v4829, 16.0
      %v7379 = vsel %vm7363, %v4828, 16.0
      %v7380 = vsel %vm7364, %v4829, 16.0
      %v7381 = vsel %vm7365, %v4828, 16.0
      %v7382 = vsel %vm7366, %v4829, 16.0
      %v7383 = vsel %vm4830, %v7367, inf
      %v7384 = vsel %vm4830, %v7368, inf
      %v7385 = vmin.f32 %v7383, %v7384
      %v7386 = vrot.slane %v7385, 4
      %v7387 = vmin.f32 %v7385, %v7386
      %v7388 = vrot.slane %v7387, 2
      %v7389 = vmin.f32 %v7387, %v7388
      %v7390 = vrot.slane %v7389, 1
      %v7391 = vmin.f32 %v7389, %v7390
      %v7392 = vsel %vm4830, %v7369, inf
      %v7393 = vsel %vm4830, %v7370, inf
      %v7394 = vmin.f32 %v7392, %v7393
      %v7395 = vrot.slane %v7394, 4
      %v7396 = vmin.f32 %v7394, %v7395
      %v7397 = vrot.slane %v7396, 2
      %v7398 = vmin.f32 %v7396, %v7397
      %v7399 = vrot.slane %v7398, 1
      %v7400 = vmin.f32 %v7398, %v7399
      %v7401 = vsel %vm4830, %v7371, inf
      %v7402 = vsel %vm4830, %v7372, inf
      %v7403 = vmin.f32 %v7401, %v7402
      %v7404 = vrot.slane %v7403, 4
      %v7405 = vmin.f32 %v7403, %v7404
      %v7406 = vrot.slane %v7405, 2
      %v7407 = vmin.f32 %v7405, %v7406
      %v7408 = vrot.slane %v7407, 1
      %v7409 = vmin.f32 %v7407, %v7408
      %v7410 = vsel %vm4830, %v7373, inf
      %v7411 = vsel %vm4830, %v7374, inf
      %v7412 = vmin.f32 %v7410, %v7411
      %v7413 = vrot.slane %v7412, 4
      %v7414 = vmin.f32 %v7412, %v7413
      %v7415 = vrot.slane %v7414, 2
      %v7416 = vmin.f32 %v7414, %v7415
      %v7417 = vrot.slane %v7416, 1
      %v7418 = vmin.f32 %v7416, %v7417
      %v7419 = vsel %vm4830, %v7375, inf
      %v7420 = vsel %vm4830, %v7376, inf
      %v7421 = vmin.f32 %v7419, %v7420
      %v7422 = vrot.slane %v7421, 4
      %v7423 = vmin.f32 %v7421, %v7422
      %v7424 = vrot.slane %v7423, 2
      %v7425 = vmin.f32 %v7423, %v7424
      %v7426 = vrot.slane %v7425, 1
      %v7427 = vmin.f32 %v7425, %v7426
      %v7428 = vsel %vm4830, %v7377, inf
      %v7429 = vsel %vm4830, %v7378, inf
      %v7430 = vmin.f32 %v7428, %v7429
      %v7431 = vrot.slane %v7430, 4
      %v7432 = vmin.f32 %v7430, %v7431
      %v7433 = vrot.slane %v7432, 2
      %v7434 = vmin.f32 %v7432, %v7433
      %v7435 = vrot.slane %v7434, 1
      %v7436 = vmin.f32 %v7434, %v7435
      %v7437 = vsel %vm4830, %v7379, inf
      %v7438 = vsel %vm4830, %v7380, inf
      %v7439 = vmin.f32 %v7437, %v7438
      %v7440 = vrot.slane %v7439, 4
      %v7441 = vmin.f32 %v7439, %v7440
      %v7442 = vrot.slane %v7441, 2
      %v7443 = vmin.f32 %v7441, %v7442
      %v7444 = vrot.slane %v7443, 1
      %v7445 = vmin.f32 %v7443, %v7444
      %v7446 = vsel %vm4830, %v7381, inf
      %v7447 = vsel %vm4830, %v7382, inf
      %v7448 = vmin.f32 %v7446, %v7447
      %v7449 = vrot.slane %v7448, 4
      %v7450 = vmin.f32 %v7448, %v7449
      %v7451 = vrot.slane %v7450, 2
      %v7452 = vmin.f32 %v7450, %v7451
      %v7453 = vrot.slane %v7452, 1
      %v7454 = vmin.f32 %v7452, %v7453
      %vm7455 = vcmp.eq.f32.partialorder %v4828, %v7391
      %vm7456 = vcmp.eq.f32.partialorder %v4829, %v7391
      %vm7457 = vcmp.eq.f32.partialorder %v4828, %v7400
      %vm7458 = vcmp.eq.f32.partialorder %v4829, %v7400
      %vm7459 = vcmp.eq.f32.partialorder %v4828, %v7409
      %vm7460 = vcmp.eq.f32.partialorder %v4829, %v7409
      %vm7461 = vcmp.eq.f32.partialorder %v4828, %v7418
      %vm7462 = vcmp.eq.f32.partialorder %v4829, %v7418
      %vm7463 = vcmp.eq.f32.partialorder %v4828, %v7427
      %vm7464 = vcmp.eq.f32.partialorder %v4829, %v7427
      %vm7465 = vcmp.eq.f32.partialorder %v4828, %v7436
      %vm7466 = vcmp.eq.f32.partialorder %v4829, %v7436
      %vm7467 = vcmp.eq.f32.partialorder %v4828, %v7445
      %vm7468 = vcmp.eq.f32.partialorder %v4829, %v7445
      %vm7469 = vcmp.eq.f32.partialorder %v4828, %v7454
      %vm7470 = vcmp.eq.f32.partialorder %v4829, %v7454
      %v7471 = vsel %vm7455, 1, 0
      %v7472 = vsel %vm7456, 1, 0
      %v7473 = vsel %vm7457, 1, 0
      %v7474 = vsel %vm7458, 1, 0
      %v7475 = vsel %vm7459, 1, 0
      %v7476 = vsel %vm7460, 1, 0
      %v7477 = vsel %vm7461, 1, 0
      %v7478 = vsel %vm7462, 1, 0
      %v7479 = vsel %vm7463, 1, 0
      %v7480 = vsel %vm7464, 1, 0
      %v7481 = vsel %vm7465, 1, 0
      %v7482 = vsel %vm7466, 1, 0
      %v7483 = vsel %vm7467, 1, 0
      %v7484 = vsel %vm7468, 1, 0
      %v7485 = vsel %vm7469, 1, 0
      %v7486 = vsel %vm7470, 1, 0
      %v7487 = vcvt.s32.f32 %v7471
      %v7488 = vcvt.s32.f32 %v7472
      %v7489 = vcvt.s32.f32 %v7473
      %v7490 = vcvt.s32.f32 %v7474
      %v7491 = vcvt.s32.f32 %v7475
      %v7492 = vcvt.s32.f32 %v7476
      %v7493 = vcvt.s32.f32 %v7477
      %v7494 = vcvt.s32.f32 %v7478
      %v7495 = vcvt.s32.f32 %v7479
      %v7496 = vcvt.s32.f32 %v7480
      %v7497 = vcvt.s32.f32 %v7481
      %v7498 = vcvt.s32.f32 %v7482
      %v7499 = vcvt.s32.f32 %v7483
      %v7500 = vcvt.s32.f32 %v7484
      %v7501 = vcvt.s32.f32 %v7485
      %v7502 = vcvt.s32.f32 %v7486
      %7504 = vset.pattern.permute.xlu0 0
      %7505 = vperm.xlu0 %7504, %v7487
      %v7506 = vpop.permute.xlu0 %7505
      %7509 = vset.pattern.permute.xlu0 0
      %7510 = vperm.xlu0 %7509, %v7488
      %v7511 = vpop.permute.xlu0 %7510
      %7514 = vset.pattern.permute.xlu0 0
      %7515 = vperm.xlu0 %7514, %v7489
      %v7516 = vpop.permute.xlu0 %7515
      %7519 = vset.pattern.permute.xlu0 0
      %7520 = vperm.xlu0 %7519, %v7490
      %v7521 = vpop.permute.xlu0 %7520
      %7524 = vset.pattern.permute.xlu0 0
      %7525 = vperm.xlu0 %7524, %v7491
      %v7526 = vpop.permute.xlu0 %7525
      %7529 = vset.pattern.permute.xlu0 0
      %7530 = vperm.xlu0 %7529, %v7492
      %v7531 = vpop.permute.xlu0 %7530
      %7534 = vset.pattern.permute.xlu0 0
      %7535 = vperm.xlu0 %7534, %v7493
      %v7536 = vpop.permute.xlu0 %7535
      %7539 = vset.pattern.permute.xlu0 0
      %7540 = vperm.xlu0 %7539, %v7494
      %v7541 = vpop.permute.xlu0 %7540
      %7544 = vset.pattern.permute.xlu0 0
      %7545 = vperm.xlu0 %7544, %v7495
      %v7546 = vpop.permute.xlu0 %7545
      %7549 = vset.pattern.permute.xlu0 0
      %7550 = vperm.xlu0 %7549, %v7496
      %v7551 = vpop.permute.xlu0 %7550
      %7554 = vset.pattern.permute.xlu0 0
      %7555 = vperm.xlu0 %7554, %v7497
      %v7556 = vpop.permute.xlu0 %7555
      %7559 = vset.pattern.permute.xlu0 0
      %7560 = vperm.xlu0 %7559, %v7498
      %v7561 = vpop.permute.xlu0 %7560
      %7564 = vset.pattern.permute.xlu0 0
      %7565 = vperm.xlu0 %7564, %v7499
      %v7566 = vpop.permute.xlu0 %7565
      %7569 = vset.pattern.permute.xlu0 0
      %7570 = vperm.xlu0 %7569, %v7500
      %v7571 = vpop.permute.xlu0 %7570
      %7574 = vset.pattern.permute.xlu0 0
      %7575 = vperm.xlu0 %7574, %v7501
      %v7576 = vpop.permute.xlu0 %7575
      %7579 = vset.pattern.permute.xlu0 0
      %7580 = vperm.xlu0 %7579, %v7502
      %v7581 = vpop.permute.xlu0 %7580
      %v7583 = vmul.f32 %v7506, %v4809
      %v7584 = vmul.f32 %v7511, %v4810
      %v7585 = vmul.f32 %v7516, %v4811
      %v7586 = vmul.f32 %v7521, %v4812
      %v7587 = vmul.f32 %v7526, %v4813
      %v7588 = vmul.f32 %v7531, %v4814
      %v7589 = vmul.f32 %v7536, %v4815
      %v7590 = vmul.f32 %v7541, %v4816
      %v7591 = vmul.f32 %v7546, %v4817
      %v7592 = vmul.f32 %v7551, %v4818
      %v7593 = vmul.f32 %v7556, %v4819
      %v7594 = vmul.f32 %v7561, %v4820
      %v7595 = vmul.f32 %v7566, %v4821
      %v7596 = vmul.f32 %v7571, %v4822
      %v7597 = vmul.f32 %v7576, %v4823
      %v7598 = vmul.f32 %v7581, %v4824
      %v7599 = vsel %vm622, %v7583, 0.0
      %v7600 = vsel %vm622, %v7584, 0.0
      %v7601 = vadd.f32 %v7599, %v7600
      %v7602 = vrot.slane %v7601, 4
      %v7603 = vadd.f32 %v7601, %v7602
      %v7604 = vrot.slane %v7603, 2
      %v7605 = vadd.f32 %v7603, %v7604
      %v7606 = vrot.slane %v7605, 1
      %v7607 = vadd.f32 %v7605, %v7606
      %v7608 = vsel %vm622, %v7585, 0.0
      %v7609 = vsel %vm622, %v7586, 0.0
      %v7610 = vadd.f32 %v7608, %v7609
      %v7611 = vrot.slane %v7610, 4
      %v7612 = vadd.f32 %v7610, %v7611
      %v7613 = vrot.slane %v7612, 2
      %v7614 = vadd.f32 %v7612, %v7613
      %v7615 = vrot.slane %v7614, 1
      %v7616 = vadd.f32 %v7614, %v7615
      %v7617 = vsel %vm622, %v7587, 0.0
      %v7618 = vsel %vm622, %v7588, 0.0
      %v7619 = vadd.f32 %v7617, %v7618
      %v7620 = vrot.slane %v7619, 4
      %v7621 = vadd.f32 %v7619, %v7620
      %v7622 = vrot.slane %v7621, 2
      %v7623 = vadd.f32 %v7621, %v7622
      %v7624 = vrot.slane %v7623, 1
      %v7625 = vadd.f32 %v7623, %v7624
      %v7626 = vsel %vm622, %v7589, 0.0
      %v7627 = vsel %vm622, %v7590, 0.0
      %v7628 = vadd.f32 %v7626, %v7627
      %v7629 = vrot.slane %v7628, 4
      %v7630 = vadd.f32 %v7628, %v7629
      %v7631 = vrot.slane %v7630, 2
      %v7632 = vadd.f32 %v7630, %v7631
      %v7633 = vrot.slane %v7632, 1
      %v7634 = vadd.f32 %v7632, %v7633
      %v7635 = vsel %vm622, %v7591, 0.0
      %v7636 = vsel %vm622, %v7592, 0.0
      %v7637 = vadd.f32 %v7635, %v7636
      %v7638 = vrot.slane %v7637, 4
      %v7639 = vadd.f32 %v7637, %v7638
      %v7640 = vrot.slane %v7639, 2
      %v7641 = vadd.f32 %v7639, %v7640
      %v7642 = vrot.slane %v7641, 1
      %v7643 = vadd.f32 %v7641, %v7642
      %v7644 = vsel %vm622, %v7593, 0.0
      %v7645 = vsel %vm622, %v7594, 0.0
      %v7646 = vadd.f32 %v7644, %v7645
      %v7647 = vrot.slane %v7646, 4
      %v7648 = vadd.f32 %v7646, %v7647
      %v7649 = vrot.slane %v7648, 2
      %v7650 = vadd.f32 %v7648, %v7649
      %v7651 = vrot.slane %v7650, 1
      %v7652 = vadd.f32 %v7650, %v7651
      %v7653 = vsel %vm622, %v7595, 0.0
      %v7654 = vsel %vm622, %v7596, 0.0
      %v7655 = vadd.f32 %v7653, %v7654
      %v7656 = vrot.slane %v7655, 4
      %v7657 = vadd.f32 %v7655, %v7656
      %v7658 = vrot.slane %v7657, 2
      %v7659 = vadd.f32 %v7657, %v7658
      %v7660 = vrot.slane %v7659, 1
      %v7661 = vadd.f32 %v7659, %v7660
      %v7662 = vsel %vm622, %v7597, 0.0
      %v7663 = vsel %vm622, %v7598, 0.0
      %v7664 = vadd.f32 %v7662, %v7663
      %v7665 = vrot.slane %v7664, 4
      %v7666 = vadd.f32 %v7664, %v7665
      %v7667 = vrot.slane %v7666, 2
      %v7668 = vadd.f32 %v7666, %v7667
      %v7669 = vrot.slane %v7668, 1
      %v7670 = vadd.f32 %v7668, %v7669
      %v7671 = vsel %vm7455, -1e+30, %v7263
      %v7672 = vsel %vm7456, -1e+30, %v7264
      %v7673 = vsel %vm7457, -1e+30, %v7265
      %v7674 = vsel %vm7458, -1e+30, %v7266
      %v7675 = vsel %vm7459, -1e+30, %v7267
      %v7676 = vsel %vm7460, -1e+30, %v7268
      %v7677 = vsel %vm7461, -1e+30, %v7269
      %v7678 = vsel %vm7462, -1e+30, %v7270
      %v7679 = vsel %vm7463, -1e+30, %v7271
      %v7680 = vsel %vm7464, -1e+30, %v7272
      %v7681 = vsel %vm7465, -1e+30, %v7273
      %v7682 = vsel %vm7466, -1e+30, %v7274
      %v7683 = vsel %vm7467, -1e+30, %v7275
      %v7684 = vsel %vm7468, -1e+30, %v7276
      %v7685 = vsel %vm7469, -1e+30, %v7277
      %v7686 = vsel %vm7470, -1e+30, %v7278
      %v7687 = vsel %vm4830, %v7671, -inf
      %v7688 = vsel %vm4830, %v7672, -inf
      %v7689 = vmax.f32 %v7687, %v7688
      %v7690 = vrot.slane %v7689, 4
      %v7691 = vmax.f32 %v7689, %v7690
      %v7692 = vrot.slane %v7691, 2
      %v7693 = vmax.f32 %v7691, %v7692
      %v7694 = vrot.slane %v7693, 1
      %v7695 = vmax.f32 %v7693, %v7694
      %v7696 = vsel %vm4830, %v7673, -inf
      %v7697 = vsel %vm4830, %v7674, -inf
      %v7698 = vmax.f32 %v7696, %v7697
      %v7699 = vrot.slane %v7698, 4
      %v7700 = vmax.f32 %v7698, %v7699
      %v7701 = vrot.slane %v7700, 2
      %v7702 = vmax.f32 %v7700, %v7701
      %v7703 = vrot.slane %v7702, 1
      %v7704 = vmax.f32 %v7702, %v7703
      %v7705 = vsel %vm4830, %v7675, -inf
      %v7706 = vsel %vm4830, %v7676, -inf
      %v7707 = vmax.f32 %v7705, %v7706
      %v7708 = vrot.slane %v7707, 4
      %v7709 = vmax.f32 %v7707, %v7708
      %v7710 = vrot.slane %v7709, 2
      %v7711 = vmax.f32 %v7709, %v7710
      %v7712 = vrot.slane %v7711, 1
      %v7713 = vmax.f32 %v7711, %v7712
      %v7714 = vsel %vm4830, %v7677, -inf
      %v7715 = vsel %vm4830, %v7678, -inf
      %v7716 = vmax.f32 %v7714, %v7715
      %v7717 = vrot.slane %v7716, 4
      %v7718 = vmax.f32 %v7716, %v7717
      %v7719 = vrot.slane %v7718, 2
      %v7720 = vmax.f32 %v7718, %v7719
      %v7721 = vrot.slane %v7720, 1
      %v7722 = vmax.f32 %v7720, %v7721
      %v7723 = vsel %vm4830, %v7679, -inf
      %v7724 = vsel %vm4830, %v7680, -inf
      %v7725 = vmax.f32 %v7723, %v7724
      %v7726 = vrot.slane %v7725, 4
      %v7727 = vmax.f32 %v7725, %v7726
      %v7728 = vrot.slane %v7727, 2
      %v7729 = vmax.f32 %v7727, %v7728
      %v7730 = vrot.slane %v7729, 1
      %v7731 = vmax.f32 %v7729, %v7730
      %v7732 = vsel %vm4830, %v7681, -inf
      %v7733 = vsel %vm4830, %v7682, -inf
      %v7734 = vmax.f32 %v7732, %v7733
      %v7735 = vrot.slane %v7734, 4
      %v7736 = vmax.f32 %v7734, %v7735
      %v7737 = vrot.slane %v7736, 2
      %v7738 = vmax.f32 %v7736, %v7737
      %v7739 = vrot.slane %v7738, 1
      %v7740 = vmax.f32 %v7738, %v7739
      %v7741 = vsel %vm4830, %v7683, -inf
      %v7742 = vsel %vm4830, %v7684, -inf
      %v7743 = vmax.f32 %v7741, %v7742
      %v7744 = vrot.slane %v7743, 4
      %v7745 = vmax.f32 %v7743, %v7744
      %v7746 = vrot.slane %v7745, 2
      %v7747 = vmax.f32 %v7745, %v7746
      %v7748 = vrot.slane %v7747, 1
      %v7749 = vmax.f32 %v7747, %v7748
      %v7750 = vsel %vm4830, %v7685, -inf
      %v7751 = vsel %vm4830, %v7686, -inf
      %v7752 = vmax.f32 %v7750, %v7751
      %v7753 = vrot.slane %v7752, 4
      %v7754 = vmax.f32 %v7752, %v7753
      %v7755 = vrot.slane %v7754, 2
      %v7756 = vmax.f32 %v7754, %v7755
      %v7757 = vrot.slane %v7756, 1
      %v7758 = vmax.f32 %v7756, %v7757
      %vm7759 = vcmp.eq.f32.partialorder %v7671, %v7695
      %vm7760 = vcmp.eq.f32.partialorder %v7672, %v7695
      %vm7761 = vcmp.eq.f32.partialorder %v7673, %v7704
      %vm7762 = vcmp.eq.f32.partialorder %v7674, %v7704
      %vm7763 = vcmp.eq.f32.partialorder %v7675, %v7713
      %vm7764 = vcmp.eq.f32.partialorder %v7676, %v7713
      %vm7765 = vcmp.eq.f32.partialorder %v7677, %v7722
      %vm7766 = vcmp.eq.f32.partialorder %v7678, %v7722
      %vm7767 = vcmp.eq.f32.partialorder %v7679, %v7731
      %vm7768 = vcmp.eq.f32.partialorder %v7680, %v7731
      %vm7769 = vcmp.eq.f32.partialorder %v7681, %v7740
      %vm7770 = vcmp.eq.f32.partialorder %v7682, %v7740
      %vm7771 = vcmp.eq.f32.partialorder %v7683, %v7749
      %vm7772 = vcmp.eq.f32.partialorder %v7684, %v7749
      %vm7773 = vcmp.eq.f32.partialorder %v7685, %v7758
      %vm7774 = vcmp.eq.f32.partialorder %v7686, %v7758
      %v7775 = vsel %vm7759, %v4828, 16.0
      %v7776 = vsel %vm7760, %v4829, 16.0
      %v7777 = vsel %vm7761, %v4828, 16.0
      %v7778 = vsel %vm7762, %v4829, 16.0
      %v7779 = vsel %vm7763, %v4828, 16.0
      %v7780 = vsel %vm7764, %v4829, 16.0
      %v7781 = vsel %vm7765, %v4828, 16.0
      %v7782 = vsel %vm7766, %v4829, 16.0
      %v7783 = vsel %vm7767, %v4828, 16.0
      %v7784 = vsel %vm7768, %v4829, 16.0
      %v7785 = vsel %vm7769, %v4828, 16.0
      %v7786 = vsel %vm7770, %v4829, 16.0
      %v7787 = vsel %vm7771, %v4828, 16.0
      %v7788 = vsel %vm7772, %v4829, 16.0
      %v7789 = vsel %vm7773, %v4828, 16.0
      %v7790 = vsel %vm7774, %v4829, 16.0
      %v7791 = vsel %vm4830, %v7775, inf
      %v7792 = vsel %vm4830, %v7776, inf
      %v7793 = vmin.f32 %v7791, %v7792
      %v7794 = vrot.slane %v7793, 4
      %v7795 = vmin.f32 %v7793, %v7794
      %v7796 = vrot.slane %v7795, 2
      %v7797 = vmin.f32 %v7795, %v7796
      %v7798 = vrot.slane %v7797, 1
      %v7799 = vmin.f32 %v7797, %v7798
      %v7800 = vsel %vm4830, %v7777, inf
      %v7801 = vsel %vm4830, %v7778, inf
      %v7802 = vmin.f32 %v7800, %v7801
      %v7803 = vrot.slane %v7802, 4
      %v7804 = vmin.f32 %v7802, %v7803
      %v7805 = vrot.slane %v7804, 2
      %v7806 = vmin.f32 %v7804, %v7805
      %v7807 = vrot.slane %v7806, 1
      %v7808 = vmin.f32 %v7806, %v7807
      %v7809 = vsel %vm4830, %v7779, inf
      %v7810 = vsel %vm4830, %v7780, inf
      %v7811 = vmin.f32 %v7809, %v7810
      %v7812 = vrot.slane %v7811, 4
      %v7813 = vmin.f32 %v7811, %v7812
      %v7814 = vrot.slane %v7813, 2
      %v7815 = vmin.f32 %v7813, %v7814
      %v7816 = vrot.slane %v7815, 1
      %v7817 = vmin.f32 %v7815, %v7816
      %v7818 = vsel %vm4830, %v7781, inf
      %v7819 = vsel %vm4830, %v7782, inf
      %v7820 = vmin.f32 %v7818, %v7819
      %v7821 = vrot.slane %v7820, 4
      %v7822 = vmin.f32 %v7820, %v7821
      %v7823 = vrot.slane %v7822, 2
      %v7824 = vmin.f32 %v7822, %v7823
      %v7825 = vrot.slane %v7824, 1
      %v7826 = vmin.f32 %v7824, %v7825
      %v7827 = vsel %vm4830, %v7783, inf
      %v7828 = vsel %vm4830, %v7784, inf
      %v7829 = vmin.f32 %v7827, %v7828
      %v7830 = vrot.slane %v7829, 4
      %v7831 = vmin.f32 %v7829, %v7830
      %v7832 = vrot.slane %v7831, 2
      %v7833 = vmin.f32 %v7831, %v7832
      %v7834 = vrot.slane %v7833, 1
      %v7835 = vmin.f32 %v7833, %v7834
      %v7836 = vsel %vm4830, %v7785, inf
      %v7837 = vsel %vm4830, %v7786, inf
      %v7838 = vmin.f32 %v7836, %v7837
      %v7839 = vrot.slane %v7838, 4
      %v7840 = vmin.f32 %v7838, %v7839
      %v7841 = vrot.slane %v7840, 2
      %v7842 = vmin.f32 %v7840, %v7841
      %v7843 = vrot.slane %v7842, 1
      %v7844 = vmin.f32 %v7842, %v7843
      %v7845 = vsel %vm4830, %v7787, inf
      %v7846 = vsel %vm4830, %v7788, inf
      %v7847 = vmin.f32 %v7845, %v7846
      %v7848 = vrot.slane %v7847, 4
      %v7849 = vmin.f32 %v7847, %v7848
      %v7850 = vrot.slane %v7849, 2
      %v7851 = vmin.f32 %v7849, %v7850
      %v7852 = vrot.slane %v7851, 1
      %v7853 = vmin.f32 %v7851, %v7852
      %v7854 = vsel %vm4830, %v7789, inf
      %v7855 = vsel %vm4830, %v7790, inf
      %v7856 = vmin.f32 %v7854, %v7855
      %v7857 = vrot.slane %v7856, 4
      %v7858 = vmin.f32 %v7856, %v7857
      %v7859 = vrot.slane %v7858, 2
      %v7860 = vmin.f32 %v7858, %v7859
      %v7861 = vrot.slane %v7860, 1
      %v7862 = vmin.f32 %v7860, %v7861
      %vm7863 = vcmp.eq.f32.partialorder %v4828, %v7799
      %vm7864 = vcmp.eq.f32.partialorder %v4829, %v7799
      %vm7865 = vcmp.eq.f32.partialorder %v4828, %v7808
      %vm7866 = vcmp.eq.f32.partialorder %v4829, %v7808
      %vm7867 = vcmp.eq.f32.partialorder %v4828, %v7817
      %vm7868 = vcmp.eq.f32.partialorder %v4829, %v7817
      %vm7869 = vcmp.eq.f32.partialorder %v4828, %v7826
      %vm7870 = vcmp.eq.f32.partialorder %v4829, %v7826
      %vm7871 = vcmp.eq.f32.partialorder %v4828, %v7835
      %vm7872 = vcmp.eq.f32.partialorder %v4829, %v7835
      %vm7873 = vcmp.eq.f32.partialorder %v4828, %v7844
      %vm7874 = vcmp.eq.f32.partialorder %v4829, %v7844
      %vm7875 = vcmp.eq.f32.partialorder %v4828, %v7853
      %vm7876 = vcmp.eq.f32.partialorder %v4829, %v7853
      %vm7877 = vcmp.eq.f32.partialorder %v4828, %v7862
      %vm7878 = vcmp.eq.f32.partialorder %v4829, %v7862
      %v7879 = vsel %vm7863, 1, 0
      %v7880 = vsel %vm7864, 1, 0
      %v7881 = vsel %vm7865, 1, 0
      %v7882 = vsel %vm7866, 1, 0
      %v7883 = vsel %vm7867, 1, 0
      %v7884 = vsel %vm7868, 1, 0
      %v7885 = vsel %vm7869, 1, 0
      %v7886 = vsel %vm7870, 1, 0
      %v7887 = vsel %vm7871, 1, 0
      %v7888 = vsel %vm7872, 1, 0
      %v7889 = vsel %vm7873, 1, 0
      %v7890 = vsel %vm7874, 1, 0
      %v7891 = vsel %vm7875, 1, 0
      %v7892 = vsel %vm7876, 1, 0
      %v7893 = vsel %vm7877, 1, 0
      %v7894 = vsel %vm7878, 1, 0
      %v7895 = vcvt.s32.f32 %v7879
      %v7896 = vcvt.s32.f32 %v7880
      %v7897 = vcvt.s32.f32 %v7881
      %v7898 = vcvt.s32.f32 %v7882
      %v7899 = vcvt.s32.f32 %v7883
      %v7900 = vcvt.s32.f32 %v7884
      %v7901 = vcvt.s32.f32 %v7885
      %v7902 = vcvt.s32.f32 %v7886
      %v7903 = vcvt.s32.f32 %v7887
      %v7904 = vcvt.s32.f32 %v7888
      %v7905 = vcvt.s32.f32 %v7889
      %v7906 = vcvt.s32.f32 %v7890
      %v7907 = vcvt.s32.f32 %v7891
      %v7908 = vcvt.s32.f32 %v7892
      %v7909 = vcvt.s32.f32 %v7893
      %v7910 = vcvt.s32.f32 %v7894
      %7912 = vset.pattern.permute.xlu0 0
      %7913 = vperm.xlu0 %7912, %v7895
      %v7914 = vpop.permute.xlu0 %7913
      %7917 = vset.pattern.permute.xlu0 0
      %7918 = vperm.xlu0 %7917, %v7896
      %v7919 = vpop.permute.xlu0 %7918
      %7922 = vset.pattern.permute.xlu0 0
      %7923 = vperm.xlu0 %7922, %v7897
      %v7924 = vpop.permute.xlu0 %7923
      %7927 = vset.pattern.permute.xlu0 0
      %7928 = vperm.xlu0 %7927, %v7898
      %v7929 = vpop.permute.xlu0 %7928
      %7932 = vset.pattern.permute.xlu0 0
      %7933 = vperm.xlu0 %7932, %v7899
      %v7934 = vpop.permute.xlu0 %7933
      %7937 = vset.pattern.permute.xlu0 0
      %7938 = vperm.xlu0 %7937, %v7900
      %v7939 = vpop.permute.xlu0 %7938
      %7942 = vset.pattern.permute.xlu0 0
      %7943 = vperm.xlu0 %7942, %v7901
      %v7944 = vpop.permute.xlu0 %7943
      %7947 = vset.pattern.permute.xlu0 0
      %7948 = vperm.xlu0 %7947, %v7902
      %v7949 = vpop.permute.xlu0 %7948
      %7952 = vset.pattern.permute.xlu0 0
      %7953 = vperm.xlu0 %7952, %v7903
      %v7954 = vpop.permute.xlu0 %7953
      %7957 = vset.pattern.permute.xlu0 0
      %7958 = vperm.xlu0 %7957, %v7904
      %v7959 = vpop.permute.xlu0 %7958
      %7962 = vset.pattern.permute.xlu0 0
      %7963 = vperm.xlu0 %7962, %v7905
      %v7964 = vpop.permute.xlu0 %7963
      %7967 = vset.pattern.permute.xlu0 0
      %7968 = vperm.xlu0 %7967, %v7906
      %v7969 = vpop.permute.xlu0 %7968
      %7972 = vset.pattern.permute.xlu0 0
      %7973 = vperm.xlu0 %7972, %v7907
      %v7974 = vpop.permute.xlu0 %7973
      %7977 = vset.pattern.permute.xlu0 0
      %7978 = vperm.xlu0 %7977, %v7908
      %v7979 = vpop.permute.xlu0 %7978
      %7982 = vset.pattern.permute.xlu0 0
      %7983 = vperm.xlu0 %7982, %v7909
      %v7984 = vpop.permute.xlu0 %7983
      %7987 = vset.pattern.permute.xlu0 0
      %7988 = vperm.xlu0 %7987, %v7910
      %v7989 = vpop.permute.xlu0 %7988
      %v7991 = vmul.f32 %v7914, %v4809
      %v7992 = vmul.f32 %v7919, %v4810
      %v7993 = vmul.f32 %v7924, %v4811
      %v7994 = vmul.f32 %v7929, %v4812
      %v7995 = vmul.f32 %v7934, %v4813
      %v7996 = vmul.f32 %v7939, %v4814
      %v7997 = vmul.f32 %v7944, %v4815
      %v7998 = vmul.f32 %v7949, %v4816
      %v7999 = vmul.f32 %v7954, %v4817
      %v8000 = vmul.f32 %v7959, %v4818
      %v8001 = vmul.f32 %v7964, %v4819
      %v8002 = vmul.f32 %v7969, %v4820
      %v8003 = vmul.f32 %v7974, %v4821
      %v8004 = vmul.f32 %v7979, %v4822
      %v8005 = vmul.f32 %v7984, %v4823
      %v8006 = vmul.f32 %v7989, %v4824
      %v8007 = vsel %vm622, %v7991, 0.0
      %v8008 = vsel %vm622, %v7992, 0.0
      %v8009 = vadd.f32 %v8007, %v8008
      %v8010 = vrot.slane %v8009, 4
      %v8011 = vadd.f32 %v8009, %v8010
      %v8012 = vrot.slane %v8011, 2
      %v8013 = vadd.f32 %v8011, %v8012
      %v8014 = vrot.slane %v8013, 1
      %v8015 = vadd.f32 %v8013, %v8014
      %v8016 = vsel %vm622, %v7993, 0.0
      %v8017 = vsel %vm622, %v7994, 0.0
      %v8018 = vadd.f32 %v8016, %v8017
      %v8019 = vrot.slane %v8018, 4
      %v8020 = vadd.f32 %v8018, %v8019
      %v8021 = vrot.slane %v8020, 2
      %v8022 = vadd.f32 %v8020, %v8021
      %v8023 = vrot.slane %v8022, 1
      %v8024 = vadd.f32 %v8022, %v8023
      %v8025 = vsel %vm622, %v7995, 0.0
      %v8026 = vsel %vm622, %v7996, 0.0
      %v8027 = vadd.f32 %v8025, %v8026
      %v8028 = vrot.slane %v8027, 4
      %v8029 = vadd.f32 %v8027, %v8028
      %v8030 = vrot.slane %v8029, 2
      %v8031 = vadd.f32 %v8029, %v8030
      %v8032 = vrot.slane %v8031, 1
      %v8033 = vadd.f32 %v8031, %v8032
      %v8034 = vsel %vm622, %v7997, 0.0
      %v8035 = vsel %vm622, %v7998, 0.0
      %v8036 = vadd.f32 %v8034, %v8035
      %v8037 = vrot.slane %v8036, 4
      %v8038 = vadd.f32 %v8036, %v8037
      %v8039 = vrot.slane %v8038, 2
      %v8040 = vadd.f32 %v8038, %v8039
      %v8041 = vrot.slane %v8040, 1
      %v8042 = vadd.f32 %v8040, %v8041
      %v8043 = vsel %vm622, %v7999, 0.0
      %v8044 = vsel %vm622, %v8000, 0.0
      %v8045 = vadd.f32 %v8043, %v8044
      %v8046 = vrot.slane %v8045, 4
      %v8047 = vadd.f32 %v8045, %v8046
      %v8048 = vrot.slane %v8047, 2
      %v8049 = vadd.f32 %v8047, %v8048
      %v8050 = vrot.slane %v8049, 1
      %v8051 = vadd.f32 %v8049, %v8050
      %v8052 = vsel %vm622, %v8001, 0.0
      %v8053 = vsel %vm622, %v8002, 0.0
      %v8054 = vadd.f32 %v8052, %v8053
      %v8055 = vrot.slane %v8054, 4
      %v8056 = vadd.f32 %v8054, %v8055
      %v8057 = vrot.slane %v8056, 2
      %v8058 = vadd.f32 %v8056, %v8057
      %v8059 = vrot.slane %v8058, 1
      %v8060 = vadd.f32 %v8058, %v8059
      %v8061 = vsel %vm622, %v8003, 0.0
      %v8062 = vsel %vm622, %v8004, 0.0
      %v8063 = vadd.f32 %v8061, %v8062
      %v8064 = vrot.slane %v8063, 4
      %v8065 = vadd.f32 %v8063, %v8064
      %v8066 = vrot.slane %v8065, 2
      %v8067 = vadd.f32 %v8065, %v8066
      %v8068 = vrot.slane %v8067, 1
      %v8069 = vadd.f32 %v8067, %v8068
      %v8070 = vsel %vm622, %v8005, 0.0
      %v8071 = vsel %vm622, %v8006, 0.0
      %v8072 = vadd.f32 %v8070, %v8071
      %v8073 = vrot.slane %v8072, 4
      %v8074 = vadd.f32 %v8072, %v8073
      %v8075 = vrot.slane %v8074, 2
      %v8076 = vadd.f32 %v8074, %v8075
      %v8077 = vrot.slane %v8076, 1
      %v8078 = vadd.f32 %v8076, %v8077
      %v8079 = vsel %vm7863, -1e+30, %v7671
      %v8080 = vsel %vm7864, -1e+30, %v7672
      %v8081 = vsel %vm7865, -1e+30, %v7673
      %v8082 = vsel %vm7866, -1e+30, %v7674
      %v8083 = vsel %vm7867, -1e+30, %v7675
      %v8084 = vsel %vm7868, -1e+30, %v7676
      %v8085 = vsel %vm7869, -1e+30, %v7677
      %v8086 = vsel %vm7870, -1e+30, %v7678
      %v8087 = vsel %vm7871, -1e+30, %v7679
      %v8088 = vsel %vm7872, -1e+30, %v7680
      %v8089 = vsel %vm7873, -1e+30, %v7681
      %v8090 = vsel %vm7874, -1e+30, %v7682
      %v8091 = vsel %vm7875, -1e+30, %v7683
      %v8092 = vsel %vm7876, -1e+30, %v7684
      %v8093 = vsel %vm7877, -1e+30, %v7685
      %v8094 = vsel %vm7878, -1e+30, %v7686
      %v8095 = vsel %vm4830, %v8079, -inf
      %v8096 = vsel %vm4830, %v8080, -inf
      %v8097 = vmax.f32 %v8095, %v8096
      %v8098 = vrot.slane %v8097, 4
      %v8099 = vmax.f32 %v8097, %v8098
      %v8100 = vrot.slane %v8099, 2
      %v8101 = vmax.f32 %v8099, %v8100
      %v8102 = vrot.slane %v8101, 1
      %v8103 = vmax.f32 %v8101, %v8102
      %v8104 = vsel %vm4830, %v8081, -inf
      %v8105 = vsel %vm4830, %v8082, -inf
      %v8106 = vmax.f32 %v8104, %v8105
      %v8107 = vrot.slane %v8106, 4
      %v8108 = vmax.f32 %v8106, %v8107
      %v8109 = vrot.slane %v8108, 2
      %v8110 = vmax.f32 %v8108, %v8109
      %v8111 = vrot.slane %v8110, 1
      %v8112 = vmax.f32 %v8110, %v8111
      %v8113 = vsel %vm4830, %v8083, -inf
      %v8114 = vsel %vm4830, %v8084, -inf
      %v8115 = vmax.f32 %v8113, %v8114
      %v8116 = vrot.slane %v8115, 4
      %v8117 = vmax.f32 %v8115, %v8116
      %v8118 = vrot.slane %v8117, 2
      %v8119 = vmax.f32 %v8117, %v8118
      %v8120 = vrot.slane %v8119, 1
      %v8121 = vmax.f32 %v8119, %v8120
      %v8122 = vsel %vm4830, %v8085, -inf
      %v8123 = vsel %vm4830, %v8086, -inf
      %v8124 = vmax.f32 %v8122, %v8123
      %v8125 = vrot.slane %v8124, 4
      %v8126 = vmax.f32 %v8124, %v8125
      %v8127 = vrot.slane %v8126, 2
      %v8128 = vmax.f32 %v8126, %v8127
      %v8129 = vrot.slane %v8128, 1
      %v8130 = vmax.f32 %v8128, %v8129
      %v8131 = vsel %vm4830, %v8087, -inf
      %v8132 = vsel %vm4830, %v8088, -inf
      %v8133 = vmax.f32 %v8131, %v8132
      %v8134 = vrot.slane %v8133, 4
      %v8135 = vmax.f32 %v8133, %v8134
      %v8136 = vrot.slane %v8135, 2
      %v8137 = vmax.f32 %v8135, %v8136
      %v8138 = vrot.slane %v8137, 1
      %v8139 = vmax.f32 %v8137, %v8138
      %v8140 = vsel %vm4830, %v8089, -inf
      %v8141 = vsel %vm4830, %v8090, -inf
      %v8142 = vmax.f32 %v8140, %v8141
      %v8143 = vrot.slane %v8142, 4
      %v8144 = vmax.f32 %v8142, %v8143
      %v8145 = vrot.slane %v8144, 2
      %v8146 = vmax.f32 %v8144, %v8145
      %v8147 = vrot.slane %v8146, 1
      %v8148 = vmax.f32 %v8146, %v8147
      %v8149 = vsel %vm4830, %v8091, -inf
      %v8150 = vsel %vm4830, %v8092, -inf
      %v8151 = vmax.f32 %v8149, %v8150
      %v8152 = vrot.slane %v8151, 4
      %v8153 = vmax.f32 %v8151, %v8152
      %v8154 = vrot.slane %v8153, 2
      %v8155 = vmax.f32 %v8153, %v8154
      %v8156 = vrot.slane %v8155, 1
      %v8157 = vmax.f32 %v8155, %v8156
      %v8158 = vsel %vm4830, %v8093, -inf
      %v8159 = vsel %vm4830, %v8094, -inf
      %v8160 = vmax.f32 %v8158, %v8159
      %v8161 = vrot.slane %v8160, 4
      %v8162 = vmax.f32 %v8160, %v8161
      %v8163 = vrot.slane %v8162, 2
      %v8164 = vmax.f32 %v8162, %v8163
      %v8165 = vrot.slane %v8164, 1
      %v8166 = vmax.f32 %v8164, %v8165
      %vm8167 = vcmp.eq.f32.partialorder %v8079, %v8103
      %vm8168 = vcmp.eq.f32.partialorder %v8080, %v8103
      %vm8169 = vcmp.eq.f32.partialorder %v8081, %v8112
      %vm8170 = vcmp.eq.f32.partialorder %v8082, %v8112
      %vm8171 = vcmp.eq.f32.partialorder %v8083, %v8121
      %vm8172 = vcmp.eq.f32.partialorder %v8084, %v8121
      %vm8173 = vcmp.eq.f32.partialorder %v8085, %v8130
      %vm8174 = vcmp.eq.f32.partialorder %v8086, %v8130
      %vm8175 = vcmp.eq.f32.partialorder %v8087, %v8139
      %vm8176 = vcmp.eq.f32.partialorder %v8088, %v8139
      %vm8177 = vcmp.eq.f32.partialorder %v8089, %v8148
      %vm8178 = vcmp.eq.f32.partialorder %v8090, %v8148
      %vm8179 = vcmp.eq.f32.partialorder %v8091, %v8157
      %vm8180 = vcmp.eq.f32.partialorder %v8092, %v8157
      %vm8181 = vcmp.eq.f32.partialorder %v8093, %v8166
      %vm8182 = vcmp.eq.f32.partialorder %v8094, %v8166
      %v8183 = vsel %vm8167, %v4828, 16.0
      %v8184 = vsel %vm8168, %v4829, 16.0
      %v8185 = vsel %vm8169, %v4828, 16.0
      %v8186 = vsel %vm8170, %v4829, 16.0
      %v8187 = vsel %vm8171, %v4828, 16.0
      %v8188 = vsel %vm8172, %v4829, 16.0
      %v8189 = vsel %vm8173, %v4828, 16.0
      %v8190 = vsel %vm8174, %v4829, 16.0
      %v8191 = vsel %vm8175, %v4828, 16.0
      %v8192 = vsel %vm8176, %v4829, 16.0
      %v8193 = vsel %vm8177, %v4828, 16.0
      %v8194 = vsel %vm8178, %v4829, 16.0
      %v8195 = vsel %vm8179, %v4828, 16.0
      %v8196 = vsel %vm8180, %v4829, 16.0
      %v8197 = vsel %vm8181, %v4828, 16.0
      %v8198 = vsel %vm8182, %v4829, 16.0
      %v8199 = vsel %vm4830, %v8183, inf
      %v8200 = vsel %vm4830, %v8184, inf
      %v8201 = vmin.f32 %v8199, %v8200
      %v8202 = vrot.slane %v8201, 4
      %v8203 = vmin.f32 %v8201, %v8202
      %v8204 = vrot.slane %v8203, 2
      %v8205 = vmin.f32 %v8203, %v8204
      %v8206 = vrot.slane %v8205, 1
      %v8207 = vmin.f32 %v8205, %v8206
      %v8208 = vsel %vm4830, %v8185, inf
      %v8209 = vsel %vm4830, %v8186, inf
      %v8210 = vmin.f32 %v8208, %v8209
      %v8211 = vrot.slane %v8210, 4
      %v8212 = vmin.f32 %v8210, %v8211
      %v8213 = vrot.slane %v8212, 2
      %v8214 = vmin.f32 %v8212, %v8213
      %v8215 = vrot.slane %v8214, 1
      %v8216 = vmin.f32 %v8214, %v8215
      %v8217 = vsel %vm4830, %v8187, inf
      %v8218 = vsel %vm4830, %v8188, inf
      %v8219 = vmin.f32 %v8217, %v8218
      %v8220 = vrot.slane %v8219, 4
      %v8221 = vmin.f32 %v8219, %v8220
      %v8222 = vrot.slane %v8221, 2
      %v8223 = vmin.f32 %v8221, %v8222
      %v8224 = vrot.slane %v8223, 1
      %v8225 = vmin.f32 %v8223, %v8224
      %v8226 = vsel %vm4830, %v8189, inf
      %v8227 = vsel %vm4830, %v8190, inf
      %v8228 = vmin.f32 %v8226, %v8227
      %v8229 = vrot.slane %v8228, 4
      %v8230 = vmin.f32 %v8228, %v8229
      %v8231 = vrot.slane %v8230, 2
      %v8232 = vmin.f32 %v8230, %v8231
      %v8233 = vrot.slane %v8232, 1
      %v8234 = vmin.f32 %v8232, %v8233
      %v8235 = vsel %vm4830, %v8191, inf
      %v8236 = vsel %vm4830, %v8192, inf
      %v8237 = vmin.f32 %v8235, %v8236
      %v8238 = vrot.slane %v8237, 4
      %v8239 = vmin.f32 %v8237, %v8238
      %v8240 = vrot.slane %v8239, 2
      %v8241 = vmin.f32 %v8239, %v8240
      %v8242 = vrot.slane %v8241, 1
      %v8243 = vmin.f32 %v8241, %v8242
      %v8244 = vsel %vm4830, %v8193, inf
      %v8245 = vsel %vm4830, %v8194, inf
      %v8246 = vmin.f32 %v8244, %v8245
      %v8247 = vrot.slane %v8246, 4
      %v8248 = vmin.f32 %v8246, %v8247
      %v8249 = vrot.slane %v8248, 2
      %v8250 = vmin.f32 %v8248, %v8249
      %v8251 = vrot.slane %v8250, 1
      %v8252 = vmin.f32 %v8250, %v8251
      %v8253 = vsel %vm4830, %v8195, inf
      %v8254 = vsel %vm4830, %v8196, inf
      %v8255 = vmin.f32 %v8253, %v8254
      %v8256 = vrot.slane %v8255, 4
      %v8257 = vmin.f32 %v8255, %v8256
      %v8258 = vrot.slane %v8257, 2
      %v8259 = vmin.f32 %v8257, %v8258
      %v8260 = vrot.slane %v8259, 1
      %v8261 = vmin.f32 %v8259, %v8260
      %v8262 = vsel %vm4830, %v8197, inf
      %v8263 = vsel %vm4830, %v8198, inf
      %v8264 = vmin.f32 %v8262, %v8263
      %v8265 = vrot.slane %v8264, 4
      %v8266 = vmin.f32 %v8264, %v8265
      %v8267 = vrot.slane %v8266, 2
      %v8268 = vmin.f32 %v8266, %v8267
      %v8269 = vrot.slane %v8268, 1
      %v8270 = vmin.f32 %v8268, %v8269
      %vm8271 = vcmp.eq.f32.partialorder %v4828, %v8207
      %vm8272 = vcmp.eq.f32.partialorder %v4829, %v8207
      %vm8273 = vcmp.eq.f32.partialorder %v4828, %v8216
      %vm8274 = vcmp.eq.f32.partialorder %v4829, %v8216
      %vm8275 = vcmp.eq.f32.partialorder %v4828, %v8225
      %vm8276 = vcmp.eq.f32.partialorder %v4829, %v8225
      %vm8277 = vcmp.eq.f32.partialorder %v4828, %v8234
      %vm8278 = vcmp.eq.f32.partialorder %v4829, %v8234
      %vm8279 = vcmp.eq.f32.partialorder %v4828, %v8243
      %vm8280 = vcmp.eq.f32.partialorder %v4829, %v8243
      %vm8281 = vcmp.eq.f32.partialorder %v4828, %v8252
      %vm8282 = vcmp.eq.f32.partialorder %v4829, %v8252
      %vm8283 = vcmp.eq.f32.partialorder %v4828, %v8261
      %vm8284 = vcmp.eq.f32.partialorder %v4829, %v8261
      %vm8285 = vcmp.eq.f32.partialorder %v4828, %v8270
      %vm8286 = vcmp.eq.f32.partialorder %v4829, %v8270
      %v8287 = vsel %vm8271, 1, 0
      %v8288 = vsel %vm8272, 1, 0
      %v8289 = vsel %vm8273, 1, 0
      %v8290 = vsel %vm8274, 1, 0
      %v8291 = vsel %vm8275, 1, 0
      %v8292 = vsel %vm8276, 1, 0
      %v8293 = vsel %vm8277, 1, 0
      %v8294 = vsel %vm8278, 1, 0
      %v8295 = vsel %vm8279, 1, 0
      %v8296 = vsel %vm8280, 1, 0
      %v8297 = vsel %vm8281, 1, 0
      %v8298 = vsel %vm8282, 1, 0
      %v8299 = vsel %vm8283, 1, 0
      %v8300 = vsel %vm8284, 1, 0
      %v8301 = vsel %vm8285, 1, 0
      %v8302 = vsel %vm8286, 1, 0
      %v8303 = vcvt.s32.f32 %v8287
      %v8304 = vcvt.s32.f32 %v8288
      %v8305 = vcvt.s32.f32 %v8289
      %v8306 = vcvt.s32.f32 %v8290
      %v8307 = vcvt.s32.f32 %v8291
      %v8308 = vcvt.s32.f32 %v8292
      %v8309 = vcvt.s32.f32 %v8293
      %v8310 = vcvt.s32.f32 %v8294
      %v8311 = vcvt.s32.f32 %v8295
      %v8312 = vcvt.s32.f32 %v8296
      %v8313 = vcvt.s32.f32 %v8297
      %v8314 = vcvt.s32.f32 %v8298
      %v8315 = vcvt.s32.f32 %v8299
      %v8316 = vcvt.s32.f32 %v8300
      %v8317 = vcvt.s32.f32 %v8301
      %v8318 = vcvt.s32.f32 %v8302
      %8320 = vset.pattern.permute.xlu0 0
      %8321 = vperm.xlu0 %8320, %v8303
      %v8322 = vpop.permute.xlu0 %8321
      %8325 = vset.pattern.permute.xlu0 0
      %8326 = vperm.xlu0 %8325, %v8304
      %v8327 = vpop.permute.xlu0 %8326
      %8330 = vset.pattern.permute.xlu0 0
      %8331 = vperm.xlu0 %8330, %v8305
      %v8332 = vpop.permute.xlu0 %8331
      %8335 = vset.pattern.permute.xlu0 0
      %8336 = vperm.xlu0 %8335, %v8306
      %v8337 = vpop.permute.xlu0 %8336
      %8340 = vset.pattern.permute.xlu0 0
      %8341 = vperm.xlu0 %8340, %v8307
      %v8342 = vpop.permute.xlu0 %8341
      %8345 = vset.pattern.permute.xlu0 0
      %8346 = vperm.xlu0 %8345, %v8308
      %v8347 = vpop.permute.xlu0 %8346
      %8350 = vset.pattern.permute.xlu0 0
      %8351 = vperm.xlu0 %8350, %v8309
      %v8352 = vpop.permute.xlu0 %8351
      %8355 = vset.pattern.permute.xlu0 0
      %8356 = vperm.xlu0 %8355, %v8310
      %v8357 = vpop.permute.xlu0 %8356
      %8360 = vset.pattern.permute.xlu0 0
      %8361 = vperm.xlu0 %8360, %v8311
      %v8362 = vpop.permute.xlu0 %8361
      %8365 = vset.pattern.permute.xlu0 0
      %8366 = vperm.xlu0 %8365, %v8312
      %v8367 = vpop.permute.xlu0 %8366
      %8370 = vset.pattern.permute.xlu0 0
      %8371 = vperm.xlu0 %8370, %v8313
      %v8372 = vpop.permute.xlu0 %8371
      %8375 = vset.pattern.permute.xlu0 0
      %8376 = vperm.xlu0 %8375, %v8314
      %v8377 = vpop.permute.xlu0 %8376
      %8380 = vset.pattern.permute.xlu0 0
      %8381 = vperm.xlu0 %8380, %v8315
      %v8382 = vpop.permute.xlu0 %8381
      %8385 = vset.pattern.permute.xlu0 0
      %8386 = vperm.xlu0 %8385, %v8316
      %v8387 = vpop.permute.xlu0 %8386
      %8390 = vset.pattern.permute.xlu0 0
      %8391 = vperm.xlu0 %8390, %v8317
      %v8392 = vpop.permute.xlu0 %8391
      %8395 = vset.pattern.permute.xlu0 0
      %8396 = vperm.xlu0 %8395, %v8318
      %v8397 = vpop.permute.xlu0 %8396
      %v8399 = vmul.f32 %v8322, %v4809
      %v8400 = vmul.f32 %v8327, %v4810
      %v8401 = vmul.f32 %v8332, %v4811
      %v8402 = vmul.f32 %v8337, %v4812
      %v8403 = vmul.f32 %v8342, %v4813
      %v8404 = vmul.f32 %v8347, %v4814
      %v8405 = vmul.f32 %v8352, %v4815
      %v8406 = vmul.f32 %v8357, %v4816
      %v8407 = vmul.f32 %v8362, %v4817
      %v8408 = vmul.f32 %v8367, %v4818
      %v8409 = vmul.f32 %v8372, %v4819
      %v8410 = vmul.f32 %v8377, %v4820
      %v8411 = vmul.f32 %v8382, %v4821
      %v8412 = vmul.f32 %v8387, %v4822
      %v8413 = vmul.f32 %v8392, %v4823
      %v8414 = vmul.f32 %v8397, %v4824
      %v8415 = vsel %vm622, %v8399, 0.0
      %v8416 = vsel %vm622, %v8400, 0.0
      %v8417 = vadd.f32 %v8415, %v8416
      %v8418 = vrot.slane %v8417, 4
      %v8419 = vadd.f32 %v8417, %v8418
      %v8420 = vrot.slane %v8419, 2
      %v8421 = vadd.f32 %v8419, %v8420
      %v8422 = vrot.slane %v8421, 1
      %v8423 = vadd.f32 %v8421, %v8422
      %v8424 = vsel %vm622, %v8401, 0.0
      %v8425 = vsel %vm622, %v8402, 0.0
      %v8426 = vadd.f32 %v8424, %v8425
      %v8427 = vrot.slane %v8426, 4
      %v8428 = vadd.f32 %v8426, %v8427
      %v8429 = vrot.slane %v8428, 2
      %v8430 = vadd.f32 %v8428, %v8429
      %v8431 = vrot.slane %v8430, 1
      %v8432 = vadd.f32 %v8430, %v8431
      %v8433 = vsel %vm622, %v8403, 0.0
      %v8434 = vsel %vm622, %v8404, 0.0
      %v8435 = vadd.f32 %v8433, %v8434
      %v8436 = vrot.slane %v8435, 4
      %v8437 = vadd.f32 %v8435, %v8436
      %v8438 = vrot.slane %v8437, 2
      %v8439 = vadd.f32 %v8437, %v8438
      %v8440 = vrot.slane %v8439, 1
      %v8441 = vadd.f32 %v8439, %v8440
      %v8442 = vsel %vm622, %v8405, 0.0
      %v8443 = vsel %vm622, %v8406, 0.0
      %v8444 = vadd.f32 %v8442, %v8443
      %v8445 = vrot.slane %v8444, 4
      %v8446 = vadd.f32 %v8444, %v8445
      %v8447 = vrot.slane %v8446, 2
      %v8448 = vadd.f32 %v8446, %v8447
      %v8449 = vrot.slane %v8448, 1
      %v8450 = vadd.f32 %v8448, %v8449
      %v8451 = vsel %vm622, %v8407, 0.0
      %v8452 = vsel %vm622, %v8408, 0.0
      %v8453 = vadd.f32 %v8451, %v8452
      %v8454 = vrot.slane %v8453, 4
      %v8455 = vadd.f32 %v8453, %v8454
      %v8456 = vrot.slane %v8455, 2
      %v8457 = vadd.f32 %v8455, %v8456
      %v8458 = vrot.slane %v8457, 1
      %v8459 = vadd.f32 %v8457, %v8458
      %v8460 = vsel %vm622, %v8409, 0.0
      %v8461 = vsel %vm622, %v8410, 0.0
      %v8462 = vadd.f32 %v8460, %v8461
      %v8463 = vrot.slane %v8462, 4
      %v8464 = vadd.f32 %v8462, %v8463
      %v8465 = vrot.slane %v8464, 2
      %v8466 = vadd.f32 %v8464, %v8465
      %v8467 = vrot.slane %v8466, 1
      %v8468 = vadd.f32 %v8466, %v8467
      %v8469 = vsel %vm622, %v8411, 0.0
      %v8470 = vsel %vm622, %v8412, 0.0
      %v8471 = vadd.f32 %v8469, %v8470
      %v8472 = vrot.slane %v8471, 4
      %v8473 = vadd.f32 %v8471, %v8472
      %v8474 = vrot.slane %v8473, 2
      %v8475 = vadd.f32 %v8473, %v8474
      %v8476 = vrot.slane %v8475, 1
      %v8477 = vadd.f32 %v8475, %v8476
      %v8478 = vsel %vm622, %v8413, 0.0
      %v8479 = vsel %vm622, %v8414, 0.0
      %v8480 = vadd.f32 %v8478, %v8479
      %v8481 = vrot.slane %v8480, 4
      %v8482 = vadd.f32 %v8480, %v8481
      %v8483 = vrot.slane %v8482, 2
      %v8484 = vadd.f32 %v8482, %v8483
      %v8485 = vrot.slane %v8484, 1
      %v8486 = vadd.f32 %v8484, %v8485
      %v8487 = vsel %vm8271, -1e+30, %v8079
      %v8488 = vsel %vm8272, -1e+30, %v8080
      %v8489 = vsel %vm8273, -1e+30, %v8081
      %v8490 = vsel %vm8274, -1e+30, %v8082
      %v8491 = vsel %vm8275, -1e+30, %v8083
      %v8492 = vsel %vm8276, -1e+30, %v8084
      %v8493 = vsel %vm8277, -1e+30, %v8085
      %v8494 = vsel %vm8278, -1e+30, %v8086
      %v8495 = vsel %vm8279, -1e+30, %v8087
      %v8496 = vsel %vm8280, -1e+30, %v8088
      %v8497 = vsel %vm8281, -1e+30, %v8089
      %v8498 = vsel %vm8282, -1e+30, %v8090
      %v8499 = vsel %vm8283, -1e+30, %v8091
      %v8500 = vsel %vm8284, -1e+30, %v8092
      %v8501 = vsel %vm8285, -1e+30, %v8093
      %v8502 = vsel %vm8286, -1e+30, %v8094
      %v8503 = vsel %vm4830, %v8487, -inf
      %v8504 = vsel %vm4830, %v8488, -inf
      %v8505 = vmax.f32 %v8503, %v8504
      %v8506 = vrot.slane %v8505, 4
      %v8507 = vmax.f32 %v8505, %v8506
      %v8508 = vrot.slane %v8507, 2
      %v8509 = vmax.f32 %v8507, %v8508
      %v8510 = vrot.slane %v8509, 1
      %v8511 = vmax.f32 %v8509, %v8510
      %v8512 = vsel %vm4830, %v8489, -inf
      %v8513 = vsel %vm4830, %v8490, -inf
      %v8514 = vmax.f32 %v8512, %v8513
      %v8515 = vrot.slane %v8514, 4
      %v8516 = vmax.f32 %v8514, %v8515
      %v8517 = vrot.slane %v8516, 2
      %v8518 = vmax.f32 %v8516, %v8517
      %v8519 = vrot.slane %v8518, 1
      %v8520 = vmax.f32 %v8518, %v8519
      %v8521 = vsel %vm4830, %v8491, -inf
      %v8522 = vsel %vm4830, %v8492, -inf
      %v8523 = vmax.f32 %v8521, %v8522
      %v8524 = vrot.slane %v8523, 4
      %v8525 = vmax.f32 %v8523, %v8524
      %v8526 = vrot.slane %v8525, 2
      %v8527 = vmax.f32 %v8525, %v8526
      %v8528 = vrot.slane %v8527, 1
      %v8529 = vmax.f32 %v8527, %v8528
      %v8530 = vsel %vm4830, %v8493, -inf
      %v8531 = vsel %vm4830, %v8494, -inf
      %v8532 = vmax.f32 %v8530, %v8531
      %v8533 = vrot.slane %v8532, 4
      %v8534 = vmax.f32 %v8532, %v8533
      %v8535 = vrot.slane %v8534, 2
      %v8536 = vmax.f32 %v8534, %v8535
      %v8537 = vrot.slane %v8536, 1
      %v8538 = vmax.f32 %v8536, %v8537
      %v8539 = vsel %vm4830, %v8495, -inf
      %v8540 = vsel %vm4830, %v8496, -inf
      %v8541 = vmax.f32 %v8539, %v8540
      %v8542 = vrot.slane %v8541, 4
      %v8543 = vmax.f32 %v8541, %v8542
      %v8544 = vrot.slane %v8543, 2
      %v8545 = vmax.f32 %v8543, %v8544
      %v8546 = vrot.slane %v8545, 1
      %v8547 = vmax.f32 %v8545, %v8546
      %v8548 = vsel %vm4830, %v8497, -inf
      %v8549 = vsel %vm4830, %v8498, -inf
      %v8550 = vmax.f32 %v8548, %v8549
      %v8551 = vrot.slane %v8550, 4
      %v8552 = vmax.f32 %v8550, %v8551
      %v8553 = vrot.slane %v8552, 2
      %v8554 = vmax.f32 %v8552, %v8553
      %v8555 = vrot.slane %v8554, 1
      %v8556 = vmax.f32 %v8554, %v8555
      %v8557 = vsel %vm4830, %v8499, -inf
      %v8558 = vsel %vm4830, %v8500, -inf
      %v8559 = vmax.f32 %v8557, %v8558
      %v8560 = vrot.slane %v8559, 4
      %v8561 = vmax.f32 %v8559, %v8560
      %v8562 = vrot.slane %v8561, 2
      %v8563 = vmax.f32 %v8561, %v8562
      %v8564 = vrot.slane %v8563, 1
      %v8565 = vmax.f32 %v8563, %v8564
      %v8566 = vsel %vm4830, %v8501, -inf
      %v8567 = vsel %vm4830, %v8502, -inf
      %v8568 = vmax.f32 %v8566, %v8567
      %v8569 = vrot.slane %v8568, 4
      %v8570 = vmax.f32 %v8568, %v8569
      %v8571 = vrot.slane %v8570, 2
      %v8572 = vmax.f32 %v8570, %v8571
      %v8573 = vrot.slane %v8572, 1
      %v8574 = vmax.f32 %v8572, %v8573
      %vm8575 = vcmp.eq.f32.partialorder %v8487, %v8511
      %vm8576 = vcmp.eq.f32.partialorder %v8488, %v8511
      %vm8577 = vcmp.eq.f32.partialorder %v8489, %v8520
      %vm8578 = vcmp.eq.f32.partialorder %v8490, %v8520
      %vm8579 = vcmp.eq.f32.partialorder %v8491, %v8529
      %vm8580 = vcmp.eq.f32.partialorder %v8492, %v8529
      %vm8581 = vcmp.eq.f32.partialorder %v8493, %v8538
      %vm8582 = vcmp.eq.f32.partialorder %v8494, %v8538
      %vm8583 = vcmp.eq.f32.partialorder %v8495, %v8547
      %vm8584 = vcmp.eq.f32.partialorder %v8496, %v8547
      %vm8585 = vcmp.eq.f32.partialorder %v8497, %v8556
      %vm8586 = vcmp.eq.f32.partialorder %v8498, %v8556
      %vm8587 = vcmp.eq.f32.partialorder %v8499, %v8565
      %vm8588 = vcmp.eq.f32.partialorder %v8500, %v8565
      %vm8589 = vcmp.eq.f32.partialorder %v8501, %v8574
      %vm8590 = vcmp.eq.f32.partialorder %v8502, %v8574
      %v8591 = vsel %vm8575, %v4828, 16.0
      %v8592 = vsel %vm8576, %v4829, 16.0
      %v8593 = vsel %vm8577, %v4828, 16.0
      %v8594 = vsel %vm8578, %v4829, 16.0
      %v8595 = vsel %vm8579, %v4828, 16.0
      %v8596 = vsel %vm8580, %v4829, 16.0
      %v8597 = vsel %vm8581, %v4828, 16.0
      %v8598 = vsel %vm8582, %v4829, 16.0
      %v8599 = vsel %vm8583, %v4828, 16.0
      %v8600 = vsel %vm8584, %v4829, 16.0
      %v8601 = vsel %vm8585, %v4828, 16.0
      %v8602 = vsel %vm8586, %v4829, 16.0
      %v8603 = vsel %vm8587, %v4828, 16.0
      %v8604 = vsel %vm8588, %v4829, 16.0
      %v8605 = vsel %vm8589, %v4828, 16.0
      %v8606 = vsel %vm8590, %v4829, 16.0
      %v8607 = vsel %vm4830, %v8591, inf
      %v8608 = vsel %vm4830, %v8592, inf
      %v8609 = vmin.f32 %v8607, %v8608
      %v8610 = vrot.slane %v8609, 4
      %v8611 = vmin.f32 %v8609, %v8610
      %v8612 = vrot.slane %v8611, 2
      %v8613 = vmin.f32 %v8611, %v8612
      %v8614 = vrot.slane %v8613, 1
      %v8615 = vmin.f32 %v8613, %v8614
      %v8616 = vsel %vm4830, %v8593, inf
      %v8617 = vsel %vm4830, %v8594, inf
      %v8618 = vmin.f32 %v8616, %v8617
      %v8619 = vrot.slane %v8618, 4
      %v8620 = vmin.f32 %v8618, %v8619
      %v8621 = vrot.slane %v8620, 2
      %v8622 = vmin.f32 %v8620, %v8621
      %v8623 = vrot.slane %v8622, 1
      %v8624 = vmin.f32 %v8622, %v8623
      %v8625 = vsel %vm4830, %v8595, inf
      %v8626 = vsel %vm4830, %v8596, inf
      %v8627 = vmin.f32 %v8625, %v8626
      %v8628 = vrot.slane %v8627, 4
      %v8629 = vmin.f32 %v8627, %v8628
      %v8630 = vrot.slane %v8629, 2
      %v8631 = vmin.f32 %v8629, %v8630
      %v8632 = vrot.slane %v8631, 1
      %v8633 = vmin.f32 %v8631, %v8632
      %v8634 = vsel %vm4830, %v8597, inf
      %v8635 = vsel %vm4830, %v8598, inf
      %v8636 = vmin.f32 %v8634, %v8635
      %v8637 = vrot.slane %v8636, 4
      %v8638 = vmin.f32 %v8636, %v8637
      %v8639 = vrot.slane %v8638, 2
      %v8640 = vmin.f32 %v8638, %v8639
      %v8641 = vrot.slane %v8640, 1
      %v8642 = vmin.f32 %v8640, %v8641
      %v8643 = vsel %vm4830, %v8599, inf
      %v8644 = vsel %vm4830, %v8600, inf
      %v8645 = vmin.f32 %v8643, %v8644
      %v8646 = vrot.slane %v8645, 4
      %v8647 = vmin.f32 %v8645, %v8646
      %v8648 = vrot.slane %v8647, 2
      %v8649 = vmin.f32 %v8647, %v8648
      %v8650 = vrot.slane %v8649, 1
      %v8651 = vmin.f32 %v8649, %v8650
      %v8652 = vsel %vm4830, %v8601, inf
      %v8653 = vsel %vm4830, %v8602, inf
      %v8654 = vmin.f32 %v8652, %v8653
      %v8655 = vrot.slane %v8654, 4
      %v8656 = vmin.f32 %v8654, %v8655
      %v8657 = vrot.slane %v8656, 2
      %v8658 = vmin.f32 %v8656, %v8657
      %v8659 = vrot.slane %v8658, 1
      %v8660 = vmin.f32 %v8658, %v8659
      %v8661 = vsel %vm4830, %v8603, inf
      %v8662 = vsel %vm4830, %v8604, inf
      %v8663 = vmin.f32 %v8661, %v8662
      %v8664 = vrot.slane %v8663, 4
      %v8665 = vmin.f32 %v8663, %v8664
      %v8666 = vrot.slane %v8665, 2
      %v8667 = vmin.f32 %v8665, %v8666
      %v8668 = vrot.slane %v8667, 1
      %v8669 = vmin.f32 %v8667, %v8668
      %v8670 = vsel %vm4830, %v8605, inf
      %v8671 = vsel %vm4830, %v8606, inf
      %v8672 = vmin.f32 %v8670, %v8671
      %v8673 = vrot.slane %v8672, 4
      %v8674 = vmin.f32 %v8672, %v8673
      %v8675 = vrot.slane %v8674, 2
      %v8676 = vmin.f32 %v8674, %v8675
      %v8677 = vrot.slane %v8676, 1
      %v8678 = vmin.f32 %v8676, %v8677
      %vm8679 = vcmp.eq.f32.partialorder %v4828, %v8615
      %vm8680 = vcmp.eq.f32.partialorder %v4829, %v8615
      %vm8681 = vcmp.eq.f32.partialorder %v4828, %v8624
      %vm8682 = vcmp.eq.f32.partialorder %v4829, %v8624
      %vm8683 = vcmp.eq.f32.partialorder %v4828, %v8633
      %vm8684 = vcmp.eq.f32.partialorder %v4829, %v8633
      %vm8685 = vcmp.eq.f32.partialorder %v4828, %v8642
      %vm8686 = vcmp.eq.f32.partialorder %v4829, %v8642
      %vm8687 = vcmp.eq.f32.partialorder %v4828, %v8651
      %vm8688 = vcmp.eq.f32.partialorder %v4829, %v8651
      %vm8689 = vcmp.eq.f32.partialorder %v4828, %v8660
      %vm8690 = vcmp.eq.f32.partialorder %v4829, %v8660
      %vm8691 = vcmp.eq.f32.partialorder %v4828, %v8669
      %vm8692 = vcmp.eq.f32.partialorder %v4829, %v8669
      %vm8693 = vcmp.eq.f32.partialorder %v4828, %v8678
      %vm8694 = vcmp.eq.f32.partialorder %v4829, %v8678
      %v8695 = vsel %vm8679, 1, 0
      %v8696 = vsel %vm8680, 1, 0
      %v8697 = vsel %vm8681, 1, 0
      %v8698 = vsel %vm8682, 1, 0
      %v8699 = vsel %vm8683, 1, 0
      %v8700 = vsel %vm8684, 1, 0
      %v8701 = vsel %vm8685, 1, 0
      %v8702 = vsel %vm8686, 1, 0
      %v8703 = vsel %vm8687, 1, 0
      %v8704 = vsel %vm8688, 1, 0
      %v8705 = vsel %vm8689, 1, 0
      %v8706 = vsel %vm8690, 1, 0
      %v8707 = vsel %vm8691, 1, 0
      %v8708 = vsel %vm8692, 1, 0
      %v8709 = vsel %vm8693, 1, 0
      %v8710 = vsel %vm8694, 1, 0
      %v8711 = vcvt.s32.f32 %v8695
      %v8712 = vcvt.s32.f32 %v8696
      %v8713 = vcvt.s32.f32 %v8697
      %v8714 = vcvt.s32.f32 %v8698
      %v8715 = vcvt.s32.f32 %v8699
      %v8716 = vcvt.s32.f32 %v8700
      %v8717 = vcvt.s32.f32 %v8701
      %v8718 = vcvt.s32.f32 %v8702
      %v8719 = vcvt.s32.f32 %v8703
      %v8720 = vcvt.s32.f32 %v8704
      %v8721 = vcvt.s32.f32 %v8705
      %v8722 = vcvt.s32.f32 %v8706
      %v8723 = vcvt.s32.f32 %v8707
      %v8724 = vcvt.s32.f32 %v8708
      %v8725 = vcvt.s32.f32 %v8709
      %v8726 = vcvt.s32.f32 %v8710
      %8728 = vset.pattern.permute.xlu0 0
      %8729 = vperm.xlu0 %8728, %v8711
      %v8730 = vpop.permute.xlu0 %8729
      %8733 = vset.pattern.permute.xlu0 0
      %8734 = vperm.xlu0 %8733, %v8712
      %v8735 = vpop.permute.xlu0 %8734
      %8738 = vset.pattern.permute.xlu0 0
      %8739 = vperm.xlu0 %8738, %v8713
      %v8740 = vpop.permute.xlu0 %8739
      %8743 = vset.pattern.permute.xlu0 0
      %8744 = vperm.xlu0 %8743, %v8714
      %v8745 = vpop.permute.xlu0 %8744
      %8748 = vset.pattern.permute.xlu0 0
      %8749 = vperm.xlu0 %8748, %v8715
      %v8750 = vpop.permute.xlu0 %8749
      %8753 = vset.pattern.permute.xlu0 0
      %8754 = vperm.xlu0 %8753, %v8716
      %v8755 = vpop.permute.xlu0 %8754
      %8758 = vset.pattern.permute.xlu0 0
      %8759 = vperm.xlu0 %8758, %v8717
      %v8760 = vpop.permute.xlu0 %8759
      %8763 = vset.pattern.permute.xlu0 0
      %8764 = vperm.xlu0 %8763, %v8718
      %v8765 = vpop.permute.xlu0 %8764
      %8768 = vset.pattern.permute.xlu0 0
      %8769 = vperm.xlu0 %8768, %v8719
      %v8770 = vpop.permute.xlu0 %8769
      %8773 = vset.pattern.permute.xlu0 0
      %8774 = vperm.xlu0 %8773, %v8720
      %v8775 = vpop.permute.xlu0 %8774
      %8778 = vset.pattern.permute.xlu0 0
      %8779 = vperm.xlu0 %8778, %v8721
      %v8780 = vpop.permute.xlu0 %8779
      %8783 = vset.pattern.permute.xlu0 0
      %8784 = vperm.xlu0 %8783, %v8722
      %v8785 = vpop.permute.xlu0 %8784
      %8788 = vset.pattern.permute.xlu0 0
      %8789 = vperm.xlu0 %8788, %v8723
      %v8790 = vpop.permute.xlu0 %8789
      %8793 = vset.pattern.permute.xlu0 0
      %8794 = vperm.xlu0 %8793, %v8724
      %v8795 = vpop.permute.xlu0 %8794
      %8798 = vset.pattern.permute.xlu0 0
      %8799 = vperm.xlu0 %8798, %v8725
      %v8800 = vpop.permute.xlu0 %8799
      %8803 = vset.pattern.permute.xlu0 0
      %8804 = vperm.xlu0 %8803, %v8726
      %v8805 = vpop.permute.xlu0 %8804
      %v8807 = vmul.f32 %v8730, %v4809
      %v8808 = vmul.f32 %v8735, %v4810
      %v8809 = vmul.f32 %v8740, %v4811
      %v8810 = vmul.f32 %v8745, %v4812
      %v8811 = vmul.f32 %v8750, %v4813
      %v8812 = vmul.f32 %v8755, %v4814
      %v8813 = vmul.f32 %v8760, %v4815
      %v8814 = vmul.f32 %v8765, %v4816
      %v8815 = vmul.f32 %v8770, %v4817
      %v8816 = vmul.f32 %v8775, %v4818
      %v8817 = vmul.f32 %v8780, %v4819
      %v8818 = vmul.f32 %v8785, %v4820
      %v8819 = vmul.f32 %v8790, %v4821
      %v8820 = vmul.f32 %v8795, %v4822
      %v8821 = vmul.f32 %v8800, %v4823
      %v8822 = vmul.f32 %v8805, %v4824
      %v8823 = vsel %vm622, %v8807, 0.0
      %v8824 = vsel %vm622, %v8808, 0.0
      %v8825 = vadd.f32 %v8823, %v8824
      %v8826 = vrot.slane %v8825, 4
      %v8827 = vadd.f32 %v8825, %v8826
      %v8828 = vrot.slane %v8827, 2
      %v8829 = vadd.f32 %v8827, %v8828
      %v8830 = vrot.slane %v8829, 1
      %v8831 = vadd.f32 %v8829, %v8830
      %v8832 = vsel %vm622, %v8809, 0.0
      %v8833 = vsel %vm622, %v8810, 0.0
      %v8834 = vadd.f32 %v8832, %v8833
      %v8835 = vrot.slane %v8834, 4
      %v8836 = vadd.f32 %v8834, %v8835
      %v8837 = vrot.slane %v8836, 2
      %v8838 = vadd.f32 %v8836, %v8837
      %v8839 = vrot.slane %v8838, 1
      %v8840 = vadd.f32 %v8838, %v8839
      %v8841 = vsel %vm622, %v8811, 0.0
      %v8842 = vsel %vm622, %v8812, 0.0
      %v8843 = vadd.f32 %v8841, %v8842
      %v8844 = vrot.slane %v8843, 4
      %v8845 = vadd.f32 %v8843, %v8844
      %v8846 = vrot.slane %v8845, 2
      %v8847 = vadd.f32 %v8845, %v8846
      %v8848 = vrot.slane %v8847, 1
      %v8849 = vadd.f32 %v8847, %v8848
      %v8850 = vsel %vm622, %v8813, 0.0
      %v8851 = vsel %vm622, %v8814, 0.0
      %v8852 = vadd.f32 %v8850, %v8851
      %v8853 = vrot.slane %v8852, 4
      %v8854 = vadd.f32 %v8852, %v8853
      %v8855 = vrot.slane %v8854, 2
      %v8856 = vadd.f32 %v8854, %v8855
      %v8857 = vrot.slane %v8856, 1
      %v8858 = vadd.f32 %v8856, %v8857
      %v8859 = vsel %vm622, %v8815, 0.0
      %v8860 = vsel %vm622, %v8816, 0.0
      %v8861 = vadd.f32 %v8859, %v8860
      %v8862 = vrot.slane %v8861, 4
      %v8863 = vadd.f32 %v8861, %v8862
      %v8864 = vrot.slane %v8863, 2
      %v8865 = vadd.f32 %v8863, %v8864
      %v8866 = vrot.slane %v8865, 1
      %v8867 = vadd.f32 %v8865, %v8866
      %v8868 = vsel %vm622, %v8817, 0.0
      %v8869 = vsel %vm622, %v8818, 0.0
      %v8870 = vadd.f32 %v8868, %v8869
      %v8871 = vrot.slane %v8870, 4
      %v8872 = vadd.f32 %v8870, %v8871
      %v8873 = vrot.slane %v8872, 2
      %v8874 = vadd.f32 %v8872, %v8873
      %v8875 = vrot.slane %v8874, 1
      %v8876 = vadd.f32 %v8874, %v8875
      %v8877 = vsel %vm622, %v8819, 0.0
      %v8878 = vsel %vm622, %v8820, 0.0
      %v8879 = vadd.f32 %v8877, %v8878
      %v8880 = vrot.slane %v8879, 4
      %v8881 = vadd.f32 %v8879, %v8880
      %v8882 = vrot.slane %v8881, 2
      %v8883 = vadd.f32 %v8881, %v8882
      %v8884 = vrot.slane %v8883, 1
      %v8885 = vadd.f32 %v8883, %v8884
      %v8886 = vsel %vm622, %v8821, 0.0
      %v8887 = vsel %vm622, %v8822, 0.0
      %v8888 = vadd.f32 %v8886, %v8887
      %v8889 = vrot.slane %v8888, 4
      %v8890 = vadd.f32 %v8888, %v8889
      %v8891 = vrot.slane %v8890, 2
      %v8892 = vadd.f32 %v8890, %v8891
      %v8893 = vrot.slane %v8892, 1
      %v8894 = vadd.f32 %v8892, %v8893
      %v8895 = vsel %vm8679, -1e+30, %v8487
      %v8896 = vsel %vm8680, -1e+30, %v8488
      %v8897 = vsel %vm8681, -1e+30, %v8489
      %v8898 = vsel %vm8682, -1e+30, %v8490
      %v8899 = vsel %vm8683, -1e+30, %v8491
      %v8900 = vsel %vm8684, -1e+30, %v8492
      %v8901 = vsel %vm8685, -1e+30, %v8493
      %v8902 = vsel %vm8686, -1e+30, %v8494
      %v8903 = vsel %vm8687, -1e+30, %v8495
      %v8904 = vsel %vm8688, -1e+30, %v8496
      %v8905 = vsel %vm8689, -1e+30, %v8497
      %v8906 = vsel %vm8690, -1e+30, %v8498
      %v8907 = vsel %vm8691, -1e+30, %v8499
      %v8908 = vsel %vm8692, -1e+30, %v8500
      %v8909 = vsel %vm8693, -1e+30, %v8501
      %v8910 = vsel %vm8694, -1e+30, %v8502
      %v8911 = vsel %vm4830, %v8895, -inf
      %v8912 = vsel %vm4830, %v8896, -inf
      %v8913 = vmax.f32 %v8911, %v8912
      %v8914 = vrot.slane %v8913, 4
      %v8915 = vmax.f32 %v8913, %v8914
      %v8916 = vrot.slane %v8915, 2
      %v8917 = vmax.f32 %v8915, %v8916
      %v8918 = vrot.slane %v8917, 1
      %v8919 = vmax.f32 %v8917, %v8918
      %v8920 = vsel %vm4830, %v8897, -inf
      %v8921 = vsel %vm4830, %v8898, -inf
      %v8922 = vmax.f32 %v8920, %v8921
      %v8923 = vrot.slane %v8922, 4
      %v8924 = vmax.f32 %v8922, %v8923
      %v8925 = vrot.slane %v8924, 2
      %v8926 = vmax.f32 %v8924, %v8925
      %v8927 = vrot.slane %v8926, 1
      %v8928 = vmax.f32 %v8926, %v8927
      %v8929 = vsel %vm4830, %v8899, -inf
      %v8930 = vsel %vm4830, %v8900, -inf
      %v8931 = vmax.f32 %v8929, %v8930
      %v8932 = vrot.slane %v8931, 4
      %v8933 = vmax.f32 %v8931, %v8932
      %v8934 = vrot.slane %v8933, 2
      %v8935 = vmax.f32 %v8933, %v8934
      %v8936 = vrot.slane %v8935, 1
      %v8937 = vmax.f32 %v8935, %v8936
      %v8938 = vsel %vm4830, %v8901, -inf
      %v8939 = vsel %vm4830, %v8902, -inf
      %v8940 = vmax.f32 %v8938, %v8939
      %v8941 = vrot.slane %v8940, 4
      %v8942 = vmax.f32 %v8940, %v8941
      %v8943 = vrot.slane %v8942, 2
      %v8944 = vmax.f32 %v8942, %v8943
      %v8945 = vrot.slane %v8944, 1
      %v8946 = vmax.f32 %v8944, %v8945
      %v8947 = vsel %vm4830, %v8903, -inf
      %v8948 = vsel %vm4830, %v8904, -inf
      %v8949 = vmax.f32 %v8947, %v8948
      %v8950 = vrot.slane %v8949, 4
      %v8951 = vmax.f32 %v8949, %v8950
      %v8952 = vrot.slane %v8951, 2
      %v8953 = vmax.f32 %v8951, %v8952
      %v8954 = vrot.slane %v8953, 1
      %v8955 = vmax.f32 %v8953, %v8954
      %v8956 = vsel %vm4830, %v8905, -inf
      %v8957 = vsel %vm4830, %v8906, -inf
      %v8958 = vmax.f32 %v8956, %v8957
      %v8959 = vrot.slane %v8958, 4
      %v8960 = vmax.f32 %v8958, %v8959
      %v8961 = vrot.slane %v8960, 2
      %v8962 = vmax.f32 %v8960, %v8961
      %v8963 = vrot.slane %v8962, 1
      %v8964 = vmax.f32 %v8962, %v8963
      %v8965 = vsel %vm4830, %v8907, -inf
      %v8966 = vsel %vm4830, %v8908, -inf
      %v8967 = vmax.f32 %v8965, %v8966
      %v8968 = vrot.slane %v8967, 4
      %v8969 = vmax.f32 %v8967, %v8968
      %v8970 = vrot.slane %v8969, 2
      %v8971 = vmax.f32 %v8969, %v8970
      %v8972 = vrot.slane %v8971, 1
      %v8973 = vmax.f32 %v8971, %v8972
      %v8974 = vsel %vm4830, %v8909, -inf
      %v8975 = vsel %vm4830, %v8910, -inf
      %v8976 = vmax.f32 %v8974, %v8975
      %v8977 = vrot.slane %v8976, 4
      %v8978 = vmax.f32 %v8976, %v8977
      %v8979 = vrot.slane %v8978, 2
      %v8980 = vmax.f32 %v8978, %v8979
      %v8981 = vrot.slane %v8980, 1
      %v8982 = vmax.f32 %v8980, %v8981
      %vm8983 = vcmp.eq.f32.partialorder %v8895, %v8919
      %vm8984 = vcmp.eq.f32.partialorder %v8896, %v8919
      %vm8985 = vcmp.eq.f32.partialorder %v8897, %v8928
      %vm8986 = vcmp.eq.f32.partialorder %v8898, %v8928
      %vm8987 = vcmp.eq.f32.partialorder %v8899, %v8937
      %vm8988 = vcmp.eq.f32.partialorder %v8900, %v8937
      %vm8989 = vcmp.eq.f32.partialorder %v8901, %v8946
      %vm8990 = vcmp.eq.f32.partialorder %v8902, %v8946
      %vm8991 = vcmp.eq.f32.partialorder %v8903, %v8955
      %vm8992 = vcmp.eq.f32.partialorder %v8904, %v8955
      %vm8993 = vcmp.eq.f32.partialorder %v8905, %v8964
      %vm8994 = vcmp.eq.f32.partialorder %v8906, %v8964
      %vm8995 = vcmp.eq.f32.partialorder %v8907, %v8973
      %vm8996 = vcmp.eq.f32.partialorder %v8908, %v8973
      %vm8997 = vcmp.eq.f32.partialorder %v8909, %v8982
      %vm8998 = vcmp.eq.f32.partialorder %v8910, %v8982
      %v8999 = vsel %vm8983, %v4828, 16.0
      %v9000 = vsel %vm8984, %v4829, 16.0
      %v9001 = vsel %vm8985, %v4828, 16.0
      %v9002 = vsel %vm8986, %v4829, 16.0
      %v9003 = vsel %vm8987, %v4828, 16.0
      %v9004 = vsel %vm8988, %v4829, 16.0
      %v9005 = vsel %vm8989, %v4828, 16.0
      %v9006 = vsel %vm8990, %v4829, 16.0
      %v9007 = vsel %vm8991, %v4828, 16.0
      %v9008 = vsel %vm8992, %v4829, 16.0
      %v9009 = vsel %vm8993, %v4828, 16.0
      %v9010 = vsel %vm8994, %v4829, 16.0
      %v9011 = vsel %vm8995, %v4828, 16.0
      %v9012 = vsel %vm8996, %v4829, 16.0
      %v9013 = vsel %vm8997, %v4828, 16.0
      %v9014 = vsel %vm8998, %v4829, 16.0
      %v9015 = vsel %vm4830, %v8999, inf
      %v9016 = vsel %vm4830, %v9000, inf
      %v9017 = vmin.f32 %v9015, %v9016
      %v9018 = vrot.slane %v9017, 4
      %v9019 = vmin.f32 %v9017, %v9018
      %v9020 = vrot.slane %v9019, 2
      %v9021 = vmin.f32 %v9019, %v9020
      %v9022 = vrot.slane %v9021, 1
      %v9023 = vmin.f32 %v9021, %v9022
      %v9024 = vsel %vm4830, %v9001, inf
      %v9025 = vsel %vm4830, %v9002, inf
      %v9026 = vmin.f32 %v9024, %v9025
      %v9027 = vrot.slane %v9026, 4
      %v9028 = vmin.f32 %v9026, %v9027
      %v9029 = vrot.slane %v9028, 2
      %v9030 = vmin.f32 %v9028, %v9029
      %v9031 = vrot.slane %v9030, 1
      %v9032 = vmin.f32 %v9030, %v9031
      %v9033 = vsel %vm4830, %v9003, inf
      %v9034 = vsel %vm4830, %v9004, inf
      %v9035 = vmin.f32 %v9033, %v9034
      %v9036 = vrot.slane %v9035, 4
      %v9037 = vmin.f32 %v9035, %v9036
      %v9038 = vrot.slane %v9037, 2
      %v9039 = vmin.f32 %v9037, %v9038
      %v9040 = vrot.slane %v9039, 1
      %v9041 = vmin.f32 %v9039, %v9040
      %v9042 = vsel %vm4830, %v9005, inf
      %v9043 = vsel %vm4830, %v9006, inf
      %v9044 = vmin.f32 %v9042, %v9043
      %v9045 = vrot.slane %v9044, 4
      %v9046 = vmin.f32 %v9044, %v9045
      %v9047 = vrot.slane %v9046, 2
      %v9048 = vmin.f32 %v9046, %v9047
      %v9049 = vrot.slane %v9048, 1
      %v9050 = vmin.f32 %v9048, %v9049
      %v9051 = vsel %vm4830, %v9007, inf
      %v9052 = vsel %vm4830, %v9008, inf
      %v9053 = vmin.f32 %v9051, %v9052
      %v9054 = vrot.slane %v9053, 4
      %v9055 = vmin.f32 %v9053, %v9054
      %v9056 = vrot.slane %v9055, 2
      %v9057 = vmin.f32 %v9055, %v9056
      %v9058 = vrot.slane %v9057, 1
      %v9059 = vmin.f32 %v9057, %v9058
      %v9060 = vsel %vm4830, %v9009, inf
      %v9061 = vsel %vm4830, %v9010, inf
      %v9062 = vmin.f32 %v9060, %v9061
      %v9063 = vrot.slane %v9062, 4
      %v9064 = vmin.f32 %v9062, %v9063
      %v9065 = vrot.slane %v9064, 2
      %v9066 = vmin.f32 %v9064, %v9065
      %v9067 = vrot.slane %v9066, 1
      %v9068 = vmin.f32 %v9066, %v9067
      %v9069 = vsel %vm4830, %v9011, inf
      %v9070 = vsel %vm4830, %v9012, inf
      %v9071 = vmin.f32 %v9069, %v9070
      %v9072 = vrot.slane %v9071, 4
      %v9073 = vmin.f32 %v9071, %v9072
      %v9074 = vrot.slane %v9073, 2
      %v9075 = vmin.f32 %v9073, %v9074
      %v9076 = vrot.slane %v9075, 1
      %v9077 = vmin.f32 %v9075, %v9076
      %v9078 = vsel %vm4830, %v9013, inf
      %v9079 = vsel %vm4830, %v9014, inf
      %v9080 = vmin.f32 %v9078, %v9079
      %v9081 = vrot.slane %v9080, 4
      %v9082 = vmin.f32 %v9080, %v9081
      %v9083 = vrot.slane %v9082, 2
      %v9084 = vmin.f32 %v9082, %v9083
      %v9085 = vrot.slane %v9084, 1
      %v9086 = vmin.f32 %v9084, %v9085
      %vm9087 = vcmp.eq.f32.partialorder %v4828, %v9023
      %vm9088 = vcmp.eq.f32.partialorder %v4829, %v9023
      %vm9089 = vcmp.eq.f32.partialorder %v4828, %v9032
      %vm9090 = vcmp.eq.f32.partialorder %v4829, %v9032
      %vm9091 = vcmp.eq.f32.partialorder %v4828, %v9041
      %vm9092 = vcmp.eq.f32.partialorder %v4829, %v9041
      %vm9093 = vcmp.eq.f32.partialorder %v4828, %v9050
      %vm9094 = vcmp.eq.f32.partialorder %v4829, %v9050
      %vm9095 = vcmp.eq.f32.partialorder %v4828, %v9059
      %vm9096 = vcmp.eq.f32.partialorder %v4829, %v9059
      %vm9097 = vcmp.eq.f32.partialorder %v4828, %v9068
      %vm9098 = vcmp.eq.f32.partialorder %v4829, %v9068
      %vm9099 = vcmp.eq.f32.partialorder %v4828, %v9077
      %vm9100 = vcmp.eq.f32.partialorder %v4829, %v9077
      %vm9101 = vcmp.eq.f32.partialorder %v4828, %v9086
      %vm9102 = vcmp.eq.f32.partialorder %v4829, %v9086
      %v9103 = vsel %vm9087, 1, 0
      %v9104 = vsel %vm9088, 1, 0
      %v9105 = vsel %vm9089, 1, 0
      %v9106 = vsel %vm9090, 1, 0
      %v9107 = vsel %vm9091, 1, 0
      %v9108 = vsel %vm9092, 1, 0
      %v9109 = vsel %vm9093, 1, 0
      %v9110 = vsel %vm9094, 1, 0
      %v9111 = vsel %vm9095, 1, 0
      %v9112 = vsel %vm9096, 1, 0
      %v9113 = vsel %vm9097, 1, 0
      %v9114 = vsel %vm9098, 1, 0
      %v9115 = vsel %vm9099, 1, 0
      %v9116 = vsel %vm9100, 1, 0
      %v9117 = vsel %vm9101, 1, 0
      %v9118 = vsel %vm9102, 1, 0
      %v9119 = vcvt.s32.f32 %v9103
      %v9120 = vcvt.s32.f32 %v9104
      %v9121 = vcvt.s32.f32 %v9105
      %v9122 = vcvt.s32.f32 %v9106
      %v9123 = vcvt.s32.f32 %v9107
      %v9124 = vcvt.s32.f32 %v9108
      %v9125 = vcvt.s32.f32 %v9109
      %v9126 = vcvt.s32.f32 %v9110
      %v9127 = vcvt.s32.f32 %v9111
      %v9128 = vcvt.s32.f32 %v9112
      %v9129 = vcvt.s32.f32 %v9113
      %v9130 = vcvt.s32.f32 %v9114
      %v9131 = vcvt.s32.f32 %v9115
      %v9132 = vcvt.s32.f32 %v9116
      %v9133 = vcvt.s32.f32 %v9117
      %v9134 = vcvt.s32.f32 %v9118
      %9136 = vset.pattern.permute.xlu0 0
      %9137 = vperm.xlu0 %9136, %v9119
      %v9138 = vpop.permute.xlu0 %9137
      %9141 = vset.pattern.permute.xlu0 0
      %9142 = vperm.xlu0 %9141, %v9120
      %v9143 = vpop.permute.xlu0 %9142
      %9146 = vset.pattern.permute.xlu0 0
      %9147 = vperm.xlu0 %9146, %v9121
      %v9148 = vpop.permute.xlu0 %9147
      %9151 = vset.pattern.permute.xlu0 0
      %9152 = vperm.xlu0 %9151, %v9122
      %v9153 = vpop.permute.xlu0 %9152
      %9156 = vset.pattern.permute.xlu0 0
      %9157 = vperm.xlu0 %9156, %v9123
      %v9158 = vpop.permute.xlu0 %9157
      %9161 = vset.pattern.permute.xlu0 0
      %9162 = vperm.xlu0 %9161, %v9124
      %v9163 = vpop.permute.xlu0 %9162
      %9166 = vset.pattern.permute.xlu0 0
      %9167 = vperm.xlu0 %9166, %v9125
      %v9168 = vpop.permute.xlu0 %9167
      %9171 = vset.pattern.permute.xlu0 0
      %9172 = vperm.xlu0 %9171, %v9126
      %v9173 = vpop.permute.xlu0 %9172
      %9176 = vset.pattern.permute.xlu0 0
      %9177 = vperm.xlu0 %9176, %v9127
      %v9178 = vpop.permute.xlu0 %9177
      %9181 = vset.pattern.permute.xlu0 0
      %9182 = vperm.xlu0 %9181, %v9128
      %v9183 = vpop.permute.xlu0 %9182
      %9186 = vset.pattern.permute.xlu0 0
      %9187 = vperm.xlu0 %9186, %v9129
      %v9188 = vpop.permute.xlu0 %9187
      %9191 = vset.pattern.permute.xlu0 0
      %9192 = vperm.xlu0 %9191, %v9130
      %v9193 = vpop.permute.xlu0 %9192
      %9196 = vset.pattern.permute.xlu0 0
      %9197 = vperm.xlu0 %9196, %v9131
      %v9198 = vpop.permute.xlu0 %9197
      %9201 = vset.pattern.permute.xlu0 0
      %9202 = vperm.xlu0 %9201, %v9132
      %v9203 = vpop.permute.xlu0 %9202
      %9206 = vset.pattern.permute.xlu0 0
      %9207 = vperm.xlu0 %9206, %v9133
      %v9208 = vpop.permute.xlu0 %9207
      %9211 = vset.pattern.permute.xlu0 0
      %9212 = vperm.xlu0 %9211, %v9134
      %v9213 = vpop.permute.xlu0 %9212
      %v9215 = vmul.f32 %v9138, %v4809
      %v9216 = vmul.f32 %v9143, %v4810
      %v9217 = vmul.f32 %v9148, %v4811
      %v9218 = vmul.f32 %v9153, %v4812
      %v9219 = vmul.f32 %v9158, %v4813
      %v9220 = vmul.f32 %v9163, %v4814
      %v9221 = vmul.f32 %v9168, %v4815
      %v9222 = vmul.f32 %v9173, %v4816
      %v9223 = vmul.f32 %v9178, %v4817
      %v9224 = vmul.f32 %v9183, %v4818
      %v9225 = vmul.f32 %v9188, %v4819
      %v9226 = vmul.f32 %v9193, %v4820
      %v9227 = vmul.f32 %v9198, %v4821
      %v9228 = vmul.f32 %v9203, %v4822
      %v9229 = vmul.f32 %v9208, %v4823
      %v9230 = vmul.f32 %v9213, %v4824
      %v9231 = vsel %vm622, %v9215, 0.0
      %v9232 = vsel %vm622, %v9216, 0.0
      %v9233 = vadd.f32 %v9231, %v9232
      %v9234 = vrot.slane %v9233, 4
      %v9235 = vadd.f32 %v9233, %v9234
      %v9236 = vrot.slane %v9235, 2
      %v9237 = vadd.f32 %v9235, %v9236
      %v9238 = vrot.slane %v9237, 1
      %v9239 = vadd.f32 %v9237, %v9238
      %v9240 = vsel %vm622, %v9217, 0.0
      %v9241 = vsel %vm622, %v9218, 0.0
      %v9242 = vadd.f32 %v9240, %v9241
      %v9243 = vrot.slane %v9242, 4
      %v9244 = vadd.f32 %v9242, %v9243
      %v9245 = vrot.slane %v9244, 2
      %v9246 = vadd.f32 %v9244, %v9245
      %v9247 = vrot.slane %v9246, 1
      %v9248 = vadd.f32 %v9246, %v9247
      %v9249 = vsel %vm622, %v9219, 0.0
      %v9250 = vsel %vm622, %v9220, 0.0
      %v9251 = vadd.f32 %v9249, %v9250
      %v9252 = vrot.slane %v9251, 4
      %v9253 = vadd.f32 %v9251, %v9252
      %v9254 = vrot.slane %v9253, 2
      %v9255 = vadd.f32 %v9253, %v9254
      %v9256 = vrot.slane %v9255, 1
      %v9257 = vadd.f32 %v9255, %v9256
      %v9258 = vsel %vm622, %v9221, 0.0
      %v9259 = vsel %vm622, %v9222, 0.0
      %v9260 = vadd.f32 %v9258, %v9259
      %v9261 = vrot.slane %v9260, 4
      %v9262 = vadd.f32 %v9260, %v9261
      %v9263 = vrot.slane %v9262, 2
      %v9264 = vadd.f32 %v9262, %v9263
      %v9265 = vrot.slane %v9264, 1
      %v9266 = vadd.f32 %v9264, %v9265
      %v9267 = vsel %vm622, %v9223, 0.0
      %v9268 = vsel %vm622, %v9224, 0.0
      %v9269 = vadd.f32 %v9267, %v9268
      %v9270 = vrot.slane %v9269, 4
      %v9271 = vadd.f32 %v9269, %v9270
      %v9272 = vrot.slane %v9271, 2
      %v9273 = vadd.f32 %v9271, %v9272
      %v9274 = vrot.slane %v9273, 1
      %v9275 = vadd.f32 %v9273, %v9274
      %v9276 = vsel %vm622, %v9225, 0.0
      %v9277 = vsel %vm622, %v9226, 0.0
      %v9278 = vadd.f32 %v9276, %v9277
      %v9279 = vrot.slane %v9278, 4
      %v9280 = vadd.f32 %v9278, %v9279
      %v9281 = vrot.slane %v9280, 2
      %v9282 = vadd.f32 %v9280, %v9281
      %v9283 = vrot.slane %v9282, 1
      %v9284 = vadd.f32 %v9282, %v9283
      %v9285 = vsel %vm622, %v9227, 0.0
      %v9286 = vsel %vm622, %v9228, 0.0
      %v9287 = vadd.f32 %v9285, %v9286
      %v9288 = vrot.slane %v9287, 4
      %v9289 = vadd.f32 %v9287, %v9288
      %v9290 = vrot.slane %v9289, 2
      %v9291 = vadd.f32 %v9289, %v9290
      %v9292 = vrot.slane %v9291, 1
      %v9293 = vadd.f32 %v9291, %v9292
      %v9294 = vsel %vm622, %v9229, 0.0
      %v9295 = vsel %vm622, %v9230, 0.0
      %v9296 = vadd.f32 %v9294, %v9295
      %v9297 = vrot.slane %v9296, 4
      %v9298 = vadd.f32 %v9296, %v9297
      %v9299 = vrot.slane %v9298, 2
      %v9300 = vadd.f32 %v9298, %v9299
      %v9301 = vrot.slane %v9300, 1
      %v9302 = vadd.f32 %v9300, %v9301
      %v9303 = vsel %vm9087, -1e+30, %v8895
      %v9304 = vsel %vm9088, -1e+30, %v8896
      %v9305 = vsel %vm9089, -1e+30, %v8897
      %v9306 = vsel %vm9090, -1e+30, %v8898
      %v9307 = vsel %vm9091, -1e+30, %v8899
      %v9308 = vsel %vm9092, -1e+30, %v8900
      %v9309 = vsel %vm9093, -1e+30, %v8901
      %v9310 = vsel %vm9094, -1e+30, %v8902
      %v9311 = vsel %vm9095, -1e+30, %v8903
      %v9312 = vsel %vm9096, -1e+30, %v8904
      %v9313 = vsel %vm9097, -1e+30, %v8905
      %v9314 = vsel %vm9098, -1e+30, %v8906
      %v9315 = vsel %vm9099, -1e+30, %v8907
      %v9316 = vsel %vm9100, -1e+30, %v8908
      %v9317 = vsel %vm9101, -1e+30, %v8909
      %v9318 = vsel %vm9102, -1e+30, %v8910
      %v9319 = vsel %vm4830, %v9303, -inf
      %v9320 = vsel %vm4830, %v9304, -inf
      %v9321 = vmax.f32 %v9319, %v9320
      %v9322 = vrot.slane %v9321, 4
      %v9323 = vmax.f32 %v9321, %v9322
      %v9324 = vrot.slane %v9323, 2
      %v9325 = vmax.f32 %v9323, %v9324
      %v9326 = vrot.slane %v9325, 1
      %v9327 = vmax.f32 %v9325, %v9326
      %v9328 = vsel %vm4830, %v9305, -inf
      %v9329 = vsel %vm4830, %v9306, -inf
      %v9330 = vmax.f32 %v9328, %v9329
      %v9331 = vrot.slane %v9330, 4
      %v9332 = vmax.f32 %v9330, %v9331
      %v9333 = vrot.slane %v9332, 2
      %v9334 = vmax.f32 %v9332, %v9333
      %v9335 = vrot.slane %v9334, 1
      %v9336 = vmax.f32 %v9334, %v9335
      %v9337 = vsel %vm4830, %v9307, -inf
      %v9338 = vsel %vm4830, %v9308, -inf
      %v9339 = vmax.f32 %v9337, %v9338
      %v9340 = vrot.slane %v9339, 4
      %v9341 = vmax.f32 %v9339, %v9340
      %v9342 = vrot.slane %v9341, 2
      %v9343 = vmax.f32 %v9341, %v9342
      %v9344 = vrot.slane %v9343, 1
      %v9345 = vmax.f32 %v9343, %v9344
      %v9346 = vsel %vm4830, %v9309, -inf
      %v9347 = vsel %vm4830, %v9310, -inf
      %v9348 = vmax.f32 %v9346, %v9347
      %v9349 = vrot.slane %v9348, 4
      %v9350 = vmax.f32 %v9348, %v9349
      %v9351 = vrot.slane %v9350, 2
      %v9352 = vmax.f32 %v9350, %v9351
      %v9353 = vrot.slane %v9352, 1
      %v9354 = vmax.f32 %v9352, %v9353
      %v9355 = vsel %vm4830, %v9311, -inf
      %v9356 = vsel %vm4830, %v9312, -inf
      %v9357 = vmax.f32 %v9355, %v9356
      %v9358 = vrot.slane %v9357, 4
      %v9359 = vmax.f32 %v9357, %v9358
      %v9360 = vrot.slane %v9359, 2
      %v9361 = vmax.f32 %v9359, %v9360
      %v9362 = vrot.slane %v9361, 1
      %v9363 = vmax.f32 %v9361, %v9362
      %v9364 = vsel %vm4830, %v9313, -inf
      %v9365 = vsel %vm4830, %v9314, -inf
      %v9366 = vmax.f32 %v9364, %v9365
      %v9367 = vrot.slane %v9366, 4
      %v9368 = vmax.f32 %v9366, %v9367
      %v9369 = vrot.slane %v9368, 2
      %v9370 = vmax.f32 %v9368, %v9369
      %v9371 = vrot.slane %v9370, 1
      %v9372 = vmax.f32 %v9370, %v9371
      %v9373 = vsel %vm4830, %v9315, -inf
      %v9374 = vsel %vm4830, %v9316, -inf
      %v9375 = vmax.f32 %v9373, %v9374
      %v9376 = vrot.slane %v9375, 4
      %v9377 = vmax.f32 %v9375, %v9376
      %v9378 = vrot.slane %v9377, 2
      %v9379 = vmax.f32 %v9377, %v9378
      %v9380 = vrot.slane %v9379, 1
      %v9381 = vmax.f32 %v9379, %v9380
      %v9382 = vsel %vm4830, %v9317, -inf
      %v9383 = vsel %vm4830, %v9318, -inf
      %v9384 = vmax.f32 %v9382, %v9383
      %v9385 = vrot.slane %v9384, 4
      %v9386 = vmax.f32 %v9384, %v9385
      %v9387 = vrot.slane %v9386, 2
      %v9388 = vmax.f32 %v9386, %v9387
      %v9389 = vrot.slane %v9388, 1
      %v9390 = vmax.f32 %v9388, %v9389
      %vm9391 = vcmp.eq.f32.partialorder %v9303, %v9327
      %vm9392 = vcmp.eq.f32.partialorder %v9304, %v9327
      %vm9393 = vcmp.eq.f32.partialorder %v9305, %v9336
      %vm9394 = vcmp.eq.f32.partialorder %v9306, %v9336
      %vm9395 = vcmp.eq.f32.partialorder %v9307, %v9345
      %vm9396 = vcmp.eq.f32.partialorder %v9308, %v9345
      %vm9397 = vcmp.eq.f32.partialorder %v9309, %v9354
      %vm9398 = vcmp.eq.f32.partialorder %v9310, %v9354
      %vm9399 = vcmp.eq.f32.partialorder %v9311, %v9363
      %vm9400 = vcmp.eq.f32.partialorder %v9312, %v9363
      %vm9401 = vcmp.eq.f32.partialorder %v9313, %v9372
      %vm9402 = vcmp.eq.f32.partialorder %v9314, %v9372
      %vm9403 = vcmp.eq.f32.partialorder %v9315, %v9381
      %vm9404 = vcmp.eq.f32.partialorder %v9316, %v9381
      %vm9405 = vcmp.eq.f32.partialorder %v9317, %v9390
      %vm9406 = vcmp.eq.f32.partialorder %v9318, %v9390
      %v9407 = vsel %vm9391, %v4828, 16.0
      %v9408 = vsel %vm9392, %v4829, 16.0
      %v9409 = vsel %vm9393, %v4828, 16.0
      %v9410 = vsel %vm9394, %v4829, 16.0
      %v9411 = vsel %vm9395, %v4828, 16.0
      %v9412 = vsel %vm9396, %v4829, 16.0
      %v9413 = vsel %vm9397, %v4828, 16.0
      %v9414 = vsel %vm9398, %v4829, 16.0
      %v9415 = vsel %vm9399, %v4828, 16.0
      %v9416 = vsel %vm9400, %v4829, 16.0
      %v9417 = vsel %vm9401, %v4828, 16.0
      %v9418 = vsel %vm9402, %v4829, 16.0
      %v9419 = vsel %vm9403, %v4828, 16.0
      %v9420 = vsel %vm9404, %v4829, 16.0
      %v9421 = vsel %vm9405, %v4828, 16.0
      %v9422 = vsel %vm9406, %v4829, 16.0
      %v9423 = vsel %vm4830, %v9407, inf
      %v9424 = vsel %vm4830, %v9408, inf
      %v9425 = vmin.f32 %v9423, %v9424
      %v9426 = vrot.slane %v9425, 4
      %v9427 = vmin.f32 %v9425, %v9426
      %v9428 = vrot.slane %v9427, 2
      %v9429 = vmin.f32 %v9427, %v9428
      %v9430 = vrot.slane %v9429, 1
      %v9431 = vmin.f32 %v9429, %v9430
      %v9432 = vsel %vm4830, %v9409, inf
      %v9433 = vsel %vm4830, %v9410, inf
      %v9434 = vmin.f32 %v9432, %v9433
      %v9435 = vrot.slane %v9434, 4
      %v9436 = vmin.f32 %v9434, %v9435
      %v9437 = vrot.slane %v9436, 2
      %v9438 = vmin.f32 %v9436, %v9437
      %v9439 = vrot.slane %v9438, 1
      %v9440 = vmin.f32 %v9438, %v9439
      %v9441 = vsel %vm4830, %v9411, inf
      %v9442 = vsel %vm4830, %v9412, inf
      %v9443 = vmin.f32 %v9441, %v9442
      %v9444 = vrot.slane %v9443, 4
      %v9445 = vmin.f32 %v9443, %v9444
      %v9446 = vrot.slane %v9445, 2
      %v9447 = vmin.f32 %v9445, %v9446
      %v9448 = vrot.slane %v9447, 1
      %v9449 = vmin.f32 %v9447, %v9448
      %v9450 = vsel %vm4830, %v9413, inf
      %v9451 = vsel %vm4830, %v9414, inf
      %v9452 = vmin.f32 %v9450, %v9451
      %v9453 = vrot.slane %v9452, 4
      %v9454 = vmin.f32 %v9452, %v9453
      %v9455 = vrot.slane %v9454, 2
      %v9456 = vmin.f32 %v9454, %v9455
      %v9457 = vrot.slane %v9456, 1
      %v9458 = vmin.f32 %v9456, %v9457
      %v9459 = vsel %vm4830, %v9415, inf
      %v9460 = vsel %vm4830, %v9416, inf
      %v9461 = vmin.f32 %v9459, %v9460
      %v9462 = vrot.slane %v9461, 4
      %v9463 = vmin.f32 %v9461, %v9462
      %v9464 = vrot.slane %v9463, 2
      %v9465 = vmin.f32 %v9463, %v9464
      %v9466 = vrot.slane %v9465, 1
      %v9467 = vmin.f32 %v9465, %v9466
      %v9468 = vsel %vm4830, %v9417, inf
      %v9469 = vsel %vm4830, %v9418, inf
      %v9470 = vmin.f32 %v9468, %v9469
      %v9471 = vrot.slane %v9470, 4
      %v9472 = vmin.f32 %v9470, %v9471
      %v9473 = vrot.slane %v9472, 2
      %v9474 = vmin.f32 %v9472, %v9473
      %v9475 = vrot.slane %v9474, 1
      %v9476 = vmin.f32 %v9474, %v9475
      %v9477 = vsel %vm4830, %v9419, inf
      %v9478 = vsel %vm4830, %v9420, inf
      %v9479 = vmin.f32 %v9477, %v9478
      %v9480 = vrot.slane %v9479, 4
      %v9481 = vmin.f32 %v9479, %v9480
      %v9482 = vrot.slane %v9481, 2
      %v9483 = vmin.f32 %v9481, %v9482
      %v9484 = vrot.slane %v9483, 1
      %v9485 = vmin.f32 %v9483, %v9484
      %v9486 = vsel %vm4830, %v9421, inf
      %v9487 = vsel %vm4830, %v9422, inf
      %v9488 = vmin.f32 %v9486, %v9487
      %v9489 = vrot.slane %v9488, 4
      %v9490 = vmin.f32 %v9488, %v9489
      %v9491 = vrot.slane %v9490, 2
      %v9492 = vmin.f32 %v9490, %v9491
      %v9493 = vrot.slane %v9492, 1
      %v9494 = vmin.f32 %v9492, %v9493
      %vm9495 = vcmp.eq.f32.partialorder %v4828, %v9431
      %vm9496 = vcmp.eq.f32.partialorder %v4829, %v9431
      %vm9497 = vcmp.eq.f32.partialorder %v4828, %v9440
      %vm9498 = vcmp.eq.f32.partialorder %v4829, %v9440
      %vm9499 = vcmp.eq.f32.partialorder %v4828, %v9449
      %vm9500 = vcmp.eq.f32.partialorder %v4829, %v9449
      %vm9501 = vcmp.eq.f32.partialorder %v4828, %v9458
      %vm9502 = vcmp.eq.f32.partialorder %v4829, %v9458
      %vm9503 = vcmp.eq.f32.partialorder %v4828, %v9467
      %vm9504 = vcmp.eq.f32.partialorder %v4829, %v9467
      %vm9505 = vcmp.eq.f32.partialorder %v4828, %v9476
      %vm9506 = vcmp.eq.f32.partialorder %v4829, %v9476
      %vm9507 = vcmp.eq.f32.partialorder %v4828, %v9485
      %vm9508 = vcmp.eq.f32.partialorder %v4829, %v9485
      %vm9509 = vcmp.eq.f32.partialorder %v4828, %v9494
      %vm9510 = vcmp.eq.f32.partialorder %v4829, %v9494
      %v9511 = vsel %vm9495, 1, 0
      %v9512 = vsel %vm9496, 1, 0
      %v9513 = vsel %vm9497, 1, 0
      %v9514 = vsel %vm9498, 1, 0
      %v9515 = vsel %vm9499, 1, 0
      %v9516 = vsel %vm9500, 1, 0
      %v9517 = vsel %vm9501, 1, 0
      %v9518 = vsel %vm9502, 1, 0
      %v9519 = vsel %vm9503, 1, 0
      %v9520 = vsel %vm9504, 1, 0
      %v9521 = vsel %vm9505, 1, 0
      %v9522 = vsel %vm9506, 1, 0
      %v9523 = vsel %vm9507, 1, 0
      %v9524 = vsel %vm9508, 1, 0
      %v9525 = vsel %vm9509, 1, 0
      %v9526 = vsel %vm9510, 1, 0
      %v9527 = vcvt.s32.f32 %v9511
      %v9528 = vcvt.s32.f32 %v9512
      %v9529 = vcvt.s32.f32 %v9513
      %v9530 = vcvt.s32.f32 %v9514
      %v9531 = vcvt.s32.f32 %v9515
      %v9532 = vcvt.s32.f32 %v9516
      %v9533 = vcvt.s32.f32 %v9517
      %v9534 = vcvt.s32.f32 %v9518
      %v9535 = vcvt.s32.f32 %v9519
      %v9536 = vcvt.s32.f32 %v9520
      %v9537 = vcvt.s32.f32 %v9521
      %v9538 = vcvt.s32.f32 %v9522
      %v9539 = vcvt.s32.f32 %v9523
      %v9540 = vcvt.s32.f32 %v9524
      %v9541 = vcvt.s32.f32 %v9525
      %v9542 = vcvt.s32.f32 %v9526
      %9544 = vset.pattern.permute.xlu0 0
      %9545 = vperm.xlu0 %9544, %v9527
      %v9546 = vpop.permute.xlu0 %9545
      %9549 = vset.pattern.permute.xlu0 0
      %9550 = vperm.xlu0 %9549, %v9528
      %v9551 = vpop.permute.xlu0 %9550
      %9554 = vset.pattern.permute.xlu0 0
      %9555 = vperm.xlu0 %9554, %v9529
      %v9556 = vpop.permute.xlu0 %9555
      %9559 = vset.pattern.permute.xlu0 0
      %9560 = vperm.xlu0 %9559, %v9530
      %v9561 = vpop.permute.xlu0 %9560
      %9564 = vset.pattern.permute.xlu0 0
      %9565 = vperm.xlu0 %9564, %v9531
      %v9566 = vpop.permute.xlu0 %9565
      %9569 = vset.pattern.permute.xlu0 0
      %9570 = vperm.xlu0 %9569, %v9532
      %v9571 = vpop.permute.xlu0 %9570
      %9574 = vset.pattern.permute.xlu0 0
      %9575 = vperm.xlu0 %9574, %v9533
      %v9576 = vpop.permute.xlu0 %9575
      %9579 = vset.pattern.permute.xlu0 0
      %9580 = vperm.xlu0 %9579, %v9534
      %v9581 = vpop.permute.xlu0 %9580
      %9584 = vset.pattern.permute.xlu0 0
      %9585 = vperm.xlu0 %9584, %v9535
      %v9586 = vpop.permute.xlu0 %9585
      %9589 = vset.pattern.permute.xlu0 0
      %9590 = vperm.xlu0 %9589, %v9536
      %v9591 = vpop.permute.xlu0 %9590
      %9594 = vset.pattern.permute.xlu0 0
      %9595 = vperm.xlu0 %9594, %v9537
      %v9596 = vpop.permute.xlu0 %9595
      %9599 = vset.pattern.permute.xlu0 0
      %9600 = vperm.xlu0 %9599, %v9538
      %v9601 = vpop.permute.xlu0 %9600
      %9604 = vset.pattern.permute.xlu0 0
      %9605 = vperm.xlu0 %9604, %v9539
      %v9606 = vpop.permute.xlu0 %9605
      %9609 = vset.pattern.permute.xlu0 0
      %9610 = vperm.xlu0 %9609, %v9540
      %v9611 = vpop.permute.xlu0 %9610
      %9614 = vset.pattern.permute.xlu0 0
      %9615 = vperm.xlu0 %9614, %v9541
      %v9616 = vpop.permute.xlu0 %9615
      %9619 = vset.pattern.permute.xlu0 0
      %9620 = vperm.xlu0 %9619, %v9542
      %v9621 = vpop.permute.xlu0 %9620
      %v9623 = vmul.f32 %v9546, %v4809
      %v9624 = vmul.f32 %v9551, %v4810
      %v9625 = vmul.f32 %v9556, %v4811
      %v9626 = vmul.f32 %v9561, %v4812
      %v9627 = vmul.f32 %v9566, %v4813
      %v9628 = vmul.f32 %v9571, %v4814
      %v9629 = vmul.f32 %v9576, %v4815
      %v9630 = vmul.f32 %v9581, %v4816
      %v9631 = vmul.f32 %v9586, %v4817
      %v9632 = vmul.f32 %v9591, %v4818
      %v9633 = vmul.f32 %v9596, %v4819
      %v9634 = vmul.f32 %v9601, %v4820
      %v9635 = vmul.f32 %v9606, %v4821
      %v9636 = vmul.f32 %v9611, %v4822
      %v9637 = vmul.f32 %v9616, %v4823
      %v9638 = vmul.f32 %v9621, %v4824
      %v9639 = vsel %vm622, %v9623, 0.0
      %v9640 = vsel %vm622, %v9624, 0.0
      %v9641 = vadd.f32 %v9639, %v9640
      %v9642 = vrot.slane %v9641, 4
      %v9643 = vadd.f32 %v9641, %v9642
      %v9644 = vrot.slane %v9643, 2
      %v9645 = vadd.f32 %v9643, %v9644
      %v9646 = vrot.slane %v9645, 1
      %v9647 = vadd.f32 %v9645, %v9646
      %v9648 = vsel %vm622, %v9625, 0.0
      %v9649 = vsel %vm622, %v9626, 0.0
      %v9650 = vadd.f32 %v9648, %v9649
      %v9651 = vrot.slane %v9650, 4
      %v9652 = vadd.f32 %v9650, %v9651
      %v9653 = vrot.slane %v9652, 2
      %v9654 = vadd.f32 %v9652, %v9653
      %v9655 = vrot.slane %v9654, 1
      %v9656 = vadd.f32 %v9654, %v9655
      %v9657 = vsel %vm622, %v9627, 0.0
      %v9658 = vsel %vm622, %v9628, 0.0
      %v9659 = vadd.f32 %v9657, %v9658
      %v9660 = vrot.slane %v9659, 4
      %v9661 = vadd.f32 %v9659, %v9660
      %v9662 = vrot.slane %v9661, 2
      %v9663 = vadd.f32 %v9661, %v9662
      %v9664 = vrot.slane %v9663, 1
      %v9665 = vadd.f32 %v9663, %v9664
      %v9666 = vsel %vm622, %v9629, 0.0
      %v9667 = vsel %vm622, %v9630, 0.0
      %v9668 = vadd.f32 %v9666, %v9667
      %v9669 = vrot.slane %v9668, 4
      %v9670 = vadd.f32 %v9668, %v9669
      %v9671 = vrot.slane %v9670, 2
      %v9672 = vadd.f32 %v9670, %v9671
      %v9673 = vrot.slane %v9672, 1
      %v9674 = vadd.f32 %v9672, %v9673
      %v9675 = vsel %vm622, %v9631, 0.0
      %v9676 = vsel %vm622, %v9632, 0.0
      %v9677 = vadd.f32 %v9675, %v9676
      %v9678 = vrot.slane %v9677, 4
      %v9679 = vadd.f32 %v9677, %v9678
      %v9680 = vrot.slane %v9679, 2
      %v9681 = vadd.f32 %v9679, %v9680
      %v9682 = vrot.slane %v9681, 1
      %v9683 = vadd.f32 %v9681, %v9682
      %v9684 = vsel %vm622, %v9633, 0.0
      %v9685 = vsel %vm622, %v9634, 0.0
      %v9686 = vadd.f32 %v9684, %v9685
      %v9687 = vrot.slane %v9686, 4
      %v9688 = vadd.f32 %v9686, %v9687
      %v9689 = vrot.slane %v9688, 2
      %v9690 = vadd.f32 %v9688, %v9689
      %v9691 = vrot.slane %v9690, 1
      %v9692 = vadd.f32 %v9690, %v9691
      %v9693 = vsel %vm622, %v9635, 0.0
      %v9694 = vsel %vm622, %v9636, 0.0
      %v9695 = vadd.f32 %v9693, %v9694
      %v9696 = vrot.slane %v9695, 4
      %v9697 = vadd.f32 %v9695, %v9696
      %v9698 = vrot.slane %v9697, 2
      %v9699 = vadd.f32 %v9697, %v9698
      %v9700 = vrot.slane %v9699, 1
      %v9701 = vadd.f32 %v9699, %v9700
      %v9702 = vsel %vm622, %v9637, 0.0
      %v9703 = vsel %vm622, %v9638, 0.0
      %v9704 = vadd.f32 %v9702, %v9703
      %v9705 = vrot.slane %v9704, 4
      %v9706 = vadd.f32 %v9704, %v9705
      %v9707 = vrot.slane %v9706, 2
      %v9708 = vadd.f32 %v9706, %v9707
      %v9709 = vrot.slane %v9708, 1
      %v9710 = vadd.f32 %v9708, %v9709
      %v9711 = vmax.f32 %v5159, %v5567
      %v9712 = vmax.f32 %v5168, %v5576
      %v9713 = vmax.f32 %v5177, %v5585
      %v9714 = vmax.f32 %v5186, %v5594
      %v9715 = vmax.f32 %v5195, %v5603
      %v9716 = vmax.f32 %v5204, %v5612
      %v9717 = vmax.f32 %v5213, %v5621
      %v9718 = vmax.f32 %v5222, %v5630
      %v9719 = vmax.f32 %v5975, %v6383
      %v9720 = vmax.f32 %v5984, %v6392
      %v9721 = vmax.f32 %v5993, %v6401
      %v9722 = vmax.f32 %v6002, %v6410
      %v9723 = vmax.f32 %v6011, %v6419
      %v9724 = vmax.f32 %v6020, %v6428
      %v9725 = vmax.f32 %v6029, %v6437
      %v9726 = vmax.f32 %v6038, %v6446
      %v9727 = vmax.f32 %v6791, %v7199
      %v9728 = vmax.f32 %v6800, %v7208
      %v9729 = vmax.f32 %v6809, %v7217
      %v9730 = vmax.f32 %v6818, %v7226
      %v9731 = vmax.f32 %v6827, %v7235
      %v9732 = vmax.f32 %v6836, %v7244
      %v9733 = vmax.f32 %v6845, %v7253
      %v9734 = vmax.f32 %v6854, %v7262
      %v9735 = vmax.f32 %v7607, %v8015
      %v9736 = vmax.f32 %v7616, %v8024
      %v9737 = vmax.f32 %v7625, %v8033
      %v9738 = vmax.f32 %v7634, %v8042
      %v9739 = vmax.f32 %v7643, %v8051
      %v9740 = vmax.f32 %v7652, %v8060
      %v9741 = vmax.f32 %v7661, %v8069
      %v9742 = vmax.f32 %v7670, %v8078
      %v9743 = vmax.f32 %v8423, %v8831
      %v9744 = vmax.f32 %v8432, %v8840
      %v9745 = vmax.f32 %v8441, %v8849
      %v9746 = vmax.f32 %v8450, %v8858
      %v9747 = vmax.f32 %v8459, %v8867
      %v9748 = vmax.f32 %v8468, %v8876
      %v9749 = vmax.f32 %v8477, %v8885
      %v9750 = vmax.f32 %v8486, %v8894
      %v9751 = vmax.f32 %v9239, %v9647
      %v9752 = vmax.f32 %v9248, %v9656
      %v9753 = vmax.f32 %v9257, %v9665
      %v9754 = vmax.f32 %v9266, %v9674
      %v9755 = vmax.f32 %v9275, %v9683
      %v9756 = vmax.f32 %v9284, %v9692
      %v9757 = vmax.f32 %v9293, %v9701
      %v9758 = vmax.f32 %v9302, %v9710
      %v9759 = vld [vmem:[%s13] sm:$0x1]
      %v9760 = vld [vmem:[%s15] sm:$0x1]
      %v9761 = vld [vmem:[%s12] sm:$0xff]
      %v9762 = vld [vmem:[%s12 + $0x8] sm:$0xff]
      %vm9771 = vcmask 1041409
      %v9772 = vsel %vm9771, %v9712, %v9711
      %vm9773 = vcmask 1042434
      %v9774 = vsel %vm9773, %v9713, %v9772
      %vm9775 = vcmask 1043459
      %v9776 = vsel %vm9775, %v9714, %v9774
      %vm9777 = vcmask 1044484
      %v9778 = vsel %vm9777, %v9715, %v9776
      %vm9779 = vcmask 1045509
      %v9780 = vsel %vm9779, %v9716, %v9778
      %vm9781 = vcmask 1046534
      %v9782 = vsel %vm9781, %v9717, %v9780
      %vm9783 = vcmask 1047559
      %v9784 = vsel %vm9783, %v9718, %v9782
      %v9785 = vsel %vm622, %v9784, 0
      %9787 = vmatprep.subr.mxu0 0.0
      %9788 = vmatpush1.msra.mxu0 %v9761
      %9789 = vmatprep.subr.mxu0 0.0
      %9790 = vmatpush1.msra.mxu0 %v9762
      %9791 = vmatprep.subr.mxu0 0.0
      %9792 = vmatpush1.msra.mxu0 0.0
      %9793 = vmatprep.subr.mxu0 0.0
      %9794 = vmatpush1.msra.mxu0 0.0
      %9795 = vmatprep.subr.mxu0 0.0
      %9796 = vmatpush1.msra.mxu0 0.0
      %9797 = vmatprep.subr.mxu0 0.0
      %9798 = vmatpush1.msra.mxu0 0.0
      %9799 = vmatprep.subr.mxu0 0.0
      %9800 = vmatpush1.msra.mxu0 0.0
      %9801 = vmatprep.subr.mxu0 0.0
      %9802 = vmatpush1.msra.mxu0 0.0
      %9803 = vmatprep.subr.mxu0 0.0
      %9804 = vmatpush1.msra.mxu0 0.0
      %9805 = vmatprep.subr.mxu0 0.0
      %9806 = vmatpush1.msra.mxu0 0.0
      %9807 = vmatprep.subr.mxu0 0.0
      %9808 = vmatpush1.msra.mxu0 0.0
      %9809 = vmatprep.subr.mxu0 0.0
      %9810 = vmatpush1.msra.mxu0 0.0
      %9811 = vmatprep.subr.mxu0 0.0
      %9812 = vmatpush1.msra.mxu0 0.0
      %9813 = vmatprep.subr.mxu0 0.0
      %9814 = vmatpush1.msra.mxu0 0.0
      %9815 = vmatprep.subr.mxu0 0.0
      %9816 = vmatpush1.msra.mxu0 0.0
      %9817 = vmatprep.subr.mxu0 0.0
      %9818 = vmatpush1.msra.mxu0 0.0
      %9819 = vmatprep.subr.mxu0 0.0
      %9820 = vmatpush1.msra.mxu0 0.0
      %9821 = vmatprep.subr.mxu0 0.0
      %9822 = vmatpush1.msra.mxu0 0.0
      %9823 = vmatprep.subr.mxu0 0.0
      %9824 = vmatpush1.msra.mxu0 0.0
      %9825 = vmatprep.subr.mxu0 0.0
      %9826 = vmatpush1.msra.mxu0 0.0
      %9827 = vmatprep.subr.mxu0 0.0
      %9828 = vmatpush1.msra.mxu0 0.0
      %9829 = vmatprep.subr.mxu0 0.0
      %9830 = vmatpush1.msra.mxu0 0.0
      %9831 = vmatprep.subr.mxu0 0.0
      %9832 = vmatpush1.msra.mxu0 0.0
      %9833 = vmatprep.subr.mxu0 0.0
      %9834 = vmatpush1.msra.mxu0 0.0
      %9835 = vmatprep.subr.mxu0 0.0
      %9836 = vmatpush1.msra.mxu0 0.0
      %9837 = vmatprep.subr.mxu0 0.0
      %9838 = vmatpush1.msra.mxu0 0.0
      %9839 = vmatprep.subr.mxu0 0.0
      %9840 = vmatpush1.msra.mxu0 0.0
      %9841 = vmatprep.subr.mxu0 0.0
      %9842 = vmatpush1.msra.mxu0 0.0
      %9843 = vmatprep.subr.mxu0 0.0
      %9844 = vmatpush1.msra.mxu0 0.0
      %9845 = vmatprep.subr.mxu0 0.0
      %9846 = vmatpush1.msra.mxu0 0.0
      %9847 = vmatprep.subr.mxu0 0.0
      %9848 = vmatpush1.msra.mxu0 0.0
      %9849 = vmatprep.subr.mxu0 0.0
      %9850 = vmatpush1.msra.mxu0 0.0
      %9851 = vmatprep.mubr.f32.mxu0 0.0
      %9852 = vmatmul.mubr.f32.gmra.mrb[0].mxu0 %v9785
      %v9853 = vpop.f32.mrb[0].mxu0
      %v9854 = vadd.f32 0.0, %v9853
      %v9855 = vpop.f32.mrb[0].mxu0
      %9856 = vdwg.mxu0
      %v9858 = vlaneseq
      %v9859 = vshrl.u32 %v9858, 7
      %v9860 = vsub.s32 0, %v9859
      %v9861 = vrot.slane %v9759, %v9860
      %v9863 = vadd.f32 %v9861, %v9854
      %v9864 = vld [vmem:[%s12 + $0x10] sm:$0xff]
      %v9865 = vld [vmem:[%s12 + $0x18] sm:$0xff]
      %v9874 = vsel %vm9771, %v9720, %v9719
      %v9875 = vsel %vm9773, %v9721, %v9874
      %v9876 = vsel %vm9775, %v9722, %v9875
      %v9877 = vsel %vm9777, %v9723, %v9876
      %v9878 = vsel %vm9779, %v9724, %v9877
      %v9879 = vsel %vm9781, %v9725, %v9878
      %v9880 = vsel %vm9783, %v9726, %v9879
      %v9881 = vsel %vm622, %v9880, 0
      %9883 = vmatprep.subr.mxu0 0.0
      %9884 = vmatpush1.msra.mxu0 %v9864
      %9885 = vmatprep.subr.mxu0 0.0
      %9886 = vmatpush1.msra.mxu0 %v9865
      %9887 = vmatprep.subr.mxu0 0.0
      %9888 = vmatpush1.msra.mxu0 0.0
      %9889 = vmatprep.subr.mxu0 0.0
      %9890 = vmatpush1.msra.mxu0 0.0
      %9891 = vmatprep.subr.mxu0 0.0
      %9892 = vmatpush1.msra.mxu0 0.0
      %9893 = vmatprep.subr.mxu0 0.0
      %9894 = vmatpush1.msra.mxu0 0.0
      %9895 = vmatprep.subr.mxu0 0.0
      %9896 = vmatpush1.msra.mxu0 0.0
      %9897 = vmatprep.subr.mxu0 0.0
      %9898 = vmatpush1.msra.mxu0 0.0
      %9899 = vmatprep.subr.mxu0 0.0
      %9900 = vmatpush1.msra.mxu0 0.0
      %9901 = vmatprep.subr.mxu0 0.0
      %9902 = vmatpush1.msra.mxu0 0.0
      %9903 = vmatprep.subr.mxu0 0.0
      %9904 = vmatpush1.msra.mxu0 0.0
      %9905 = vmatprep.subr.mxu0 0.0
      %9906 = vmatpush1.msra.mxu0 0.0
      %9907 = vmatprep.subr.mxu0 0.0
      %9908 = vmatpush1.msra.mxu0 0.0
      %9909 = vmatprep.subr.mxu0 0.0
      %9910 = vmatpush1.msra.mxu0 0.0
      %9911 = vmatprep.subr.mxu0 0.0
      %9912 = vmatpush1.msra.mxu0 0.0
      %9913 = vmatprep.subr.mxu0 0.0
      %9914 = vmatpush1.msra.mxu0 0.0
      %9915 = vmatprep.subr.mxu0 0.0
      %9916 = vmatpush1.msra.mxu0 0.0
      %9917 = vmatprep.subr.mxu0 0.0
      %9918 = vmatpush1.msra.mxu0 0.0
      %9919 = vmatprep.subr.mxu0 0.0
      %9920 = vmatpush1.msra.mxu0 0.0
      %9921 = vmatprep.subr.mxu0 0.0
      %9922 = vmatpush1.msra.mxu0 0.0
      %9923 = vmatprep.subr.mxu0 0.0
      %9924 = vmatpush1.msra.mxu0 0.0
      %9925 = vmatprep.subr.mxu0 0.0
      %9926 = vmatpush1.msra.mxu0 0.0
      %9927 = vmatprep.subr.mxu0 0.0
      %9928 = vmatpush1.msra.mxu0 0.0
      %9929 = vmatprep.subr.mxu0 0.0
      %9930 = vmatpush1.msra.mxu0 0.0
      %9931 = vmatprep.subr.mxu0 0.0
      %9932 = vmatpush1.msra.mxu0 0.0
      %9933 = vmatprep.subr.mxu0 0.0
      %9934 = vmatpush1.msra.mxu0 0.0
      %9935 = vmatprep.subr.mxu0 0.0
      %9936 = vmatpush1.msra.mxu0 0.0
      %9937 = vmatprep.subr.mxu0 0.0
      %9938 = vmatpush1.msra.mxu0 0.0
      %9939 = vmatprep.subr.mxu0 0.0
      %9940 = vmatpush1.msra.mxu0 0.0
      %9941 = vmatprep.subr.mxu0 0.0
      %9942 = vmatpush1.msra.mxu0 0.0
      %9943 = vmatprep.subr.mxu0 0.0
      %9944 = vmatpush1.msra.mxu0 0.0
      %9945 = vmatprep.subr.mxu0 0.0
      %9946 = vmatpush1.msra.mxu0 0.0
      %9947 = vmatprep.mubr.f32.mxu0 0.0
      %9948 = vmatmul.mubr.f32.gmra.mrb[0].mxu0 %v9881
      %v9949 = vpop.f32.mrb[0].mxu0
      %v9950 = vadd.f32 0.0, %v9949
      %v9951 = vpop.f32.mrb[0].mxu0
      %9952 = vdwg.mxu0
      %v9953 = vadd.f32 %v9863, %v9950
      %v9954 = vld [vmem:[%s12 + $0x20] sm:$0xff]
      %v9955 = vld [vmem:[%s12 + $0x28] sm:$0xff]
      %v9964 = vsel %vm9771, %v9728, %v9727
      %v9965 = vsel %vm9773, %v9729, %v9964
      %v9966 = vsel %vm9775, %v9730, %v9965
      %v9967 = vsel %vm9777, %v9731, %v9966
      %v9968 = vsel %vm9779, %v9732, %v9967
      %v9969 = vsel %vm9781, %v9733, %v9968
      %v9970 = vsel %vm9783, %v9734, %v9969
      %v9971 = vsel %vm622, %v9970, 0
      %9973 = vmatprep.subr.mxu0 0.0
      %9974 = vmatpush1.msra.mxu0 %v9954
      %9975 = vmatprep.subr.mxu0 0.0
      %9976 = vmatpush1.msra.mxu0 %v9955
      %9977 = vmatprep.subr.mxu0 0.0
      %9978 = vmatpush1.msra.mxu0 0.0
      %9979 = vmatprep.subr.mxu0 0.0
      %9980 = vmatpush1.msra.mxu0 0.0
      %9981 = vmatprep.subr.mxu0 0.0
      %9982 = vmatpush1.msra.mxu0 0.0
      %9983 = vmatprep.subr.mxu0 0.0
      %9984 = vmatpush1.msra.mxu0 0.0
      %9985 = vmatprep.subr.mxu0 0.0
      %9986 = vmatpush1.msra.mxu0 0.0
      %9987 = vmatprep.subr.mxu0 0.0
      %9988 = vmatpush1.msra.mxu0 0.0
      %9989 = vmatprep.subr.mxu0 0.0
      %9990 = vmatpush1.msra.mxu0 0.0
      %9991 = vmatprep.subr.mxu0 0.0
      %9992 = vmatpush1.msra.mxu0 0.0
      %9993 = vmatprep.subr.mxu0 0.0
      %9994 = vmatpush1.msra.mxu0 0.0
      %9995 = vmatprep.subr.mxu0 0.0
      %9996 = vmatpush1.msra.mxu0 0.0
      %9997 = vmatprep.subr.mxu0 0.0
      %9998 = vmatpush1.msra.mxu0 0.0
      %9999 = vmatprep.subr.mxu0 0.0
      %10000 = vmatpush1.msra.mxu0 0.0
      %10001 = vmatprep.subr.mxu0 0.0
      %10002 = vmatpush1.msra.mxu0 0.0
      %10003 = vmatprep.subr.mxu0 0.0
      %10004 = vmatpush1.msra.mxu0 0.0
      %10005 = vmatprep.subr.mxu0 0.0
      %10006 = vmatpush1.msra.mxu0 0.0
      %10007 = vmatprep.subr.mxu0 0.0
      %10008 = vmatpush1.msra.mxu0 0.0
      %10009 = vmatprep.subr.mxu0 0.0
      %10010 = vmatpush1.msra.mxu0 0.0
      %10011 = vmatprep.subr.mxu0 0.0
      %10012 = vmatpush1.msra.mxu0 0.0
      %10013 = vmatprep.subr.mxu0 0.0
      %10014 = vmatpush1.msra.mxu0 0.0
      %10015 = vmatprep.subr.mxu0 0.0
      %10016 = vmatpush1.msra.mxu0 0.0
      %10017 = vmatprep.subr.mxu0 0.0
      %10018 = vmatpush1.msra.mxu0 0.0
      %10019 = vmatprep.subr.mxu0 0.0
      %10020 = vmatpush1.msra.mxu0 0.0
      %10021 = vmatprep.subr.mxu0 0.0
      %10022 = vmatpush1.msra.mxu0 0.0
      %10023 = vmatprep.subr.mxu0 0.0
      %10024 = vmatpush1.msra.mxu0 0.0
      %10025 = vmatprep.subr.mxu0 0.0
      %10026 = vmatpush1.msra.mxu0 0.0
      %10027 = vmatprep.subr.mxu0 0.0
      %10028 = vmatpush1.msra.mxu0 0.0
      %10029 = vmatprep.subr.mxu0 0.0
      %10030 = vmatpush1.msra.mxu0 0.0
      %10031 = vmatprep.subr.mxu0 0.0
      %10032 = vmatpush1.msra.mxu0 0.0
      %10033 = vmatprep.subr.mxu0 0.0
      %10034 = vmatpush1.msra.mxu0 0.0
      %10035 = vmatprep.subr.mxu0 0.0
      %10036 = vmatpush1.msra.mxu0 0.0
      %10037 = vmatprep.mubr.f32.mxu0 0.0
      %10038 = vmatmul.mubr.f32.gmra.mrb[0].mxu0 %v9971
      %v10039 = vpop.f32.mrb[0].mxu0
      %v10040 = vadd.f32 0.0, %v10039
      %v10041 = vpop.f32.mrb[0].mxu0
      %10042 = vdwg.mxu0
      %v10043 = vadd.f32 %v9953, %v10040
      %v10044 = vld [vmem:[%s12 + $0x30] sm:$0xff]
      %v10045 = vld [vmem:[%s12 + $0x38] sm:$0xff]
      %v10054 = vsel %vm9771, %v9736, %v9735
      %v10055 = vsel %vm9773, %v9737, %v10054
      %v10056 = vsel %vm9775, %v9738, %v10055
      %v10057 = vsel %vm9777, %v9739, %v10056
      %v10058 = vsel %vm9779, %v9740, %v10057
      %v10059 = vsel %vm9781, %v9741, %v10058
      %v10060 = vsel %vm9783, %v9742, %v10059
      %v10061 = vsel %vm622, %v10060, 0
      %10063 = vmatprep.subr.mxu0 0.0
      %10064 = vmatpush1.msra.mxu0 %v10044
      %10065 = vmatprep.subr.mxu0 0.0
      %10066 = vmatpush1.msra.mxu0 %v10045
      %10067 = vmatprep.subr.mxu0 0.0
      %10068 = vmatpush1.msra.mxu0 0.0
      %10069 = vmatprep.subr.mxu0 0.0
      %10070 = vmatpush1.msra.mxu0 0.0
      %10071 = vmatprep.subr.mxu0 0.0
      %10072 = vmatpush1.msra.mxu0 0.0
      %10073 = vmatprep.subr.mxu0 0.0
      %10074 = vmatpush1.msra.mxu0 0.0
      %10075 = vmatprep.subr.mxu0 0.0
      %10076 = vmatpush1.msra.mxu0 0.0
      %10077 = vmatprep.subr.mxu0 0.0
      %10078 = vmatpush1.msra.mxu0 0.0
      %10079 = vmatprep.subr.mxu0 0.0
      %10080 = vmatpush1.msra.mxu0 0.0
      %10081 = vmatprep.subr.mxu0 0.0
      %10082 = vmatpush1.msra.mxu0 0.0
      %10083 = vmatprep.subr.mxu0 0.0
      %10084 = vmatpush1.msra.mxu0 0.0
      %10085 = vmatprep.subr.mxu0 0.0
      %10086 = vmatpush1.msra.mxu0 0.0
      %10087 = vmatprep.subr.mxu0 0.0
      %10088 = vmatpush1.msra.mxu0 0.0
      %10089 = vmatprep.subr.mxu0 0.0
      %10090 = vmatpush1.msra.mxu0 0.0
      %10091 = vmatprep.subr.mxu0 0.0
      %10092 = vmatpush1.msra.mxu0 0.0
      %10093 = vmatprep.subr.mxu0 0.0
      %10094 = vmatpush1.msra.mxu0 0.0
      %10095 = vmatprep.subr.mxu0 0.0
      %10096 = vmatpush1.msra.mxu0 0.0
      %10097 = vmatprep.subr.mxu0 0.0
      %10098 = vmatpush1.msra.mxu0 0.0
      %10099 = vmatprep.subr.mxu0 0.0
      %10100 = vmatpush1.msra.mxu0 0.0
      %10101 = vmatprep.subr.mxu0 0.0
      %10102 = vmatpush1.msra.mxu0 0.0
      %10103 = vmatprep.subr.mxu0 0.0
      %10104 = vmatpush1.msra.mxu0 0.0
      %10105 = vmatprep.subr.mxu0 0.0
      %10106 = vmatpush1.msra.mxu0 0.0
      %10107 = vmatprep.subr.mxu0 0.0
      %10108 = vmatpush1.msra.mxu0 0.0
      %10109 = vmatprep.subr.mxu0 0.0
      %10110 = vmatpush1.msra.mxu0 0.0
      %10111 = vmatprep.subr.mxu0 0.0
      %10112 = vmatpush1.msra.mxu0 0.0
      %10113 = vmatprep.subr.mxu0 0.0
      %10114 = vmatpush1.msra.mxu0 0.0
      %10115 = vmatprep.subr.mxu0 0.0
      %10116 = vmatpush1.msra.mxu0 0.0
      %10117 = vmatprep.subr.mxu0 0.0
      %10118 = vmatpush1.msra.mxu0 0.0
      %10119 = vmatprep.subr.mxu0 0.0
      %10120 = vmatpush1.msra.mxu0 0.0
      %10121 = vmatprep.subr.mxu0 0.0
      %10122 = vmatpush1.msra.mxu0 0.0
      %10123 = vmatprep.subr.mxu0 0.0
      %10124 = vmatpush1.msra.mxu0 0.0
      %10125 = vmatprep.subr.mxu0 0.0
      %10126 = vmatpush1.msra.mxu0 0.0
      %10127 = vmatprep.mubr.f32.mxu0 0.0
      %10128 = vmatmul.mubr.f32.gmra.mrb[0].mxu0 %v10061
      %v10129 = vpop.f32.mrb[0].mxu0
      %v10130 = vadd.f32 0.0, %v10129
      %v10131 = vpop.f32.mrb[0].mxu0
      %10132 = vdwg.mxu0
      %v10133 = vadd.f32 %v10043, %v10130
      %v10134 = vld [vmem:[%s12 + $0x40] sm:$0xff]
      %v10135 = vld [vmem:[%s12 + $0x48] sm:$0xff]
      %v10144 = vsel %vm9771, %v9744, %v9743
      %v10145 = vsel %vm9773, %v9745, %v10144
      %v10146 = vsel %vm9775, %v9746, %v10145
      %v10147 = vsel %vm9777, %v9747, %v10146
      %v10148 = vsel %vm9779, %v9748, %v10147
      %v10149 = vsel %vm9781, %v9749, %v10148
      %v10150 = vsel %vm9783, %v9750, %v10149
      %v10151 = vsel %vm622, %v10150, 0
      %10153 = vmatprep.subr.mxu0 0.0
      %10154 = vmatpush1.msra.mxu0 %v10134
      %10155 = vmatprep.subr.mxu0 0.0
      %10156 = vmatpush1.msra.mxu0 %v10135
      %10157 = vmatprep.subr.mxu0 0.0
      %10158 = vmatpush1.msra.mxu0 0.0
      %10159 = vmatprep.subr.mxu0 0.0
      %10160 = vmatpush1.msra.mxu0 0.0
      %10161 = vmatprep.subr.mxu0 0.0
      %10162 = vmatpush1.msra.mxu0 0.0
      %10163 = vmatprep.subr.mxu0 0.0
      %10164 = vmatpush1.msra.mxu0 0.0
      %10165 = vmatprep.subr.mxu0 0.0
      %10166 = vmatpush1.msra.mxu0 0.0
      %10167 = vmatprep.subr.mxu0 0.0
      %10168 = vmatpush1.msra.mxu0 0.0
      %10169 = vmatprep.subr.mxu0 0.0
      %10170 = vmatpush1.msra.mxu0 0.0
      %10171 = vmatprep.subr.mxu0 0.0
      %10172 = vmatpush1.msra.mxu0 0.0
      %10173 = vmatprep.subr.mxu0 0.0
      %10174 = vmatpush1.msra.mxu0 0.0
      %10175 = vmatprep.subr.mxu0 0.0
      %10176 = vmatpush1.msra.mxu0 0.0
      %10177 = vmatprep.subr.mxu0 0.0
      %10178 = vmatpush1.msra.mxu0 0.0
      %10179 = vmatprep.subr.mxu0 0.0
      %10180 = vmatpush1.msra.mxu0 0.0
      %10181 = vmatprep.subr.mxu0 0.0
      %10182 = vmatpush1.msra.mxu0 0.0
      %10183 = vmatprep.subr.mxu0 0.0
      %10184 = vmatpush1.msra.mxu0 0.0
      %10185 = vmatprep.subr.mxu0 0.0
      %10186 = vmatpush1.msra.mxu0 0.0
      %10187 = vmatprep.subr.mxu0 0.0
      %10188 = vmatpush1.msra.mxu0 0.0
      %10189 = vmatprep.subr.mxu0 0.0
      %10190 = vmatpush1.msra.mxu0 0.0
      %10191 = vmatprep.subr.mxu0 0.0
      %10192 = vmatpush1.msra.mxu0 0.0
      %10193 = vmatprep.subr.mxu0 0.0
      %10194 = vmatpush1.msra.mxu0 0.0
      %10195 = vmatprep.subr.mxu0 0.0
      %10196 = vmatpush1.msra.mxu0 0.0
      %10197 = vmatprep.subr.mxu0 0.0
      %10198 = vmatpush1.msra.mxu0 0.0
      %10199 = vmatprep.subr.mxu0 0.0
      %10200 = vmatpush1.msra.mxu0 0.0
      %10201 = vmatprep.subr.mxu0 0.0
      %10202 = vmatpush1.msra.mxu0 0.0
      %10203 = vmatprep.subr.mxu0 0.0
      %10204 = vmatpush1.msra.mxu0 0.0
      %10205 = vmatprep.subr.mxu0 0.0
      %10206 = vmatpush1.msra.mxu0 0.0
      %10207 = vmatprep.subr.mxu0 0.0
      %10208 = vmatpush1.msra.mxu0 0.0
      %10209 = vmatprep.subr.mxu0 0.0
      %10210 = vmatpush1.msra.mxu0 0.0
      %10211 = vmatprep.subr.mxu0 0.0
      %10212 = vmatpush1.msra.mxu0 0.0
      %10213 = vmatprep.subr.mxu0 0.0
      %10214 = vmatpush1.msra.mxu0 0.0
      %10215 = vmatprep.subr.mxu0 0.0
      %10216 = vmatpush1.msra.mxu0 0.0
      %10217 = vmatprep.mubr.f32.mxu0 0.0
      %10218 = vmatmul.mubr.f32.gmra.mrb[0].mxu0 %v10151
      %v10219 = vpop.f32.mrb[0].mxu0
      %v10220 = vadd.f32 0.0, %v10219
      %v10221 = vpop.f32.mrb[0].mxu0
      %10222 = vdwg.mxu0
      %v10223 = vadd.f32 %v10133, %v10220
      %v10224 = vmax.f32 %v10223, 0.0
      %v10225 = vld [vmem:[%s14] sm:$0xff]
      %v10226 = vld [vmem:[%s14 + $0x8] sm:$0xff]
      %v10227 = vld [vmem:[%s14 + $0x10] sm:$0xff]
      %v10228 = vld [vmem:[%s14 + $0x18] sm:$0xff]
      %v10230 = vsel %vm1637, %v10224, 0
      %10232 = vmatprep.subr.mxu0 0.0
      %10233 = vmatpush1.msra.mxu0 %v10225
      %10234 = vmatprep.subr.mxu0 0.0
      %10235 = vmatpush1.msra.mxu0 %v10226
      %10236 = vmatprep.subr.mxu0 0.0
      %10237 = vmatpush1.msra.mxu0 %v10227
      %10238 = vmatprep.subr.mxu0 0.0
      %10239 = vmatpush1.msra.mxu0 %v10228
      %10240 = vmatprep.subr.mxu0 0.0
      %10241 = vmatpush1.msra.mxu0 0.0
      %10242 = vmatprep.subr.mxu0 0.0
      %10243 = vmatpush1.msra.mxu0 0.0
      %10244 = vmatprep.subr.mxu0 0.0
      %10245 = vmatpush1.msra.mxu0 0.0
      %10246 = vmatprep.subr.mxu0 0.0
      %10247 = vmatpush1.msra.mxu0 0.0
      %10248 = vmatprep.subr.mxu0 0.0
      %10249 = vmatpush1.msra.mxu0 0.0
      %10250 = vmatprep.subr.mxu0 0.0
      %10251 = vmatpush1.msra.mxu0 0.0
      %10252 = vmatprep.subr.mxu0 0.0
      %10253 = vmatpush1.msra.mxu0 0.0
      %10254 = vmatprep.subr.mxu0 0.0
      %10255 = vmatpush1.msra.mxu0 0.0
      %10256 = vmatprep.subr.mxu0 0.0
      %10257 = vmatpush1.msra.mxu0 0.0
      %10258 = vmatprep.subr.mxu0 0.0
      %10259 = vmatpush1.msra.mxu0 0.0
      %10260 = vmatprep.subr.mxu0 0.0
      %10261 = vmatpush1.msra.mxu0 0.0
      %10262 = vmatprep.subr.mxu0 0.0
      %10263 = vmatpush1.msra.mxu0 0.0
      %10264 = vmatprep.subr.mxu0 0.0
      %10265 = vmatpush1.msra.mxu0 0.0
      %10266 = vmatprep.subr.mxu0 0.0
      %10267 = vmatpush1.msra.mxu0 0.0
      %10268 = vmatprep.subr.mxu0 0.0
      %10269 = vmatpush1.msra.mxu0 0.0
      %10270 = vmatprep.subr.mxu0 0.0
      %10271 = vmatpush1.msra.mxu0 0.0
      %10272 = vmatprep.subr.mxu0 0.0
      %10273 = vmatpush1.msra.mxu0 0.0
      %10274 = vmatprep.subr.mxu0 0.0
      %10275 = vmatpush1.msra.mxu0 0.0
      %10276 = vmatprep.subr.mxu0 0.0
      %10277 = vmatpush1.msra.mxu0 0.0
      %10278 = vmatprep.subr.mxu0 0.0
      %10279 = vmatpush1.msra.mxu0 0.0
      %10280 = vmatprep.subr.mxu0 0.0
      %10281 = vmatpush1.msra.mxu0 0.0
      %10282 = vmatprep.subr.mxu0 0.0
      %10283 = vmatpush1.msra.mxu0 0.0
      %10284 = vmatprep.subr.mxu0 0.0
      %10285 = vmatpush1.msra.mxu0 0.0
      %10286 = vmatprep.subr.mxu0 0.0
      %10287 = vmatpush1.msra.mxu0 0.0
      %10288 = vmatprep.subr.mxu0 0.0
      %10289 = vmatpush1.msra.mxu0 0.0
      %10290 = vmatprep.subr.mxu0 0.0
      %10291 = vmatpush1.msra.mxu0 0.0
      %10292 = vmatprep.subr.mxu0 0.0
      %10293 = vmatpush1.msra.mxu0 0.0
      %10294 = vmatprep.subr.mxu0 0.0
      %10295 = vmatpush1.msra.mxu0 0.0
      %10296 = vmatprep.mubr.f32.mxu0 0.0
      %10297 = vmatmul.mubr.f32.gmra.mrb[0].mxu0 %v10230
      %v10298 = vpop.f32.mrb[0].mxu0
      %v10299 = vadd.f32 0.0, %v10298
      %v10300 = vpop.f32.mrb[0].mxu0
      %10301 = vdwg.mxu0
      %v10303 = vlaneseq
      %v10304 = vshrl.u32 %v10303, 7
      %v10305 = vsub.s32 0, %v10304
      %v10306 = vrot.slane %v9760, %v10305
      %v10308 = vadd.f32 %v10306, %v10299
      %10309 = vmatprep.subr.mxu0 0.0
      %10310 = vmatpush1.msra.mxu0 %v9761
      %10311 = vmatprep.subr.mxu0 0.0
      %10312 = vmatpush1.msra.mxu0 %v9762
      %10313 = vmatprep.subr.mxu0 0.0
      %10314 = vmatpush1.msra.mxu0 0.0
      %10315 = vmatprep.subr.mxu0 0.0
      %10316 = vmatpush1.msra.mxu0 0.0
      %10317 = vmatprep.subr.mxu0 0.0
      %10318 = vmatpush1.msra.mxu0 0.0
      %10319 = vmatprep.subr.mxu0 0.0
      %10320 = vmatpush1.msra.mxu0 0.0
      %10321 = vmatprep.subr.mxu0 0.0
      %10322 = vmatpush1.msra.mxu0 0.0
      %10323 = vmatprep.subr.mxu0 0.0
      %10324 = vmatpush1.msra.mxu0 0.0
      %10325 = vmatprep.subr.mxu0 0.0
      %10326 = vmatpush1.msra.mxu0 0.0
      %10327 = vmatprep.subr.mxu0 0.0
      %10328 = vmatpush1.msra.mxu0 0.0
      %10329 = vmatprep.subr.mxu0 0.0
      %10330 = vmatpush1.msra.mxu0 0.0
      %10331 = vmatprep.subr.mxu0 0.0
      %10332 = vmatpush1.msra.mxu0 0.0
      %10333 = vmatprep.subr.mxu0 0.0
      %10334 = vmatpush1.msra.mxu0 0.0
      %10335 = vmatprep.subr.mxu0 0.0
      %10336 = vmatpush1.msra.mxu0 0.0
      %10337 = vmatprep.subr.mxu0 0.0
      %10338 = vmatpush1.msra.mxu0 0.0
      %10339 = vmatprep.subr.mxu0 0.0
      %10340 = vmatpush1.msra.mxu0 0.0
      %10341 = vmatprep.subr.mxu0 0.0
      %10342 = vmatpush1.msra.mxu0 0.0
      %10343 = vmatprep.subr.mxu0 0.0
      %10344 = vmatpush1.msra.mxu0 0.0
      %10345 = vmatprep.subr.mxu0 0.0
      %10346 = vmatpush1.msra.mxu0 0.0
      %10347 = vmatprep.subr.mxu0 0.0
      %10348 = vmatpush1.msra.mxu0 0.0
      %10349 = vmatprep.subr.mxu0 0.0
      %10350 = vmatpush1.msra.mxu0 0.0
      %10351 = vmatprep.subr.mxu0 0.0
      %10352 = vmatpush1.msra.mxu0 0.0
      %10353 = vmatprep.subr.mxu0 0.0
      %10354 = vmatpush1.msra.mxu0 0.0
      %10355 = vmatprep.subr.mxu0 0.0
      %10356 = vmatpush1.msra.mxu0 0.0
      %10357 = vmatprep.subr.mxu0 0.0
      %10358 = vmatpush1.msra.mxu0 0.0
      %10359 = vmatprep.subr.mxu0 0.0
      %10360 = vmatpush1.msra.mxu0 0.0
      %10361 = vmatprep.subr.mxu0 0.0
      %10362 = vmatpush1.msra.mxu0 0.0
      %10363 = vmatprep.subr.mxu0 0.0
      %10364 = vmatpush1.msra.mxu0 0.0
      %10365 = vmatprep.subr.mxu0 0.0
      %10366 = vmatpush1.msra.mxu0 0.0
      %10367 = vmatprep.subr.mxu0 0.0
      %10368 = vmatpush1.msra.mxu0 0.0
      %10369 = vmatprep.subr.mxu0 0.0
      %10370 = vmatpush1.msra.mxu0 0.0
      %10371 = vmatprep.subr.mxu0 0.0
      %10372 = vmatpush1.msra.mxu0 0.0
      %10373 = vmatprep.mubr.f32.mxu0 0.0
      %10374 = vmatmul.mubr.f32.gmra.mrb[0].mxu0 %v9881
      %v10375 = vpop.f32.mrb[0].mxu0
      %v10376 = vadd.f32 0.0, %v10375
      %v10377 = vpop.f32.mrb[0].mxu0
      %10378 = vdwg.mxu0
      %v10379 = vadd.f32 %v9861, %v10376
      %10380 = vmatprep.subr.mxu0 0.0
      %10381 = vmatpush1.msra.mxu0 %v9864
      %10382 = vmatprep.subr.mxu0 0.0
      %10383 = vmatpush1.msra.mxu0 %v9865
      %10384 = vmatprep.subr.mxu0 0.0
      %10385 = vmatpush1.msra.mxu0 0.0
      %10386 = vmatprep.subr.mxu0 0.0
      %10387 = vmatpush1.msra.mxu0 0.0
      %10388 = vmatprep.subr.mxu0 0.0
      %10389 = vmatpush1.msra.mxu0 0.0
      %10390 = vmatprep.subr.mxu0 0.0
      %10391 = vmatpush1.msra.mxu0 0.0
      %10392 = vmatprep.subr.mxu0 0.0
      %10393 = vmatpush1.msra.mxu0 0.0
      %10394 = vmatprep.subr.mxu0 0.0
      %10395 = vmatpush1.msra.mxu0 0.0
      %10396 = vmatprep.subr.mxu0 0.0
      %10397 = vmatpush1.msra.mxu0 0.0
      %10398 = vmatprep.subr.mxu0 0.0
      %10399 = vmatpush1.msra.mxu0 0.0
      %10400 = vmatprep.subr.mxu0 0.0
      %10401 = vmatpush1.msra.mxu0 0.0
      %10402 = vmatprep.subr.mxu0 0.0
      %10403 = vmatpush1.msra.mxu0 0.0
      %10404 = vmatprep.subr.mxu0 0.0
      %10405 = vmatpush1.msra.mxu0 0.0
      %10406 = vmatprep.subr.mxu0 0.0
      %10407 = vmatpush1.msra.mxu0 0.0
      %10408 = vmatprep.subr.mxu0 0.0
      %10409 = vmatpush1.msra.mxu0 0.0
      %10410 = vmatprep.subr.mxu0 0.0
      %10411 = vmatpush1.msra.mxu0 0.0
      %10412 = vmatprep.subr.mxu0 0.0
      %10413 = vmatpush1.msra.mxu0 0.0
      %10414 = vmatprep.subr.mxu0 0.0
      %10415 = vmatpush1.msra.mxu0 0.0
      %10416 = vmatprep.subr.mxu0 0.0
      %10417 = vmatpush1.msra.mxu0 0.0
      %10418 = vmatprep.subr.mxu0 0.0
      %10419 = vmatpush1.msra.mxu0 0.0
      %10420 = vmatprep.subr.mxu0 0.0
      %10421 = vmatpush1.msra.mxu0 0.0
      %10422 = vmatprep.subr.mxu0 0.0
      %10423 = vmatpush1.msra.mxu0 0.0
      %10424 = vmatprep.subr.mxu0 0.0
      %10425 = vmatpush1.msra.mxu0 0.0
      %10426 = vmatprep.subr.mxu0 0.0
      %10427 = vmatpush1.msra.mxu0 0.0
      %10428 = vmatprep.subr.mxu0 0.0
      %10429 = vmatpush1.msra.mxu0 0.0
      %10430 = vmatprep.subr.mxu0 0.0
      %10431 = vmatpush1.msra.mxu0 0.0
      %10432 = vmatprep.subr.mxu0 0.0
      %10433 = vmatpush1.msra.mxu0 0.0
      %10434 = vmatprep.subr.mxu0 0.0
      %10435 = vmatpush1.msra.mxu0 0.0
      %10436 = vmatprep.subr.mxu0 0.0
      %10437 = vmatpush1.msra.mxu0 0.0
      %10438 = vmatprep.subr.mxu0 0.0
      %10439 = vmatpush1.msra.mxu0 0.0
      %10440 = vmatprep.subr.mxu0 0.0
      %10441 = vmatpush1.msra.mxu0 0.0
      %10442 = vmatprep.subr.mxu0 0.0
      %10443 = vmatpush1.msra.mxu0 0.0
      %10444 = vmatprep.mubr.f32.mxu0 0.0
      %10445 = vmatmul.mubr.f32.gmra.mrb[0].mxu0 %v9971
      %v10446 = vpop.f32.mrb[0].mxu0
      %v10447 = vadd.f32 0.0, %v10446
      %v10448 = vpop.f32.mrb[0].mxu0
      %10449 = vdwg.mxu0
      %v10450 = vadd.f32 %v10379, %v10447
      %10451 = vmatprep.subr.mxu0 0.0
      %10452 = vmatpush1.msra.mxu0 %v9954
      %10453 = vmatprep.subr.mxu0 0.0
      %10454 = vmatpush1.msra.mxu0 %v9955
      %10455 = vmatprep.subr.mxu0 0.0
      %10456 = vmatpush1.msra.mxu0 0.0
      %10457 = vmatprep.subr.mxu0 0.0
      %10458 = vmatpush1.msra.mxu0 0.0
      %10459 = vmatprep.subr.mxu0 0.0
      %10460 = vmatpush1.msra.mxu0 0.0
      %10461 = vmatprep.subr.mxu0 0.0
      %10462 = vmatpush1.msra.mxu0 0.0
      %10463 = vmatprep.subr.mxu0 0.0
      %10464 = vmatpush1.msra.mxu0 0.0
      %10465 = vmatprep.subr.mxu0 0.0
      %10466 = vmatpush1.msra.mxu0 0.0
      %10467 = vmatprep.subr.mxu0 0.0
      %10468 = vmatpush1.msra.mxu0 0.0
      %10469 = vmatprep.subr.mxu0 0.0
      %10470 = vmatpush1.msra.mxu0 0.0
      %10471 = vmatprep.subr.mxu0 0.0
      %10472 = vmatpush1.msra.mxu0 0.0
      %10473 = vmatprep.subr.mxu0 0.0
      %10474 = vmatpush1.msra.mxu0 0.0
      %10475 = vmatprep.subr.mxu0 0.0
      %10476 = vmatpush1.msra.mxu0 0.0
      %10477 = vmatprep.subr.mxu0 0.0
      %10478 = vmatpush1.msra.mxu0 0.0
      %10479 = vmatprep.subr.mxu0 0.0
      %10480 = vmatpush1.msra.mxu0 0.0
      %10481 = vmatprep.subr.mxu0 0.0
      %10482 = vmatpush1.msra.mxu0 0.0
      %10483 = vmatprep.subr.mxu0 0.0
      %10484 = vmatpush1.msra.mxu0 0.0
      %10485 = vmatprep.subr.mxu0 0.0
      %10486 = vmatpush1.msra.mxu0 0.0
      %10487 = vmatprep.subr.mxu0 0.0
      %10488 = vmatpush1.msra.mxu0 0.0
      %10489 = vmatprep.subr.mxu0 0.0
      %10490 = vmatpush1.msra.mxu0 0.0
      %10491 = vmatprep.subr.mxu0 0.0
      %10492 = vmatpush1.msra.mxu0 0.0
      %10493 = vmatprep.subr.mxu0 0.0
      %10494 = vmatpush1.msra.mxu0 0.0
      %10495 = vmatprep.subr.mxu0 0.0
      %10496 = vmatpush1.msra.mxu0 0.0
      %10497 = vmatprep.subr.mxu0 0.0
      %10498 = vmatpush1.msra.mxu0 0.0
      %10499 = vmatprep.subr.mxu0 0.0
      %10500 = vmatpush1.msra.mxu0 0.0
      %10501 = vmatprep.subr.mxu0 0.0
      %10502 = vmatpush1.msra.mxu0 0.0
      %10503 = vmatprep.subr.mxu0 0.0
      %10504 = vmatpush1.msra.mxu0 0.0
      %10505 = vmatprep.subr.mxu0 0.0
      %10506 = vmatpush1.msra.mxu0 0.0
      %10507 = vmatprep.subr.mxu0 0.0
      %10508 = vmatpush1.msra.mxu0 0.0
      %10509 = vmatprep.subr.mxu0 0.0
      %10510 = vmatpush1.msra.mxu0 0.0
      %10511 = vmatprep.subr.mxu0 0.0
      %10512 = vmatpush1.msra.mxu0 0.0
      %10513 = vmatprep.subr.mxu0 0.0
      %10514 = vmatpush1.msra.mxu0 0.0
      %10515 = vmatprep.mubr.f32.mxu0 0.0
      %10516 = vmatmul.mubr.f32.gmra.mrb[0].mxu0 %v10061
      %v10517 = vpop.f32.mrb[0].mxu0
      %v10518 = vadd.f32 0.0, %v10517
      %v10519 = vpop.f32.mrb[0].mxu0
      %10520 = vdwg.mxu0
      %v10521 = vadd.f32 %v10450, %v10518
      %10522 = vmatprep.subr.mxu0 0.0
      %10523 = vmatpush1.msra.mxu0 %v10044
      %10524 = vmatprep.subr.mxu0 0.0
      %10525 = vmatpush1.msra.mxu0 %v10045
      %10526 = vmatprep.subr.mxu0 0.0
      %10527 = vmatpush1.msra.mxu0 0.0
      %10528 = vmatprep.subr.mxu0 0.0
      %10529 = vmatpush1.msra.mxu0 0.0
      %10530 = vmatprep.subr.mxu0 0.0
      %10531 = vmatpush1.msra.mxu0 0.0
      %10532 = vmatprep.subr.mxu0 0.0
      %10533 = vmatpush1.msra.mxu0 0.0
      %10534 = vmatprep.subr.mxu0 0.0
      %10535 = vmatpush1.msra.mxu0 0.0
      %10536 = vmatprep.subr.mxu0 0.0
      %10537 = vmatpush1.msra.mxu0 0.0
      %10538 = vmatprep.subr.mxu0 0.0
      %10539 = vmatpush1.msra.mxu0 0.0
      %10540 = vmatprep.subr.mxu0 0.0
      %10541 = vmatpush1.msra.mxu0 0.0
      %10542 = vmatprep.subr.mxu0 0.0
      %10543 = vmatpush1.msra.mxu0 0.0
      %10544 = vmatprep.subr.mxu0 0.0
      %10545 = vmatpush1.msra.mxu0 0.0
      %10546 = vmatprep.subr.mxu0 0.0
      %10547 = vmatpush1.msra.mxu0 0.0
      %10548 = vmatprep.subr.mxu0 0.0
      %10549 = vmatpush1.msra.mxu0 0.0
      %10550 = vmatprep.subr.mxu0 0.0
      %10551 = vmatpush1.msra.mxu0 0.0
      %10552 = vmatprep.subr.mxu0 0.0
      %10553 = vmatpush1.msra.mxu0 0.0
      %10554 = vmatprep.subr.mxu0 0.0
      %10555 = vmatpush1.msra.mxu0 0.0
      %10556 = vmatprep.subr.mxu0 0.0
      %10557 = vmatpush1.msra.mxu0 0.0
      %10558 = vmatprep.subr.mxu0 0.0
      %10559 = vmatpush1.msra.mxu0 0.0
      %10560 = vmatprep.subr.mxu0 0.0
      %10561 = vmatpush1.msra.mxu0 0.0
      %10562 = vmatprep.subr.mxu0 0.0
      %10563 = vmatpush1.msra.mxu0 0.0
      %10564 = vmatprep.subr.mxu0 0.0
      %10565 = vmatpush1.msra.mxu0 0.0
      %10566 = vmatprep.subr.mxu0 0.0
      %10567 = vmatpush1.msra.mxu0 0.0
      %10568 = vmatprep.subr.mxu0 0.0
      %10569 = vmatpush1.msra.mxu0 0.0
      %10570 = vmatprep.subr.mxu0 0.0
      %10571 = vmatpush1.msra.mxu0 0.0
      %10572 = vmatprep.subr.mxu0 0.0
      %10573 = vmatpush1.msra.mxu0 0.0
      %10574 = vmatprep.subr.mxu0 0.0
      %10575 = vmatpush1.msra.mxu0 0.0
      %10576 = vmatprep.subr.mxu0 0.0
      %10577 = vmatpush1.msra.mxu0 0.0
      %10578 = vmatprep.subr.mxu0 0.0
      %10579 = vmatpush1.msra.mxu0 0.0
      %10580 = vmatprep.subr.mxu0 0.0
      %10581 = vmatpush1.msra.mxu0 0.0
      %10582 = vmatprep.subr.mxu0 0.0
      %10583 = vmatpush1.msra.mxu0 0.0
      %10584 = vmatprep.subr.mxu0 0.0
      %10585 = vmatpush1.msra.mxu0 0.0
      %10586 = vmatprep.mubr.f32.mxu0 0.0
      %10587 = vmatmul.mubr.f32.gmra.mrb[0].mxu0 %v10151
      %v10588 = vpop.f32.mrb[0].mxu0
      %v10589 = vadd.f32 0.0, %v10588
      %v10590 = vpop.f32.mrb[0].mxu0
      %10591 = vdwg.mxu0
      %v10592 = vadd.f32 %v10521, %v10589
      %v10601 = vsel %vm9771, %v9752, %v9751
      %v10602 = vsel %vm9773, %v9753, %v10601
      %v10603 = vsel %vm9775, %v9754, %v10602
      %v10604 = vsel %vm9777, %v9755, %v10603
      %v10605 = vsel %vm9779, %v9756, %v10604
      %v10606 = vsel %vm9781, %v9757, %v10605
      %v10607 = vsel %vm9783, %v9758, %v10606
      %v10608 = vsel %vm622, %v10607, 0
      %10610 = vmatprep.subr.mxu0 0.0
      %10611 = vmatpush1.msra.mxu0 %v10134
      %10612 = vmatprep.subr.mxu0 0.0
      %10613 = vmatpush1.msra.mxu0 %v10135
      %10614 = vmatprep.subr.mxu0 0.0
      %10615 = vmatpush1.msra.mxu0 0.0
      %10616 = vmatprep.subr.mxu0 0.0
      %10617 = vmatpush1.msra.mxu0 0.0
      %10618 = vmatprep.subr.mxu0 0.0
      %10619 = vmatpush1.msra.mxu0 0.0
      %10620 = vmatprep.subr.mxu0 0.0
      %10621 = vmatpush1.msra.mxu0 0.0
      %10622 = vmatprep.subr.mxu0 0.0
      %10623 = vmatpush1.msra.mxu0 0.0
      %10624 = vmatprep.subr.mxu0 0.0
      %10625 = vmatpush1.msra.mxu0 0.0
      %10626 = vmatprep.subr.mxu0 0.0
      %10627 = vmatpush1.msra.mxu0 0.0
      %10628 = vmatprep.subr.mxu0 0.0
      %10629 = vmatpush1.msra.mxu0 0.0
      %10630 = vmatprep.subr.mxu0 0.0
      %10631 = vmatpush1.msra.mxu0 0.0
      %10632 = vmatprep.subr.mxu0 0.0
      %10633 = vmatpush1.msra.mxu0 0.0
      %10634 = vmatprep.subr.mxu0 0.0
      %10635 = vmatpush1.msra.mxu0 0.0
      %10636 = vmatprep.subr.mxu0 0.0
      %10637 = vmatpush1.msra.mxu0 0.0
      %10638 = vmatprep.subr.mxu0 0.0
      %10639 = vmatpush1.msra.mxu0 0.0
      %10640 = vmatprep.subr.mxu0 0.0
      %10641 = vmatpush1.msra.mxu0 0.0
      %10642 = vmatprep.subr.mxu0 0.0
      %10643 = vmatpush1.msra.mxu0 0.0
      %10644 = vmatprep.subr.mxu0 0.0
      %10645 = vmatpush1.msra.mxu0 0.0
      %10646 = vmatprep.subr.mxu0 0.0
      %10647 = vmatpush1.msra.mxu0 0.0
      %10648 = vmatprep.subr.mxu0 0.0
      %10649 = vmatpush1.msra.mxu0 0.0
      %10650 = vmatprep.subr.mxu0 0.0
      %10651 = vmatpush1.msra.mxu0 0.0
      %10652 = vmatprep.subr.mxu0 0.0
      %10653 = vmatpush1.msra.mxu0 0.0
      %10654 = vmatprep.subr.mxu0 0.0
      %10655 = vmatpush1.msra.mxu0 0.0
      %10656 = vmatprep.subr.mxu0 0.0
      %10657 = vmatpush1.msra.mxu0 0.0
      %10658 = vmatprep.subr.mxu0 0.0
      %10659 = vmatpush1.msra.mxu0 0.0
      %10660 = vmatprep.subr.mxu0 0.0
      %10661 = vmatpush1.msra.mxu0 0.0
      %10662 = vmatprep.subr.mxu0 0.0
      %10663 = vmatpush1.msra.mxu0 0.0
      %10664 = vmatprep.subr.mxu0 0.0
      %10665 = vmatpush1.msra.mxu0 0.0
      %10666 = vmatprep.subr.mxu0 0.0
      %10667 = vmatpush1.msra.mxu0 0.0
      %10668 = vmatprep.subr.mxu0 0.0
      %10669 = vmatpush1.msra.mxu0 0.0
      %10670 = vmatprep.subr.mxu0 0.0
      %10671 = vmatpush1.msra.mxu0 0.0
      %10672 = vmatprep.subr.mxu0 0.0
      %10673 = vmatpush1.msra.mxu0 0.0
      %10674 = vmatprep.mubr.f32.mxu0 0.0
      %10675 = vmatmul.mubr.f32.gmra.mrb[0].mxu0 %v10608
      %v10676 = vpop.f32.mrb[0].mxu0
      %v10677 = vadd.f32 0.0, %v10676
      %v10678 = vpop.f32.mrb[0].mxu0
      %10679 = vdwg.mxu0
      %v10680 = vadd.f32 %v10592, %v10677
      %v10681 = vmax.f32 %v10680, 0.0
      %v10682 = vld [vmem:[%s14 + $0x20] sm:$0xff]
      %v10683 = vld [vmem:[%s14 + $0x28] sm:$0xff]
      %v10684 = vld [vmem:[%s14 + $0x30] sm:$0xff]
      %v10685 = vld [vmem:[%s14 + $0x38] sm:$0xff]
      %v10687 = vsel %vm1637, %v10681, 0
      %10689 = vmatprep.subr.mxu0 0.0
      %10690 = vmatpush1.msra.mxu0 %v10682
      %10691 = vmatprep.subr.mxu0 0.0
      %10692 = vmatpush1.msra.mxu0 %v10683
      %10693 = vmatprep.subr.mxu0 0.0
      %10694 = vmatpush1.msra.mxu0 %v10684
      %10695 = vmatprep.subr.mxu0 0.0
      %10696 = vmatpush1.msra.mxu0 %v10685
      %10697 = vmatprep.subr.mxu0 0.0
      %10698 = vmatpush1.msra.mxu0 0.0
      %10699 = vmatprep.subr.mxu0 0.0
      %10700 = vmatpush1.msra.mxu0 0.0
      %10701 = vmatprep.subr.mxu0 0.0
      %10702 = vmatpush1.msra.mxu0 0.0
      %10703 = vmatprep.subr.mxu0 0.0
      %10704 = vmatpush1.msra.mxu0 0.0
      %10705 = vmatprep.subr.mxu0 0.0
      %10706 = vmatpush1.msra.mxu0 0.0
      %10707 = vmatprep.subr.mxu0 0.0
      %10708 = vmatpush1.msra.mxu0 0.0
      %10709 = vmatprep.subr.mxu0 0.0
      %10710 = vmatpush1.msra.mxu0 0.0
      %10711 = vmatprep.subr.mxu0 0.0
      %10712 = vmatpush1.msra.mxu0 0.0
      %10713 = vmatprep.subr.mxu0 0.0
      %10714 = vmatpush1.msra.mxu0 0.0
      %10715 = vmatprep.subr.mxu0 0.0
      %10716 = vmatpush1.msra.mxu0 0.0
      %10717 = vmatprep.subr.mxu0 0.0
      %10718 = vmatpush1.msra.mxu0 0.0
      %10719 = vmatprep.subr.mxu0 0.0
      %10720 = vmatpush1.msra.mxu0 0.0
      %10721 = vmatprep.subr.mxu0 0.0
      %10722 = vmatpush1.msra.mxu0 0.0
      %10723 = vmatprep.subr.mxu0 0.0
      %10724 = vmatpush1.msra.mxu0 0.0
      %10725 = vmatprep.subr.mxu0 0.0
      %10726 = vmatpush1.msra.mxu0 0.0
      %10727 = vmatprep.subr.mxu0 0.0
      %10728 = vmatpush1.msra.mxu0 0.0
      %10729 = vmatprep.subr.mxu0 0.0
      %10730 = vmatpush1.msra.mxu0 0.0
      %10731 = vmatprep.subr.mxu0 0.0
      %10732 = vmatpush1.msra.mxu0 0.0
      %10733 = vmatprep.subr.mxu0 0.0
      %10734 = vmatpush1.msra.mxu0 0.0
      %10735 = vmatprep.subr.mxu0 0.0
      %10736 = vmatpush1.msra.mxu0 0.0
      %10737 = vmatprep.subr.mxu0 0.0
      %10738 = vmatpush1.msra.mxu0 0.0
      %10739 = vmatprep.subr.mxu0 0.0
      %10740 = vmatpush1.msra.mxu0 0.0
      %10741 = vmatprep.subr.mxu0 0.0
      %10742 = vmatpush1.msra.mxu0 0.0
      %10743 = vmatprep.subr.mxu0 0.0
      %10744 = vmatpush1.msra.mxu0 0.0
      %10745 = vmatprep.subr.mxu0 0.0
      %10746 = vmatpush1.msra.mxu0 0.0
      %10747 = vmatprep.subr.mxu0 0.0
      %10748 = vmatpush1.msra.mxu0 0.0
      %10749 = vmatprep.subr.mxu0 0.0
      %10750 = vmatpush1.msra.mxu0 0.0
      %10751 = vmatprep.subr.mxu0 0.0
      %10752 = vmatpush1.msra.mxu0 0.0
      %10753 = vmatprep.mubr.f32.mxu0 0.0
      %10754 = vmatmul.mubr.f32.gmra.mrb[0].mxu0 %v10687
      %v10755 = vpop.f32.mrb[0].mxu0
      %v10756 = vadd.f32 0.0, %v10755
      %v10757 = vpop.f32.mrb[0].mxu0
      %10758 = vdwg.mxu0
      %v10759 = vadd.f32 %v10308, %v10756
      %v10760 = vmax.f32 %v10759, 0.0
      %v10761 = vld [vmem:[%s16] sm:$0xff]
      %v10762 = vld [vmem:[%s16 + $0x8] sm:$0xff]
      %v10763 = vld [vmem:[%s16 + $0x10] sm:$0xff]
      %v10764 = vld [vmem:[%s16 + $0x18] sm:$0xff]
      %v10765 = vld [vmem:[%s17] sm:$0x1]
      %v10767 = vlaneseq
      %v10768 = vshrl.u32 %v10767, 7
      %v10769 = vsub.s32 0, %v10768
      %v10770 = vrot.slane %v10765, %v10769
      %v10773 = vsel %vm1637, %v10760, 0
      %10775 = vmatprep.subr.mxu0 0.0
      %10776 = vmatpush1.msra.mxu0 %v10761
      %10777 = vmatprep.subr.mxu0 0.0
      %10778 = vmatpush1.msra.mxu0 %v10762
      %10779 = vmatprep.subr.mxu0 0.0
      %10780 = vmatpush1.msra.mxu0 %v10763
      %10781 = vmatprep.subr.mxu0 0.0
      %10782 = vmatpush1.msra.mxu0 %v10764
      %10783 = vmatprep.subr.mxu0 0.0
      %10784 = vmatpush1.msra.mxu0 0.0
      %10785 = vmatprep.subr.mxu0 0.0
      %10786 = vmatpush1.msra.mxu0 0.0
      %10787 = vmatprep.subr.mxu0 0.0
      %10788 = vmatpush1.msra.mxu0 0.0
      %10789 = vmatprep.subr.mxu0 0.0
      %10790 = vmatpush1.msra.mxu0 0.0
      %10791 = vmatprep.subr.mxu0 0.0
      %10792 = vmatpush1.msra.mxu0 0.0
      %10793 = vmatprep.subr.mxu0 0.0
      %10794 = vmatpush1.msra.mxu0 0.0
      %10795 = vmatprep.subr.mxu0 0.0
      %10796 = vmatpush1.msra.mxu0 0.0
      %10797 = vmatprep.subr.mxu0 0.0
      %10798 = vmatpush1.msra.mxu0 0.0
      %10799 = vmatprep.subr.mxu0 0.0
      %10800 = vmatpush1.msra.mxu0 0.0
      %10801 = vmatprep.subr.mxu0 0.0
      %10802 = vmatpush1.msra.mxu0 0.0
      %10803 = vmatprep.subr.mxu0 0.0
      %10804 = vmatpush1.msra.mxu0 0.0
      %10805 = vmatprep.subr.mxu0 0.0
      %10806 = vmatpush1.msra.mxu0 0.0
      %10807 = vmatprep.subr.mxu0 0.0
      %10808 = vmatpush1.msra.mxu0 0.0
      %10809 = vmatprep.subr.mxu0 0.0
      %10810 = vmatpush1.msra.mxu0 0.0
      %10811 = vmatprep.subr.mxu0 0.0
      %10812 = vmatpush1.msra.mxu0 0.0
      %10813 = vmatprep.subr.mxu0 0.0
      %10814 = vmatpush1.msra.mxu0 0.0
      %10815 = vmatprep.subr.mxu0 0.0
      %10816 = vmatpush1.msra.mxu0 0.0
      %10817 = vmatprep.subr.mxu0 0.0
      %10818 = vmatpush1.msra.mxu0 0.0
      %10819 = vmatprep.subr.mxu0 0.0
      %10820 = vmatpush1.msra.mxu0 0.0
      %10821 = vmatprep.subr.mxu0 0.0
      %10822 = vmatpush1.msra.mxu0 0.0
      %10823 = vmatprep.subr.mxu0 0.0
      %10824 = vmatpush1.msra.mxu0 0.0
      %10825 = vmatprep.subr.mxu0 0.0
      %10826 = vmatpush1.msra.mxu0 0.0
      %10827 = vmatprep.subr.mxu0 0.0
      %10828 = vmatpush1.msra.mxu0 0.0
      %10829 = vmatprep.subr.mxu0 0.0
      %10830 = vmatpush1.msra.mxu0 0.0
      %10831 = vmatprep.subr.mxu0 0.0
      %10832 = vmatpush1.msra.mxu0 0.0
      %10833 = vmatprep.subr.mxu0 0.0
      %10834 = vmatpush1.msra.mxu0 0.0
      %10835 = vmatprep.subr.mxu0 0.0
      %10836 = vmatpush1.msra.mxu0 0.0
      %10837 = vmatprep.subr.mxu0 0.0
      %10838 = vmatpush1.msra.mxu0 0.0
      %10839 = vmatprep.mubr.f32.mxu0 0.0
      %10840 = vmatmul.mubr.f32.gmra.mrb[0].mxu0 %v10773
      %v10841 = vpop.f32.mrb[0].mxu0
      %v10842 = vadd.f32 %v10770, %v10841
      %v10843 = vpop.f32.mrb[0].mxu0
      %10844 = vdwg.mxu0
      %vm10845 = vcmask 15360
      %v10846 = vsel %vm10845, %v10842, -inf
      %10847 = vmax.xlane.f32.xlu0 %v10846
      %v10848 = vpop.xlane.xlu0 %10847
      %v10849 = vsub.f32 %v10842, %v10848
      %v10850 = vmul.f32 %v10849, 1.442695
      %v10851 = vpow.pop %v10850
      %v10852 = vsel %vm10845, %v10851, 0.0
      %10853 = vadd.xlane.f32.xlu0 %v10852
      %v10854 = vpop.xlane.xlu0 %10853
      %v10855 = vlog2.pop %v10854
      %v10856 = vmul.f32 %v10855, 0.6931472
      %v10857 = vsub.f32 %v10849, %v10856
      %v10858 = vsel %vm10845, %v10857, 0.0
      %10859 = vst [vmem:[%s605] sm:$0xff] %v10858
      %p10860 = scmp.lt.s32.totalorder %s31, 1
      %s10861 = scalar_select %p10860, %s31, 1
      %s10862 = smul.addr %s10861, 8
      %s10863 = scalar_lea.vmem %s18, %s10862
      // Predicated region
      $region93: #{classifier_forward.1} parent=91 // pred_check
        %p10864 = pneg %p437
      $region94: #{classifier_forward.1} parent=91 // pred_check_branch
        %10866 = sbr.rel (%p10864) target = $region96
      $region95: #{classifier_forward.1} parent=91 // pred_region
        _
      $region96: #{classifier_forward.1} parent=91 // pred_fallthru
        _
    $region92: #{classifier_forward.1} parent=5 // pred_fallthru
      _
    %p10867 = scmp.le.s32.totalorder 2, %s26
    // Predicated region
    $region97: #{classifier_forward.1} parent=5 // pred_check
      %p10868 = pneg %p10867
    $region98: #{classifier_forward.1} parent=5 // pred_check_branch
      %10870 = sbr.rel (%p10868) target = $region100
    $region99: #{classifier_forward.1} parent=5 // pred_region
      %s10871 = ssub.s32 %s26, 2
      // Predicated region
      $region101: #{classifier_forward.1} parent=99 // pred_check
        %p10872 = pneg %p443
      $region102: #{classifier_forward.1} parent=99 // pred_check_branch
        %10874 = sbr.rel (%p10872) target = $region104
      $region103: #{classifier_forward.1} parent=99 // pred_region
        %p10875 = scmp.lt.s32.totalorder %s32, 1
        %s10876 = scalar_select %p10875, %s32, 1
        %s10877 = smul.addr %s10876, 8
        %s10878 = scalar_lea.vmem %s18, %s10877
      $region104: #{classifier_forward.1} parent=99 // pred_fallthru
        _
    $region100: #{classifier_forward.1} parent=5 // pred_fallthru
      _
  $region6: #{classifier_forward.1} parent=0 // loop_footer
    %s30 = sadd.s32 1, %s26
  $region7: #{classifier_forward.1} parent=0 // loop_footer_branch
    %25 = sbr.rel target = $region3
  $region8: #{classifier_forward.1} parent=0 // loop_exit
    _

</llo_original>
